<compile_context>
chip_gen: v7x
topology: tpu7x:2x2x1
jax: 0.10.0
libtpu: 0.0.40
codegen_flags: <defaults>
</compile_context>

<pallas_src>
import functools

import jax
import jax.numpy as jnp
import numpy as np
from jax.experimental import pallas as pl
from jax.experimental.pallas import tpu as pltpu


# ---------------------------------------------------------------------------
# Pallas kernel: one resolution; grid = (num_splits, row_tiles_per_split).
# ---------------------------------------------------------------------------
def _stft_loss_kernel(fx_ref, fy_ref, basis_ref, out_ref, acc_ref, *,
                      tm, tiles_per_split, n_valid, n_freq, eps):
    i = pl.program_id(0)          # split across TensorCores ("parallel")
    j = pl.program_id(1)          # row tiles within a split ("arbitrary")

    @pl.when(j == 0)
    def _():
        acc_ref[...] = jnp.zeros_like(acc_ref)

    basis = basis_ref[...]        # (n_fft, 2*n_freq) bf16: [win*cos | -win*sin]

    # STFT via MXU matmuls: bf16 inputs, f32 accumulation.  One lane-dense dot
    # per signal gives real and imag parts together.
    rx = jnp.dot(fx_ref[...], basis, preferred_element_type=jnp.float32)
    ry = jnp.dot(fy_ref[...], basis, preferred_element_type=jnp.float32)

    xr, xi = rx[:, :n_freq], rx[:, n_freq:]
    yr, yi = ry[:, :n_freq], ry[:, n_freq:]
    # STFT is linear -> STFT(x + y) = STFT(x) + STFT(y).
    sr, si = xr + yr, xi + yi

    x_mag = jnp.sqrt(jnp.maximum(xr * xr + xi * xi, eps))
    y_mag = jnp.sqrt(jnp.maximum(yr * yr + yi * yi, eps))
    s_mag = jnp.sqrt(jnp.maximum(sr * sr + si * si, eps))   # mag_1
    diff = (x_mag + y_mag) - s_mag                           # mag_2 - mag_1
    sq = diff * diff

    row0 = (i * tiles_per_split + j) * tm
    fully_valid = row0 + tm <= n_valid

    @pl.when(fully_valid)
    def _():
        acc_ref[...] += sq

    @pl.when(jnp.logical_not(fully_valid))
    def _():
        # Mask out zero-padded frame rows (only boundary / tail tiles).
        row = row0 + jax.lax.broadcasted_iota(jnp.int32, sq.shape, 0)
        acc_ref[...] += jnp.where(row < n_valid, sq, 0.0)

    @pl.when(j == pl.num_programs(1) - 1)
    def _():
        total = jnp.sum(acc_ref[...])
        out_ref[...] = jnp.broadcast_to(total, out_ref.shape)


# ---------------------------------------------------------------------------
# Glue: framing (torch.stft, center=True, reflect pad) and fused DFT basis.
# ---------------------------------------------------------------------------
def _frame_signal(sig, n_fft, hop):
    # sig: (B, T) float32
    pad = n_fft // 2
    padded = jnp.pad(sig, ((0, 0), (pad, pad)), mode="reflect")
    T = sig.shape[1]
    n_frames = 1 + T // hop
    idx = jnp.arange(n_frames)[:, None] * hop + jnp.arange(n_fft)[None, :]
    frames = padded[:, idx]                       # (B, n_frames, n_fft)
    return frames.reshape(-1, n_fft)              # (B * n_frames, n_fft)


def _dft_basis(n_fft, win_length, n_freq):
    # torch.hann_window(win_length) -> periodic Hann, centered zero-pad to
    # n_fft (what torch.stft does when win_length < n_fft).
    n = np.arange(win_length)
    win = 0.5 * (1.0 - np.cos(2.0 * np.pi * n / win_length))
    w = np.zeros(n_fft, dtype=np.float64)
    pad_left = (n_fft - win_length) // 2
    w[pad_left:pad_left + win_length] = win

    nn = np.arange(n_fft)[:, None]
    ff = np.arange(n_freq)[None, :]
    ang = 2.0 * np.pi * nn * ff / n_fft
    cmat = w[:, None] * np.cos(ang)               # real-part basis
    smat = -w[:, None] * np.sin(ang)              # imag-part basis
    basis = np.concatenate([cmat, smat], axis=1).astype(np.float32)
    return jnp.asarray(basis, dtype=jnp.bfloat16)  # (n_fft, 2*n_freq)


def _round_up(v, m):
    return ((v + m - 1) // m) * m


def _single_resolution_loss(x2d, y2d, fft_size, hop_size, win_length,
                            eps=1e-8):
    n_freq = fft_size // 8
    fx = _frame_signal(x2d, fft_size, hop_size)
    fy = _frame_signal(y2d, fft_size, hop_size)
    m = fx.shape[0]

    # Adaptive tiling: big tiles for throughput, small tiles for tiny inputs
    # so we don't matmul mostly zero-padded rows.
    tm = min(256, _round_up(m, 8))
    total_tiles = _round_up(m, tm) // tm
    num_splits = 2 if total_tiles >= 2 else 1       # megacore split (v7x)
    tiles_per_split = _round_up(total_tiles, num_splits) // num_splits
    m_pad = num_splits * tiles_per_split * tm

    # bf16 frames: native MXU rate + half the frame DMA bytes.
    fx = jnp.pad(fx, ((0, m_pad - m), (0, 0))).astype(jnp.bfloat16)
    fy = jnp.pad(fy, ((0, m_pad - m), (0, 0))).astype(jnp.bfloat16)
    basis = _dft_basis(fft_size, win_length, n_freq)   # (n_fft, 2*n_freq) bf16

    # Explicit VMEM budget for the chosen tile (double-buffered inputs,
    # constant basis, f32 accumulator scratch, f32 intermediates headroom).
    vmem_bytes = (
        2 * 2 * tm * fft_size * 2            # fx + fy tiles, bf16, 2 buffers
        + 2 * fft_size * (2 * n_freq) * 2    # fused basis, bf16, 2 buffers
        + tm * n_freq * 4                    # f32 accumulator scratch
        + 8 * tm * (2 * n_freq) * 4          # f32 intermediates headroom
    )
    vmem_limit = int(min(max(2 * vmem_bytes, 32 * 1024 * 1024),
                         56 * 1024 * 1024))  # stay under v7x's 64 MiB

    kernel = functools.partial(
        _stft_loss_kernel, tm=tm, tiles_per_split=tiles_per_split,
        n_valid=m, n_freq=n_freq, eps=eps)

    out = pl.pallas_call(
        kernel,
        out_shape=jax.ShapeDtypeStruct((num_splits, 8, 128), jnp.float32),
        grid=(num_splits, tiles_per_split),
        in_specs=[
            pl.BlockSpec((tm, fft_size),
                         lambda i, j, tps=tiles_per_split: (i * tps + j, 0)),
            pl.BlockSpec((tm, fft_size),
                         lambda i, j, tps=tiles_per_split: (i * tps + j, 0)),
            pl.BlockSpec((fft_size, 2 * n_freq), lambda i, j: (0, 0)),
        ],
        out_specs=pl.BlockSpec((1, 8, 128), lambda i, j: (i, 0, 0)),
        scratch_shapes=[pltpu.VMEM((tm, n_freq), jnp.float32)],
        compiler_params=pltpu.CompilerParams(
            dimension_semantics=("parallel", "arbitrary"),
            vmem_limit_bytes=vmem_limit),
    )(fx, fy, basis)

    sq_sum = jnp.sum(out[:, 0, 0])        # one partial sum per split
    # MSELoss(reduction='mean') over (B, n_freq, n_frames) elements.
    return sq_sum / jnp.float32(m * n_freq)


def multi_resolution_stft_loss(x, y,
                               fft_sizes=(1024, 512, 2048),
                               hop_sizes=(120, 50, 240),
                               win_lengths=(600, 240, 1200),
                               eps=1e-8):
    # x, y: (..., T) -> flattened to (-1, T), matching x.view(-1, x.size(-1)).
    T = x.shape[-1]
    x2d = x.reshape(-1, T).astype(jnp.float32)
    y2d = y.reshape(-1, T).astype(jnp.float32)
    total = jnp.float32(0.0)
    for fs, hs, wl in zip(fft_sizes, hop_sizes, win_lengths):
        total = total + _single_resolution_loss(x2d, y2d, fs, hs, wl, eps=eps)
    return total / jnp.float32(len(fft_sizes))


if __name__ == "__main__":
    key = jax.random.PRNGKey(0)
    kx, ky = jax.random.split(key)
    # Signal must be longer than max(fft_size)//2 for the reflect padding.
    x = jax.random.normal(kx, (2, 2048), dtype=jnp.float32)
    y = jax.random.normal(ky, (2, 2048), dtype=jnp.float32)

    loss_fn = jax.jit(lambda a, b: multi_resolution_stft_loss(a, b))
    loss = loss_fn(x, y)
    jax.block_until_ready(loss)
    print("KERNEL_OK")
</pallas_src>

<mosaic_0001>
module attributes {stable_mosaic.version = 11 : i64} {
  func.func @_stft_loss_kernel(%arg0: i32, %arg1: i32, %arg2: memref<88x512xbf16, #tpu.memory_space<vmem>>, %arg3: memref<88x512xbf16, #tpu.memory_space<vmem>>, %arg4: memref<512x128xbf16, #tpu.memory_space<vmem>>, %arg5: memref<1x8x128xf32, #tpu.memory_space<vmem>>, %arg6: memref<88x64xf32, #tpu.memory_space<vmem>>) attributes {dimension_semantics = [#tpu.dimension_semantics<parallel>, #tpu.dimension_semantics<arbitrary>], iteration_bounds = array<i64: 1, 1>, scalar_prefetch = 0 : i64, scratch_operands = 1 : i64, tpu.core_type = #tpu.core_type<tc>, window_params = [{transform_indices = @transform_0, window_bounds = array<i64: 88, 512>}, {transform_indices = @transform_1, window_bounds = array<i64: 88, 512>}, {pipeline_mode = #tpu.pipeline_mode<synchronous>, transform_indices = @transform_2, window_bounds = array<i64: 512, 128>}, {transform_indices = @transform_3, window_bounds = array<i64: 1, 8, 128>}]} {
    %c0_i32 = arith.constant 0 : i32
    %0 = arith.cmpi eq, %arg1, %c0_i32 : i32
    %1 = arith.extui %0 : i1 to i32
    %c0_i32_0 = arith.constant 0 : i32
    %2 = arith.cmpi ne, %1, %c0_i32_0 : i32
    scf.if %2 {
      %cst_15 = arith.constant 0.000000e+00 : f32
      %48 = vector.broadcast %cst_15 : f32 to vector<88x64xf32>
      %c0_16 = arith.constant 0 : index
      %c0_17 = arith.constant 0 : index
      %49 = vector.load %arg6[%c0_16, %c0_17] : memref<88x64xf32, #tpu.memory_space<vmem>>, vector<88x64xf32>
      tpu.vector_store %arg6[%c0_16, %c0_17], %48 {strides = array<i32>} : memref<88x64xf32, #tpu.memory_space<vmem>>, vector<88x64xf32>,
    } else {
    }
    %c0 = arith.constant 0 : index
    %c0_1 = arith.constant 0 : index
    %3 = vector.load %arg4[%c0, %c0_1] : memref<512x128xbf16, #tpu.memory_space<vmem>>, vector<512x128xbf16>
    %c0_2 = arith.constant 0 : index
    %c0_3 = arith.constant 0 : index
    %4 = vector.load %arg2[%c0_2, %c0_3] : memref<88x512xbf16, #tpu.memory_space<vmem>>, vector<88x512xbf16>
    %cst = arith.constant dense<0.000000e+00> : vector<88x128xf32>
    %5 = tpu.matmul %4, %3, %cst {dimension_numbers = #tpu.dot_dimension_numbers<[1], [0], [0], [1], [0, 0, 1, 1], [], []>} : vector<88x512xbf16>, vector<512x128xbf16>, vector<88x128xf32> -> vector<88x128xf32>
    %c0_4 = arith.constant 0 : index
    %c0_5 = arith.constant 0 : index
    %6 = vector.load %arg3[%c0_4, %c0_5] : memref<88x512xbf16, #tpu.memory_space<vmem>>, vector<88x512xbf16>
    %cst_6 = arith.constant dense<0.000000e+00> : vector<88x128xf32>
    %7 = tpu.matmul %6, %3, %cst_6 {dimension_numbers = #tpu.dot_dimension_numbers<[1], [0], [0], [1], [0, 0, 1, 1], [], []>} : vector<88x512xbf16>, vector<512x128xbf16>, vector<88x128xf32> -> vector<88x128xf32>
    %8 = vector.extract_strided_slice %5 {offsets = [0, 0], sizes = [88, 64], strides = [1, 1]} : vector<88x128xf32> to vector<88x64xf32>
    %9 = vector.extract_strided_slice %5 {offsets = [0, 64], sizes = [88, 64], strides = [1, 1]} : vector<88x128xf32> to vector<88x64xf32>
    %10 = vector.extract_strided_slice %7 {offsets = [0, 0], sizes = [88, 64], strides = [1, 1]} : vector<88x128xf32> to vector<88x64xf32>
    %11 = vector.extract_strided_slice %7 {offsets = [0, 64], sizes = [88, 64], strides = [1, 1]} : vector<88x128xf32> to vector<88x64xf32>
    %12 = arith.addf %8, %10 : vector<88x64xf32>
    %13 = arith.addf %9, %11 : vector<88x64xf32>
    %14 = arith.mulf %8, %8 : vector<88x64xf32>
    %15 = arith.mulf %9, %9 : vector<88x64xf32>
    %16 = arith.addf %14, %15 : vector<88x64xf32>
    %cst_7 = arith.constant 9.99999993E-9 : f32
    %17 = vector.broadcast %cst_7 : f32 to vector<88x64xf32>
    %18 = arith.maximumf %16, %17 : vector<88x64xf32>
    %19 = math.sqrt %18 : vector<88x64xf32>
    %20 = arith.mulf %10, %10 : vector<88x64xf32>
    %21 = arith.mulf %11, %11 : vector<88x64xf32>
    %22 = arith.addf %20, %21 : vector<88x64xf32>
    %cst_8 = arith.constant 9.99999993E-9 : f32
    %23 = vector.broadcast %cst_8 : f32 to vector<88x64xf32>
    %24 = arith.maximumf %22, %23 : vector<88x64xf32>
    %25 = math.sqrt %24 : vector<88x64xf32>
    %26 = arith.mulf %12, %12 : vector<88x64xf32>
    %27 = arith.mulf %13, %13 : vector<88x64xf32>
    %28 = arith.addf %26, %27 : vector<88x64xf32>
    %cst_9 = arith.constant 9.99999993E-9 : f32
    %29 = vector.broadcast %cst_9 : f32 to vector<88x64xf32>
    %30 = arith.maximumf %28, %29 : vector<88x64xf32>
    %31 = math.sqrt %30 : vector<88x64xf32>
    %32 = arith.addf %19, %25 : vector<88x64xf32>
    %33 = arith.subf %32, %31 : vector<88x64xf32>
    %34 = arith.mulf %33, %33 : vector<88x64xf32>
    %c1_i32 = arith.constant 1 : i32
    %35 = arith.muli %arg0, %c1_i32 : i32
    %36 = arith.addi %35, %arg1 : i32
    %c88_i32 = arith.constant 88 : i32
    %37 = arith.muli %36, %c88_i32 : i32
    %c88_i32_10 = arith.constant 88 : i32
    %38 = arith.addi %37, %c88_i32_10 : i32
    %c82_i32 = arith.constant 82 : i32
    %39 = arith.cmpi sle, %38, %c82_i32 : i32
    %40 = arith.extui %39 : i1 to i32
    %c0_i32_11 = arith.constant 0 : i32
    %41 = arith.cmpi ne, %40, %c0_i32_11 : i32
    scf.if %41 {
      %c0_15 = arith.constant 0 : index
      %c0_16 = arith.constant 0 : index
      %48 = vector.load %arg6[%c0_15, %c0_16] : memref<88x64xf32, #tpu.memory_space<vmem>>, vector<88x64xf32>
      %49 = arith.addf %48, %34 : vector<88x64xf32>
      %c0_17 = arith.constant 0 : index
      %c0_18 = arith.constant 0 : index
      %50 = vector.load %arg6[%c0_17, %c0_18] : memref<88x64xf32, #tpu.memory_space<vmem>>, vector<88x64xf32>
      tpu.vector_store %arg6[%c0_17, %c0_18], %49 {strides = array<i32>} : memref<88x64xf32, #tpu.memory_space<vmem>>, vector<88x64xf32>,
    } else {
    }
    %true = arith.constant true
    %42 = arith.xori %39, %true : i1
    %43 = arith.extui %42 : i1 to i32
    %c0_i32_12 = arith.constant 0 : i32
    %44 = arith.cmpi ne, %43, %c0_i32_12 : i32
    scf.if %44 {
      %48 = tpu.iota {dimensions = array<i32: 0>} : vector<88x64xi32>
      %49 = vector.broadcast %37 : i32 to vector<88x64xi32>
      %50 = arith.addi %49, %48 : vector<88x64xi32>
      %c0_15 = arith.constant 0 : index
      %c0_16 = arith.constant 0 : index
      %51 = vector.load %arg6[%c0_15, %c0_16] : memref<88x64xf32, #tpu.memory_space<vmem>>, vector<88x64xf32>
      %c82_i32_17 = arith.constant 82 : i32
      %52 = vector.broadcast %c82_i32_17 : i32 to vector<88x64xi32>
      %53 = arith.cmpi slt, %50, %52 : vector<88x64xi32>
      %cst_18 = arith.constant 0.000000e+00 : f32
      %54 = vector.broadcast %cst_18 : f32 to vector<88x64xf32>
      %55 = arith.select %53, %34, %54 : vector<88x64xi1>, vector<88x64xf32>
      %56 = arith.addf %51, %55 : vector<88x64xf32>
      %c0_19 = arith.constant 0 : index
      %c0_20 = arith.constant 0 : index
      %57 = vector.load %arg6[%c0_19, %c0_20] : memref<88x64xf32, #tpu.memory_space<vmem>>, vector<88x64xf32>
      tpu.vector_store %arg6[%c0_19, %c0_20], %56 {strides = array<i32>} : memref<88x64xf32, #tpu.memory_space<vmem>>, vector<88x64xf32>,
    } else {
    }
    %c0_i32_13 = arith.constant 0 : i32
    %45 = arith.cmpi eq, %arg1, %c0_i32_13 : i32
    %46 = arith.extui %45 : i1 to i32
    %c0_i32_14 = arith.constant 0 : i32
    %47 = arith.cmpi ne, %46, %c0_i32_14 : i32
    scf.if %47 {
      %c0_15 = arith.constant 0 : index
      %c0_16 = arith.constant 0 : index
      %48 = vector.load %arg6[%c0_15, %c0_16] : memref<88x64xf32, #tpu.memory_space<vmem>>, vector<88x64xf32>
      %49 = vector.shape_cast %48 : vector<88x64xf32> to vector<1x88x64xf32>
      %cst_17 = arith.constant dense<0.000000e+00> : vector<1xf32>
      %50 = vector.multi_reduction <add>, %49, %cst_17 [1, 2] : vector<1x88x64xf32> to vector<1xf32>
      %51 = vector.shape_cast %50 : vector<1xf32> to vector<1x1x1xf32>
      %52 = vector.extract %51[0, 0, 0] : f32 from vector<1x1x1xf32>
      %53 = vector.broadcast %52 : f32 to vector<1x8x128xf32>
      %c0_18 = arith.constant 0 : index
      %c0_19 = arith.constant 0 : index
      %c0_20 = arith.constant 0 : index
      %54 = vector.load %arg5[%c0_18, %c0_19, %c0_20] : memref<1x8x128xf32, #tpu.memory_space<vmem>>, vector<1x8x128xf32>
      tpu.vector_store %arg5[%c0_18, %c0_19, %c0_20], %53 {strides = array<i32>} : memref<1x8x128xf32, #tpu.memory_space<vmem>>, vector<1x8x128xf32>,
    } else {
    }
    return
  }
  func.func @transform_0(%arg0: i32, %arg1: i32) -> (i32, i32) {
    %c1_i32 = arith.constant 1 : i32
    %0 = arith.muli %arg0, %c1_i32 : i32
    %1 = arith.addi %0, %arg1 : i32
    %c0_i32 = arith.constant 0 : i32
    %c0_i32_0 = arith.constant 0 : i32
    return %1, %c0_i32 : i32, i32
  }
  func.func @transform_1(%arg0: i32, %arg1: i32) -> (i32, i32) {
    %c1_i32 = arith.constant 1 : i32
    %0 = arith.muli %arg0, %c1_i32 : i32
    %1 = arith.addi %0, %arg1 : i32
    %c0_i32 = arith.constant 0 : i32
    %c0_i32_0 = arith.constant 0 : i32
    return %1, %c0_i32 : i32, i32
  }
  func.func @transform_2(%arg0: i32, %arg1: i32) -> (i32, i32) {
    %c0_i32 = arith.constant 0 : i32
    %c0_i32_0 = arith.constant 0 : i32
    %c0_i32_1 = arith.constant 0 : i32
    return %c0_i32, %c0_i32_0 : i32, i32
  }
  func.func @transform_3(%arg0: i32, %arg1: i32) -> (i32, i32, i32) {
    %c0_i32 = arith.constant 0 : i32
    %c0_i32_0 = arith.constant 0 : i32
    %c0_i32_1 = arith.constant 0 : i32
    return %arg0, %c0_i32, %c0_i32_0 : i32, i32, i32
  }
}

module attributes {stable_mosaic.version = 11 : i64} {
  func.func @_stft_loss_kernel(%arg0: i32, %arg1: i32, %arg2: memref<40x1024xbf16, #tpu.memory_space<vmem>>, %arg3: memref<40x1024xbf16, #tpu.memory_space<vmem>>, %arg4: memref<1024x256xbf16, #tpu.memory_space<vmem>>, %arg5: memref<1x8x128xf32, #tpu.memory_space<vmem>>, %arg6: memref<40x128xf32, #tpu.memory_space<vmem>>) attributes {dimension_semantics = [#tpu.dimension_semantics<parallel>, #tpu.dimension_semantics<arbitrary>], iteration_bounds = array<i64: 1, 1>, scalar_prefetch = 0 : i64, scratch_operands = 1 : i64, tpu.core_type = #tpu.core_type<tc>, window_params = [{transform_indices = @transform_0, window_bounds = array<i64: 40, 1024>}, {transform_indices = @transform_1, window_bounds = array<i64: 40, 1024>}, {pipeline_mode = #tpu.pipeline_mode<synchronous>, transform_indices = @transform_2, window_bounds = array<i64: 1024, 256>}, {transform_indices = @transform_3, window_bounds = array<i64: 1, 8, 128>}]} {
    %c0_i32 = arith.constant 0 : i32
    %0 = arith.cmpi eq, %arg1, %c0_i32 : i32
    %1 = arith.extui %0 : i1 to i32
    %c0_i32_0 = arith.constant 0 : i32
    %2 = arith.cmpi ne, %1, %c0_i32_0 : i32
    scf.if %2 {
      %cst_15 = arith.constant 0.000000e+00 : f32
      %48 = vector.broadcast %cst_15 : f32 to vector<40x128xf32>
      %c0_16 = arith.constant 0 : index
      %c0_17 = arith.constant 0 : index
      %49 = vector.load %arg6[%c0_16, %c0_17] : memref<40x128xf32, #tpu.memory_space<vmem>>, vector<40x128xf32>
      tpu.vector_store %arg6[%c0_16, %c0_17], %48 {strides = array<i32>} : memref<40x128xf32, #tpu.memory_space<vmem>>, vector<40x128xf32>,
    } else {
    }
    %c0 = arith.constant 0 : index
    %c0_1 = arith.constant 0 : index
    %3 = vector.load %arg4[%c0, %c0_1] : memref<1024x256xbf16, #tpu.memory_space<vmem>>, vector<1024x256xbf16>
    %c0_2 = arith.constant 0 : index
    %c0_3 = arith.constant 0 : index
    %4 = vector.load %arg2[%c0_2, %c0_3] : memref<40x1024xbf16, #tpu.memory_space<vmem>>, vector<40x1024xbf16>
    %cst = arith.constant dense<0.000000e+00> : vector<40x256xf32>
    %5 = tpu.matmul %4, %3, %cst {dimension_numbers = #tpu.dot_dimension_numbers<[1], [0], [0], [1], [0, 0, 1, 1], [], []>} : vector<40x1024xbf16>, vector<1024x256xbf16>, vector<40x256xf32> -> vector<40x256xf32>
    %c0_4 = arith.constant 0 : index
    %c0_5 = arith.constant 0 : index
    %6 = vector.load %arg3[%c0_4, %c0_5] : memref<40x1024xbf16, #tpu.memory_space<vmem>>, vector<40x1024xbf16>
    %cst_6 = arith.constant dense<0.000000e+00> : vector<40x256xf32>
    %7 = tpu.matmul %6, %3, %cst_6 {dimension_numbers = #tpu.dot_dimension_numbers<[1], [0], [0], [1], [0, 0, 1, 1], [], []>} : vector<40x1024xbf16>, vector<1024x256xbf16>, vector<40x256xf32> -> vector<40x256xf32>
    %8 = vector.extract_strided_slice %5 {offsets = [0, 0], sizes = [40, 128], strides = [1, 1]} : vector<40x256xf32> to vector<40x128xf32>
    %9 = vector.extract_strided_slice %5 {offsets = [0, 128], sizes = [40, 128], strides = [1, 1]} : vector<40x256xf32> to vector<40x128xf32>
    %10 = vector.extract_strided_slice %7 {offsets = [0, 0], sizes = [40, 128], strides = [1, 1]} : vector<40x256xf32> to vector<40x128xf32>
    %11 = vector.extract_strided_slice %7 {offsets = [0, 128], sizes = [40, 128], strides = [1, 1]} : vector<40x256xf32> to vector<40x128xf32>
    %12 = arith.addf %8, %10 : vector<40x128xf32>
    %13 = arith.addf %9, %11 : vector<40x128xf32>
    %14 = arith.mulf %8, %8 : vector<40x128xf32>
    %15 = arith.mulf %9, %9 : vector<40x128xf32>
    %16 = arith.addf %14, %15 : vector<40x128xf32>
    %cst_7 = arith.constant 9.99999993E-9 : f32
    %17 = vector.broadcast %cst_7 : f32 to vector<40x128xf32>
    %18 = arith.maximumf %16, %17 : vector<40x128xf32>
    %19 = math.sqrt %18 : vector<40x128xf32>
    %20 = arith.mulf %10, %10 : vector<40x128xf32>
    %21 = arith.mulf %11, %11 : vector<40x128xf32>
    %22 = arith.addf %20, %21 : vector<40x128xf32>
    %cst_8 = arith.constant 9.99999993E-9 : f32
    %23 = vector.broadcast %cst_8 : f32 to vector<40x128xf32>
    %24 = arith.maximumf %22, %23 : vector<40x128xf32>
    %25 = math.sqrt %24 : vector<40x128xf32>
    %26 = arith.mulf %12, %12 : vector<40x128xf32>
    %27 = arith.mulf %13, %13 : vector<40x128xf32>
    %28 = arith.addf %26, %27 : vector<40x128xf32>
    %cst_9 = arith.constant 9.99999993E-9 : f32
    %29 = vector.broadcast %cst_9 : f32 to vector<40x128xf32>
    %30 = arith.maximumf %28, %29 : vector<40x128xf32>
    %31 = math.sqrt %30 : vector<40x128xf32>
    %32 = arith.addf %19, %25 : vector<40x128xf32>
    %33 = arith.subf %32, %31 : vector<40x128xf32>
    %34 = arith.mulf %33, %33 : vector<40x128xf32>
    %c1_i32 = arith.constant 1 : i32
    %35 = arith.muli %arg0, %c1_i32 : i32
    %36 = arith.addi %35, %arg1 : i32
    %c40_i32 = arith.constant 40 : i32
    %37 = arith.muli %36, %c40_i32 : i32
    %c40_i32_10 = arith.constant 40 : i32
    %38 = arith.addi %37, %c40_i32_10 : i32
    %c36_i32 = arith.constant 36 : i32
    %39 = arith.cmpi sle, %38, %c36_i32 : i32
    %40 = arith.extui %39 : i1 to i32
    %c0_i32_11 = arith.constant 0 : i32
    %41 = arith.cmpi ne, %40, %c0_i32_11 : i32
    scf.if %41 {
      %c0_15 = arith.constant 0 : index
      %c0_16 = arith.constant 0 : index
      %48 = vector.load %arg6[%c0_15, %c0_16] : memref<40x128xf32, #tpu.memory_space<vmem>>, vector<40x128xf32>
      %49 = arith.addf %48, %34 : vector<40x128xf32>
      %c0_17 = arith.constant 0 : index
      %c0_18 = arith.constant 0 : index
      %50 = vector.load %arg6[%c0_17, %c0_18] : memref<40x128xf32, #tpu.memory_space<vmem>>, vector<40x128xf32>
      tpu.vector_store %arg6[%c0_17, %c0_18], %49 {strides = array<i32>} : memref<40x128xf32, #tpu.memory_space<vmem>>, vector<40x128xf32>,
    } else {
    }
    %true = arith.constant true
    %42 = arith.xori %39, %true : i1
    %43 = arith.extui %42 : i1 to i32
    %c0_i32_12 = arith.constant 0 : i32
    %44 = arith.cmpi ne, %43, %c0_i32_12 : i32
    scf.if %44 {
      %48 = tpu.iota {dimensions = array<i32: 0>} : vector<40x128xi32>
      %49 = vector.broadcast %37 : i32 to vector<40x128xi32>
      %50 = arith.addi %49, %48 : vector<40x128xi32>
      %c0_15 = arith.constant 0 : index
      %c0_16 = arith.constant 0 : index
      %51 = vector.load %arg6[%c0_15, %c0_16] : memref<40x128xf32, #tpu.memory_space<vmem>>, vector<40x128xf32>
      %c36_i32_17 = arith.constant 36 : i32
      %52 = vector.broadcast %c36_i32_17 : i32 to vector<40x128xi32>
      %53 = arith.cmpi slt, %50, %52 : vector<40x128xi32>
      %cst_18 = arith.constant 0.000000e+00 : f32
      %54 = vector.broadcast %cst_18 : f32 to vector<40x128xf32>
      %55 = arith.select %53, %34, %54 : vector<40x128xi1>, vector<40x128xf32>
      %56 = arith.addf %51, %55 : vector<40x128xf32>
      %c0_19 = arith.constant 0 : index
      %c0_20 = arith.constant 0 : index
      %57 = vector.load %arg6[%c0_19, %c0_20] : memref<40x128xf32, #tpu.memory_space<vmem>>, vector<40x128xf32>
      tpu.vector_store %arg6[%c0_19, %c0_20], %56 {strides = array<i32>} : memref<40x128xf32, #tpu.memory_space<vmem>>, vector<40x128xf32>,
    } else {
    }
    %c0_i32_13 = arith.constant 0 : i32
    %45 = arith.cmpi eq, %arg1, %c0_i32_13 : i32
    %46 = arith.extui %45 : i1 to i32
    %c0_i32_14 = arith.constant 0 : i32
    %47 = arith.cmpi ne, %46, %c0_i32_14 : i32
    scf.if %47 {
      %c0_15 = arith.constant 0 : index
      %c0_16 = arith.constant 0 : index
      %48 = vector.load %arg6[%c0_15, %c0_16] : memref<40x128xf32, #tpu.memory_space<vmem>>, vector<40x128xf32>
      %49 = vector.shape_cast %48 : vector<40x128xf32> to vector<1x40x128xf32>
      %cst_17 = arith.constant dense<0.000000e+00> : vector<1xf32>
      %50 = vector.multi_reduction <add>, %49, %cst_17 [1, 2] : vector<1x40x128xf32> to vector<1xf32>
      %51 = vector.shape_cast %50 : vector<1xf32> to vector<1x1x1xf32>
      %52 = vector.extract %51[0, 0, 0] : f32 from vector<1x1x1xf32>
      %53 = vector.broadcast %52 : f32 to vector<1x8x128xf32>
      %c0_18 = arith.constant 0 : index
      %c0_19 = arith.constant 0 : index
      %c0_20 = arith.constant 0 : index
      %54 = vector.load %arg5[%c0_18, %c0_19, %c0_20] : memref<1x8x128xf32, #tpu.memory_space<vmem>>, vector<1x8x128xf32>
      tpu.vector_store %arg5[%c0_18, %c0_19, %c0_20], %53 {strides = array<i32>} : memref<1x8x128xf32, #tpu.memory_space<vmem>>, vector<1x8x128xf32>,
    } else {
    }
    return
  }
  func.func @transform_0(%arg0: i32, %arg1: i32) -> (i32, i32) {
    %c1_i32 = arith.constant 1 : i32
    %0 = arith.muli %arg0, %c1_i32 : i32
    %1 = arith.addi %0, %arg1 : i32
    %c0_i32 = arith.constant 0 : i32
    %c0_i32_0 = arith.constant 0 : i32
    return %1, %c0_i32 : i32, i32
  }
  func.func @transform_1(%arg0: i32, %arg1: i32) -> (i32, i32) {
    %c1_i32 = arith.constant 1 : i32
    %0 = arith.muli %arg0, %c1_i32 : i32
    %1 = arith.addi %0, %arg1 : i32
    %c0_i32 = arith.constant 0 : i32
    %c0_i32_0 = arith.constant 0 : i32
    return %1, %c0_i32 : i32, i32
  }
  func.func @transform_2(%arg0: i32, %arg1: i32) -> (i32, i32) {
    %c0_i32 = arith.constant 0 : i32
    %c0_i32_0 = arith.constant 0 : i32
    %c0_i32_1 = arith.constant 0 : i32
    return %c0_i32, %c0_i32_0 : i32, i32
  }
  func.func @transform_3(%arg0: i32, %arg1: i32) -> (i32, i32, i32) {
    %c0_i32 = arith.constant 0 : i32
    %c0_i32_0 = arith.constant 0 : i32
    %c0_i32_1 = arith.constant 0 : i32
    return %arg0, %c0_i32, %c0_i32_0 : i32, i32, i32
  }
}

module attributes {stable_mosaic.version = 11 : i64} {
  func.func @_stft_loss_kernel(%arg0: i32, %arg1: i32, %arg2: memref<24x2048xbf16, #tpu.memory_space<vmem>>, %arg3: memref<24x2048xbf16, #tpu.memory_space<vmem>>, %arg4: memref<2048x512xbf16, #tpu.memory_space<vmem>>, %arg5: memref<1x8x128xf32, #tpu.memory_space<vmem>>, %arg6: memref<24x256xf32, #tpu.memory_space<vmem>>) attributes {dimension_semantics = [#tpu.dimension_semantics<parallel>, #tpu.dimension_semantics<arbitrary>], iteration_bounds = array<i64: 1, 1>, scalar_prefetch = 0 : i64, scratch_operands = 1 : i64, tpu.core_type = #tpu.core_type<tc>, window_params = [{transform_indices = @transform_0, window_bounds = array<i64: 24, 2048>}, {transform_indices = @transform_1, window_bounds = array<i64: 24, 2048>}, {pipeline_mode = #tpu.pipeline_mode<synchronous>, transform_indices = @transform_2, window_bounds = array<i64: 2048, 512>}, {transform_indices = @transform_3, window_bounds = array<i64: 1, 8, 128>}]} {
    %c0_i32 = arith.constant 0 : i32
    %0 = arith.cmpi eq, %arg1, %c0_i32 : i32
    %1 = arith.extui %0 : i1 to i32
    %c0_i32_0 = arith.constant 0 : i32
    %2 = arith.cmpi ne, %1, %c0_i32_0 : i32
    scf.if %2 {
      %cst_15 = arith.constant 0.000000e+00 : f32
      %48 = vector.broadcast %cst_15 : f32 to vector<24x256xf32>
      %c0_16 = arith.constant 0 : index
      %c0_17 = arith.constant 0 : index
      %49 = vector.load %arg6[%c0_16, %c0_17] : memref<24x256xf32, #tpu.memory_space<vmem>>, vector<24x256xf32>
      tpu.vector_store %arg6[%c0_16, %c0_17], %48 {strides = array<i32>} : memref<24x256xf32, #tpu.memory_space<vmem>>, vector<24x256xf32>,
    } else {
    }
    %c0 = arith.constant 0 : index
    %c0_1 = arith.constant 0 : index
    %3 = vector.load %arg4[%c0, %c0_1] : memref<2048x512xbf16, #tpu.memory_space<vmem>>, vector<2048x512xbf16>
    %c0_2 = arith.constant 0 : index
    %c0_3 = arith.constant 0 : index
    %4 = vector.load %arg2[%c0_2, %c0_3] : memref<24x2048xbf16, #tpu.memory_space<vmem>>, vector<24x2048xbf16>
    %cst = arith.constant dense<0.000000e+00> : vector<24x512xf32>
    %5 = tpu.matmul %4, %3, %cst {dimension_numbers = #tpu.dot_dimension_numbers<[1], [0], [0], [1], [0, 0, 1, 1], [], []>} : vector<24x2048xbf16>, vector<2048x512xbf16>, vector<24x512xf32> -> vector<24x512xf32>
    %c0_4 = arith.constant 0 : index
    %c0_5 = arith.constant 0 : index
    %6 = vector.load %arg3[%c0_4, %c0_5] : memref<24x2048xbf16, #tpu.memory_space<vmem>>, vector<24x2048xbf16>
    %cst_6 = arith.constant dense<0.000000e+00> : vector<24x512xf32>
    %7 = tpu.matmul %6, %3, %cst_6 {dimension_numbers = #tpu.dot_dimension_numbers<[1], [0], [0], [1], [0, 0, 1, 1], [], []>} : vector<24x2048xbf16>, vector<2048x512xbf16>, vector<24x512xf32> -> vector<24x512xf32>
    %8 = vector.extract_strided_slice %5 {offsets = [0, 0], sizes = [24, 256], strides = [1, 1]} : vector<24x512xf32> to vector<24x256xf32>
    %9 = vector.extract_strided_slice %5 {offsets = [0, 256], sizes = [24, 256], strides = [1, 1]} : vector<24x512xf32> to vector<24x256xf32>
    %10 = vector.extract_strided_slice %7 {offsets = [0, 0], sizes = [24, 256], strides = [1, 1]} : vector<24x512xf32> to vector<24x256xf32>
    %11 = vector.extract_strided_slice %7 {offsets = [0, 256], sizes = [24, 256], strides = [1, 1]} : vector<24x512xf32> to vector<24x256xf32>
    %12 = arith.addf %8, %10 : vector<24x256xf32>
    %13 = arith.addf %9, %11 : vector<24x256xf32>
    %14 = arith.mulf %8, %8 : vector<24x256xf32>
    %15 = arith.mulf %9, %9 : vector<24x256xf32>
    %16 = arith.addf %14, %15 : vector<24x256xf32>
    %cst_7 = arith.constant 9.99999993E-9 : f32
    %17 = vector.broadcast %cst_7 : f32 to vector<24x256xf32>
    %18 = arith.maximumf %16, %17 : vector<24x256xf32>
    %19 = math.sqrt %18 : vector<24x256xf32>
    %20 = arith.mulf %10, %10 : vector<24x256xf32>
    %21 = arith.mulf %11, %11 : vector<24x256xf32>
    %22 = arith.addf %20, %21 : vector<24x256xf32>
    %cst_8 = arith.constant 9.99999993E-9 : f32
    %23 = vector.broadcast %cst_8 : f32 to vector<24x256xf32>
    %24 = arith.maximumf %22, %23 : vector<24x256xf32>
    %25 = math.sqrt %24 : vector<24x256xf32>
    %26 = arith.mulf %12, %12 : vector<24x256xf32>
    %27 = arith.mulf %13, %13 : vector<24x256xf32>
    %28 = arith.addf %26, %27 : vector<24x256xf32>
    %cst_9 = arith.constant 9.99999993E-9 : f32
    %29 = vector.broadcast %cst_9 : f32 to vector<24x256xf32>
    %30 = arith.maximumf %28, %29 : vector<24x256xf32>
    %31 = math.sqrt %30 : vector<24x256xf32>
    %32 = arith.addf %19, %25 : vector<24x256xf32>
    %33 = arith.subf %32, %31 : vector<24x256xf32>
    %34 = arith.mulf %33, %33 : vector<24x256xf32>
    %c1_i32 = arith.constant 1 : i32
    %35 = arith.muli %arg0, %c1_i32 : i32
    %36 = arith.addi %35, %arg1 : i32
    %c24_i32 = arith.constant 24 : i32
    %37 = arith.muli %36, %c24_i32 : i32
    %c24_i32_10 = arith.constant 24 : i32
    %38 = arith.addi %37, %c24_i32_10 : i32
    %c18_i32 = arith.constant 18 : i32
    %39 = arith.cmpi sle, %38, %c18_i32 : i32
    %40 = arith.extui %39 : i1 to i32
    %c0_i32_11 = arith.constant 0 : i32
    %41 = arith.cmpi ne, %40, %c0_i32_11 : i32
    scf.if %41 {
      %c0_15 = arith.constant 0 : index
      %c0_16 = arith.constant 0 : index
      %48 = vector.load %arg6[%c0_15, %c0_16] : memref<24x256xf32, #tpu.memory_space<vmem>>, vector<24x256xf32>
      %49 = arith.addf %48, %34 : vector<24x256xf32>
      %c0_17 = arith.constant 0 : index
      %c0_18 = arith.constant 0 : index
      %50 = vector.load %arg6[%c0_17, %c0_18] : memref<24x256xf32, #tpu.memory_space<vmem>>, vector<24x256xf32>
      tpu.vector_store %arg6[%c0_17, %c0_18], %49 {strides = array<i32>} : memref<24x256xf32, #tpu.memory_space<vmem>>, vector<24x256xf32>,
    } else {
    }
    %true = arith.constant true
    %42 = arith.xori %39, %true : i1
    %43 = arith.extui %42 : i1 to i32
    %c0_i32_12 = arith.constant 0 : i32
    %44 = arith.cmpi ne, %43, %c0_i32_12 : i32
    scf.if %44 {
      %48 = tpu.iota {dimensions = array<i32: 0>} : vector<24x256xi32>
      %49 = vector.broadcast %37 : i32 to vector<24x256xi32>
      %50 = arith.addi %49, %48 : vector<24x256xi32>
      %c0_15 = arith.constant 0 : index
      %c0_16 = arith.constant 0 : index
      %51 = vector.load %arg6[%c0_15, %c0_16] : memref<24x256xf32, #tpu.memory_space<vmem>>, vector<24x256xf32>
      %c18_i32_17 = arith.constant 18 : i32
      %52 = vector.broadcast %c18_i32_17 : i32 to vector<24x256xi32>
      %53 = arith.cmpi slt, %50, %52 : vector<24x256xi32>
      %cst_18 = arith.constant 0.000000e+00 : f32
      %54 = vector.broadcast %cst_18 : f32 to vector<24x256xf32>
      %55 = arith.select %53, %34, %54 : vector<24x256xi1>, vector<24x256xf32>
      %56 = arith.addf %51, %55 : vector<24x256xf32>
      %c0_19 = arith.constant 0 : index
      %c0_20 = arith.constant 0 : index
      %57 = vector.load %arg6[%c0_19, %c0_20] : memref<24x256xf32, #tpu.memory_space<vmem>>, vector<24x256xf32>
      tpu.vector_store %arg6[%c0_19, %c0_20], %56 {strides = array<i32>} : memref<24x256xf32, #tpu.memory_space<vmem>>, vector<24x256xf32>,
    } else {
    }
    %c0_i32_13 = arith.constant 0 : i32
    %45 = arith.cmpi eq, %arg1, %c0_i32_13 : i32
    %46 = arith.extui %45 : i1 to i32
    %c0_i32_14 = arith.constant 0 : i32
    %47 = arith.cmpi ne, %46, %c0_i32_14 : i32
    scf.if %47 {
      %c0_15 = arith.constant 0 : index
      %c0_16 = arith.constant 0 : index
      %48 = vector.load %arg6[%c0_15, %c0_16] : memref<24x256xf32, #tpu.memory_space<vmem>>, vector<24x256xf32>
      %49 = vector.shape_cast %48 : vector<24x256xf32> to vector<1x24x256xf32>
      %cst_17 = arith.constant dense<0.000000e+00> : vector<1xf32>
      %50 = vector.multi_reduction <add>, %49, %cst_17 [1, 2] : vector<1x24x256xf32> to vector<1xf32>
      %51 = vector.shape_cast %50 : vector<1xf32> to vector<1x1x1xf32>
      %52 = vector.extract %51[0, 0, 0] : f32 from vector<1x1x1xf32>
      %53 = vector.broadcast %52 : f32 to vector<1x8x128xf32>
      %c0_18 = arith.constant 0 : index
      %c0_19 = arith.constant 0 : index
      %c0_20 = arith.constant 0 : index
      %54 = vector.load %arg5[%c0_18, %c0_19, %c0_20] : memref<1x8x128xf32, #tpu.memory_space<vmem>>, vector<1x8x128xf32>
      tpu.vector_store %arg5[%c0_18, %c0_19, %c0_20], %53 {strides = array<i32>} : memref<1x8x128xf32, #tpu.memory_space<vmem>>, vector<1x8x128xf32>,
    } else {
    }
    return
  }
  func.func @transform_0(%arg0: i32, %arg1: i32) -> (i32, i32) {
    %c1_i32 = arith.constant 1 : i32
    %0 = arith.muli %arg0, %c1_i32 : i32
    %1 = arith.addi %0, %arg1 : i32
    %c0_i32 = arith.constant 0 : i32
    %c0_i32_0 = arith.constant 0 : i32
    return %1, %c0_i32 : i32, i32
  }
  func.func @transform_1(%arg0: i32, %arg1: i32) -> (i32, i32) {
    %c1_i32 = arith.constant 1 : i32
    %0 = arith.muli %arg0, %c1_i32 : i32
    %1 = arith.addi %0, %arg1 : i32
    %c0_i32 = arith.constant 0 : i32
    %c0_i32_0 = arith.constant 0 : i32
    return %1, %c0_i32 : i32, i32
  }
  func.func @transform_2(%arg0: i32, %arg1: i32) -> (i32, i32) {
    %c0_i32 = arith.constant 0 : i32
    %c0_i32_0 = arith.constant 0 : i32
    %c0_i32_1 = arith.constant 0 : i32
    return %c0_i32, %c0_i32_0 : i32, i32
  }
  func.func @transform_3(%arg0: i32, %arg1: i32) -> (i32, i32, i32) {
    %c0_i32 = arith.constant 0 : i32
    %c0_i32_0 = arith.constant 0 : i32
    %c0_i32_1 = arith.constant 0 : i32
    return %arg0, %c0_i32, %c0_i32_0 : i32, i32, i32
  }
}

</mosaic_0001>

<llo_original>
// kernel: _lambda_.4
$region0: #{_lambda_.4}
  #allocation0 [shape = 'u32[]', space=smem, size = 0x4, offset = 0x4, fixed_abs, tag = 'smem constant byte address 0x4 - core index']
  #allocation1 [shape = 'u32[144,128]{1,0:T(1,128)}', space=vmem, size = 0x12000, scoped, tag = 'internal scratch']
  #allocation2 [shape = 'f32[88,64]{1,0:T(8,128)}', space=vmem, size = 0xb000, scoped, tag = 'scratch operand']
  %s0 = inlined_call_operand.vmem [shape: bf16[88,512], index: 0, kind: input, shape index: {}]
  %s1 = inlined_call_operand.vmem [shape: bf16[88,512], index: 1, kind: input, shape index: {}]
  %s2 = inlined_call_operand.vmem [shape: bf16[512,128], index: 2, kind: input, shape index: {}]
  %s3 = inlined_call_operand.vmem [shape: f32[1,8,128], index: 3, kind: output, shape index: {}]
  %s4 = sld [smem:[#allocation0]]
  $region38: #{_lambda_.4} parent=0
    _
  %s6 = ssub.s32 1, %s4
  %s7 = scalar_select 0, %s6, %s4
  // Predicated region
  $region2: #{_lambda_.4} parent=0 // pred_check
    _
  $region3: #{_lambda_.4} parent=0 // pred_check_branch
    %9 = sbr.rel (0) target = $region5
  $region4: #{_lambda_.4} parent=0 // pred_region
    %s10 = sadd.s32 0, 0
    %s11 = smul.u32 11, %s10
    %p12 = scmp.lt.s32.totalorder %s11, 10
    %s13 = scalar_select %p12, %s11, 10
    %s14 = smul.addr %s13, 4
    %s15 = smul.addr %s14, 4
    %s16 = scalar_lea.vmem %s0, %s15
    %s17 = sadd.s32 0, 0
    %s18 = smul.u32 11, %s17
  $region5: #{_lambda_.4} parent=0 // pred_fallthru
    _
  // Predicated region
  $region6: #{_lambda_.4} parent=0 // pred_check
    _
  $region7: #{_lambda_.4} parent=0 // pred_check_branch
    %20 = sbr.rel (0) target = $region9
  $region8: #{_lambda_.4} parent=0 // pred_region
    %s21 = sadd.s32 0, 0
    %s22 = smul.u32 11, %s21
    %p23 = scmp.lt.s32.totalorder %s22, 10
    %s24 = scalar_select %p23, %s22, 10
    %s25 = smul.addr %s24, 4
    %s26 = smul.addr %s25, 4
    %s27 = scalar_lea.vmem %s1, %s26
    %s28 = sadd.s32 0, 0
    %s29 = smul.u32 11, %s28
  $region9: #{_lambda_.4} parent=0 // pred_fallthru
    _
  // Predicated region
  $region10: #{_lambda_.4} parent=0 // pred_check
    _
  $region11: #{_lambda_.4} parent=0 // pred_check_branch
    %31 = sbr.rel (0) target = $region13
  $region12: #{_lambda_.4} parent=0 // pred_region
    _
  $region13: #{_lambda_.4} parent=0 // pred_fallthru
    _
  %s32 = sadd.s32 0, 0
  %s33 = smul.u32 11, %s32
  %p34 = scmp.lt.s32.totalorder %s33, 10
  %s35 = scalar_select %p34, %s33, 10
  %s36 = smul.addr %s35, 4
  %s37 = smul.addr %s36, 4
  %s38 = scalar_lea.vmem %s0, %s37
  %s39 = sadd.s32 0, 0
  %s40 = smul.u32 11, %s39
  %p41 = scmp.lt.s32.totalorder %s40, 10
  %s42 = scalar_select %p41, %s40, 10
  %s43 = smul.addr %s42, 4
  %s44 = smul.addr %s43, 4
  %s45 = scalar_lea.vmem %s1, %s44
  %s46 = sadd.s32 0, 0
  %s47 = smul.u32 11, %s46
  %p48 = scmp.lt.s32.totalorder %s47, 10
  %s49 = scalar_select %p48, %s47, 10
  %s50 = smul.addr %s49, 4
  %s51 = smul.addr %s50, 4
  %s52 = scalar_lea.vmem %s0, %s51
  %s53 = sadd.s32 0, 0
  %s54 = smul.u32 11, %s53
  %s55 = sadd.s32 0, 0
  %s56 = smul.u32 11, %s55
  %p57 = scmp.lt.s32.totalorder %s56, 10
  %s58 = scalar_select %p57, %s56, 10
  %s59 = smul.addr %s58, 4
  %s60 = smul.addr %s59, 4
  %s61 = scalar_lea.vmem %s1, %s60
  %s62 = sadd.s32 0, 0
  %s63 = smul.u32 11, %s62
  %p65 = scmp.eq.s32.totalorder 0, 0
  // Predicated region
  $region14: #{_lambda_.4} parent=0 // pred_check
    %p66 = pneg %p65
  $region15: #{_lambda_.4} parent=0 // pred_check_branch
    %68 = sbr.rel (%p66) target = $region17
  $region16: #{_lambda_.4} parent=0 // pred_region
    %vm69 = vcmask 523264
    %70 = vst.msk [vmem:[#allocation2] sm:$0xff] %vm69, 0.0
    %71 = vst.msk [vmem:[#allocation2 + $0x8] sm:$0xff] %vm69, 0.0
    %72 = vst.msk [vmem:[#allocation2 + $0x10] sm:$0xff] %vm69, 0.0
    %73 = vst.msk [vmem:[#allocation2 + $0x18] sm:$0xff] %vm69, 0.0
    %74 = vst.msk [vmem:[#allocation2 + $0x20] sm:$0xff] %vm69, 0.0
    %75 = vst.msk [vmem:[#allocation2 + $0x28] sm:$0xff] %vm69, 0.0
    %76 = vst.msk [vmem:[#allocation2 + $0x30] sm:$0xff] %vm69, 0.0
    %77 = vst.msk [vmem:[#allocation2 + $0x38] sm:$0xff] %vm69, 0.0
    %78 = vst.msk [vmem:[#allocation2 + $0x40] sm:$0xff] %vm69, 0.0
    %79 = vst.msk [vmem:[#allocation2 + $0x48] sm:$0xff] %vm69, 0.0
    %80 = vst.msk [vmem:[#allocation2 + $0x50] sm:$0xff] %vm69, 0.0
  $region17: #{_lambda_.4} parent=0 // pred_fallthru
    _
  %v81 = vld [vmem:[%s2] sm:$0xf]
  %v82 = vld [vmem:[%s2 + $0x4] sm:$0xf]
  %v83 = vld [vmem:[%s2 + $0x8] sm:$0xf]
  %v84 = vld [vmem:[%s2 + $0xc] sm:$0xf]
  %v85 = vld [vmem:[%s2 + $0x10] sm:$0xf]
  %v86 = vld [vmem:[%s2 + $0x14] sm:$0xf]
  %v87 = vld [vmem:[%s2 + $0x18] sm:$0xf]
  %v88 = vld [vmem:[%s2 + $0x1c] sm:$0xf]
  %v89 = vld [vmem:[%s2 + $0x20] sm:$0xf]
  %v90 = vld [vmem:[%s2 + $0x24] sm:$0xf]
  %v91 = vld [vmem:[%s2 + $0x28] sm:$0xf]
  %v92 = vld [vmem:[%s2 + $0x2c] sm:$0xf]
  %v93 = vld [vmem:[%s2 + $0x30] sm:$0xf]
  %v94 = vld [vmem:[%s2 + $0x34] sm:$0xf]
  %v95 = vld [vmem:[%s2 + $0x38] sm:$0xf]
  %v96 = vld [vmem:[%s2 + $0x3c] sm:$0xf]
  %v97 = vld [vmem:[%s2 + $0x40] sm:$0xf]
  %v98 = vld [vmem:[%s2 + $0x44] sm:$0xf]
  %v99 = vld [vmem:[%s2 + $0x48] sm:$0xf]
  %v100 = vld [vmem:[%s2 + $0x4c] sm:$0xf]
  %v101 = vld [vmem:[%s2 + $0x50] sm:$0xf]
  %v102 = vld [vmem:[%s2 + $0x54] sm:$0xf]
  %v103 = vld [vmem:[%s2 + $0x58] sm:$0xf]
  %v104 = vld [vmem:[%s2 + $0x5c] sm:$0xf]
  %v105 = vld [vmem:[%s2 + $0x60] sm:$0xf]
  %v106 = vld [vmem:[%s2 + $0x64] sm:$0xf]
  %v107 = vld [vmem:[%s2 + $0x68] sm:$0xf]
  %v108 = vld [vmem:[%s2 + $0x6c] sm:$0xf]
  %v109 = vld [vmem:[%s2 + $0x70] sm:$0xf]
  %v110 = vld [vmem:[%s2 + $0x74] sm:$0xf]
  %v111 = vld [vmem:[%s2 + $0x78] sm:$0xf]
  %v112 = vld [vmem:[%s2 + $0x7c] sm:$0xf]
  %v113 = vld [vmem:[%s2 + $0x80] sm:$0xf]
  %v114 = vld [vmem:[%s2 + $0x84] sm:$0xf]
  %v115 = vld [vmem:[%s2 + $0x88] sm:$0xf]
  %v116 = vld [vmem:[%s2 + $0x8c] sm:$0xf]
  %v117 = vld [vmem:[%s2 + $0x90] sm:$0xf]
  %v118 = vld [vmem:[%s2 + $0x94] sm:$0xf]
  %v119 = vld [vmem:[%s2 + $0x98] sm:$0xf]
  %v120 = vld [vmem:[%s2 + $0x9c] sm:$0xf]
  %v121 = vld [vmem:[%s2 + $0xa0] sm:$0xf]
  %v122 = vld [vmem:[%s2 + $0xa4] sm:$0xf]
  %v123 = vld [vmem:[%s2 + $0xa8] sm:$0xf]
  %v124 = vld [vmem:[%s2 + $0xac] sm:$0xf]
  %v125 = vld [vmem:[%s2 + $0xb0] sm:$0xf]
  %v126 = vld [vmem:[%s2 + $0xb4] sm:$0xf]
  %v127 = vld [vmem:[%s2 + $0xb8] sm:$0xf]
  %v128 = vld [vmem:[%s2 + $0xbc] sm:$0xf]
  %v129 = vld [vmem:[%s2 + $0xc0] sm:$0xf]
  %v130 = vld [vmem:[%s2 + $0xc4] sm:$0xf]
  %v131 = vld [vmem:[%s2 + $0xc8] sm:$0xf]
  %v132 = vld [vmem:[%s2 + $0xcc] sm:$0xf]
  %v133 = vld [vmem:[%s2 + $0xd0] sm:$0xf]
  %v134 = vld [vmem:[%s2 + $0xd4] sm:$0xf]
  %v135 = vld [vmem:[%s2 + $0xd8] sm:$0xf]
  %v136 = vld [vmem:[%s2 + $0xdc] sm:$0xf]
  %v137 = vld [vmem:[%s2 + $0xe0] sm:$0xf]
  %v138 = vld [vmem:[%s2 + $0xe4] sm:$0xf]
  %v139 = vld [vmem:[%s2 + $0xe8] sm:$0xf]
  %v140 = vld [vmem:[%s2 + $0xec] sm:$0xf]
  %v141 = vld [vmem:[%s2 + $0xf0] sm:$0xf]
  %v142 = vld [vmem:[%s2 + $0xf4] sm:$0xf]
  %v143 = vld [vmem:[%s2 + $0xf8] sm:$0xf]
  %v144 = vld [vmem:[%s2 + $0xfc] sm:$0xf]
  %v145 = vld [vmem:[%s52] sm:$0xff]
  %v146 = vld [vmem:[%s52 + $0x8] sm:$0xff]
  %v147 = vld [vmem:[%s52 + $0x10] sm:$0xff]
  %v148 = vld [vmem:[%s52 + $0x18] sm:$0xff]
  %v149 = vld [vmem:[%s52 + $0x20] sm:$0xff]
  %v150 = vld [vmem:[%s52 + $0x28] sm:$0xff]
  %v151 = vld [vmem:[%s52 + $0x30] sm:$0xff]
  %v152 = vld [vmem:[%s52 + $0x38] sm:$0xff]
  %v153 = vld [vmem:[%s52 + $0x40] sm:$0xff]
  %v154 = vld [vmem:[%s52 + $0x48] sm:$0xff]
  %v155 = vld [vmem:[%s52 + $0x50] sm:$0xff]
  %v156 = vld [vmem:[%s52 + $0x58] sm:$0xff]
  %v157 = vld [vmem:[%s52 + $0x60] sm:$0xff]
  %v158 = vld [vmem:[%s52 + $0x68] sm:$0xff]
  %v159 = vld [vmem:[%s52 + $0x70] sm:$0xff]
  %v160 = vld [vmem:[%s52 + $0x78] sm:$0xff]
  %v161 = vld [vmem:[%s52 + $0x80] sm:$0xff]
  %v162 = vld [vmem:[%s52 + $0x88] sm:$0xff]
  %v163 = vld [vmem:[%s52 + $0x90] sm:$0xff]
  %v164 = vld [vmem:[%s52 + $0x98] sm:$0xff]
  %v165 = vld [vmem:[%s52 + $0xa0] sm:$0xff]
  %v166 = vld [vmem:[%s52 + $0xa8] sm:$0xff]
  %v189 = vunpack.c.l.b16 %v145
  %v190 = vunpack.c.h.b16 %v145
  %v191 = vunpack.c.l.b16 %v146
  %v192 = vunpack.c.h.b16 %v146
  %v193 = vunpack.c.l.b16 %v147
  %v194 = vunpack.c.h.b16 %v147
  %v195 = vunpack.c.l.b16 %v148
  %v196 = vunpack.c.h.b16 %v148
  %v197 = vunpack.c.l.b16 %v149
  %v198 = vunpack.c.h.b16 %v149
  %v199 = vunpack.c.l.b16 %v150
  %v200 = vunpack.c.h.b16 %v150
  %v201 = vunpack.c.l.b16 %v151
  %v202 = vunpack.c.h.b16 %v151
  %v203 = vunpack.c.l.b16 %v152
  %v204 = vunpack.c.h.b16 %v152
  %v205 = vunpack.c.l.b16 %v153
  %v206 = vunpack.c.h.b16 %v153
  %v207 = vunpack.c.l.b16 %v154
  %v208 = vunpack.c.h.b16 %v154
  %v209 = vunpack.c.l.b16 %v155
  %v210 = vunpack.c.h.b16 %v155
  %v211 = vunpack.c.l.b16 %v156
  %v212 = vunpack.c.h.b16 %v156
  %v213 = vunpack.c.l.b16 %v157
  %v214 = vunpack.c.h.b16 %v157
  %v215 = vunpack.c.l.b16 %v158
  %v216 = vunpack.c.h.b16 %v158
  %v217 = vunpack.c.l.b16 %v159
  %v218 = vunpack.c.h.b16 %v159
  %v219 = vunpack.c.l.b16 %v160
  %v220 = vunpack.c.h.b16 %v160
  %v221 = vunpack.c.l.b16 %v161
  %v222 = vunpack.c.h.b16 %v161
  %v223 = vunpack.c.l.b16 %v162
  %v224 = vunpack.c.h.b16 %v162
  %v225 = vunpack.c.l.b16 %v163
  %v226 = vunpack.c.h.b16 %v163
  %v227 = vunpack.c.l.b16 %v164
  %v228 = vunpack.c.h.b16 %v164
  %v229 = vunpack.c.l.b16 %v165
  %v230 = vunpack.c.h.b16 %v165
  %v231 = vunpack.c.l.b16 %v166
  %v232 = vunpack.c.h.b16 %v166
  %v233 = vpack.c.b16 %v193, %v189
  %v234 = vpack.c.b16 %v194, %v190
  %v235 = vpack.c.b16 %v195, %v191
  %v236 = vpack.c.b16 %v196, %v192
  %v237 = vpack.c.b16 %v201, %v197
  %v238 = vpack.c.b16 %v202, %v198
  %v239 = vpack.c.b16 %v203, %v199
  %v240 = vpack.c.b16 %v204, %v200
  %v241 = vpack.c.b16 %v209, %v205
  %v242 = vpack.c.b16 %v210, %v206
  %v243 = vpack.c.b16 %v211, %v207
  %v244 = vpack.c.b16 %v212, %v208
  %v245 = vpack.c.b16 %v217, %v213
  %v246 = vpack.c.b16 %v218, %v214
  %v247 = vpack.c.b16 %v219, %v215
  %v248 = vpack.c.b16 %v220, %v216
  %v249 = vpack.c.b16 %v225, %v221
  %v250 = vpack.c.b16 %v226, %v222
  %v251 = vpack.c.b16 %v227, %v223
  %v252 = vpack.c.b16 %v228, %v224
  %v253 = vpack.c.b16 %v229, %v229
  %v254 = vpack.c.b16 %v230, %v230
  %v255 = vpack.c.b16 %v231, %v231
  %v256 = vpack.c.b16 %v232, %v232
  %v345 = vunpack.c.l.b16 %v81
  %v346 = vunpack.c.l.b16 %v82
  %v347 = vunpack.c.l.b16 %v83
  %v348 = vunpack.c.l.b16 %v84
  %v349 = vunpack.c.l.b16 %v85
  %v350 = vunpack.c.l.b16 %v86
  %v351 = vunpack.c.l.b16 %v87
  %v352 = vunpack.c.l.b16 %v88
  %v353 = vunpack.c.l.b16 %v89
  %v354 = vunpack.c.l.b16 %v90
  %v355 = vunpack.c.l.b16 %v91
  %v356 = vunpack.c.l.b16 %v92
  %v357 = vunpack.c.l.b16 %v93
  %v358 = vunpack.c.l.b16 %v94
  %v359 = vunpack.c.l.b16 %v95
  %v360 = vunpack.c.l.b16 %v96
  %v361 = vunpack.c.l.b16 %v97
  %v362 = vunpack.c.l.b16 %v98
  %v363 = vunpack.c.l.b16 %v99
  %v364 = vunpack.c.l.b16 %v100
  %v365 = vunpack.c.l.b16 %v101
  %v366 = vunpack.c.l.b16 %v102
  %v367 = vunpack.c.l.b16 %v103
  %v368 = vunpack.c.l.b16 %v104
  %v369 = vunpack.c.l.b16 %v105
  %v370 = vunpack.c.l.b16 %v106
  %v371 = vunpack.c.l.b16 %v107
  %v372 = vunpack.c.l.b16 %v108
  %v373 = vunpack.c.l.b16 %v109
  %v374 = vunpack.c.l.b16 %v110
  %v375 = vunpack.c.l.b16 %v111
  %v376 = vunpack.c.l.b16 %v112
  %v377 = vunpack.c.l.b16 %v113
  %v378 = vunpack.c.l.b16 %v114
  %v379 = vunpack.c.l.b16 %v115
  %v380 = vunpack.c.l.b16 %v116
  %v381 = vunpack.c.l.b16 %v117
  %v382 = vunpack.c.l.b16 %v118
  %v383 = vunpack.c.l.b16 %v119
  %v384 = vunpack.c.l.b16 %v120
  %v385 = vunpack.c.l.b16 %v121
  %v386 = vunpack.c.l.b16 %v122
  %v387 = vunpack.c.l.b16 %v123
  %v388 = vunpack.c.l.b16 %v124
  %v389 = vunpack.c.l.b16 %v125
  %v390 = vunpack.c.l.b16 %v126
  %v391 = vunpack.c.l.b16 %v127
  %v392 = vunpack.c.l.b16 %v128
  %v393 = vunpack.c.l.b16 %v129
  %v394 = vunpack.c.l.b16 %v130
  %v395 = vunpack.c.l.b16 %v131
  %v396 = vunpack.c.l.b16 %v132
  %v397 = vunpack.c.l.b16 %v133
  %v398 = vunpack.c.l.b16 %v134
  %v399 = vunpack.c.l.b16 %v135
  %v400 = vunpack.c.l.b16 %v136
  %v401 = vunpack.c.l.b16 %v137
  %v402 = vunpack.c.l.b16 %v138
  %v403 = vunpack.c.l.b16 %v139
  %v404 = vunpack.c.l.b16 %v140
  %v405 = vunpack.c.l.b16 %v141
  %v406 = vunpack.c.l.b16 %v142
  %v407 = vunpack.c.l.b16 %v143
  %v408 = vunpack.c.l.b16 %v144
  %v409 = vpack.c.b16 %v346, %v345
  %v410 = vpack.c.b16 %v348, %v347
  %v411 = vpack.c.b16 %v350, %v349
  %v412 = vpack.c.b16 %v352, %v351
  %v413 = vpack.c.b16 %v354, %v353
  %v414 = vpack.c.b16 %v356, %v355
  %v415 = vpack.c.b16 %v358, %v357
  %v416 = vpack.c.b16 %v360, %v359
  %v417 = vpack.c.b16 %v362, %v361
  %v418 = vpack.c.b16 %v364, %v363
  %v419 = vpack.c.b16 %v366, %v365
  %v420 = vpack.c.b16 %v368, %v367
  %v421 = vpack.c.b16 %v370, %v369
  %v422 = vpack.c.b16 %v372, %v371
  %v423 = vpack.c.b16 %v374, %v373
  %v424 = vpack.c.b16 %v376, %v375
  %v425 = vpack.c.b16 %v378, %v377
  %v426 = vpack.c.b16 %v380, %v379
  %v427 = vpack.c.b16 %v382, %v381
  %v428 = vpack.c.b16 %v384, %v383
  %v429 = vpack.c.b16 %v386, %v385
  %v430 = vpack.c.b16 %v388, %v387
  %v431 = vpack.c.b16 %v390, %v389
  %v432 = vpack.c.b16 %v392, %v391
  %v433 = vpack.c.b16 %v394, %v393
  %v434 = vpack.c.b16 %v396, %v395
  %v435 = vpack.c.b16 %v398, %v397
  %v436 = vpack.c.b16 %v400, %v399
  %v437 = vpack.c.b16 %v402, %v401
  %v438 = vpack.c.b16 %v404, %v403
  %v439 = vpack.c.b16 %v406, %v405
  %v440 = vpack.c.b16 %v408, %v407
  %473 = vmatprep.subr.bf16.mxu0 0
  %474 = vmatpush1.bf16.msra.mxu0 %v409
  %475 = vmatprep.subr.bf16.mxu0 0
  %476 = vmatpush1.bf16.msra.mxu0 %v410
  %477 = vmatprep.subr.bf16.mxu0 0
  %478 = vmatpush1.bf16.msra.mxu0 %v411
  %479 = vmatprep.subr.bf16.mxu0 0
  %480 = vmatpush1.bf16.msra.mxu0 %v412
  %481 = vmatprep.subr.bf16.mxu0 0
  %482 = vmatpush1.bf16.msra.mxu0 %v413
  %483 = vmatprep.subr.bf16.mxu0 0
  %484 = vmatpush1.bf16.msra.mxu0 %v414
  %485 = vmatprep.subr.bf16.mxu0 0
  %486 = vmatpush1.bf16.msra.mxu0 %v415
  %487 = vmatprep.subr.bf16.mxu0 0
  %488 = vmatpush1.bf16.msra.mxu0 %v416
  %489 = vmatprep.subr.bf16.mxu0 0
  %490 = vmatpush1.bf16.msra.mxu0 %v417
  %491 = vmatprep.subr.bf16.mxu0 0
  %492 = vmatpush1.bf16.msra.mxu0 %v418
  %493 = vmatprep.subr.bf16.mxu0 0
  %494 = vmatpush1.bf16.msra.mxu0 %v419
  %495 = vmatprep.subr.bf16.mxu0 0
  %496 = vmatpush1.bf16.msra.mxu0 %v420
  %497 = vmatprep.subr.bf16.mxu0 0
  %498 = vmatpush1.bf16.msra.mxu0 %v421
  %499 = vmatprep.subr.bf16.mxu0 0
  %500 = vmatpush1.bf16.msra.mxu0 %v422
  %501 = vmatprep.subr.bf16.mxu0 0
  %502 = vmatpush1.bf16.msra.mxu0 %v423
  %503 = vmatprep.subr.bf16.mxu0 0
  %504 = vmatpush1.bf16.msra.mxu0 %v424
  %505 = vmatprep.mubr.bf16.mxu0 %v234
  %506 = vmatmul.mubr.bf16.gmra.mrb[0].mxu0 %v233
  %v507 = vpop.f32.mrb[0].mxu0
  %v508 = vadd.f32 0.0, %v507
  %v509 = vpop.f32.mrb[0].mxu0
  %v510 = vpop.f32.mrb[0].mxu0
  %v511 = vadd.f32 0.0, %v510
  %v512 = vpop.f32.mrb[0].mxu0
  %513 = vmatprep.mubr.bf16.mxu0 %v238
  %514 = vmatmul.mubr.bf16.gmra.mrb[0].mxu0 %v237
  %v515 = vpop.f32.mrb[0].mxu0
  %v516 = vadd.f32 0.0, %v515
  %v517 = vpop.f32.mrb[0].mxu0
  %v518 = vpop.f32.mrb[0].mxu0
  %v519 = vadd.f32 0.0, %v518
  %v520 = vpop.f32.mrb[0].mxu0
  %521 = vmatprep.mubr.bf16.mxu0 %v242
  %522 = vmatmul.mubr.bf16.gmra.mrb[0].mxu0 %v241
  %v523 = vpop.f32.mrb[0].mxu0
  %v524 = vadd.f32 0.0, %v523
  %v525 = vpop.f32.mrb[0].mxu0
  %v526 = vpop.f32.mrb[0].mxu0
  %v527 = vadd.f32 0.0, %v526
  %v528 = vpop.f32.mrb[0].mxu0
  %529 = vmatprep.mubr.bf16.mxu0 %v246
  %530 = vmatmul.mubr.bf16.gmra.mrb[0].mxu0 %v245
  %v531 = vpop.f32.mrb[0].mxu0
  %v532 = vadd.f32 0.0, %v531
  %v533 = vpop.f32.mrb[0].mxu0
  %v534 = vpop.f32.mrb[0].mxu0
  %v535 = vadd.f32 0.0, %v534
  %v536 = vpop.f32.mrb[0].mxu0
  %537 = vmatprep.mubr.bf16.mxu0 %v250
  %538 = vmatmul.mubr.bf16.gmra.mrb[0].mxu0 %v249
  %v539 = vpop.f32.mrb[0].mxu0
  %v540 = vadd.f32 0.0, %v539
  %v541 = vpop.f32.mrb[0].mxu0
  %v542 = vpop.f32.mrb[0].mxu0
  %v543 = vadd.f32 0.0, %v542
  %v544 = vpop.f32.mrb[0].mxu0
  %545 = vmatprep.mubr.bf16.mxu0 %v254
  %546 = vmatmul.mubr.bf16.gmra.mrb[0].mxu0 %v253
  %v547 = vpop.f32.mrb[0].mxu0
  %v548 = vadd.f32 0.0, %v547
  %v549 = vpop.f32.mrb[0].mxu0
  %v550 = vpop.f32.mrb[0].mxu0
  %v551 = vpop.f32.mrb[0].mxu0
  %552 = vdwg.mxu0
  %553 = vmatprep.subr.bf16.mxu0 0
  %554 = vmatpush1.bf16.msra.mxu0 %v425
  %555 = vmatprep.subr.bf16.mxu0 0
  %556 = vmatpush1.bf16.msra.mxu0 %v426
  %557 = vmatprep.subr.bf16.mxu0 0
  %558 = vmatpush1.bf16.msra.mxu0 %v427
  %559 = vmatprep.subr.bf16.mxu0 0
  %560 = vmatpush1.bf16.msra.mxu0 %v428
  %561 = vmatprep.subr.bf16.mxu0 0
  %562 = vmatpush1.bf16.msra.mxu0 %v429
  %563 = vmatprep.subr.bf16.mxu0 0
  %564 = vmatpush1.bf16.msra.mxu0 %v430
  %565 = vmatprep.subr.bf16.mxu0 0
  %566 = vmatpush1.bf16.msra.mxu0 %v431
  %567 = vmatprep.subr.bf16.mxu0 0
  %568 = vmatpush1.bf16.msra.mxu0 %v432
  %569 = vmatprep.subr.bf16.mxu0 0
  %570 = vmatpush1.bf16.msra.mxu0 %v433
  %571 = vmatprep.subr.bf16.mxu0 0
  %572 = vmatpush1.bf16.msra.mxu0 %v434
  %573 = vmatprep.subr.bf16.mxu0 0
  %574 = vmatpush1.bf16.msra.mxu0 %v435
  %575 = vmatprep.subr.bf16.mxu0 0
  %576 = vmatpush1.bf16.msra.mxu0 %v436
  %577 = vmatprep.subr.bf16.mxu0 0
  %578 = vmatpush1.bf16.msra.mxu0 %v437
  %579 = vmatprep.subr.bf16.mxu0 0
  %580 = vmatpush1.bf16.msra.mxu0 %v438
  %581 = vmatprep.subr.bf16.mxu0 0
  %582 = vmatpush1.bf16.msra.mxu0 %v439
  %583 = vmatprep.subr.bf16.mxu0 0
  %584 = vmatpush1.bf16.msra.mxu0 %v440
  %585 = vmatprep.mubr.bf16.mxu0 %v236
  %586 = vmatmul.mubr.bf16.gmra.mrb[0].mxu0 %v235
  %v587 = vpop.f32.mrb[0].mxu0
  %v588 = vadd.f32 %v508, %v587
  %v589 = vpop.f32.mrb[0].mxu0
  %v590 = vpop.f32.mrb[0].mxu0
  %v591 = vadd.f32 %v511, %v590
  %v592 = vpop.f32.mrb[0].mxu0
  %593 = vmatprep.mubr.bf16.mxu0 %v240
  %594 = vmatmul.mubr.bf16.gmra.mrb[0].mxu0 %v239
  %v595 = vpop.f32.mrb[0].mxu0
  %v596 = vadd.f32 %v516, %v595
  %v597 = vpop.f32.mrb[0].mxu0
  %v598 = vpop.f32.mrb[0].mxu0
  %v599 = vadd.f32 %v519, %v598
  %v600 = vpop.f32.mrb[0].mxu0
  %601 = vmatprep.mubr.bf16.mxu0 %v244
  %602 = vmatmul.mubr.bf16.gmra.mrb[0].mxu0 %v243
  %v603 = vpop.f32.mrb[0].mxu0
  %v604 = vadd.f32 %v524, %v603
  %v605 = vpop.f32.mrb[0].mxu0
  %v606 = vpop.f32.mrb[0].mxu0
  %v607 = vadd.f32 %v527, %v606
  %v608 = vpop.f32.mrb[0].mxu0
  %609 = vmatprep.mubr.bf16.mxu0 %v248
  %610 = vmatmul.mubr.bf16.gmra.mrb[0].mxu0 %v247
  %v611 = vpop.f32.mrb[0].mxu0
  %v612 = vadd.f32 %v532, %v611
  %v613 = vpop.f32.mrb[0].mxu0
  %v614 = vpop.f32.mrb[0].mxu0
  %v615 = vadd.f32 %v535, %v614
  %v616 = vpop.f32.mrb[0].mxu0
  %617 = vmatprep.mubr.bf16.mxu0 %v252
  %618 = vmatmul.mubr.bf16.gmra.mrb[0].mxu0 %v251
  %v619 = vpop.f32.mrb[0].mxu0
  %v620 = vadd.f32 %v540, %v619
  %v621 = vpop.f32.mrb[0].mxu0
  %v622 = vpop.f32.mrb[0].mxu0
  %v623 = vadd.f32 %v543, %v622
  %v624 = vpop.f32.mrb[0].mxu0
  %625 = vmatprep.mubr.bf16.mxu0 %v256
  %626 = vmatmul.mubr.bf16.gmra.mrb[0].mxu0 %v255
  %v627 = vpop.f32.mrb[0].mxu0
  %v628 = vadd.f32 %v548, %v627
  %v629 = vpop.f32.mrb[0].mxu0
  %v630 = vpop.f32.mrb[0].mxu0
  %v631 = vpop.f32.mrb[0].mxu0
  %632 = vdwg.mxu0
  %v633 = vld [vmem:[%s61] sm:$0xff]
  %v634 = vld [vmem:[%s61 + $0x8] sm:$0xff]
  %v635 = vld [vmem:[%s61 + $0x10] sm:$0xff]
  %v636 = vld [vmem:[%s61 + $0x18] sm:$0xff]
  %v637 = vld [vmem:[%s61 + $0x20] sm:$0xff]
  %v638 = vld [vmem:[%s61 + $0x28] sm:$0xff]
  %v639 = vld [vmem:[%s61 + $0x30] sm:$0xff]
  %v640 = vld [vmem:[%s61 + $0x38] sm:$0xff]
  %v641 = vld [vmem:[%s61 + $0x40] sm:$0xff]
  %v642 = vld [vmem:[%s61 + $0x48] sm:$0xff]
  %v643 = vld [vmem:[%s61 + $0x50] sm:$0xff]
  %v644 = vld [vmem:[%s61 + $0x58] sm:$0xff]
  %v645 = vld [vmem:[%s61 + $0x60] sm:$0xff]
  %v646 = vld [vmem:[%s61 + $0x68] sm:$0xff]
  %v647 = vld [vmem:[%s61 + $0x70] sm:$0xff]
  %v648 = vld [vmem:[%s61 + $0x78] sm:$0xff]
  %v649 = vld [vmem:[%s61 + $0x80] sm:$0xff]
  %v650 = vld [vmem:[%s61 + $0x88] sm:$0xff]
  %v651 = vld [vmem:[%s61 + $0x90] sm:$0xff]
  %v652 = vld [vmem:[%s61 + $0x98] sm:$0xff]
  %v653 = vld [vmem:[%s61 + $0xa0] sm:$0xff]
  %v654 = vld [vmem:[%s61 + $0xa8] sm:$0xff]
  %v677 = vunpack.c.l.b16 %v633
  %v678 = vunpack.c.h.b16 %v633
  %v679 = vunpack.c.l.b16 %v634
  %v680 = vunpack.c.h.b16 %v634
  %v681 = vunpack.c.l.b16 %v635
  %v682 = vunpack.c.h.b16 %v635
  %v683 = vunpack.c.l.b16 %v636
  %v684 = vunpack.c.h.b16 %v636
  %v685 = vunpack.c.l.b16 %v637
  %v686 = vunpack.c.h.b16 %v637
  %v687 = vunpack.c.l.b16 %v638
  %v688 = vunpack.c.h.b16 %v638
  %v689 = vunpack.c.l.b16 %v639
  %v690 = vunpack.c.h.b16 %v639
  %v691 = vunpack.c.l.b16 %v640
  %v692 = vunpack.c.h.b16 %v640
  %v693 = vunpack.c.l.b16 %v641
  %v694 = vunpack.c.h.b16 %v641
  %v695 = vunpack.c.l.b16 %v642
  %v696 = vunpack.c.h.b16 %v642
  %v697 = vunpack.c.l.b16 %v643
  %v698 = vunpack.c.h.b16 %v643
  %v699 = vunpack.c.l.b16 %v644
  %v700 = vunpack.c.h.b16 %v644
  %v701 = vunpack.c.l.b16 %v645
  %v702 = vunpack.c.h.b16 %v645
  %v703 = vunpack.c.l.b16 %v646
  %v704 = vunpack.c.h.b16 %v646
  %v705 = vunpack.c.l.b16 %v647
  %v706 = vunpack.c.h.b16 %v647
  %v707 = vunpack.c.l.b16 %v648
  %v708 = vunpack.c.h.b16 %v648
  %v709 = vunpack.c.l.b16 %v649
  %v710 = vunpack.c.h.b16 %v649
  %v711 = vunpack.c.l.b16 %v650
  %v712 = vunpack.c.h.b16 %v650
  %v713 = vunpack.c.l.b16 %v651
  %v714 = vunpack.c.h.b16 %v651
  %v715 = vunpack.c.l.b16 %v652
  %v716 = vunpack.c.h.b16 %v652
  %v717 = vunpack.c.l.b16 %v653
  %v718 = vunpack.c.h.b16 %v653
  %v719 = vunpack.c.l.b16 %v654
  %v720 = vunpack.c.h.b16 %v654
  %v721 = vpack.c.b16 %v681, %v677
  %v722 = vpack.c.b16 %v682, %v678
  %v723 = vpack.c.b16 %v683, %v679
  %v724 = vpack.c.b16 %v684, %v680
  %v725 = vpack.c.b16 %v689, %v685
  %v726 = vpack.c.b16 %v690, %v686
  %v727 = vpack.c.b16 %v691, %v687
  %v728 = vpack.c.b16 %v692, %v688
  %v729 = vpack.c.b16 %v697, %v693
  %v730 = vpack.c.b16 %v698, %v694
  %v731 = vpack.c.b16 %v699, %v695
  %v732 = vpack.c.b16 %v700, %v696
  %v733 = vpack.c.b16 %v705, %v701
  %v734 = vpack.c.b16 %v706, %v702
  %v735 = vpack.c.b16 %v707, %v703
  %v736 = vpack.c.b16 %v708, %v704
  %v737 = vpack.c.b16 %v713, %v709
  %v738 = vpack.c.b16 %v714, %v710
  %v739 = vpack.c.b16 %v715, %v711
  %v740 = vpack.c.b16 %v716, %v712
  %v741 = vpack.c.b16 %v717, %v717
  %v742 = vpack.c.b16 %v718, %v718
  %v743 = vpack.c.b16 %v719, %v719
  %v744 = vpack.c.b16 %v720, %v720
  %769 = vmatprep.subr.bf16.mxu0 0
  %770 = vmatpush1.bf16.msra.mxu0 %v409
  %771 = vmatprep.subr.bf16.mxu0 0
  %772 = vmatpush1.bf16.msra.mxu0 %v410
  %773 = vmatprep.subr.bf16.mxu0 0
  %774 = vmatpush1.bf16.msra.mxu0 %v411
  %775 = vmatprep.subr.bf16.mxu0 0
  %776 = vmatpush1.bf16.msra.mxu0 %v412
  %777 = vmatprep.subr.bf16.mxu0 0
  %778 = vmatpush1.bf16.msra.mxu0 %v413
  %779 = vmatprep.subr.bf16.mxu0 0
  %780 = vmatpush1.bf16.msra.mxu0 %v414
  %781 = vmatprep.subr.bf16.mxu0 0
  %782 = vmatpush1.bf16.msra.mxu0 %v415
  %783 = vmatprep.subr.bf16.mxu0 0
  %784 = vmatpush1.bf16.msra.mxu0 %v416
  %785 = vmatprep.subr.bf16.mxu0 0
  %786 = vmatpush1.bf16.msra.mxu0 %v417
  %787 = vmatprep.subr.bf16.mxu0 0
  %788 = vmatpush1.bf16.msra.mxu0 %v418
  %789 = vmatprep.subr.bf16.mxu0 0
  %790 = vmatpush1.bf16.msra.mxu0 %v419
  %791 = vmatprep.subr.bf16.mxu0 0
  %792 = vmatpush1.bf16.msra.mxu0 %v420
  %793 = vmatprep.subr.bf16.mxu0 0
  %794 = vmatpush1.bf16.msra.mxu0 %v421
  %795 = vmatprep.subr.bf16.mxu0 0
  %796 = vmatpush1.bf16.msra.mxu0 %v422
  %797 = vmatprep.subr.bf16.mxu0 0
  %798 = vmatpush1.bf16.msra.mxu0 %v423
  %799 = vmatprep.subr.bf16.mxu0 0
  %800 = vmatpush1.bf16.msra.mxu0 %v424
  %801 = vmatprep.mubr.bf16.mxu0 %v722
  %802 = vmatmul.mubr.bf16.gmra.mrb[0].mxu0 %v721
  %v803 = vpop.f32.mrb[0].mxu0
  %v804 = vadd.f32 0.0, %v803
  %v805 = vpop.f32.mrb[0].mxu0
  %v806 = vpop.f32.mrb[0].mxu0
  %v807 = vadd.f32 0.0, %v806
  %v808 = vpop.f32.mrb[0].mxu0
  %809 = vmatprep.mubr.bf16.mxu0 %v726
  %810 = vmatmul.mubr.bf16.gmra.mrb[0].mxu0 %v725
  %v811 = vpop.f32.mrb[0].mxu0
  %v812 = vadd.f32 0.0, %v811
  %v813 = vpop.f32.mrb[0].mxu0
  %v814 = vpop.f32.mrb[0].mxu0
  %v815 = vadd.f32 0.0, %v814
  %v816 = vpop.f32.mrb[0].mxu0
  %817 = vmatprep.mubr.bf16.mxu0 %v730
  %818 = vmatmul.mubr.bf16.gmra.mrb[0].mxu0 %v729
  %v819 = vpop.f32.mrb[0].mxu0
  %v820 = vadd.f32 0.0, %v819
  %v821 = vpop.f32.mrb[0].mxu0
  %v822 = vpop.f32.mrb[0].mxu0
  %v823 = vadd.f32 0.0, %v822
  %v824 = vpop.f32.mrb[0].mxu0
  %825 = vmatprep.mubr.bf16.mxu0 %v734
  %826 = vmatmul.mubr.bf16.gmra.mrb[0].mxu0 %v733
  %v827 = vpop.f32.mrb[0].mxu0
  %v828 = vadd.f32 0.0, %v827
  %v829 = vpop.f32.mrb[0].mxu0
  %v830 = vpop.f32.mrb[0].mxu0
  %v831 = vadd.f32 0.0, %v830
  %v832 = vpop.f32.mrb[0].mxu0
  %833 = vmatprep.mubr.bf16.mxu0 %v738
  %834 = vmatmul.mubr.bf16.gmra.mrb[0].mxu0 %v737
  %v835 = vpop.f32.mrb[0].mxu0
  %v836 = vadd.f32 0.0, %v835
  %v837 = vpop.f32.mrb[0].mxu0
  %v838 = vpop.f32.mrb[0].mxu0
  %v839 = vadd.f32 0.0, %v838
  %v840 = vpop.f32.mrb[0].mxu0
  %841 = vmatprep.mubr.bf16.mxu0 %v742
  %842 = vmatmul.mubr.bf16.gmra.mrb[0].mxu0 %v741
  %v843 = vpop.f32.mrb[0].mxu0
  %v844 = vadd.f32 0.0, %v843
  %v845 = vpop.f32.mrb[0].mxu0
  %v846 = vpop.f32.mrb[0].mxu0
  %v847 = vpop.f32.mrb[0].mxu0
  %848 = vdwg.mxu0
  %849 = vmatprep.subr.bf16.mxu0 0
  %850 = vmatpush1.bf16.msra.mxu0 %v425
  %851 = vmatprep.subr.bf16.mxu0 0
  %852 = vmatpush1.bf16.msra.mxu0 %v426
  %853 = vmatprep.subr.bf16.mxu0 0
  %854 = vmatpush1.bf16.msra.mxu0 %v427
  %855 = vmatprep.subr.bf16.mxu0 0
  %856 = vmatpush1.bf16.msra.mxu0 %v428
  %857 = vmatprep.subr.bf16.mxu0 0
  %858 = vmatpush1.bf16.msra.mxu0 %v429
  %859 = vmatprep.subr.bf16.mxu0 0
  %860 = vmatpush1.bf16.msra.mxu0 %v430
  %861 = vmatprep.subr.bf16.mxu0 0
  %862 = vmatpush1.bf16.msra.mxu0 %v431
  %863 = vmatprep.subr.bf16.mxu0 0
  %864 = vmatpush1.bf16.msra.mxu0 %v432
  %865 = vmatprep.subr.bf16.mxu0 0
  %866 = vmatpush1.bf16.msra.mxu0 %v433
  %867 = vmatprep.subr.bf16.mxu0 0
  %868 = vmatpush1.bf16.msra.mxu0 %v434
  %869 = vmatprep.subr.bf16.mxu0 0
  %870 = vmatpush1.bf16.msra.mxu0 %v435
  %871 = vmatprep.subr.bf16.mxu0 0
  %872 = vmatpush1.bf16.msra.mxu0 %v436
  %873 = vmatprep.subr.bf16.mxu0 0
  %874 = vmatpush1.bf16.msra.mxu0 %v437
  %875 = vmatprep.subr.bf16.mxu0 0
  %876 = vmatpush1.bf16.msra.mxu0 %v438
  %877 = vmatprep.subr.bf16.mxu0 0
  %878 = vmatpush1.bf16.msra.mxu0 %v439
  %879 = vmatprep.subr.bf16.mxu0 0
  %880 = vmatpush1.bf16.msra.mxu0 %v440
  %881 = vmatprep.mubr.bf16.mxu0 %v724
  %882 = vmatmul.mubr.bf16.gmra.mrb[0].mxu0 %v723
  %v883 = vpop.f32.mrb[0].mxu0
  %v884 = vadd.f32 %v804, %v883
  %v885 = vpop.f32.mrb[0].mxu0
  %v886 = vpop.f32.mrb[0].mxu0
  %v887 = vadd.f32 %v807, %v886
  %v888 = vpop.f32.mrb[0].mxu0
  %889 = vmatprep.mubr.bf16.mxu0 %v728
  %890 = vmatmul.mubr.bf16.gmra.mrb[0].mxu0 %v727
  %v891 = vpop.f32.mrb[0].mxu0
  %v892 = vadd.f32 %v812, %v891
  %v893 = vpop.f32.mrb[0].mxu0
  %v894 = vpop.f32.mrb[0].mxu0
  %v895 = vadd.f32 %v815, %v894
  %v896 = vpop.f32.mrb[0].mxu0
  %897 = vmatprep.mubr.bf16.mxu0 %v732
  %898 = vmatmul.mubr.bf16.gmra.mrb[0].mxu0 %v731
  %v899 = vpop.f32.mrb[0].mxu0
  %v900 = vadd.f32 %v820, %v899
  %v901 = vpop.f32.mrb[0].mxu0
  %v902 = vpop.f32.mrb[0].mxu0
  %v903 = vadd.f32 %v823, %v902
  %v904 = vpop.f32.mrb[0].mxu0
  %905 = vmatprep.mubr.bf16.mxu0 %v736
  %906 = vmatmul.mubr.bf16.gmra.mrb[0].mxu0 %v735
  %v907 = vpop.f32.mrb[0].mxu0
  %v908 = vadd.f32 %v828, %v907
  %v909 = vpop.f32.mrb[0].mxu0
  %v910 = vpop.f32.mrb[0].mxu0
  %v911 = vadd.f32 %v831, %v910
  %v912 = vpop.f32.mrb[0].mxu0
  %913 = vmatprep.mubr.bf16.mxu0 %v740
  %914 = vmatmul.mubr.bf16.gmra.mrb[0].mxu0 %v739
  %v915 = vpop.f32.mrb[0].mxu0
  %v916 = vadd.f32 %v836, %v915
  %v917 = vpop.f32.mrb[0].mxu0
  %v918 = vpop.f32.mrb[0].mxu0
  %v919 = vadd.f32 %v839, %v918
  %v920 = vpop.f32.mrb[0].mxu0
  %921 = vmatprep.mubr.bf16.mxu0 %v744
  %922 = vmatmul.mubr.bf16.gmra.mrb[0].mxu0 %v743
  %v923 = vpop.f32.mrb[0].mxu0
  %v924 = vadd.f32 %v844, %v923
  %v925 = vpop.f32.mrb[0].mxu0
  %v926 = vpop.f32.mrb[0].mxu0
  %v927 = vpop.f32.mrb[0].mxu0
  %928 = vdwg.mxu0
  %v929 = vadd.f32 %v588, %v884
  %v930 = vadd.f32 %v591, %v887
  %v931 = vadd.f32 %v596, %v892
  %v932 = vadd.f32 %v599, %v895
  %v933 = vadd.f32 %v604, %v900
  %v934 = vadd.f32 %v607, %v903
  %v935 = vadd.f32 %v612, %v908
  %v936 = vadd.f32 %v615, %v911
  %v937 = vadd.f32 %v620, %v916
  %v938 = vadd.f32 %v623, %v919
  %v939 = vadd.f32 %v628, %v924
  %v940 = vmul.f32 %v588, %v588
  %v941 = vmul.f32 %v591, %v591
  %v942 = vmul.f32 %v596, %v596
  %v943 = vmul.f32 %v599, %v599
  %v944 = vmul.f32 %v604, %v604
  %v945 = vmul.f32 %v607, %v607
  %v946 = vmul.f32 %v612, %v612
  %v947 = vmul.f32 %v615, %v615
  %v948 = vmul.f32 %v620, %v620
  %v949 = vmul.f32 %v623, %v623
  %v950 = vmul.f32 %v628, %v628
  %962 = vrot.lane.b32.xlu0 %v940, 64
  %v963 = vpop.permute.xlu0 %962
  %964 = vrot.lane.b32.xlu0 %v941, 64
  %v965 = vpop.permute.xlu0 %964
  %966 = vrot.lane.b32.xlu0 %v942, 64
  %v967 = vpop.permute.xlu0 %966
  %968 = vrot.lane.b32.xlu0 %v943, 64
  %v969 = vpop.permute.xlu0 %968
  %970 = vrot.lane.b32.xlu0 %v944, 64
  %v971 = vpop.permute.xlu0 %970
  %972 = vrot.lane.b32.xlu0 %v945, 64
  %v973 = vpop.permute.xlu0 %972
  %974 = vrot.lane.b32.xlu0 %v946, 64
  %v975 = vpop.permute.xlu0 %974
  %976 = vrot.lane.b32.xlu0 %v947, 64
  %v977 = vpop.permute.xlu0 %976
  %978 = vrot.lane.b32.xlu0 %v948, 64
  %v979 = vpop.permute.xlu0 %978
  %980 = vrot.lane.b32.xlu0 %v949, 64
  %v981 = vpop.permute.xlu0 %980
  %982 = vrot.lane.b32.xlu0 %v950, 64
  %v983 = vpop.permute.xlu0 %982
  %v995 = vadd.f32 %v940, %v963
  %v996 = vadd.f32 %v941, %v965
  %v997 = vadd.f32 %v942, %v967
  %v998 = vadd.f32 %v943, %v969
  %v999 = vadd.f32 %v944, %v971
  %v1000 = vadd.f32 %v945, %v973
  %v1001 = vadd.f32 %v946, %v975
  %v1002 = vadd.f32 %v947, %v977
  %v1003 = vadd.f32 %v948, %v979
  %v1004 = vadd.f32 %v949, %v981
  %v1005 = vadd.f32 %v950, %v983
  %v1006 = vmax.f32 %v995, 1e-08
  %v1007 = vmax.f32 %v996, 1e-08
  %v1008 = vmax.f32 %v997, 1e-08
  %v1009 = vmax.f32 %v998, 1e-08
  %v1010 = vmax.f32 %v999, 1e-08
  %v1011 = vmax.f32 %v1000, 1e-08
  %v1012 = vmax.f32 %v1001, 1e-08
  %v1013 = vmax.f32 %v1002, 1e-08
  %v1014 = vmax.f32 %v1003, 1e-08
  %v1015 = vmax.f32 %v1004, 1e-08
  %v1016 = vmax.f32 %v1005, 1e-08
  %v1017 = vrsqrt.pop %v1006
  %v1018 = vmul.f32 %v1006, %v1017
  %vm1019 = vcmp.eq.f32.partialorder %v1006, inf
  %v1020 = vsel %vm1019, %v1006, %v1018
  %vm1021 = vcmp.eq.f32.partialorder %v1006, 0.0
  %v1022 = vand.u32 %v1006, 2147483648
  %v1023 = vsel %vm1021, %v1022, %v1020
  %v1024 = vrsqrt.pop %v1007
  %v1025 = vmul.f32 %v1007, %v1024
  %vm1026 = vcmp.eq.f32.partialorder %v1007, inf
  %v1027 = vsel %vm1026, %v1007, %v1025
  %vm1028 = vcmp.eq.f32.partialorder %v1007, 0.0
  %v1029 = vand.u32 %v1007, 2147483648
  %v1030 = vsel %vm1028, %v1029, %v1027
  %v1031 = vrsqrt.pop %v1008
  %v1032 = vmul.f32 %v1008, %v1031
  %vm1033 = vcmp.eq.f32.partialorder %v1008, inf
  %v1034 = vsel %vm1033, %v1008, %v1032
  %vm1035 = vcmp.eq.f32.partialorder %v1008, 0.0
  %v1036 = vand.u32 %v1008, 2147483648
  %v1037 = vsel %vm1035, %v1036, %v1034
  %v1038 = vrsqrt.pop %v1009
  %v1039 = vmul.f32 %v1009, %v1038
  %vm1040 = vcmp.eq.f32.partialorder %v1009, inf
  %v1041 = vsel %vm1040, %v1009, %v1039
  %vm1042 = vcmp.eq.f32.partialorder %v1009, 0.0
  %v1043 = vand.u32 %v1009, 2147483648
  %v1044 = vsel %vm1042, %v1043, %v1041
  %v1045 = vrsqrt.pop %v1010
  %v1046 = vmul.f32 %v1010, %v1045
  %vm1047 = vcmp.eq.f32.partialorder %v1010, inf
  %v1048 = vsel %vm1047, %v1010, %v1046
  %vm1049 = vcmp.eq.f32.partialorder %v1010, 0.0
  %v1050 = vand.u32 %v1010, 2147483648
  %v1051 = vsel %vm1049, %v1050, %v1048
  %v1052 = vrsqrt.pop %v1011
  %v1053 = vmul.f32 %v1011, %v1052
  %vm1054 = vcmp.eq.f32.partialorder %v1011, inf
  %v1055 = vsel %vm1054, %v1011, %v1053
  %vm1056 = vcmp.eq.f32.partialorder %v1011, 0.0
  %v1057 = vand.u32 %v1011, 2147483648
  %v1058 = vsel %vm1056, %v1057, %v1055
  %v1059 = vrsqrt.pop %v1012
  %v1060 = vmul.f32 %v1012, %v1059
  %vm1061 = vcmp.eq.f32.partialorder %v1012, inf
  %v1062 = vsel %vm1061, %v1012, %v1060
  %vm1063 = vcmp.eq.f32.partialorder %v1012, 0.0
  %v1064 = vand.u32 %v1012, 2147483648
  %v1065 = vsel %vm1063, %v1064, %v1062
  %v1066 = vrsqrt.pop %v1013
  %v1067 = vmul.f32 %v1013, %v1066
  %vm1068 = vcmp.eq.f32.partialorder %v1013, inf
  %v1069 = vsel %vm1068, %v1013, %v1067
  %vm1070 = vcmp.eq.f32.partialorder %v1013, 0.0
  %v1071 = vand.u32 %v1013, 2147483648
  %v1072 = vsel %vm1070, %v1071, %v1069
  %v1073 = vrsqrt.pop %v1014
  %v1074 = vmul.f32 %v1014, %v1073
  %vm1075 = vcmp.eq.f32.partialorder %v1014, inf
  %v1076 = vsel %vm1075, %v1014, %v1074
  %vm1077 = vcmp.eq.f32.partialorder %v1014, 0.0
  %v1078 = vand.u32 %v1014, 2147483648
  %v1079 = vsel %vm1077, %v1078, %v1076
  %v1080 = vrsqrt.pop %v1015
  %v1081 = vmul.f32 %v1015, %v1080
  %vm1082 = vcmp.eq.f32.partialorder %v1015, inf
  %v1083 = vsel %vm1082, %v1015, %v1081
  %vm1084 = vcmp.eq.f32.partialorder %v1015, 0.0
  %v1085 = vand.u32 %v1015, 2147483648
  %v1086 = vsel %vm1084, %v1085, %v1083
  %v1087 = vrsqrt.pop %v1016
  %v1088 = vmul.f32 %v1016, %v1087
  %vm1089 = vcmp.eq.f32.partialorder %v1016, inf
  %v1090 = vsel %vm1089, %v1016, %v1088
  %vm1091 = vcmp.eq.f32.partialorder %v1016, 0.0
  %v1092 = vand.u32 %v1016, 2147483648
  %v1093 = vsel %vm1091, %v1092, %v1090
  %v1094 = vmul.f32 %v884, %v884
  %v1095 = vmul.f32 %v887, %v887
  %v1096 = vmul.f32 %v892, %v892
  %v1097 = vmul.f32 %v895, %v895
  %v1098 = vmul.f32 %v900, %v900
  %v1099 = vmul.f32 %v903, %v903
  %v1100 = vmul.f32 %v908, %v908
  %v1101 = vmul.f32 %v911, %v911
  %v1102 = vmul.f32 %v916, %v916
  %v1103 = vmul.f32 %v919, %v919
  %v1104 = vmul.f32 %v924, %v924
  %1116 = vrot.lane.b32.xlu0 %v1094, 64
  %v1117 = vpop.permute.xlu0 %1116
  %1118 = vrot.lane.b32.xlu0 %v1095, 64
  %v1119 = vpop.permute.xlu0 %1118
  %1120 = vrot.lane.b32.xlu0 %v1096, 64
  %v1121 = vpop.permute.xlu0 %1120
  %1122 = vrot.lane.b32.xlu0 %v1097, 64
  %v1123 = vpop.permute.xlu0 %1122
  %1124 = vrot.lane.b32.xlu0 %v1098, 64
  %v1125 = vpop.permute.xlu0 %1124
  %1126 = vrot.lane.b32.xlu0 %v1099, 64
  %v1127 = vpop.permute.xlu0 %1126
  %1128 = vrot.lane.b32.xlu0 %v1100, 64
  %v1129 = vpop.permute.xlu0 %1128
  %1130 = vrot.lane.b32.xlu0 %v1101, 64
  %v1131 = vpop.permute.xlu0 %1130
  %1132 = vrot.lane.b32.xlu0 %v1102, 64
  %v1133 = vpop.permute.xlu0 %1132
  %1134 = vrot.lane.b32.xlu0 %v1103, 64
  %v1135 = vpop.permute.xlu0 %1134
  %1136 = vrot.lane.b32.xlu0 %v1104, 64
  %v1137 = vpop.permute.xlu0 %1136
  %v1149 = vadd.f32 %v1094, %v1117
  %v1150 = vadd.f32 %v1095, %v1119
  %v1151 = vadd.f32 %v1096, %v1121
  %v1152 = vadd.f32 %v1097, %v1123
  %v1153 = vadd.f32 %v1098, %v1125
  %v1154 = vadd.f32 %v1099, %v1127
  %v1155 = vadd.f32 %v1100, %v1129
  %v1156 = vadd.f32 %v1101, %v1131
  %v1157 = vadd.f32 %v1102, %v1133
  %v1158 = vadd.f32 %v1103, %v1135
  %v1159 = vadd.f32 %v1104, %v1137
  %v1160 = vmax.f32 %v1149, 1e-08
  %v1161 = vmax.f32 %v1150, 1e-08
  %v1162 = vmax.f32 %v1151, 1e-08
  %v1163 = vmax.f32 %v1152, 1e-08
  %v1164 = vmax.f32 %v1153, 1e-08
  %v1165 = vmax.f32 %v1154, 1e-08
  %v1166 = vmax.f32 %v1155, 1e-08
  %v1167 = vmax.f32 %v1156, 1e-08
  %v1168 = vmax.f32 %v1157, 1e-08
  %v1169 = vmax.f32 %v1158, 1e-08
  %v1170 = vmax.f32 %v1159, 1e-08
  %v1171 = vrsqrt.pop %v1160
  %v1172 = vmul.f32 %v1160, %v1171
  %vm1173 = vcmp.eq.f32.partialorder %v1160, inf
  %v1174 = vsel %vm1173, %v1160, %v1172
  %vm1175 = vcmp.eq.f32.partialorder %v1160, 0.0
  %v1176 = vand.u32 %v1160, 2147483648
  %v1177 = vsel %vm1175, %v1176, %v1174
  %v1178 = vrsqrt.pop %v1161
  %v1179 = vmul.f32 %v1161, %v1178
  %vm1180 = vcmp.eq.f32.partialorder %v1161, inf
  %v1181 = vsel %vm1180, %v1161, %v1179
  %vm1182 = vcmp.eq.f32.partialorder %v1161, 0.0
  %v1183 = vand.u32 %v1161, 2147483648
  %v1184 = vsel %vm1182, %v1183, %v1181
  %v1185 = vrsqrt.pop %v1162
  %v1186 = vmul.f32 %v1162, %v1185
  %vm1187 = vcmp.eq.f32.partialorder %v1162, inf
  %v1188 = vsel %vm1187, %v1162, %v1186
  %vm1189 = vcmp.eq.f32.partialorder %v1162, 0.0
  %v1190 = vand.u32 %v1162, 2147483648
  %v1191 = vsel %vm1189, %v1190, %v1188
  %v1192 = vrsqrt.pop %v1163
  %v1193 = vmul.f32 %v1163, %v1192
  %vm1194 = vcmp.eq.f32.partialorder %v1163, inf
  %v1195 = vsel %vm1194, %v1163, %v1193
  %vm1196 = vcmp.eq.f32.partialorder %v1163, 0.0
  %v1197 = vand.u32 %v1163, 2147483648
  %v1198 = vsel %vm1196, %v1197, %v1195
  %v1199 = vrsqrt.pop %v1164
  %v1200 = vmul.f32 %v1164, %v1199
  %vm1201 = vcmp.eq.f32.partialorder %v1164, inf
  %v1202 = vsel %vm1201, %v1164, %v1200
  %vm1203 = vcmp.eq.f32.partialorder %v1164, 0.0
  %v1204 = vand.u32 %v1164, 2147483648
  %v1205 = vsel %vm1203, %v1204, %v1202
  %v1206 = vrsqrt.pop %v1165
  %v1207 = vmul.f32 %v1165, %v1206
  %vm1208 = vcmp.eq.f32.partialorder %v1165, inf
  %v1209 = vsel %vm1208, %v1165, %v1207
  %vm1210 = vcmp.eq.f32.partialorder %v1165, 0.0
  %v1211 = vand.u32 %v1165, 2147483648
  %v1212 = vsel %vm1210, %v1211, %v1209
  %v1213 = vrsqrt.pop %v1166
  %v1214 = vmul.f32 %v1166, %v1213
  %vm1215 = vcmp.eq.f32.partialorder %v1166, inf
  %v1216 = vsel %vm1215, %v1166, %v1214
  %vm1217 = vcmp.eq.f32.partialorder %v1166, 0.0
  %v1218 = vand.u32 %v1166, 2147483648
  %v1219 = vsel %vm1217, %v1218, %v1216
  %v1220 = vrsqrt.pop %v1167
  %v1221 = vmul.f32 %v1167, %v1220
  %vm1222 = vcmp.eq.f32.partialorder %v1167, inf
  %v1223 = vsel %vm1222, %v1167, %v1221
  %vm1224 = vcmp.eq.f32.partialorder %v1167, 0.0
  %v1225 = vand.u32 %v1167, 2147483648
  %v1226 = vsel %vm1224, %v1225, %v1223
  %v1227 = vrsqrt.pop %v1168
  %v1228 = vmul.f32 %v1168, %v1227
  %vm1229 = vcmp.eq.f32.partialorder %v1168, inf
  %v1230 = vsel %vm1229, %v1168, %v1228
  %vm1231 = vcmp.eq.f32.partialorder %v1168, 0.0
  %v1232 = vand.u32 %v1168, 2147483648
  %v1233 = vsel %vm1231, %v1232, %v1230
  %v1234 = vrsqrt.pop %v1169
  %v1235 = vmul.f32 %v1169, %v1234
  %vm1236 = vcmp.eq.f32.partialorder %v1169, inf
  %v1237 = vsel %vm1236, %v1169, %v1235
  %vm1238 = vcmp.eq.f32.partialorder %v1169, 0.0
  %v1239 = vand.u32 %v1169, 2147483648
  %v1240 = vsel %vm1238, %v1239, %v1237
  %v1241 = vrsqrt.pop %v1170
  %v1242 = vmul.f32 %v1170, %v1241
  %vm1243 = vcmp.eq.f32.partialorder %v1170, inf
  %v1244 = vsel %vm1243, %v1170, %v1242
  %vm1245 = vcmp.eq.f32.partialorder %v1170, 0.0
  %v1246 = vand.u32 %v1170, 2147483648
  %v1247 = vsel %vm1245, %v1246, %v1244
  %v1248 = vmul.f32 %v929, %v929
  %v1249 = vmul.f32 %v930, %v930
  %v1250 = vmul.f32 %v931, %v931
  %v1251 = vmul.f32 %v932, %v932
  %v1252 = vmul.f32 %v933, %v933
  %v1253 = vmul.f32 %v934, %v934
  %v1254 = vmul.f32 %v935, %v935
  %v1255 = vmul.f32 %v936, %v936
  %v1256 = vmul.f32 %v937, %v937
  %v1257 = vmul.f32 %v938, %v938
  %v1258 = vmul.f32 %v939, %v939
  %1270 = vrot.lane.b32.xlu0 %v1248, 64
  %v1271 = vpop.permute.xlu0 %1270
  %1272 = vrot.lane.b32.xlu0 %v1249, 64
  %v1273 = vpop.permute.xlu0 %1272
  %1274 = vrot.lane.b32.xlu0 %v1250, 64
  %v1275 = vpop.permute.xlu0 %1274
  %1276 = vrot.lane.b32.xlu0 %v1251, 64
  %v1277 = vpop.permute.xlu0 %1276
  %1278 = vrot.lane.b32.xlu0 %v1252, 64
  %v1279 = vpop.permute.xlu0 %1278
  %1280 = vrot.lane.b32.xlu0 %v1253, 64
  %v1281 = vpop.permute.xlu0 %1280
  %1282 = vrot.lane.b32.xlu0 %v1254, 64
  %v1283 = vpop.permute.xlu0 %1282
  %1284 = vrot.lane.b32.xlu0 %v1255, 64
  %v1285 = vpop.permute.xlu0 %1284
  %1286 = vrot.lane.b32.xlu0 %v1256, 64
  %v1287 = vpop.permute.xlu0 %1286
  %1288 = vrot.lane.b32.xlu0 %v1257, 64
  %v1289 = vpop.permute.xlu0 %1288
  %1290 = vrot.lane.b32.xlu0 %v1258, 64
  %v1291 = vpop.permute.xlu0 %1290
  %v1303 = vadd.f32 %v1248, %v1271
  %v1304 = vadd.f32 %v1249, %v1273
  %v1305 = vadd.f32 %v1250, %v1275
  %v1306 = vadd.f32 %v1251, %v1277
  %v1307 = vadd.f32 %v1252, %v1279
  %v1308 = vadd.f32 %v1253, %v1281
  %v1309 = vadd.f32 %v1254, %v1283
  %v1310 = vadd.f32 %v1255, %v1285
  %v1311 = vadd.f32 %v1256, %v1287
  %v1312 = vadd.f32 %v1257, %v1289
  %v1313 = vadd.f32 %v1258, %v1291
  %v1314 = vmax.f32 %v1303, 1e-08
  %v1315 = vmax.f32 %v1304, 1e-08
  %v1316 = vmax.f32 %v1305, 1e-08
  %v1317 = vmax.f32 %v1306, 1e-08
  %v1318 = vmax.f32 %v1307, 1e-08
  %v1319 = vmax.f32 %v1308, 1e-08
  %v1320 = vmax.f32 %v1309, 1e-08
  %v1321 = vmax.f32 %v1310, 1e-08
  %v1322 = vmax.f32 %v1311, 1e-08
  %v1323 = vmax.f32 %v1312, 1e-08
  %v1324 = vmax.f32 %v1313, 1e-08
  %v1325 = vrsqrt.pop %v1314
  %v1326 = vmul.f32 %v1314, %v1325
  %vm1327 = vcmp.eq.f32.partialorder %v1314, inf
  %v1328 = vsel %vm1327, %v1314, %v1326
  %vm1329 = vcmp.eq.f32.partialorder %v1314, 0.0
  %v1330 = vand.u32 %v1314, 2147483648
  %v1331 = vsel %vm1329, %v1330, %v1328
  %v1332 = vrsqrt.pop %v1315
  %v1333 = vmul.f32 %v1315, %v1332
  %vm1334 = vcmp.eq.f32.partialorder %v1315, inf
  %v1335 = vsel %vm1334, %v1315, %v1333
  %vm1336 = vcmp.eq.f32.partialorder %v1315, 0.0
  %v1337 = vand.u32 %v1315, 2147483648
  %v1338 = vsel %vm1336, %v1337, %v1335
  %v1339 = vrsqrt.pop %v1316
  %v1340 = vmul.f32 %v1316, %v1339
  %vm1341 = vcmp.eq.f32.partialorder %v1316, inf
  %v1342 = vsel %vm1341, %v1316, %v1340
  %vm1343 = vcmp.eq.f32.partialorder %v1316, 0.0
  %v1344 = vand.u32 %v1316, 2147483648
  %v1345 = vsel %vm1343, %v1344, %v1342
  %v1346 = vrsqrt.pop %v1317
  %v1347 = vmul.f32 %v1317, %v1346
  %vm1348 = vcmp.eq.f32.partialorder %v1317, inf
  %v1349 = vsel %vm1348, %v1317, %v1347
  %vm1350 = vcmp.eq.f32.partialorder %v1317, 0.0
  %v1351 = vand.u32 %v1317, 2147483648
  %v1352 = vsel %vm1350, %v1351, %v1349
  %v1353 = vrsqrt.pop %v1318
  %v1354 = vmul.f32 %v1318, %v1353
  %vm1355 = vcmp.eq.f32.partialorder %v1318, inf
  %v1356 = vsel %vm1355, %v1318, %v1354
  %vm1357 = vcmp.eq.f32.partialorder %v1318, 0.0
  %v1358 = vand.u32 %v1318, 2147483648
  %v1359 = vsel %vm1357, %v1358, %v1356
  %v1360 = vrsqrt.pop %v1319
  %v1361 = vmul.f32 %v1319, %v1360
  %vm1362 = vcmp.eq.f32.partialorder %v1319, inf
  %v1363 = vsel %vm1362, %v1319, %v1361
  %vm1364 = vcmp.eq.f32.partialorder %v1319, 0.0
  %v1365 = vand.u32 %v1319, 2147483648
  %v1366 = vsel %vm1364, %v1365, %v1363
  %v1367 = vrsqrt.pop %v1320
  %v1368 = vmul.f32 %v1320, %v1367
  %vm1369 = vcmp.eq.f32.partialorder %v1320, inf
  %v1370 = vsel %vm1369, %v1320, %v1368
  %vm1371 = vcmp.eq.f32.partialorder %v1320, 0.0
  %v1372 = vand.u32 %v1320, 2147483648
  %v1373 = vsel %vm1371, %v1372, %v1370
  %v1374 = vrsqrt.pop %v1321
  %v1375 = vmul.f32 %v1321, %v1374
  %vm1376 = vcmp.eq.f32.partialorder %v1321, inf
  %v1377 = vsel %vm1376, %v1321, %v1375
  %vm1378 = vcmp.eq.f32.partialorder %v1321, 0.0
  %v1379 = vand.u32 %v1321, 2147483648
  %v1380 = vsel %vm1378, %v1379, %v1377
  %v1381 = vrsqrt.pop %v1322
  %v1382 = vmul.f32 %v1322, %v1381
  %vm1383 = vcmp.eq.f32.partialorder %v1322, inf
  %v1384 = vsel %vm1383, %v1322, %v1382
  %vm1385 = vcmp.eq.f32.partialorder %v1322, 0.0
  %v1386 = vand.u32 %v1322, 2147483648
  %v1387 = vsel %vm1385, %v1386, %v1384
  %v1388 = vrsqrt.pop %v1323
  %v1389 = vmul.f32 %v1323, %v1388
  %vm1390 = vcmp.eq.f32.partialorder %v1323, inf
  %v1391 = vsel %vm1390, %v1323, %v1389
  %vm1392 = vcmp.eq.f32.partialorder %v1323, 0.0
  %v1393 = vand.u32 %v1323, 2147483648
  %v1394 = vsel %vm1392, %v1393, %v1391
  %v1395 = vrsqrt.pop %v1324
  %v1396 = vmul.f32 %v1324, %v1395
  %vm1397 = vcmp.eq.f32.partialorder %v1324, inf
  %v1398 = vsel %vm1397, %v1324, %v1396
  %vm1399 = vcmp.eq.f32.partialorder %v1324, 0.0
  %v1400 = vand.u32 %v1324, 2147483648
  %v1401 = vsel %vm1399, %v1400, %v1398
  %v1402 = vadd.f32 %v1023, %v1177
  %v1403 = vadd.f32 %v1030, %v1184
  %v1404 = vadd.f32 %v1037, %v1191
  %v1405 = vadd.f32 %v1044, %v1198
  %v1406 = vadd.f32 %v1051, %v1205
  %v1407 = vadd.f32 %v1058, %v1212
  %v1408 = vadd.f32 %v1065, %v1219
  %v1409 = vadd.f32 %v1072, %v1226
  %v1410 = vadd.f32 %v1079, %v1233
  %v1411 = vadd.f32 %v1086, %v1240
  %v1412 = vadd.f32 %v1093, %v1247
  %v1413 = vsub.f32 %v1402, %v1331
  %v1414 = vsub.f32 %v1403, %v1338
  %v1415 = vsub.f32 %v1404, %v1345
  %v1416 = vsub.f32 %v1405, %v1352
  %v1417 = vsub.f32 %v1406, %v1359
  %v1418 = vsub.f32 %v1407, %v1366
  %v1419 = vsub.f32 %v1408, %v1373
  %v1420 = vsub.f32 %v1409, %v1380
  %v1421 = vsub.f32 %v1410, %v1387
  %v1422 = vsub.f32 %v1411, %v1394
  %v1423 = vsub.f32 %v1412, %v1401
  %v1424 = vmul.f32 %v1413, %v1413
  %v1425 = vmul.f32 %v1414, %v1414
  %v1426 = vmul.f32 %v1415, %v1415
  %v1427 = vmul.f32 %v1416, %v1416
  %v1428 = vmul.f32 %v1417, %v1417
  %v1429 = vmul.f32 %v1418, %v1418
  %v1430 = vmul.f32 %v1419, %v1419
  %v1431 = vmul.f32 %v1420, %v1420
  %v1432 = vmul.f32 %v1421, %v1421
  %v1433 = vmul.f32 %v1422, %v1422
  %v1434 = vmul.f32 %v1423, %v1423
  %s1435 = sadd.s32 0, 0
  %s1436 = smul.u32 %s1435, 88
  %s1437 = sadd.s32 %s1436, 88
  %p1438 = scmp.le.s32.totalorder %s1437, 82
  // Predicated region
  $region18: #{_lambda_.4} parent=0 // pred_check
    %p1439 = pneg %p1438
  $region19: #{_lambda_.4} parent=0 // pred_check_branch
    %1441 = sbr.rel (%p1439) target = $region21
  $region20: #{_lambda_.4} parent=0 // pred_region
    %v1442 = vld [vmem:[#allocation2] sm:$0xff]
    %v1443 = vld [vmem:[#allocation2 + $0x8] sm:$0xff]
    %v1444 = vld [vmem:[#allocation2 + $0x10] sm:$0xff]
    %v1445 = vld [vmem:[#allocation2 + $0x18] sm:$0xff]
    %v1446 = vld [vmem:[#allocation2 + $0x20] sm:$0xff]
    %v1447 = vld [vmem:[#allocation2 + $0x28] sm:$0xff]
    %v1448 = vld [vmem:[#allocation2 + $0x30] sm:$0xff]
    %v1449 = vld [vmem:[#allocation2 + $0x38] sm:$0xff]
    %v1450 = vld [vmem:[#allocation2 + $0x40] sm:$0xff]
    %v1451 = vld [vmem:[#allocation2 + $0x48] sm:$0xff]
    %v1452 = vld [vmem:[#allocation2 + $0x50] sm:$0xff]
    %v1453 = vadd.f32 %v1442, %v1424
    %v1454 = vadd.f32 %v1443, %v1425
    %v1455 = vadd.f32 %v1444, %v1426
    %v1456 = vadd.f32 %v1445, %v1427
    %v1457 = vadd.f32 %v1446, %v1428
    %v1458 = vadd.f32 %v1447, %v1429
    %v1459 = vadd.f32 %v1448, %v1430
    %v1460 = vadd.f32 %v1449, %v1431
    %v1461 = vadd.f32 %v1450, %v1432
    %v1462 = vadd.f32 %v1451, %v1433
    %v1463 = vadd.f32 %v1452, %v1434
    %vm1464 = vcmask 523264
    %1465 = vst.msk [vmem:[#allocation2] sm:$0xff] %vm1464, %v1453
    %1466 = vst.msk [vmem:[#allocation2 + $0x8] sm:$0xff] %vm1464, %v1454
    %1467 = vst.msk [vmem:[#allocation2 + $0x10] sm:$0xff] %vm1464, %v1455
    %1468 = vst.msk [vmem:[#allocation2 + $0x18] sm:$0xff] %vm1464, %v1456
    %1469 = vst.msk [vmem:[#allocation2 + $0x20] sm:$0xff] %vm1464, %v1457
    %1470 = vst.msk [vmem:[#allocation2 + $0x28] sm:$0xff] %vm1464, %v1458
    %1471 = vst.msk [vmem:[#allocation2 + $0x30] sm:$0xff] %vm1464, %v1459
    %1472 = vst.msk [vmem:[#allocation2 + $0x38] sm:$0xff] %vm1464, %v1460
    %1473 = vst.msk [vmem:[#allocation2 + $0x40] sm:$0xff] %vm1464, %v1461
    %1474 = vst.msk [vmem:[#allocation2 + $0x48] sm:$0xff] %vm1464, %v1462
    %1475 = vst.msk [vmem:[#allocation2 + $0x50] sm:$0xff] %vm1464, %v1463
  $region21: #{_lambda_.4} parent=0 // pred_fallthru
    _
  %p1476 = scmp.gt.s32.totalorder %s1437, 82
  // Predicated region
  $region22: #{_lambda_.4} parent=0 // pred_check
    %p1477 = pneg %p1476
  $region23: #{_lambda_.4} parent=0 // pred_check_branch
    %1479 = sbr.rel (%p1477) target = $region25
  $region24: #{_lambda_.4} parent=0 // pred_region
    %v1480 = vlaneseq
    %v1481 = vshrl.u32 %v1480, 7
    %v1482 = vadd.s32 %v1481, 8
    %v1483 = vadd.s32 %v1481, 16
    %v1484 = vadd.s32 %v1481, 24
    %v1485 = vadd.s32 %v1481, 32
    %v1486 = vadd.s32 %v1481, 40
    %v1487 = vadd.s32 %v1481, 48
    %v1488 = vadd.s32 %v1481, 56
    %v1489 = vadd.s32 %v1481, 64
    %v1490 = vadd.s32 %v1481, 72
    %v1491 = vadd.s32 %v1481, 80
    %v1492 = vstv %s1436
    %v1493 = vadd.s32 %v1492, %v1481
    %v1494 = vadd.s32 %v1492, %v1482
    %v1495 = vadd.s32 %v1492, %v1483
    %v1496 = vadd.s32 %v1492, %v1484
    %v1497 = vadd.s32 %v1492, %v1485
    %v1498 = vadd.s32 %v1492, %v1486
    %v1499 = vadd.s32 %v1492, %v1487
    %v1500 = vadd.s32 %v1492, %v1488
    %v1501 = vadd.s32 %v1492, %v1489
    %v1502 = vadd.s32 %v1492, %v1490
    %v1503 = vadd.s32 %v1492, %v1491
    %v1504 = vld [vmem:[#allocation2] sm:$0xff]
    %v1505 = vld [vmem:[#allocation2 + $0x8] sm:$0xff]
    %v1506 = vld [vmem:[#allocation2 + $0x10] sm:$0xff]
    %v1507 = vld [vmem:[#allocation2 + $0x18] sm:$0xff]
    %v1508 = vld [vmem:[#allocation2 + $0x20] sm:$0xff]
    %v1509 = vld [vmem:[#allocation2 + $0x28] sm:$0xff]
    %v1510 = vld [vmem:[#allocation2 + $0x30] sm:$0xff]
    %v1511 = vld [vmem:[#allocation2 + $0x38] sm:$0xff]
    %v1512 = vld [vmem:[#allocation2 + $0x40] sm:$0xff]
    %v1513 = vld [vmem:[#allocation2 + $0x48] sm:$0xff]
    %v1514 = vld [vmem:[#allocation2 + $0x50] sm:$0xff]
    %vm1515 = vcmp.lt.s32.totalorder %v1493, 82
    %vm1516 = vcmp.lt.s32.totalorder %v1494, 82
    %vm1517 = vcmp.lt.s32.totalorder %v1495, 82
    %vm1518 = vcmp.lt.s32.totalorder %v1496, 82
    %vm1519 = vcmp.lt.s32.totalorder %v1497, 82
    %vm1520 = vcmp.lt.s32.totalorder %v1498, 82
    %vm1521 = vcmp.lt.s32.totalorder %v1499, 82
    %vm1522 = vcmp.lt.s32.totalorder %v1500, 82
    %vm1523 = vcmp.lt.s32.totalorder %v1501, 82
    %vm1524 = vcmp.lt.s32.totalorder %v1502, 82
    %vm1525 = vcmp.lt.s32.totalorder %v1503, 82
    %v1526 = vsel %vm1515, %v1424, 0.0
    %v1527 = vsel %vm1516, %v1425, 0.0
    %v1528 = vsel %vm1517, %v1426, 0.0
    %v1529 = vsel %vm1518, %v1427, 0.0
    %v1530 = vsel %vm1519, %v1428, 0.0
    %v1531 = vsel %vm1520, %v1429, 0.0
    %v1532 = vsel %vm1521, %v1430, 0.0
    %v1533 = vsel %vm1522, %v1431, 0.0
    %v1534 = vsel %vm1523, %v1432, 0.0
    %v1535 = vsel %vm1524, %v1433, 0.0
    %v1536 = vsel %vm1525, %v1434, 0.0
    %v1537 = vadd.f32 %v1504, %v1526
    %v1538 = vadd.f32 %v1505, %v1527
    %v1539 = vadd.f32 %v1506, %v1528
    %v1540 = vadd.f32 %v1507, %v1529
    %v1541 = vadd.f32 %v1508, %v1530
    %v1542 = vadd.f32 %v1509, %v1531
    %v1543 = vadd.f32 %v1510, %v1532
    %v1544 = vadd.f32 %v1511, %v1533
    %v1545 = vadd.f32 %v1512, %v1534
    %v1546 = vadd.f32 %v1513, %v1535
    %v1547 = vadd.f32 %v1514, %v1536
    %vm1548 = vcmask 523264
    %1549 = vst.msk [vmem:[#allocation2] sm:$0xff] %vm1548, %v1537
    %1550 = vst.msk [vmem:[#allocation2 + $0x8] sm:$0xff] %vm1548, %v1538
    %1551 = vst.msk [vmem:[#allocation2 + $0x10] sm:$0xff] %vm1548, %v1539
    %1552 = vst.msk [vmem:[#allocation2 + $0x18] sm:$0xff] %vm1548, %v1540
    %1553 = vst.msk [vmem:[#allocation2 + $0x20] sm:$0xff] %vm1548, %v1541
    %1554 = vst.msk [vmem:[#allocation2 + $0x28] sm:$0xff] %vm1548, %v1542
    %1555 = vst.msk [vmem:[#allocation2 + $0x30] sm:$0xff] %vm1548, %v1543
    %1556 = vst.msk [vmem:[#allocation2 + $0x38] sm:$0xff] %vm1548, %v1544
    %1557 = vst.msk [vmem:[#allocation2 + $0x40] sm:$0xff] %vm1548, %v1545
    %1558 = vst.msk [vmem:[#allocation2 + $0x48] sm:$0xff] %vm1548, %v1546
    %1559 = vst.msk [vmem:[#allocation2 + $0x50] sm:$0xff] %vm1548, %v1547
  $region25: #{_lambda_.4} parent=0 // pred_fallthru
    _
  // Predicated region
  $region26: #{_lambda_.4} parent=0 // pred_check
    %p1560 = pneg %p65
  $region27: #{_lambda_.4} parent=0 // pred_check_branch
    %1562 = sbr.rel (%p1560) target = $region29
  $region28: #{_lambda_.4} parent=0 // pred_region
    %v1563 = vld [vmem:[#allocation2] sm:$0xff]
    %v1564 = vld [vmem:[#allocation2 + $0x8] sm:$0xff]
    %v1565 = vld [vmem:[#allocation2 + $0x10] sm:$0xff]
    %v1566 = vld [vmem:[#allocation2 + $0x18] sm:$0xff]
    %v1567 = vld [vmem:[#allocation2 + $0x20] sm:$0xff]
    %v1568 = vld [vmem:[#allocation2 + $0x28] sm:$0xff]
    %v1569 = vld [vmem:[#allocation2 + $0x30] sm:$0xff]
    %v1570 = vld [vmem:[#allocation2 + $0x38] sm:$0xff]
    %v1571 = vld [vmem:[#allocation2 + $0x40] sm:$0xff]
    %v1572 = vld [vmem:[#allocation2 + $0x48] sm:$0xff]
    %v1573 = vld [vmem:[#allocation2 + $0x50] sm:$0xff]
    %vm1574 = vcmask 523264
    %v1575 = vsel %vm1574, %v1563, 0.0
    %v1576 = vsel %vm1574, %v1564, 0.0
    %v1577 = vadd.f32 %v1575, %v1576
    %v1578 = vsel %vm1574, %v1565, 0.0
    %v1579 = vadd.f32 %v1577, %v1578
    %v1580 = vsel %vm1574, %v1566, 0.0
    %v1581 = vadd.f32 %v1579, %v1580
    %v1582 = vsel %vm1574, %v1567, 0.0
    %v1583 = vadd.f32 %v1581, %v1582
    %v1584 = vsel %vm1574, %v1568, 0.0
    %v1585 = vadd.f32 %v1583, %v1584
    %v1586 = vsel %vm1574, %v1569, 0.0
    %v1587 = vadd.f32 %v1585, %v1586
    %v1588 = vsel %vm1574, %v1570, 0.0
    %v1589 = vadd.f32 %v1587, %v1588
    %v1590 = vsel %vm1574, %v1571, 0.0
    %v1591 = vadd.f32 %v1589, %v1590
    %v1592 = vsel %vm1574, %v1572, 0.0
    %v1593 = vadd.f32 %v1591, %v1592
    %v1594 = vsel %vm1574, %v1573, 0.0
    %v1595 = vadd.f32 %v1593, %v1594
    %1596 = vadd.xlane.f32.xlu0 %v1595
    %v1597 = vpop.xlane.xlu0 %1596
    %v1598 = vrot.slane %v1597, 4
    %v1599 = vadd.f32 %v1597, %v1598
    %v1600 = vrot.slane %v1599, 2
    %v1601 = vadd.f32 %v1599, %v1600
    %v1602 = vrot.slane %v1601, 1
    %v1603 = vadd.f32 %v1601, %v1602
    %s1604 = vtos %v1603
    %v1605 = vstv %s1604
    %1606 = vst [vmem:[%s3] sm:$0xff] %v1605
  $region29: #{_lambda_.4} parent=0 // pred_fallthru
    _
  // Predicated region
  $region30: #{_lambda_.4} parent=0 // pred_check
    _
  $region31: #{_lambda_.4} parent=0 // pred_check_branch
    %1608 = sbr.rel (0) target = $region33
  $region32: #{_lambda_.4} parent=0 // pred_region
    _
  $region33: #{_lambda_.4} parent=0 // pred_fallthru
    _
  // Predicated region
  $region34: #{_lambda_.4} parent=0 // pred_check
    _
  $region35: #{_lambda_.4} parent=0 // pred_check_branch
    %1610 = sbr.rel (0) target = $region37
  $region36: #{_lambda_.4} parent=0 // pred_region
    _
  $region37: #{_lambda_.4} parent=0 // pred_fallthru
    _

// kernel: _lambda_.3
$region0: #{_lambda_.3}
  #allocation0 [shape = 'u32[]', space=smem, size = 0x4, offset = 0x4, fixed_abs, tag = 'smem constant byte address 0x4 - core index']
  #allocation1 [shape = 'u32[144,128]{1,0:T(1,128)}', space=vmem, size = 0x12000, scoped, tag = 'internal scratch']
  #allocation2 [shape = 'f32[40,128]{1,0:T(8,128)}', space=vmem, size = 0x5000, scoped, tag = 'scratch operand']
  %s0 = inlined_call_operand.vmem [shape: bf16[40,1024], index: 0, kind: input, shape index: {}]
  %s1 = inlined_call_operand.vmem [shape: bf16[40,1024], index: 1, kind: input, shape index: {}]
  %s2 = inlined_call_operand.vmem [shape: bf16[1024,256], index: 2, kind: input, shape index: {}]
  %s3 = inlined_call_operand.vmem [shape: f32[1,8,128], index: 3, kind: output, shape index: {}]
  %s4 = sld [smem:[#allocation0]]
  $region38: #{_lambda_.3} parent=0
    _
  %s6 = ssub.s32 1, %s4
  %s7 = scalar_select 0, %s6, %s4
  // Predicated region
  $region2: #{_lambda_.3} parent=0 // pred_check
    _
  $region3: #{_lambda_.3} parent=0 // pred_check_branch
    %9 = sbr.rel (0) target = $region5
  $region4: #{_lambda_.3} parent=0 // pred_region
    %s10 = sadd.s32 0, 0
    %s11 = smul.u32 5, %s10
    %p12 = scmp.lt.s32.totalorder %s11, 4
    %s13 = scalar_select %p12, %s11, 4
    %s14 = smul.addr %s13, 8
    %s15 = smul.addr %s14, 4
    %s16 = scalar_lea.vmem %s0, %s15
    %s17 = sadd.s32 0, 0
    %s18 = smul.u32 5, %s17
  $region5: #{_lambda_.3} parent=0 // pred_fallthru
    _
  // Predicated region
  $region6: #{_lambda_.3} parent=0 // pred_check
    _
  $region7: #{_lambda_.3} parent=0 // pred_check_branch
    %20 = sbr.rel (0) target = $region9
  $region8: #{_lambda_.3} parent=0 // pred_region
    %s21 = sadd.s32 0, 0
    %s22 = smul.u32 5, %s21
    %p23 = scmp.lt.s32.totalorder %s22, 4
    %s24 = scalar_select %p23, %s22, 4
    %s25 = smul.addr %s24, 8
    %s26 = smul.addr %s25, 4
    %s27 = scalar_lea.vmem %s1, %s26
    %s28 = sadd.s32 0, 0
    %s29 = smul.u32 5, %s28
  $region9: #{_lambda_.3} parent=0 // pred_fallthru
    _
  // Predicated region
  $region10: #{_lambda_.3} parent=0 // pred_check
    _
  $region11: #{_lambda_.3} parent=0 // pred_check_branch
    %31 = sbr.rel (0) target = $region13
  $region12: #{_lambda_.3} parent=0 // pred_region
    _
  $region13: #{_lambda_.3} parent=0 // pred_fallthru
    _
  %s32 = sadd.s32 0, 0
  %s33 = smul.u32 5, %s32
  %p34 = scmp.lt.s32.totalorder %s33, 4
  %s35 = scalar_select %p34, %s33, 4
  %s36 = smul.addr %s35, 8
  %s37 = smul.addr %s36, 4
  %s38 = scalar_lea.vmem %s0, %s37
  %s39 = sadd.s32 0, 0
  %s40 = smul.u32 5, %s39
  %p41 = scmp.lt.s32.totalorder %s40, 4
  %s42 = scalar_select %p41, %s40, 4
  %s43 = smul.addr %s42, 8
  %s44 = smul.addr %s43, 4
  %s45 = scalar_lea.vmem %s1, %s44
  %s46 = sadd.s32 0, 0
  %s47 = smul.u32 5, %s46
  %p48 = scmp.lt.s32.totalorder %s47, 4
  %s49 = scalar_select %p48, %s47, 4
  %s50 = smul.addr %s49, 8
  %s51 = smul.addr %s50, 4
  %s52 = scalar_lea.vmem %s0, %s51
  %s53 = sadd.s32 0, 0
  %s54 = smul.u32 5, %s53
  %s55 = sadd.s32 0, 0
  %s56 = smul.u32 5, %s55
  %p57 = scmp.lt.s32.totalorder %s56, 4
  %s58 = scalar_select %p57, %s56, 4
  %s59 = smul.addr %s58, 8
  %s60 = smul.addr %s59, 4
  %s61 = scalar_lea.vmem %s1, %s60
  %s62 = sadd.s32 0, 0
  %s63 = smul.u32 5, %s62
  %p64 = scmp.eq.s32.totalorder 0, 0
  // Predicated region
  $region14: #{_lambda_.3} parent=0 // pred_check
    %p65 = pneg %p64
  $region15: #{_lambda_.3} parent=0 // pred_check_branch
    %67 = sbr.rel (%p65) target = $region17
  $region16: #{_lambda_.3} parent=0 // pred_region
    %68 = vst [vmem:[#allocation2] sm:$0xff] 0.0
    %69 = vst [vmem:[#allocation2 + $0x8] sm:$0xff] 0.0
    %70 = vst [vmem:[#allocation2 + $0x10] sm:$0xff] 0.0
    %71 = vst [vmem:[#allocation2 + $0x18] sm:$0xff] 0.0
    %72 = vst [vmem:[#allocation2 + $0x20] sm:$0xff] 0.0
  $region17: #{_lambda_.3} parent=0 // pred_fallthru
    _
  %v73 = vld [vmem:[%s2] sm:$0xff]
  %v74 = vld [vmem:[%s2 + $0x8] sm:$0xff]
  %v75 = vld [vmem:[%s2 + $0x10] sm:$0xff]
  %v76 = vld [vmem:[%s2 + $0x18] sm:$0xff]
  %v77 = vld [vmem:[%s2 + $0x20] sm:$0xff]
  %v78 = vld [vmem:[%s2 + $0x28] sm:$0xff]
  %v79 = vld [vmem:[%s2 + $0x30] sm:$0xff]
  %v80 = vld [vmem:[%s2 + $0x38] sm:$0xff]
  %v81 = vld [vmem:[%s2 + $0x40] sm:$0xff]
  %v82 = vld [vmem:[%s2 + $0x48] sm:$0xff]
  %v83 = vld [vmem:[%s2 + $0x50] sm:$0xff]
  %v84 = vld [vmem:[%s2 + $0x58] sm:$0xff]
  %v85 = vld [vmem:[%s2 + $0x60] sm:$0xff]
  %v86 = vld [vmem:[%s2 + $0x68] sm:$0xff]
  %v87 = vld [vmem:[%s2 + $0x70] sm:$0xff]
  %v88 = vld [vmem:[%s2 + $0x78] sm:$0xff]
  %v89 = vld [vmem:[%s2 + $0x80] sm:$0xff]
  %v90 = vld [vmem:[%s2 + $0x88] sm:$0xff]
  %v91 = vld [vmem:[%s2 + $0x90] sm:$0xff]
  %v92 = vld [vmem:[%s2 + $0x98] sm:$0xff]
  %v93 = vld [vmem:[%s2 + $0xa0] sm:$0xff]
  %v94 = vld [vmem:[%s2 + $0xa8] sm:$0xff]
  %v95 = vld [vmem:[%s2 + $0xb0] sm:$0xff]
  %v96 = vld [vmem:[%s2 + $0xb8] sm:$0xff]
  %v97 = vld [vmem:[%s2 + $0xc0] sm:$0xff]
  %v98 = vld [vmem:[%s2 + $0xc8] sm:$0xff]
  %v99 = vld [vmem:[%s2 + $0xd0] sm:$0xff]
  %v100 = vld [vmem:[%s2 + $0xd8] sm:$0xff]
  %v101 = vld [vmem:[%s2 + $0xe0] sm:$0xff]
  %v102 = vld [vmem:[%s2 + $0xe8] sm:$0xff]
  %v103 = vld [vmem:[%s2 + $0xf0] sm:$0xff]
  %v104 = vld [vmem:[%s2 + $0xf8] sm:$0xff]
  %v105 = vld [vmem:[%s2 + $0x100] sm:$0xff]
  %v106 = vld [vmem:[%s2 + $0x108] sm:$0xff]
  %v107 = vld [vmem:[%s2 + $0x110] sm:$0xff]
  %v108 = vld [vmem:[%s2 + $0x118] sm:$0xff]
  %v109 = vld [vmem:[%s2 + $0x120] sm:$0xff]
  %v110 = vld [vmem:[%s2 + $0x128] sm:$0xff]
  %v111 = vld [vmem:[%s2 + $0x130] sm:$0xff]
  %v112 = vld [vmem:[%s2 + $0x138] sm:$0xff]
  %v113 = vld [vmem:[%s2 + $0x140] sm:$0xff]
  %v114 = vld [vmem:[%s2 + $0x148] sm:$0xff]
  %v115 = vld [vmem:[%s2 + $0x150] sm:$0xff]
  %v116 = vld [vmem:[%s2 + $0x158] sm:$0xff]
  %v117 = vld [vmem:[%s2 + $0x160] sm:$0xff]
  %v118 = vld [vmem:[%s2 + $0x168] sm:$0xff]
  %v119 = vld [vmem:[%s2 + $0x170] sm:$0xff]
  %v120 = vld [vmem:[%s2 + $0x178] sm:$0xff]
  %v121 = vld [vmem:[%s2 + $0x180] sm:$0xff]
  %v122 = vld [vmem:[%s2 + $0x188] sm:$0xff]
  %v123 = vld [vmem:[%s2 + $0x190] sm:$0xff]
  %v124 = vld [vmem:[%s2 + $0x198] sm:$0xff]
  %v125 = vld [vmem:[%s2 + $0x1a0] sm:$0xff]
  %v126 = vld [vmem:[%s2 + $0x1a8] sm:$0xff]
  %v127 = vld [vmem:[%s2 + $0x1b0] sm:$0xff]
  %v128 = vld [vmem:[%s2 + $0x1b8] sm:$0xff]
  %v129 = vld [vmem:[%s2 + $0x1c0] sm:$0xff]
  %v130 = vld [vmem:[%s2 + $0x1c8] sm:$0xff]
  %v131 = vld [vmem:[%s2 + $0x1d0] sm:$0xff]
  %v132 = vld [vmem:[%s2 + $0x1d8] sm:$0xff]
  %v133 = vld [vmem:[%s2 + $0x1e0] sm:$0xff]
  %v134 = vld [vmem:[%s2 + $0x1e8] sm:$0xff]
  %v135 = vld [vmem:[%s2 + $0x1f0] sm:$0xff]
  %v136 = vld [vmem:[%s2 + $0x1f8] sm:$0xff]
  %v137 = vld [vmem:[%s2 + $0x200] sm:$0xff]
  %v138 = vld [vmem:[%s2 + $0x208] sm:$0xff]
  %v139 = vld [vmem:[%s2 + $0x210] sm:$0xff]
  %v140 = vld [vmem:[%s2 + $0x218] sm:$0xff]
  %v141 = vld [vmem:[%s2 + $0x220] sm:$0xff]
  %v142 = vld [vmem:[%s2 + $0x228] sm:$0xff]
  %v143 = vld [vmem:[%s2 + $0x230] sm:$0xff]
  %v144 = vld [vmem:[%s2 + $0x238] sm:$0xff]
  %v145 = vld [vmem:[%s2 + $0x240] sm:$0xff]
  %v146 = vld [vmem:[%s2 + $0x248] sm:$0xff]
  %v147 = vld [vmem:[%s2 + $0x250] sm:$0xff]
  %v148 = vld [vmem:[%s2 + $0x258] sm:$0xff]
  %v149 = vld [vmem:[%s2 + $0x260] sm:$0xff]
  %v150 = vld [vmem:[%s2 + $0x268] sm:$0xff]
  %v151 = vld [vmem:[%s2 + $0x270] sm:$0xff]
  %v152 = vld [vmem:[%s2 + $0x278] sm:$0xff]
  %v153 = vld [vmem:[%s2 + $0x280] sm:$0xff]
  %v154 = vld [vmem:[%s2 + $0x288] sm:$0xff]
  %v155 = vld [vmem:[%s2 + $0x290] sm:$0xff]
  %v156 = vld [vmem:[%s2 + $0x298] sm:$0xff]
  %v157 = vld [vmem:[%s2 + $0x2a0] sm:$0xff]
  %v158 = vld [vmem:[%s2 + $0x2a8] sm:$0xff]
  %v159 = vld [vmem:[%s2 + $0x2b0] sm:$0xff]
  %v160 = vld [vmem:[%s2 + $0x2b8] sm:$0xff]
  %v161 = vld [vmem:[%s2 + $0x2c0] sm:$0xff]
  %v162 = vld [vmem:[%s2 + $0x2c8] sm:$0xff]
  %v163 = vld [vmem:[%s2 + $0x2d0] sm:$0xff]
  %v164 = vld [vmem:[%s2 + $0x2d8] sm:$0xff]
  %v165 = vld [vmem:[%s2 + $0x2e0] sm:$0xff]
  %v166 = vld [vmem:[%s2 + $0x2e8] sm:$0xff]
  %v167 = vld [vmem:[%s2 + $0x2f0] sm:$0xff]
  %v168 = vld [vmem:[%s2 + $0x2f8] sm:$0xff]
  %v169 = vld [vmem:[%s2 + $0x300] sm:$0xff]
  %v170 = vld [vmem:[%s2 + $0x308] sm:$0xff]
  %v171 = vld [vmem:[%s2 + $0x310] sm:$0xff]
  %v172 = vld [vmem:[%s2 + $0x318] sm:$0xff]
  %v173 = vld [vmem:[%s2 + $0x320] sm:$0xff]
  %v174 = vld [vmem:[%s2 + $0x328] sm:$0xff]
  %v175 = vld [vmem:[%s2 + $0x330] sm:$0xff]
  %v176 = vld [vmem:[%s2 + $0x338] sm:$0xff]
  %v177 = vld [vmem:[%s2 + $0x340] sm:$0xff]
  %v178 = vld [vmem:[%s2 + $0x348] sm:$0xff]
  %v179 = vld [vmem:[%s2 + $0x350] sm:$0xff]
  %v180 = vld [vmem:[%s2 + $0x358] sm:$0xff]
  %v181 = vld [vmem:[%s2 + $0x360] sm:$0xff]
  %v182 = vld [vmem:[%s2 + $0x368] sm:$0xff]
  %v183 = vld [vmem:[%s2 + $0x370] sm:$0xff]
  %v184 = vld [vmem:[%s2 + $0x378] sm:$0xff]
  %v185 = vld [vmem:[%s2 + $0x380] sm:$0xff]
  %v186 = vld [vmem:[%s2 + $0x388] sm:$0xff]
  %v187 = vld [vmem:[%s2 + $0x390] sm:$0xff]
  %v188 = vld [vmem:[%s2 + $0x398] sm:$0xff]
  %v189 = vld [vmem:[%s2 + $0x3a0] sm:$0xff]
  %v190 = vld [vmem:[%s2 + $0x3a8] sm:$0xff]
  %v191 = vld [vmem:[%s2 + $0x3b0] sm:$0xff]
  %v192 = vld [vmem:[%s2 + $0x3b8] sm:$0xff]
  %v193 = vld [vmem:[%s2 + $0x3c0] sm:$0xff]
  %v194 = vld [vmem:[%s2 + $0x3c8] sm:$0xff]
  %v195 = vld [vmem:[%s2 + $0x3d0] sm:$0xff]
  %v196 = vld [vmem:[%s2 + $0x3d8] sm:$0xff]
  %v197 = vld [vmem:[%s2 + $0x3e0] sm:$0xff]
  %v198 = vld [vmem:[%s2 + $0x3e8] sm:$0xff]
  %v199 = vld [vmem:[%s2 + $0x3f0] sm:$0xff]
  %v200 = vld [vmem:[%s2 + $0x3f8] sm:$0xff]
  %v201 = vld [vmem:[%s52] sm:$0xff]
  %v202 = vld [vmem:[%s52 + $0x8] sm:$0xff]
  %v203 = vld [vmem:[%s52 + $0x10] sm:$0xff]
  %v204 = vld [vmem:[%s52 + $0x18] sm:$0xff]
  %v205 = vld [vmem:[%s52 + $0x20] sm:$0xff]
  %v206 = vld [vmem:[%s52 + $0x28] sm:$0xff]
  %v207 = vld [vmem:[%s52 + $0x30] sm:$0xff]
  %v208 = vld [vmem:[%s52 + $0x38] sm:$0xff]
  %v209 = vld [vmem:[%s52 + $0x40] sm:$0xff]
  %v210 = vld [vmem:[%s52 + $0x48] sm:$0xff]
  %v211 = vld [vmem:[%s52 + $0x50] sm:$0xff]
  %v212 = vld [vmem:[%s52 + $0x58] sm:$0xff]
  %v213 = vld [vmem:[%s52 + $0x60] sm:$0xff]
  %v214 = vld [vmem:[%s52 + $0x68] sm:$0xff]
  %v215 = vld [vmem:[%s52 + $0x70] sm:$0xff]
  %v216 = vld [vmem:[%s52 + $0x78] sm:$0xff]
  %v217 = vld [vmem:[%s52 + $0x80] sm:$0xff]
  %v218 = vld [vmem:[%s52 + $0x88] sm:$0xff]
  %v219 = vld [vmem:[%s52 + $0x90] sm:$0xff]
  %v220 = vld [vmem:[%s52 + $0x98] sm:$0xff]
  %v241 = vunpack.c.l.b16 %v201
  %v242 = vunpack.c.h.b16 %v201
  %v243 = vunpack.c.l.b16 %v202
  %v244 = vunpack.c.h.b16 %v202
  %v245 = vunpack.c.l.b16 %v203
  %v246 = vunpack.c.h.b16 %v203
  %v247 = vunpack.c.l.b16 %v204
  %v248 = vunpack.c.h.b16 %v204
  %v249 = vunpack.c.l.b16 %v205
  %v250 = vunpack.c.h.b16 %v205
  %v251 = vunpack.c.l.b16 %v206
  %v252 = vunpack.c.h.b16 %v206
  %v253 = vunpack.c.l.b16 %v207
  %v254 = vunpack.c.h.b16 %v207
  %v255 = vunpack.c.l.b16 %v208
  %v256 = vunpack.c.h.b16 %v208
  %v257 = vunpack.c.l.b16 %v209
  %v258 = vunpack.c.h.b16 %v209
  %v259 = vunpack.c.l.b16 %v210
  %v260 = vunpack.c.h.b16 %v210
  %v261 = vunpack.c.l.b16 %v211
  %v262 = vunpack.c.h.b16 %v211
  %v263 = vunpack.c.l.b16 %v212
  %v264 = vunpack.c.h.b16 %v212
  %v265 = vunpack.c.l.b16 %v213
  %v266 = vunpack.c.h.b16 %v213
  %v267 = vunpack.c.l.b16 %v214
  %v268 = vunpack.c.h.b16 %v214
  %v269 = vunpack.c.l.b16 %v215
  %v270 = vunpack.c.h.b16 %v215
  %v271 = vunpack.c.l.b16 %v216
  %v272 = vunpack.c.h.b16 %v216
  %v273 = vunpack.c.l.b16 %v217
  %v274 = vunpack.c.h.b16 %v217
  %v275 = vunpack.c.l.b16 %v218
  %v276 = vunpack.c.h.b16 %v218
  %v277 = vunpack.c.l.b16 %v219
  %v278 = vunpack.c.h.b16 %v219
  %v279 = vunpack.c.l.b16 %v220
  %v280 = vunpack.c.h.b16 %v220
  %v281 = vpack.c.b16 %v249, %v241
  %v282 = vpack.c.b16 %v250, %v242
  %v283 = vpack.c.b16 %v251, %v243
  %v284 = vpack.c.b16 %v252, %v244
  %v285 = vpack.c.b16 %v253, %v245
  %v286 = vpack.c.b16 %v254, %v246
  %v287 = vpack.c.b16 %v255, %v247
  %v288 = vpack.c.b16 %v256, %v248
  %v289 = vpack.c.b16 %v265, %v257
  %v290 = vpack.c.b16 %v266, %v258
  %v291 = vpack.c.b16 %v267, %v259
  %v292 = vpack.c.b16 %v268, %v260
  %v293 = vpack.c.b16 %v269, %v261
  %v294 = vpack.c.b16 %v270, %v262
  %v295 = vpack.c.b16 %v271, %v263
  %v296 = vpack.c.b16 %v272, %v264
  %v297 = vpack.c.b16 %v273, %v273
  %v298 = vpack.c.b16 %v274, %v274
  %v299 = vpack.c.b16 %v275, %v275
  %v300 = vpack.c.b16 %v276, %v276
  %v301 = vpack.c.b16 %v277, %v277
  %v302 = vpack.c.b16 %v278, %v278
  %v303 = vpack.c.b16 %v279, %v279
  %v304 = vpack.c.b16 %v280, %v280
  %v457 = vunpack.c.l.b16 %v73
  %v458 = vunpack.c.h.b16 %v73
  %v459 = vunpack.c.l.b16 %v74
  %v460 = vunpack.c.h.b16 %v74
  %v461 = vunpack.c.l.b16 %v75
  %v462 = vunpack.c.h.b16 %v75
  %v463 = vunpack.c.l.b16 %v76
  %v464 = vunpack.c.h.b16 %v76
  %v465 = vunpack.c.l.b16 %v77
  %v466 = vunpack.c.h.b16 %v77
  %v467 = vunpack.c.l.b16 %v78
  %v468 = vunpack.c.h.b16 %v78
  %v469 = vunpack.c.l.b16 %v79
  %v470 = vunpack.c.h.b16 %v79
  %v471 = vunpack.c.l.b16 %v80
  %v472 = vunpack.c.h.b16 %v80
  %v473 = vunpack.c.l.b16 %v81
  %v474 = vunpack.c.h.b16 %v81
  %v475 = vunpack.c.l.b16 %v82
  %v476 = vunpack.c.h.b16 %v82
  %v477 = vunpack.c.l.b16 %v83
  %v478 = vunpack.c.h.b16 %v83
  %v479 = vunpack.c.l.b16 %v84
  %v480 = vunpack.c.h.b16 %v84
  %v481 = vunpack.c.l.b16 %v85
  %v482 = vunpack.c.h.b16 %v85
  %v483 = vunpack.c.l.b16 %v86
  %v484 = vunpack.c.h.b16 %v86
  %v485 = vunpack.c.l.b16 %v87
  %v486 = vunpack.c.h.b16 %v87
  %v487 = vunpack.c.l.b16 %v88
  %v488 = vunpack.c.h.b16 %v88
  %v489 = vunpack.c.l.b16 %v89
  %v490 = vunpack.c.h.b16 %v89
  %v491 = vunpack.c.l.b16 %v90
  %v492 = vunpack.c.h.b16 %v90
  %v493 = vunpack.c.l.b16 %v91
  %v494 = vunpack.c.h.b16 %v91
  %v495 = vunpack.c.l.b16 %v92
  %v496 = vunpack.c.h.b16 %v92
  %v497 = vunpack.c.l.b16 %v93
  %v498 = vunpack.c.h.b16 %v93
  %v499 = vunpack.c.l.b16 %v94
  %v500 = vunpack.c.h.b16 %v94
  %v501 = vunpack.c.l.b16 %v95
  %v502 = vunpack.c.h.b16 %v95
  %v503 = vunpack.c.l.b16 %v96
  %v504 = vunpack.c.h.b16 %v96
  %v505 = vunpack.c.l.b16 %v97
  %v506 = vunpack.c.h.b16 %v97
  %v507 = vunpack.c.l.b16 %v98
  %v508 = vunpack.c.h.b16 %v98
  %v509 = vunpack.c.l.b16 %v99
  %v510 = vunpack.c.h.b16 %v99
  %v511 = vunpack.c.l.b16 %v100
  %v512 = vunpack.c.h.b16 %v100
  %v513 = vunpack.c.l.b16 %v101
  %v514 = vunpack.c.h.b16 %v101
  %v515 = vunpack.c.l.b16 %v102
  %v516 = vunpack.c.h.b16 %v102
  %v517 = vunpack.c.l.b16 %v103
  %v518 = vunpack.c.h.b16 %v103
  %v519 = vunpack.c.l.b16 %v104
  %v520 = vunpack.c.h.b16 %v104
  %v521 = vunpack.c.l.b16 %v105
  %v522 = vunpack.c.h.b16 %v105
  %v523 = vunpack.c.l.b16 %v106
  %v524 = vunpack.c.h.b16 %v106
  %v525 = vunpack.c.l.b16 %v107
  %v526 = vunpack.c.h.b16 %v107
  %v527 = vunpack.c.l.b16 %v108
  %v528 = vunpack.c.h.b16 %v108
  %v529 = vunpack.c.l.b16 %v109
  %v530 = vunpack.c.h.b16 %v109
  %v531 = vunpack.c.l.b16 %v110
  %v532 = vunpack.c.h.b16 %v110
  %v533 = vunpack.c.l.b16 %v111
  %v534 = vunpack.c.h.b16 %v111
  %v535 = vunpack.c.l.b16 %v112
  %v536 = vunpack.c.h.b16 %v112
  %v537 = vunpack.c.l.b16 %v113
  %v538 = vunpack.c.h.b16 %v113
  %v539 = vunpack.c.l.b16 %v114
  %v540 = vunpack.c.h.b16 %v114
  %v541 = vunpack.c.l.b16 %v115
  %v542 = vunpack.c.h.b16 %v115
  %v543 = vunpack.c.l.b16 %v116
  %v544 = vunpack.c.h.b16 %v116
  %v545 = vunpack.c.l.b16 %v117
  %v546 = vunpack.c.h.b16 %v117
  %v547 = vunpack.c.l.b16 %v118
  %v548 = vunpack.c.h.b16 %v118
  %v549 = vunpack.c.l.b16 %v119
  %v550 = vunpack.c.h.b16 %v119
  %v551 = vunpack.c.l.b16 %v120
  %v552 = vunpack.c.h.b16 %v120
  %v553 = vunpack.c.l.b16 %v121
  %v554 = vunpack.c.h.b16 %v121
  %v555 = vunpack.c.l.b16 %v122
  %v556 = vunpack.c.h.b16 %v122
  %v557 = vunpack.c.l.b16 %v123
  %v558 = vunpack.c.h.b16 %v123
  %v559 = vunpack.c.l.b16 %v124
  %v560 = vunpack.c.h.b16 %v124
  %v561 = vunpack.c.l.b16 %v125
  %v562 = vunpack.c.h.b16 %v125
  %v563 = vunpack.c.l.b16 %v126
  %v564 = vunpack.c.h.b16 %v126
  %v565 = vunpack.c.l.b16 %v127
  %v566 = vunpack.c.h.b16 %v127
  %v567 = vunpack.c.l.b16 %v128
  %v568 = vunpack.c.h.b16 %v128
  %v569 = vunpack.c.l.b16 %v129
  %v570 = vunpack.c.h.b16 %v129
  %v571 = vunpack.c.l.b16 %v130
  %v572 = vunpack.c.h.b16 %v130
  %v573 = vunpack.c.l.b16 %v131
  %v574 = vunpack.c.h.b16 %v131
  %v575 = vunpack.c.l.b16 %v132
  %v576 = vunpack.c.h.b16 %v132
  %v577 = vunpack.c.l.b16 %v133
  %v578 = vunpack.c.h.b16 %v133
  %v579 = vunpack.c.l.b16 %v134
  %v580 = vunpack.c.h.b16 %v134
  %v581 = vunpack.c.l.b16 %v135
  %v582 = vunpack.c.h.b16 %v135
  %v583 = vunpack.c.l.b16 %v136
  %v584 = vunpack.c.h.b16 %v136
  %v585 = vunpack.c.l.b16 %v137
  %v586 = vunpack.c.h.b16 %v137
  %v587 = vunpack.c.l.b16 %v138
  %v588 = vunpack.c.h.b16 %v138
  %v589 = vunpack.c.l.b16 %v139
  %v590 = vunpack.c.h.b16 %v139
  %v591 = vunpack.c.l.b16 %v140
  %v592 = vunpack.c.h.b16 %v140
  %v593 = vunpack.c.l.b16 %v141
  %v594 = vunpack.c.h.b16 %v141
  %v595 = vunpack.c.l.b16 %v142
  %v596 = vunpack.c.h.b16 %v142
  %v597 = vunpack.c.l.b16 %v143
  %v598 = vunpack.c.h.b16 %v143
  %v599 = vunpack.c.l.b16 %v144
  %v600 = vunpack.c.h.b16 %v144
  %v601 = vunpack.c.l.b16 %v145
  %v602 = vunpack.c.h.b16 %v145
  %v603 = vunpack.c.l.b16 %v146
  %v604 = vunpack.c.h.b16 %v146
  %v605 = vunpack.c.l.b16 %v147
  %v606 = vunpack.c.h.b16 %v147
  %v607 = vunpack.c.l.b16 %v148
  %v608 = vunpack.c.h.b16 %v148
  %v609 = vunpack.c.l.b16 %v149
  %v610 = vunpack.c.h.b16 %v149
  %v611 = vunpack.c.l.b16 %v150
  %v612 = vunpack.c.h.b16 %v150
  %v613 = vunpack.c.l.b16 %v151
  %v614 = vunpack.c.h.b16 %v151
  %v615 = vunpack.c.l.b16 %v152
  %v616 = vunpack.c.h.b16 %v152
  %v617 = vunpack.c.l.b16 %v153
  %v618 = vunpack.c.h.b16 %v153
  %v619 = vunpack.c.l.b16 %v154
  %v620 = vunpack.c.h.b16 %v154
  %v621 = vunpack.c.l.b16 %v155
  %v622 = vunpack.c.h.b16 %v155
  %v623 = vunpack.c.l.b16 %v156
  %v624 = vunpack.c.h.b16 %v156
  %v625 = vunpack.c.l.b16 %v157
  %v626 = vunpack.c.h.b16 %v157
  %v627 = vunpack.c.l.b16 %v158
  %v628 = vunpack.c.h.b16 %v158
  %v629 = vunpack.c.l.b16 %v159
  %v630 = vunpack.c.h.b16 %v159
  %v631 = vunpack.c.l.b16 %v160
  %v632 = vunpack.c.h.b16 %v160
  %v633 = vunpack.c.l.b16 %v161
  %v634 = vunpack.c.h.b16 %v161
  %v635 = vunpack.c.l.b16 %v162
  %v636 = vunpack.c.h.b16 %v162
  %v637 = vunpack.c.l.b16 %v163
  %v638 = vunpack.c.h.b16 %v163
  %v639 = vunpack.c.l.b16 %v164
  %v640 = vunpack.c.h.b16 %v164
  %v641 = vunpack.c.l.b16 %v165
  %v642 = vunpack.c.h.b16 %v165
  %v643 = vunpack.c.l.b16 %v166
  %v644 = vunpack.c.h.b16 %v166
  %v645 = vunpack.c.l.b16 %v167
  %v646 = vunpack.c.h.b16 %v167
  %v647 = vunpack.c.l.b16 %v168
  %v648 = vunpack.c.h.b16 %v168
  %v649 = vunpack.c.l.b16 %v169
  %v650 = vunpack.c.h.b16 %v169
  %v651 = vunpack.c.l.b16 %v170
  %v652 = vunpack.c.h.b16 %v170
  %v653 = vunpack.c.l.b16 %v171
  %v654 = vunpack.c.h.b16 %v171
  %v655 = vunpack.c.l.b16 %v172
  %v656 = vunpack.c.h.b16 %v172
  %v657 = vunpack.c.l.b16 %v173
  %v658 = vunpack.c.h.b16 %v173
  %v659 = vunpack.c.l.b16 %v174
  %v660 = vunpack.c.h.b16 %v174
  %v661 = vunpack.c.l.b16 %v175
  %v662 = vunpack.c.h.b16 %v175
  %v663 = vunpack.c.l.b16 %v176
  %v664 = vunpack.c.h.b16 %v176
  %v665 = vunpack.c.l.b16 %v177
  %v666 = vunpack.c.h.b16 %v177
  %v667 = vunpack.c.l.b16 %v178
  %v668 = vunpack.c.h.b16 %v178
  %v669 = vunpack.c.l.b16 %v179
  %v670 = vunpack.c.h.b16 %v179
  %v671 = vunpack.c.l.b16 %v180
  %v672 = vunpack.c.h.b16 %v180
  %v673 = vunpack.c.l.b16 %v181
  %v674 = vunpack.c.h.b16 %v181
  %v675 = vunpack.c.l.b16 %v182
  %v676 = vunpack.c.h.b16 %v182
  %v677 = vunpack.c.l.b16 %v183
  %v678 = vunpack.c.h.b16 %v183
  %v679 = vunpack.c.l.b16 %v184
  %v680 = vunpack.c.h.b16 %v184
  %v681 = vunpack.c.l.b16 %v185
  %v682 = vunpack.c.h.b16 %v185
  %v683 = vunpack.c.l.b16 %v186
  %v684 = vunpack.c.h.b16 %v186
  %v685 = vunpack.c.l.b16 %v187
  %v686 = vunpack.c.h.b16 %v187
  %v687 = vunpack.c.l.b16 %v188
  %v688 = vunpack.c.h.b16 %v188
  %v689 = vunpack.c.l.b16 %v189
  %v690 = vunpack.c.h.b16 %v189
  %v691 = vunpack.c.l.b16 %v190
  %v692 = vunpack.c.h.b16 %v190
  %v693 = vunpack.c.l.b16 %v191
  %v694 = vunpack.c.h.b16 %v191
  %v695 = vunpack.c.l.b16 %v192
  %v696 = vunpack.c.h.b16 %v192
  %v697 = vunpack.c.l.b16 %v193
  %v698 = vunpack.c.h.b16 %v193
  %v699 = vunpack.c.l.b16 %v194
  %v700 = vunpack.c.h.b16 %v194
  %v701 = vunpack.c.l.b16 %v195
  %v702 = vunpack.c.h.b16 %v195
  %v703 = vunpack.c.l.b16 %v196
  %v704 = vunpack.c.h.b16 %v196
  %v705 = vunpack.c.l.b16 %v197
  %v706 = vunpack.c.h.b16 %v197
  %v707 = vunpack.c.l.b16 %v198
  %v708 = vunpack.c.h.b16 %v198
  %v709 = vunpack.c.l.b16 %v199
  %v710 = vunpack.c.h.b16 %v199
  %v711 = vunpack.c.l.b16 %v200
  %v712 = vunpack.c.h.b16 %v200
  %v713 = vpack.c.b16 %v459, %v457
  %v714 = vpack.c.b16 %v460, %v458
  %v715 = vpack.c.b16 %v463, %v461
  %v716 = vpack.c.b16 %v464, %v462
  %v717 = vpack.c.b16 %v467, %v465
  %v718 = vpack.c.b16 %v468, %v466
  %v719 = vpack.c.b16 %v471, %v469
  %v720 = vpack.c.b16 %v472, %v470
  %v721 = vpack.c.b16 %v475, %v473
  %v722 = vpack.c.b16 %v476, %v474
  %v723 = vpack.c.b16 %v479, %v477
  %v724 = vpack.c.b16 %v480, %v478
  %v725 = vpack.c.b16 %v483, %v481
  %v726 = vpack.c.b16 %v484, %v482
  %v727 = vpack.c.b16 %v487, %v485
  %v728 = vpack.c.b16 %v488, %v486
  %v729 = vpack.c.b16 %v491, %v489
  %v730 = vpack.c.b16 %v492, %v490
  %v731 = vpack.c.b16 %v495, %v493
  %v732 = vpack.c.b16 %v496, %v494
  %v733 = vpack.c.b16 %v499, %v497
  %v734 = vpack.c.b16 %v500, %v498
  %v735 = vpack.c.b16 %v503, %v501
  %v736 = vpack.c.b16 %v504, %v502
  %v737 = vpack.c.b16 %v507, %v505
  %v738 = vpack.c.b16 %v508, %v506
  %v739 = vpack.c.b16 %v511, %v509
  %v740 = vpack.c.b16 %v512, %v510
  %v741 = vpack.c.b16 %v515, %v513
  %v742 = vpack.c.b16 %v516, %v514
  %v743 = vpack.c.b16 %v519, %v517
  %v744 = vpack.c.b16 %v520, %v518
  %v745 = vpack.c.b16 %v523, %v521
  %v746 = vpack.c.b16 %v524, %v522
  %v747 = vpack.c.b16 %v527, %v525
  %v748 = vpack.c.b16 %v528, %v526
  %v749 = vpack.c.b16 %v531, %v529
  %v750 = vpack.c.b16 %v532, %v530
  %v751 = vpack.c.b16 %v535, %v533
  %v752 = vpack.c.b16 %v536, %v534
  %v753 = vpack.c.b16 %v539, %v537
  %v754 = vpack.c.b16 %v540, %v538
  %v755 = vpack.c.b16 %v543, %v541
  %v756 = vpack.c.b16 %v544, %v542
  %v757 = vpack.c.b16 %v547, %v545
  %v758 = vpack.c.b16 %v548, %v546
  %v759 = vpack.c.b16 %v551, %v549
  %v760 = vpack.c.b16 %v552, %v550
  %v761 = vpack.c.b16 %v555, %v553
  %v762 = vpack.c.b16 %v556, %v554
  %v763 = vpack.c.b16 %v559, %v557
  %v764 = vpack.c.b16 %v560, %v558
  %v765 = vpack.c.b16 %v563, %v561
  %v766 = vpack.c.b16 %v564, %v562
  %v767 = vpack.c.b16 %v567, %v565
  %v768 = vpack.c.b16 %v568, %v566
  %v769 = vpack.c.b16 %v571, %v569
  %v770 = vpack.c.b16 %v572, %v570
  %v771 = vpack.c.b16 %v575, %v573
  %v772 = vpack.c.b16 %v576, %v574
  %v773 = vpack.c.b16 %v579, %v577
  %v774 = vpack.c.b16 %v580, %v578
  %v775 = vpack.c.b16 %v583, %v581
  %v776 = vpack.c.b16 %v584, %v582
  %v777 = vpack.c.b16 %v587, %v585
  %v778 = vpack.c.b16 %v588, %v586
  %v779 = vpack.c.b16 %v591, %v589
  %v780 = vpack.c.b16 %v592, %v590
  %v781 = vpack.c.b16 %v595, %v593
  %v782 = vpack.c.b16 %v596, %v594
  %v783 = vpack.c.b16 %v599, %v597
  %v784 = vpack.c.b16 %v600, %v598
  %v785 = vpack.c.b16 %v603, %v601
  %v786 = vpack.c.b16 %v604, %v602
  %v787 = vpack.c.b16 %v607, %v605
  %v788 = vpack.c.b16 %v608, %v606
  %v789 = vpack.c.b16 %v611, %v609
  %v790 = vpack.c.b16 %v612, %v610
  %v791 = vpack.c.b16 %v615, %v613
  %v792 = vpack.c.b16 %v616, %v614
  %v793 = vpack.c.b16 %v619, %v617
  %v794 = vpack.c.b16 %v620, %v618
  %v795 = vpack.c.b16 %v623, %v621
  %v796 = vpack.c.b16 %v624, %v622
  %v797 = vpack.c.b16 %v627, %v625
  %v798 = vpack.c.b16 %v628, %v626
  %v799 = vpack.c.b16 %v631, %v629
  %v800 = vpack.c.b16 %v632, %v630
  %v801 = vpack.c.b16 %v635, %v633
  %v802 = vpack.c.b16 %v636, %v634
  %v803 = vpack.c.b16 %v639, %v637
  %v804 = vpack.c.b16 %v640, %v638
  %v805 = vpack.c.b16 %v643, %v641
  %v806 = vpack.c.b16 %v644, %v642
  %v807 = vpack.c.b16 %v647, %v645
  %v808 = vpack.c.b16 %v648, %v646
  %v809 = vpack.c.b16 %v651, %v649
  %v810 = vpack.c.b16 %v652, %v650
  %v811 = vpack.c.b16 %v655, %v653
  %v812 = vpack.c.b16 %v656, %v654
  %v813 = vpack.c.b16 %v659, %v657
  %v814 = vpack.c.b16 %v660, %v658
  %v815 = vpack.c.b16 %v663, %v661
  %v816 = vpack.c.b16 %v664, %v662
  %v817 = vpack.c.b16 %v667, %v665
  %v818 = vpack.c.b16 %v668, %v666
  %v819 = vpack.c.b16 %v671, %v669
  %v820 = vpack.c.b16 %v672, %v670
  %v821 = vpack.c.b16 %v675, %v673
  %v822 = vpack.c.b16 %v676, %v674
  %v823 = vpack.c.b16 %v679, %v677
  %v824 = vpack.c.b16 %v680, %v678
  %v825 = vpack.c.b16 %v683, %v681
  %v826 = vpack.c.b16 %v684, %v682
  %v827 = vpack.c.b16 %v687, %v685
  %v828 = vpack.c.b16 %v688, %v686
  %v829 = vpack.c.b16 %v691, %v689
  %v830 = vpack.c.b16 %v692, %v690
  %v831 = vpack.c.b16 %v695, %v693
  %v832 = vpack.c.b16 %v696, %v694
  %v833 = vpack.c.b16 %v699, %v697
  %v834 = vpack.c.b16 %v700, %v698
  %v835 = vpack.c.b16 %v703, %v701
  %v836 = vpack.c.b16 %v704, %v702
  %v837 = vpack.c.b16 %v707, %v705
  %v838 = vpack.c.b16 %v708, %v706
  %v839 = vpack.c.b16 %v711, %v709
  %v840 = vpack.c.b16 %v712, %v710
  %969 = vmatprep.subr.bf16.mxu0 %v714
  %970 = vmatpush1.bf16.msra.mxu0 %v713
  %971 = vmatprep.subr.bf16.mxu0 %v716
  %972 = vmatpush1.bf16.msra.mxu0 %v715
  %973 = vmatprep.subr.bf16.mxu0 %v718
  %974 = vmatpush1.bf16.msra.mxu0 %v717
  %975 = vmatprep.subr.bf16.mxu0 %v720
  %976 = vmatpush1.bf16.msra.mxu0 %v719
  %977 = vmatprep.subr.bf16.mxu0 %v722
  %978 = vmatpush1.bf16.msra.mxu0 %v721
  %979 = vmatprep.subr.bf16.mxu0 %v724
  %980 = vmatpush1.bf16.msra.mxu0 %v723
  %981 = vmatprep.subr.bf16.mxu0 %v726
  %982 = vmatpush1.bf16.msra.mxu0 %v725
  %983 = vmatprep.subr.bf16.mxu0 %v728
  %984 = vmatpush1.bf16.msra.mxu0 %v727
  %985 = vmatprep.subr.bf16.mxu0 %v730
  %986 = vmatpush1.bf16.msra.mxu0 %v729
  %987 = vmatprep.subr.bf16.mxu0 %v732
  %988 = vmatpush1.bf16.msra.mxu0 %v731
  %989 = vmatprep.subr.bf16.mxu0 %v734
  %990 = vmatpush1.bf16.msra.mxu0 %v733
  %991 = vmatprep.subr.bf16.mxu0 %v736
  %992 = vmatpush1.bf16.msra.mxu0 %v735
  %993 = vmatprep.subr.bf16.mxu0 %v738
  %994 = vmatpush1.bf16.msra.mxu0 %v737
  %995 = vmatprep.subr.bf16.mxu0 %v740
  %996 = vmatpush1.bf16.msra.mxu0 %v739
  %997 = vmatprep.subr.bf16.mxu0 %v742
  %998 = vmatpush1.bf16.msra.mxu0 %v741
  %999 = vmatprep.subr.bf16.mxu0 %v744
  %1000 = vmatpush1.bf16.msra.mxu0 %v743
  %1001 = vmatprep.mubr.bf16.mxu0 %v282
  %1002 = vmatmul.mubr.bf16.gmra.mrb[0].mxu0 %v281
  %v1003 = vpop.f32.mrb[0].mxu0
  %v1004 = vadd.f32 0.0, %v1003
  %v1005 = vpop.f32.mrb[0].mxu0
  %v1006 = vadd.f32 0.0, %v1005
  %v1007 = vpop.f32.mrb[0].mxu0
  %v1008 = vadd.f32 0.0, %v1007
  %v1009 = vpop.f32.mrb[0].mxu0
  %v1010 = vadd.f32 0.0, %v1009
  %1011 = vmatprep.mubr.bf16.mxu0 %v290
  %1012 = vmatmul.mubr.bf16.gmra.mrb[0].mxu0 %v289
  %v1013 = vpop.f32.mrb[0].mxu0
  %v1014 = vadd.f32 0.0, %v1013
  %v1015 = vpop.f32.mrb[0].mxu0
  %v1016 = vadd.f32 0.0, %v1015
  %v1017 = vpop.f32.mrb[0].mxu0
  %v1018 = vadd.f32 0.0, %v1017
  %v1019 = vpop.f32.mrb[0].mxu0
  %v1020 = vadd.f32 0.0, %v1019
  %1021 = vmatprep.mubr.bf16.mxu0 %v298
  %1022 = vmatmul.mubr.bf16.gmra.mrb[0].mxu0 %v297
  %v1023 = vpop.f32.mrb[0].mxu0
  %v1024 = vadd.f32 0.0, %v1023
  %v1025 = vpop.f32.mrb[0].mxu0
  %v1026 = vadd.f32 0.0, %v1025
  %v1027 = vpop.f32.mrb[0].mxu0
  %v1028 = vpop.f32.mrb[0].mxu0
  %1029 = vdwg.mxu0
  %1030 = vmatprep.subr.bf16.mxu0 %v746
  %1031 = vmatpush1.bf16.msra.mxu0 %v745
  %1032 = vmatprep.subr.bf16.mxu0 %v748
  %1033 = vmatpush1.bf16.msra.mxu0 %v747
  %1034 = vmatprep.subr.bf16.mxu0 %v750
  %1035 = vmatpush1.bf16.msra.mxu0 %v749
  %1036 = vmatprep.subr.bf16.mxu0 %v752
  %1037 = vmatpush1.bf16.msra.mxu0 %v751
  %1038 = vmatprep.subr.bf16.mxu0 %v754
  %1039 = vmatpush1.bf16.msra.mxu0 %v753
  %1040 = vmatprep.subr.bf16.mxu0 %v756
  %1041 = vmatpush1.bf16.msra.mxu0 %v755
  %1042 = vmatprep.subr.bf16.mxu0 %v758
  %1043 = vmatpush1.bf16.msra.mxu0 %v757
  %1044 = vmatprep.subr.bf16.mxu0 %v760
  %1045 = vmatpush1.bf16.msra.mxu0 %v759
  %1046 = vmatprep.subr.bf16.mxu0 %v762
  %1047 = vmatpush1.bf16.msra.mxu0 %v761
  %1048 = vmatprep.subr.bf16.mxu0 %v764
  %1049 = vmatpush1.bf16.msra.mxu0 %v763
  %1050 = vmatprep.subr.bf16.mxu0 %v766
  %1051 = vmatpush1.bf16.msra.mxu0 %v765
  %1052 = vmatprep.subr.bf16.mxu0 %v768
  %1053 = vmatpush1.bf16.msra.mxu0 %v767
  %1054 = vmatprep.subr.bf16.mxu0 %v770
  %1055 = vmatpush1.bf16.msra.mxu0 %v769
  %1056 = vmatprep.subr.bf16.mxu0 %v772
  %1057 = vmatpush1.bf16.msra.mxu0 %v771
  %1058 = vmatprep.subr.bf16.mxu0 %v774
  %1059 = vmatpush1.bf16.msra.mxu0 %v773
  %1060 = vmatprep.subr.bf16.mxu0 %v776
  %1061 = vmatpush1.bf16.msra.mxu0 %v775
  %1062 = vmatprep.mubr.bf16.mxu0 %v284
  %1063 = vmatmul.mubr.bf16.gmra.mrb[0].mxu0 %v283
  %v1064 = vpop.f32.mrb[0].mxu0
  %v1065 = vadd.f32 %v1004, %v1064
  %v1066 = vpop.f32.mrb[0].mxu0
  %v1067 = vadd.f32 %v1006, %v1066
  %v1068 = vpop.f32.mrb[0].mxu0
  %v1069 = vadd.f32 %v1008, %v1068
  %v1070 = vpop.f32.mrb[0].mxu0
  %v1071 = vadd.f32 %v1010, %v1070
  %1072 = vmatprep.mubr.bf16.mxu0 %v292
  %1073 = vmatmul.mubr.bf16.gmra.mrb[0].mxu0 %v291
  %v1074 = vpop.f32.mrb[0].mxu0
  %v1075 = vadd.f32 %v1014, %v1074
  %v1076 = vpop.f32.mrb[0].mxu0
  %v1077 = vadd.f32 %v1016, %v1076
  %v1078 = vpop.f32.mrb[0].mxu0
  %v1079 = vadd.f32 %v1018, %v1078
  %v1080 = vpop.f32.mrb[0].mxu0
  %v1081 = vadd.f32 %v1020, %v1080
  %1082 = vmatprep.mubr.bf16.mxu0 %v300
  %1083 = vmatmul.mubr.bf16.gmra.mrb[0].mxu0 %v299
  %v1084 = vpop.f32.mrb[0].mxu0
  %v1085 = vadd.f32 %v1024, %v1084
  %v1086 = vpop.f32.mrb[0].mxu0
  %v1087 = vadd.f32 %v1026, %v1086
  %v1088 = vpop.f32.mrb[0].mxu0
  %v1089 = vpop.f32.mrb[0].mxu0
  %1090 = vdwg.mxu0
  %1091 = vmatprep.subr.bf16.mxu0 %v778
  %1092 = vmatpush1.bf16.msra.mxu0 %v777
  %1093 = vmatprep.subr.bf16.mxu0 %v780
  %1094 = vmatpush1.bf16.msra.mxu0 %v779
  %1095 = vmatprep.subr.bf16.mxu0 %v782
  %1096 = vmatpush1.bf16.msra.mxu0 %v781
  %1097 = vmatprep.subr.bf16.mxu0 %v784
  %1098 = vmatpush1.bf16.msra.mxu0 %v783
  %1099 = vmatprep.subr.bf16.mxu0 %v786
  %1100 = vmatpush1.bf16.msra.mxu0 %v785
  %1101 = vmatprep.subr.bf16.mxu0 %v788
  %1102 = vmatpush1.bf16.msra.mxu0 %v787
  %1103 = vmatprep.subr.bf16.mxu0 %v790
  %1104 = vmatpush1.bf16.msra.mxu0 %v789
  %1105 = vmatprep.subr.bf16.mxu0 %v792
  %1106 = vmatpush1.bf16.msra.mxu0 %v791
  %1107 = vmatprep.subr.bf16.mxu0 %v794
  %1108 = vmatpush1.bf16.msra.mxu0 %v793
  %1109 = vmatprep.subr.bf16.mxu0 %v796
  %1110 = vmatpush1.bf16.msra.mxu0 %v795
  %1111 = vmatprep.subr.bf16.mxu0 %v798
  %1112 = vmatpush1.bf16.msra.mxu0 %v797
  %1113 = vmatprep.subr.bf16.mxu0 %v800
  %1114 = vmatpush1.bf16.msra.mxu0 %v799
  %1115 = vmatprep.subr.bf16.mxu0 %v802
  %1116 = vmatpush1.bf16.msra.mxu0 %v801
  %1117 = vmatprep.subr.bf16.mxu0 %v804
  %1118 = vmatpush1.bf16.msra.mxu0 %v803
  %1119 = vmatprep.subr.bf16.mxu0 %v806
  %1120 = vmatpush1.bf16.msra.mxu0 %v805
  %1121 = vmatprep.subr.bf16.mxu0 %v808
  %1122 = vmatpush1.bf16.msra.mxu0 %v807
  %1123 = vmatprep.mubr.bf16.mxu0 %v286
  %1124 = vmatmul.mubr.bf16.gmra.mrb[0].mxu0 %v285
  %v1125 = vpop.f32.mrb[0].mxu0
  %v1126 = vadd.f32 %v1065, %v1125
  %v1127 = vpop.f32.mrb[0].mxu0
  %v1128 = vadd.f32 %v1067, %v1127
  %v1129 = vpop.f32.mrb[0].mxu0
  %v1130 = vadd.f32 %v1069, %v1129
  %v1131 = vpop.f32.mrb[0].mxu0
  %v1132 = vadd.f32 %v1071, %v1131
  %1133 = vmatprep.mubr.bf16.mxu0 %v294
  %1134 = vmatmul.mubr.bf16.gmra.mrb[0].mxu0 %v293
  %v1135 = vpop.f32.mrb[0].mxu0
  %v1136 = vadd.f32 %v1075, %v1135
  %v1137 = vpop.f32.mrb[0].mxu0
  %v1138 = vadd.f32 %v1077, %v1137
  %v1139 = vpop.f32.mrb[0].mxu0
  %v1140 = vadd.f32 %v1079, %v1139
  %v1141 = vpop.f32.mrb[0].mxu0
  %v1142 = vadd.f32 %v1081, %v1141
  %1143 = vmatprep.mubr.bf16.mxu0 %v302
  %1144 = vmatmul.mubr.bf16.gmra.mrb[0].mxu0 %v301
  %v1145 = vpop.f32.mrb[0].mxu0
  %v1146 = vadd.f32 %v1085, %v1145
  %v1147 = vpop.f32.mrb[0].mxu0
  %v1148 = vadd.f32 %v1087, %v1147
  %v1149 = vpop.f32.mrb[0].mxu0
  %v1150 = vpop.f32.mrb[0].mxu0
  %1151 = vdwg.mxu0
  %1152 = vmatprep.subr.bf16.mxu0 %v810
  %1153 = vmatpush1.bf16.msra.mxu0 %v809
  %1154 = vmatprep.subr.bf16.mxu0 %v812
  %1155 = vmatpush1.bf16.msra.mxu0 %v811
  %1156 = vmatprep.subr.bf16.mxu0 %v814
  %1157 = vmatpush1.bf16.msra.mxu0 %v813
  %1158 = vmatprep.subr.bf16.mxu0 %v816
  %1159 = vmatpush1.bf16.msra.mxu0 %v815
  %1160 = vmatprep.subr.bf16.mxu0 %v818
  %1161 = vmatpush1.bf16.msra.mxu0 %v817
  %1162 = vmatprep.subr.bf16.mxu0 %v820
  %1163 = vmatpush1.bf16.msra.mxu0 %v819
  %1164 = vmatprep.subr.bf16.mxu0 %v822
  %1165 = vmatpush1.bf16.msra.mxu0 %v821
  %1166 = vmatprep.subr.bf16.mxu0 %v824
  %1167 = vmatpush1.bf16.msra.mxu0 %v823
  %1168 = vmatprep.subr.bf16.mxu0 %v826
  %1169 = vmatpush1.bf16.msra.mxu0 %v825
  %1170 = vmatprep.subr.bf16.mxu0 %v828
  %1171 = vmatpush1.bf16.msra.mxu0 %v827
  %1172 = vmatprep.subr.bf16.mxu0 %v830
  %1173 = vmatpush1.bf16.msra.mxu0 %v829
  %1174 = vmatprep.subr.bf16.mxu0 %v832
  %1175 = vmatpush1.bf16.msra.mxu0 %v831
  %1176 = vmatprep.subr.bf16.mxu0 %v834
  %1177 = vmatpush1.bf16.msra.mxu0 %v833
  %1178 = vmatprep.subr.bf16.mxu0 %v836
  %1179 = vmatpush1.bf16.msra.mxu0 %v835
  %1180 = vmatprep.subr.bf16.mxu0 %v838
  %1181 = vmatpush1.bf16.msra.mxu0 %v837
  %1182 = vmatprep.subr.bf16.mxu0 %v840
  %1183 = vmatpush1.bf16.msra.mxu0 %v839
  %1184 = vmatprep.mubr.bf16.mxu0 %v288
  %1185 = vmatmul.mubr.bf16.gmra.mrb[0].mxu0 %v287
  %v1186 = vpop.f32.mrb[0].mxu0
  %v1187 = vadd.f32 %v1126, %v1186
  %v1188 = vpop.f32.mrb[0].mxu0
  %v1189 = vadd.f32 %v1128, %v1188
  %v1190 = vpop.f32.mrb[0].mxu0
  %v1191 = vadd.f32 %v1130, %v1190
  %v1192 = vpop.f32.mrb[0].mxu0
  %v1193 = vadd.f32 %v1132, %v1192
  %1194 = vmatprep.mubr.bf16.mxu0 %v296
  %1195 = vmatmul.mubr.bf16.gmra.mrb[0].mxu0 %v295
  %v1196 = vpop.f32.mrb[0].mxu0
  %v1197 = vadd.f32 %v1136, %v1196
  %v1198 = vpop.f32.mrb[0].mxu0
  %v1199 = vadd.f32 %v1138, %v1198
  %v1200 = vpop.f32.mrb[0].mxu0
  %v1201 = vadd.f32 %v1140, %v1200
  %v1202 = vpop.f32.mrb[0].mxu0
  %v1203 = vadd.f32 %v1142, %v1202
  %1204 = vmatprep.mubr.bf16.mxu0 %v304
  %1205 = vmatmul.mubr.bf16.gmra.mrb[0].mxu0 %v303
  %v1206 = vpop.f32.mrb[0].mxu0
  %v1207 = vadd.f32 %v1146, %v1206
  %v1208 = vpop.f32.mrb[0].mxu0
  %v1209 = vadd.f32 %v1148, %v1208
  %v1210 = vpop.f32.mrb[0].mxu0
  %v1211 = vpop.f32.mrb[0].mxu0
  %1212 = vdwg.mxu0
  %v1213 = vld [vmem:[%s61] sm:$0xff]
  %v1214 = vld [vmem:[%s61 + $0x8] sm:$0xff]
  %v1215 = vld [vmem:[%s61 + $0x10] sm:$0xff]
  %v1216 = vld [vmem:[%s61 + $0x18] sm:$0xff]
  %v1217 = vld [vmem:[%s61 + $0x20] sm:$0xff]
  %v1218 = vld [vmem:[%s61 + $0x28] sm:$0xff]
  %v1219 = vld [vmem:[%s61 + $0x30] sm:$0xff]
  %v1220 = vld [vmem:[%s61 + $0x38] sm:$0xff]
  %v1221 = vld [vmem:[%s61 + $0x40] sm:$0xff]
  %v1222 = vld [vmem:[%s61 + $0x48] sm:$0xff]
  %v1223 = vld [vmem:[%s61 + $0x50] sm:$0xff]
  %v1224 = vld [vmem:[%s61 + $0x58] sm:$0xff]
  %v1225 = vld [vmem:[%s61 + $0x60] sm:$0xff]
  %v1226 = vld [vmem:[%s61 + $0x68] sm:$0xff]
  %v1227 = vld [vmem:[%s61 + $0x70] sm:$0xff]
  %v1228 = vld [vmem:[%s61 + $0x78] sm:$0xff]
  %v1229 = vld [vmem:[%s61 + $0x80] sm:$0xff]
  %v1230 = vld [vmem:[%s61 + $0x88] sm:$0xff]
  %v1231 = vld [vmem:[%s61 + $0x90] sm:$0xff]
  %v1232 = vld [vmem:[%s61 + $0x98] sm:$0xff]
  %v1253 = vunpack.c.l.b16 %v1213
  %v1254 = vunpack.c.h.b16 %v1213
  %v1255 = vunpack.c.l.b16 %v1214
  %v1256 = vunpack.c.h.b16 %v1214
  %v1257 = vunpack.c.l.b16 %v1215
  %v1258 = vunpack.c.h.b16 %v1215
  %v1259 = vunpack.c.l.b16 %v1216
  %v1260 = vunpack.c.h.b16 %v1216
  %v1261 = vunpack.c.l.b16 %v1217
  %v1262 = vunpack.c.h.b16 %v1217
  %v1263 = vunpack.c.l.b16 %v1218
  %v1264 = vunpack.c.h.b16 %v1218
  %v1265 = vunpack.c.l.b16 %v1219
  %v1266 = vunpack.c.h.b16 %v1219
  %v1267 = vunpack.c.l.b16 %v1220
  %v1268 = vunpack.c.h.b16 %v1220
  %v1269 = vunpack.c.l.b16 %v1221
  %v1270 = vunpack.c.h.b16 %v1221
  %v1271 = vunpack.c.l.b16 %v1222
  %v1272 = vunpack.c.h.b16 %v1222
  %v1273 = vunpack.c.l.b16 %v1223
  %v1274 = vunpack.c.h.b16 %v1223
  %v1275 = vunpack.c.l.b16 %v1224
  %v1276 = vunpack.c.h.b16 %v1224
  %v1277 = vunpack.c.l.b16 %v1225
  %v1278 = vunpack.c.h.b16 %v1225
  %v1279 = vunpack.c.l.b16 %v1226
  %v1280 = vunpack.c.h.b16 %v1226
  %v1281 = vunpack.c.l.b16 %v1227
  %v1282 = vunpack.c.h.b16 %v1227
  %v1283 = vunpack.c.l.b16 %v1228
  %v1284 = vunpack.c.h.b16 %v1228
  %v1285 = vunpack.c.l.b16 %v1229
  %v1286 = vunpack.c.h.b16 %v1229
  %v1287 = vunpack.c.l.b16 %v1230
  %v1288 = vunpack.c.h.b16 %v1230
  %v1289 = vunpack.c.l.b16 %v1231
  %v1290 = vunpack.c.h.b16 %v1231
  %v1291 = vunpack.c.l.b16 %v1232
  %v1292 = vunpack.c.h.b16 %v1232
  %v1293 = vpack.c.b16 %v1261, %v1253
  %v1294 = vpack.c.b16 %v1262, %v1254
  %v1295 = vpack.c.b16 %v1263, %v1255
  %v1296 = vpack.c.b16 %v1264, %v1256
  %v1297 = vpack.c.b16 %v1265, %v1257
  %v1298 = vpack.c.b16 %v1266, %v1258
  %v1299 = vpack.c.b16 %v1267, %v1259
  %v1300 = vpack.c.b16 %v1268, %v1260
  %v1301 = vpack.c.b16 %v1277, %v1269
  %v1302 = vpack.c.b16 %v1278, %v1270
  %v1303 = vpack.c.b16 %v1279, %v1271
  %v1304 = vpack.c.b16 %v1280, %v1272
  %v1305 = vpack.c.b16 %v1281, %v1273
  %v1306 = vpack.c.b16 %v1282, %v1274
  %v1307 = vpack.c.b16 %v1283, %v1275
  %v1308 = vpack.c.b16 %v1284, %v1276
  %v1309 = vpack.c.b16 %v1285, %v1285
  %v1310 = vpack.c.b16 %v1286, %v1286
  %v1311 = vpack.c.b16 %v1287, %v1287
  %v1312 = vpack.c.b16 %v1288, %v1288
  %v1313 = vpack.c.b16 %v1289, %v1289
  %v1314 = vpack.c.b16 %v1290, %v1290
  %v1315 = vpack.c.b16 %v1291, %v1291
  %v1316 = vpack.c.b16 %v1292, %v1292
  %1341 = vmatprep.subr.bf16.mxu0 %v714
  %1342 = vmatpush1.bf16.msra.mxu0 %v713
  %1343 = vmatprep.subr.bf16.mxu0 %v716
  %1344 = vmatpush1.bf16.msra.mxu0 %v715
  %1345 = vmatprep.subr.bf16.mxu0 %v718
  %1346 = vmatpush1.bf16.msra.mxu0 %v717
  %1347 = vmatprep.subr.bf16.mxu0 %v720
  %1348 = vmatpush1.bf16.msra.mxu0 %v719
  %1349 = vmatprep.subr.bf16.mxu0 %v722
  %1350 = vmatpush1.bf16.msra.mxu0 %v721
  %1351 = vmatprep.subr.bf16.mxu0 %v724
  %1352 = vmatpush1.bf16.msra.mxu0 %v723
  %1353 = vmatprep.subr.bf16.mxu0 %v726
  %1354 = vmatpush1.bf16.msra.mxu0 %v725
  %1355 = vmatprep.subr.bf16.mxu0 %v728
  %1356 = vmatpush1.bf16.msra.mxu0 %v727
  %1357 = vmatprep.subr.bf16.mxu0 %v730
  %1358 = vmatpush1.bf16.msra.mxu0 %v729
  %1359 = vmatprep.subr.bf16.mxu0 %v732
  %1360 = vmatpush1.bf16.msra.mxu0 %v731
  %1361 = vmatprep.subr.bf16.mxu0 %v734
  %1362 = vmatpush1.bf16.msra.mxu0 %v733
  %1363 = vmatprep.subr.bf16.mxu0 %v736
  %1364 = vmatpush1.bf16.msra.mxu0 %v735
  %1365 = vmatprep.subr.bf16.mxu0 %v738
  %1366 = vmatpush1.bf16.msra.mxu0 %v737
  %1367 = vmatprep.subr.bf16.mxu0 %v740
  %1368 = vmatpush1.bf16.msra.mxu0 %v739
  %1369 = vmatprep.subr.bf16.mxu0 %v742
  %1370 = vmatpush1.bf16.msra.mxu0 %v741
  %1371 = vmatprep.subr.bf16.mxu0 %v744
  %1372 = vmatpush1.bf16.msra.mxu0 %v743
  %1373 = vmatprep.mubr.bf16.mxu0 %v1294
  %1374 = vmatmul.mubr.bf16.gmra.mrb[0].mxu0 %v1293
  %v1375 = vpop.f32.mrb[0].mxu0
  %v1376 = vadd.f32 0.0, %v1375
  %v1377 = vpop.f32.mrb[0].mxu0
  %v1378 = vadd.f32 0.0, %v1377
  %v1379 = vpop.f32.mrb[0].mxu0
  %v1380 = vadd.f32 0.0, %v1379
  %v1381 = vpop.f32.mrb[0].mxu0
  %v1382 = vadd.f32 0.0, %v1381
  %1383 = vmatprep.mubr.bf16.mxu0 %v1302
  %1384 = vmatmul.mubr.bf16.gmra.mrb[0].mxu0 %v1301
  %v1385 = vpop.f32.mrb[0].mxu0
  %v1386 = vadd.f32 0.0, %v1385
  %v1387 = vpop.f32.mrb[0].mxu0
  %v1388 = vadd.f32 0.0, %v1387
  %v1389 = vpop.f32.mrb[0].mxu0
  %v1390 = vadd.f32 0.0, %v1389
  %v1391 = vpop.f32.mrb[0].mxu0
  %v1392 = vadd.f32 0.0, %v1391
  %1393 = vmatprep.mubr.bf16.mxu0 %v1310
  %1394 = vmatmul.mubr.bf16.gmra.mrb[0].mxu0 %v1309
  %v1395 = vpop.f32.mrb[0].mxu0
  %v1396 = vadd.f32 0.0, %v1395
  %v1397 = vpop.f32.mrb[0].mxu0
  %v1398 = vadd.f32 0.0, %v1397
  %v1399 = vpop.f32.mrb[0].mxu0
  %v1400 = vpop.f32.mrb[0].mxu0
  %1401 = vdwg.mxu0
  %1402 = vmatprep.subr.bf16.mxu0 %v746
  %1403 = vmatpush1.bf16.msra.mxu0 %v745
  %1404 = vmatprep.subr.bf16.mxu0 %v748
  %1405 = vmatpush1.bf16.msra.mxu0 %v747
  %1406 = vmatprep.subr.bf16.mxu0 %v750
  %1407 = vmatpush1.bf16.msra.mxu0 %v749
  %1408 = vmatprep.subr.bf16.mxu0 %v752
  %1409 = vmatpush1.bf16.msra.mxu0 %v751
  %1410 = vmatprep.subr.bf16.mxu0 %v754
  %1411 = vmatpush1.bf16.msra.mxu0 %v753
  %1412 = vmatprep.subr.bf16.mxu0 %v756
  %1413 = vmatpush1.bf16.msra.mxu0 %v755
  %1414 = vmatprep.subr.bf16.mxu0 %v758
  %1415 = vmatpush1.bf16.msra.mxu0 %v757
  %1416 = vmatprep.subr.bf16.mxu0 %v760
  %1417 = vmatpush1.bf16.msra.mxu0 %v759
  %1418 = vmatprep.subr.bf16.mxu0 %v762
  %1419 = vmatpush1.bf16.msra.mxu0 %v761
  %1420 = vmatprep.subr.bf16.mxu0 %v764
  %1421 = vmatpush1.bf16.msra.mxu0 %v763
  %1422 = vmatprep.subr.bf16.mxu0 %v766
  %1423 = vmatpush1.bf16.msra.mxu0 %v765
  %1424 = vmatprep.subr.bf16.mxu0 %v768
  %1425 = vmatpush1.bf16.msra.mxu0 %v767
  %1426 = vmatprep.subr.bf16.mxu0 %v770
  %1427 = vmatpush1.bf16.msra.mxu0 %v769
  %1428 = vmatprep.subr.bf16.mxu0 %v772
  %1429 = vmatpush1.bf16.msra.mxu0 %v771
  %1430 = vmatprep.subr.bf16.mxu0 %v774
  %1431 = vmatpush1.bf16.msra.mxu0 %v773
  %1432 = vmatprep.subr.bf16.mxu0 %v776
  %1433 = vmatpush1.bf16.msra.mxu0 %v775
  %1434 = vmatprep.mubr.bf16.mxu0 %v1296
  %1435 = vmatmul.mubr.bf16.gmra.mrb[0].mxu0 %v1295
  %v1436 = vpop.f32.mrb[0].mxu0
  %v1437 = vadd.f32 %v1376, %v1436
  %v1438 = vpop.f32.mrb[0].mxu0
  %v1439 = vadd.f32 %v1378, %v1438
  %v1440 = vpop.f32.mrb[0].mxu0
  %v1441 = vadd.f32 %v1380, %v1440
  %v1442 = vpop.f32.mrb[0].mxu0
  %v1443 = vadd.f32 %v1382, %v1442
  %1444 = vmatprep.mubr.bf16.mxu0 %v1304
  %1445 = vmatmul.mubr.bf16.gmra.mrb[0].mxu0 %v1303
  %v1446 = vpop.f32.mrb[0].mxu0
  %v1447 = vadd.f32 %v1386, %v1446
  %v1448 = vpop.f32.mrb[0].mxu0
  %v1449 = vadd.f32 %v1388, %v1448
  %v1450 = vpop.f32.mrb[0].mxu0
  %v1451 = vadd.f32 %v1390, %v1450
  %v1452 = vpop.f32.mrb[0].mxu0
  %v1453 = vadd.f32 %v1392, %v1452
  %1454 = vmatprep.mubr.bf16.mxu0 %v1312
  %1455 = vmatmul.mubr.bf16.gmra.mrb[0].mxu0 %v1311
  %v1456 = vpop.f32.mrb[0].mxu0
  %v1457 = vadd.f32 %v1396, %v1456
  %v1458 = vpop.f32.mrb[0].mxu0
  %v1459 = vadd.f32 %v1398, %v1458
  %v1460 = vpop.f32.mrb[0].mxu0
  %v1461 = vpop.f32.mrb[0].mxu0
  %1462 = vdwg.mxu0
  %1463 = vmatprep.subr.bf16.mxu0 %v778
  %1464 = vmatpush1.bf16.msra.mxu0 %v777
  %1465 = vmatprep.subr.bf16.mxu0 %v780
  %1466 = vmatpush1.bf16.msra.mxu0 %v779
  %1467 = vmatprep.subr.bf16.mxu0 %v782
  %1468 = vmatpush1.bf16.msra.mxu0 %v781
  %1469 = vmatprep.subr.bf16.mxu0 %v784
  %1470 = vmatpush1.bf16.msra.mxu0 %v783
  %1471 = vmatprep.subr.bf16.mxu0 %v786
  %1472 = vmatpush1.bf16.msra.mxu0 %v785
  %1473 = vmatprep.subr.bf16.mxu0 %v788
  %1474 = vmatpush1.bf16.msra.mxu0 %v787
  %1475 = vmatprep.subr.bf16.mxu0 %v790
  %1476 = vmatpush1.bf16.msra.mxu0 %v789
  %1477 = vmatprep.subr.bf16.mxu0 %v792
  %1478 = vmatpush1.bf16.msra.mxu0 %v791
  %1479 = vmatprep.subr.bf16.mxu0 %v794
  %1480 = vmatpush1.bf16.msra.mxu0 %v793
  %1481 = vmatprep.subr.bf16.mxu0 %v796
  %1482 = vmatpush1.bf16.msra.mxu0 %v795
  %1483 = vmatprep.subr.bf16.mxu0 %v798
  %1484 = vmatpush1.bf16.msra.mxu0 %v797
  %1485 = vmatprep.subr.bf16.mxu0 %v800
  %1486 = vmatpush1.bf16.msra.mxu0 %v799
  %1487 = vmatprep.subr.bf16.mxu0 %v802
  %1488 = vmatpush1.bf16.msra.mxu0 %v801
  %1489 = vmatprep.subr.bf16.mxu0 %v804
  %1490 = vmatpush1.bf16.msra.mxu0 %v803
  %1491 = vmatprep.subr.bf16.mxu0 %v806
  %1492 = vmatpush1.bf16.msra.mxu0 %v805
  %1493 = vmatprep.subr.bf16.mxu0 %v808
  %1494 = vmatpush1.bf16.msra.mxu0 %v807
  %1495 = vmatprep.mubr.bf16.mxu0 %v1298
  %1496 = vmatmul.mubr.bf16.gmra.mrb[0].mxu0 %v1297
  %v1497 = vpop.f32.mrb[0].mxu0
  %v1498 = vadd.f32 %v1437, %v1497
  %v1499 = vpop.f32.mrb[0].mxu0
  %v1500 = vadd.f32 %v1439, %v1499
  %v1501 = vpop.f32.mrb[0].mxu0
  %v1502 = vadd.f32 %v1441, %v1501
  %v1503 = vpop.f32.mrb[0].mxu0
  %v1504 = vadd.f32 %v1443, %v1503
  %1505 = vmatprep.mubr.bf16.mxu0 %v1306
  %1506 = vmatmul.mubr.bf16.gmra.mrb[0].mxu0 %v1305
  %v1507 = vpop.f32.mrb[0].mxu0
  %v1508 = vadd.f32 %v1447, %v1507
  %v1509 = vpop.f32.mrb[0].mxu0
  %v1510 = vadd.f32 %v1449, %v1509
  %v1511 = vpop.f32.mrb[0].mxu0
  %v1512 = vadd.f32 %v1451, %v1511
  %v1513 = vpop.f32.mrb[0].mxu0
  %v1514 = vadd.f32 %v1453, %v1513
  %1515 = vmatprep.mubr.bf16.mxu0 %v1314
  %1516 = vmatmul.mubr.bf16.gmra.mrb[0].mxu0 %v1313
  %v1517 = vpop.f32.mrb[0].mxu0
  %v1518 = vadd.f32 %v1457, %v1517
  %v1519 = vpop.f32.mrb[0].mxu0
  %v1520 = vadd.f32 %v1459, %v1519
  %v1521 = vpop.f32.mrb[0].mxu0
  %v1522 = vpop.f32.mrb[0].mxu0
  %1523 = vdwg.mxu0
  %1524 = vmatprep.subr.bf16.mxu0 %v810
  %1525 = vmatpush1.bf16.msra.mxu0 %v809
  %1526 = vmatprep.subr.bf16.mxu0 %v812
  %1527 = vmatpush1.bf16.msra.mxu0 %v811
  %1528 = vmatprep.subr.bf16.mxu0 %v814
  %1529 = vmatpush1.bf16.msra.mxu0 %v813
  %1530 = vmatprep.subr.bf16.mxu0 %v816
  %1531 = vmatpush1.bf16.msra.mxu0 %v815
  %1532 = vmatprep.subr.bf16.mxu0 %v818
  %1533 = vmatpush1.bf16.msra.mxu0 %v817
  %1534 = vmatprep.subr.bf16.mxu0 %v820
  %1535 = vmatpush1.bf16.msra.mxu0 %v819
  %1536 = vmatprep.subr.bf16.mxu0 %v822
  %1537 = vmatpush1.bf16.msra.mxu0 %v821
  %1538 = vmatprep.subr.bf16.mxu0 %v824
  %1539 = vmatpush1.bf16.msra.mxu0 %v823
  %1540 = vmatprep.subr.bf16.mxu0 %v826
  %1541 = vmatpush1.bf16.msra.mxu0 %v825
  %1542 = vmatprep.subr.bf16.mxu0 %v828
  %1543 = vmatpush1.bf16.msra.mxu0 %v827
  %1544 = vmatprep.subr.bf16.mxu0 %v830
  %1545 = vmatpush1.bf16.msra.mxu0 %v829
  %1546 = vmatprep.subr.bf16.mxu0 %v832
  %1547 = vmatpush1.bf16.msra.mxu0 %v831
  %1548 = vmatprep.subr.bf16.mxu0 %v834
  %1549 = vmatpush1.bf16.msra.mxu0 %v833
  %1550 = vmatprep.subr.bf16.mxu0 %v836
  %1551 = vmatpush1.bf16.msra.mxu0 %v835
  %1552 = vmatprep.subr.bf16.mxu0 %v838
  %1553 = vmatpush1.bf16.msra.mxu0 %v837
  %1554 = vmatprep.subr.bf16.mxu0 %v840
  %1555 = vmatpush1.bf16.msra.mxu0 %v839
  %1556 = vmatprep.mubr.bf16.mxu0 %v1300
  %1557 = vmatmul.mubr.bf16.gmra.mrb[0].mxu0 %v1299
  %v1558 = vpop.f32.mrb[0].mxu0
  %v1559 = vadd.f32 %v1498, %v1558
  %v1560 = vpop.f32.mrb[0].mxu0
  %v1561 = vadd.f32 %v1500, %v1560
  %v1562 = vpop.f32.mrb[0].mxu0
  %v1563 = vadd.f32 %v1502, %v1562
  %v1564 = vpop.f32.mrb[0].mxu0
  %v1565 = vadd.f32 %v1504, %v1564
  %1566 = vmatprep.mubr.bf16.mxu0 %v1308
  %1567 = vmatmul.mubr.bf16.gmra.mrb[0].mxu0 %v1307
  %v1568 = vpop.f32.mrb[0].mxu0
  %v1569 = vadd.f32 %v1508, %v1568
  %v1570 = vpop.f32.mrb[0].mxu0
  %v1571 = vadd.f32 %v1510, %v1570
  %v1572 = vpop.f32.mrb[0].mxu0
  %v1573 = vadd.f32 %v1512, %v1572
  %v1574 = vpop.f32.mrb[0].mxu0
  %v1575 = vadd.f32 %v1514, %v1574
  %1576 = vmatprep.mubr.bf16.mxu0 %v1316
  %1577 = vmatmul.mubr.bf16.gmra.mrb[0].mxu0 %v1315
  %v1578 = vpop.f32.mrb[0].mxu0
  %v1579 = vadd.f32 %v1518, %v1578
  %v1580 = vpop.f32.mrb[0].mxu0
  %v1581 = vadd.f32 %v1520, %v1580
  %v1582 = vpop.f32.mrb[0].mxu0
  %v1583 = vpop.f32.mrb[0].mxu0
  %1584 = vdwg.mxu0
  %v1585 = vadd.f32 %v1187, %v1559
  %v1586 = vadd.f32 %v1191, %v1563
  %v1587 = vadd.f32 %v1197, %v1569
  %v1588 = vadd.f32 %v1201, %v1573
  %v1589 = vadd.f32 %v1207, %v1579
  %v1590 = vadd.f32 %v1189, %v1561
  %v1591 = vadd.f32 %v1193, %v1565
  %v1592 = vadd.f32 %v1199, %v1571
  %v1593 = vadd.f32 %v1203, %v1575
  %v1594 = vadd.f32 %v1209, %v1581
  %v1595 = vmul.f32 %v1187, %v1187
  %v1596 = vmul.f32 %v1191, %v1191
  %v1597 = vmul.f32 %v1197, %v1197
  %v1598 = vmul.f32 %v1201, %v1201
  %v1599 = vmul.f32 %v1207, %v1207
  %v1600 = vmul.f32 %v1189, %v1189
  %v1601 = vmul.f32 %v1193, %v1193
  %v1602 = vmul.f32 %v1199, %v1199
  %v1603 = vmul.f32 %v1203, %v1203
  %v1604 = vmul.f32 %v1209, %v1209
  %v1605 = vadd.f32 %v1595, %v1600
  %v1606 = vadd.f32 %v1596, %v1601
  %v1607 = vadd.f32 %v1597, %v1602
  %v1608 = vadd.f32 %v1598, %v1603
  %v1609 = vadd.f32 %v1599, %v1604
  %v1610 = vmax.f32 %v1605, 1e-08
  %v1611 = vmax.f32 %v1606, 1e-08
  %v1612 = vmax.f32 %v1607, 1e-08
  %v1613 = vmax.f32 %v1608, 1e-08
  %v1614 = vmax.f32 %v1609, 1e-08
  %v1615 = vrsqrt.pop %v1610
  %v1616 = vmul.f32 %v1610, %v1615
  %vm1617 = vcmp.eq.f32.partialorder %v1610, inf
  %v1618 = vsel %vm1617, %v1610, %v1616
  %vm1619 = vcmp.eq.f32.partialorder %v1610, 0.0
  %v1620 = vand.u32 %v1610, 2147483648
  %v1621 = vsel %vm1619, %v1620, %v1618
  %v1622 = vrsqrt.pop %v1611
  %v1623 = vmul.f32 %v1611, %v1622
  %vm1624 = vcmp.eq.f32.partialorder %v1611, inf
  %v1625 = vsel %vm1624, %v1611, %v1623
  %vm1626 = vcmp.eq.f32.partialorder %v1611, 0.0
  %v1627 = vand.u32 %v1611, 2147483648
  %v1628 = vsel %vm1626, %v1627, %v1625
  %v1629 = vrsqrt.pop %v1612
  %v1630 = vmul.f32 %v1612, %v1629
  %vm1631 = vcmp.eq.f32.partialorder %v1612, inf
  %v1632 = vsel %vm1631, %v1612, %v1630
  %vm1633 = vcmp.eq.f32.partialorder %v1612, 0.0
  %v1634 = vand.u32 %v1612, 2147483648
  %v1635 = vsel %vm1633, %v1634, %v1632
  %v1636 = vrsqrt.pop %v1613
  %v1637 = vmul.f32 %v1613, %v1636
  %vm1638 = vcmp.eq.f32.partialorder %v1613, inf
  %v1639 = vsel %vm1638, %v1613, %v1637
  %vm1640 = vcmp.eq.f32.partialorder %v1613, 0.0
  %v1641 = vand.u32 %v1613, 2147483648
  %v1642 = vsel %vm1640, %v1641, %v1639
  %v1643 = vrsqrt.pop %v1614
  %v1644 = vmul.f32 %v1614, %v1643
  %vm1645 = vcmp.eq.f32.partialorder %v1614, inf
  %v1646 = vsel %vm1645, %v1614, %v1644
  %vm1647 = vcmp.eq.f32.partialorder %v1614, 0.0
  %v1648 = vand.u32 %v1614, 2147483648
  %v1649 = vsel %vm1647, %v1648, %v1646
  %v1650 = vmul.f32 %v1559, %v1559
  %v1651 = vmul.f32 %v1563, %v1563
  %v1652 = vmul.f32 %v1569, %v1569
  %v1653 = vmul.f32 %v1573, %v1573
  %v1654 = vmul.f32 %v1579, %v1579
  %v1655 = vmul.f32 %v1561, %v1561
  %v1656 = vmul.f32 %v1565, %v1565
  %v1657 = vmul.f32 %v1571, %v1571
  %v1658 = vmul.f32 %v1575, %v1575
  %v1659 = vmul.f32 %v1581, %v1581
  %v1660 = vadd.f32 %v1650, %v1655
  %v1661 = vadd.f32 %v1651, %v1656
  %v1662 = vadd.f32 %v1652, %v1657
  %v1663 = vadd.f32 %v1653, %v1658
  %v1664 = vadd.f32 %v1654, %v1659
  %v1665 = vmax.f32 %v1660, 1e-08
  %v1666 = vmax.f32 %v1661, 1e-08
  %v1667 = vmax.f32 %v1662, 1e-08
  %v1668 = vmax.f32 %v1663, 1e-08
  %v1669 = vmax.f32 %v1664, 1e-08
  %v1670 = vrsqrt.pop %v1665
  %v1671 = vmul.f32 %v1665, %v1670
  %vm1672 = vcmp.eq.f32.partialorder %v1665, inf
  %v1673 = vsel %vm1672, %v1665, %v1671
  %vm1674 = vcmp.eq.f32.partialorder %v1665, 0.0
  %v1675 = vand.u32 %v1665, 2147483648
  %v1676 = vsel %vm1674, %v1675, %v1673
  %v1677 = vrsqrt.pop %v1666
  %v1678 = vmul.f32 %v1666, %v1677
  %vm1679 = vcmp.eq.f32.partialorder %v1666, inf
  %v1680 = vsel %vm1679, %v1666, %v1678
  %vm1681 = vcmp.eq.f32.partialorder %v1666, 0.0
  %v1682 = vand.u32 %v1666, 2147483648
  %v1683 = vsel %vm1681, %v1682, %v1680
  %v1684 = vrsqrt.pop %v1667
  %v1685 = vmul.f32 %v1667, %v1684
  %vm1686 = vcmp.eq.f32.partialorder %v1667, inf
  %v1687 = vsel %vm1686, %v1667, %v1685
  %vm1688 = vcmp.eq.f32.partialorder %v1667, 0.0
  %v1689 = vand.u32 %v1667, 2147483648
  %v1690 = vsel %vm1688, %v1689, %v1687
  %v1691 = vrsqrt.pop %v1668
  %v1692 = vmul.f32 %v1668, %v1691
  %vm1693 = vcmp.eq.f32.partialorder %v1668, inf
  %v1694 = vsel %vm1693, %v1668, %v1692
  %vm1695 = vcmp.eq.f32.partialorder %v1668, 0.0
  %v1696 = vand.u32 %v1668, 2147483648
  %v1697 = vsel %vm1695, %v1696, %v1694
  %v1698 = vrsqrt.pop %v1669
  %v1699 = vmul.f32 %v1669, %v1698
  %vm1700 = vcmp.eq.f32.partialorder %v1669, inf
  %v1701 = vsel %vm1700, %v1669, %v1699
  %vm1702 = vcmp.eq.f32.partialorder %v1669, 0.0
  %v1703 = vand.u32 %v1669, 2147483648
  %v1704 = vsel %vm1702, %v1703, %v1701
  %v1705 = vmul.f32 %v1585, %v1585
  %v1706 = vmul.f32 %v1586, %v1586
  %v1707 = vmul.f32 %v1587, %v1587
  %v1708 = vmul.f32 %v1588, %v1588
  %v1709 = vmul.f32 %v1589, %v1589
  %v1710 = vmul.f32 %v1590, %v1590
  %v1711 = vmul.f32 %v1591, %v1591
  %v1712 = vmul.f32 %v1592, %v1592
  %v1713 = vmul.f32 %v1593, %v1593
  %v1714 = vmul.f32 %v1594, %v1594
  %v1715 = vadd.f32 %v1705, %v1710
  %v1716 = vadd.f32 %v1706, %v1711
  %v1717 = vadd.f32 %v1707, %v1712
  %v1718 = vadd.f32 %v1708, %v1713
  %v1719 = vadd.f32 %v1709, %v1714
  %v1720 = vmax.f32 %v1715, 1e-08
  %v1721 = vmax.f32 %v1716, 1e-08
  %v1722 = vmax.f32 %v1717, 1e-08
  %v1723 = vmax.f32 %v1718, 1e-08
  %v1724 = vmax.f32 %v1719, 1e-08
  %v1725 = vrsqrt.pop %v1720
  %v1726 = vmul.f32 %v1720, %v1725
  %vm1727 = vcmp.eq.f32.partialorder %v1720, inf
  %v1728 = vsel %vm1727, %v1720, %v1726
  %vm1729 = vcmp.eq.f32.partialorder %v1720, 0.0
  %v1730 = vand.u32 %v1720, 2147483648
  %v1731 = vsel %vm1729, %v1730, %v1728
  %v1732 = vrsqrt.pop %v1721
  %v1733 = vmul.f32 %v1721, %v1732
  %vm1734 = vcmp.eq.f32.partialorder %v1721, inf
  %v1735 = vsel %vm1734, %v1721, %v1733
  %vm1736 = vcmp.eq.f32.partialorder %v1721, 0.0
  %v1737 = vand.u32 %v1721, 2147483648
  %v1738 = vsel %vm1736, %v1737, %v1735
  %v1739 = vrsqrt.pop %v1722
  %v1740 = vmul.f32 %v1722, %v1739
  %vm1741 = vcmp.eq.f32.partialorder %v1722, inf
  %v1742 = vsel %vm1741, %v1722, %v1740
  %vm1743 = vcmp.eq.f32.partialorder %v1722, 0.0
  %v1744 = vand.u32 %v1722, 2147483648
  %v1745 = vsel %vm1743, %v1744, %v1742
  %v1746 = vrsqrt.pop %v1723
  %v1747 = vmul.f32 %v1723, %v1746
  %vm1748 = vcmp.eq.f32.partialorder %v1723, inf
  %v1749 = vsel %vm1748, %v1723, %v1747
  %vm1750 = vcmp.eq.f32.partialorder %v1723, 0.0
  %v1751 = vand.u32 %v1723, 2147483648
  %v1752 = vsel %vm1750, %v1751, %v1749
  %v1753 = vrsqrt.pop %v1724
  %v1754 = vmul.f32 %v1724, %v1753
  %vm1755 = vcmp.eq.f32.partialorder %v1724, inf
  %v1756 = vsel %vm1755, %v1724, %v1754
  %vm1757 = vcmp.eq.f32.partialorder %v1724, 0.0
  %v1758 = vand.u32 %v1724, 2147483648
  %v1759 = vsel %vm1757, %v1758, %v1756
  %v1760 = vadd.f32 %v1621, %v1676
  %v1761 = vadd.f32 %v1628, %v1683
  %v1762 = vadd.f32 %v1635, %v1690
  %v1763 = vadd.f32 %v1642, %v1697
  %v1764 = vadd.f32 %v1649, %v1704
  %v1765 = vsub.f32 %v1760, %v1731
  %v1766 = vsub.f32 %v1761, %v1738
  %v1767 = vsub.f32 %v1762, %v1745
  %v1768 = vsub.f32 %v1763, %v1752
  %v1769 = vsub.f32 %v1764, %v1759
  %v1770 = vmul.f32 %v1765, %v1765
  %v1771 = vmul.f32 %v1766, %v1766
  %v1772 = vmul.f32 %v1767, %v1767
  %v1773 = vmul.f32 %v1768, %v1768
  %v1774 = vmul.f32 %v1769, %v1769
  %s1775 = sadd.s32 0, 0
  %s1776 = smul.u32 %s1775, 40
  %s1777 = sadd.s32 %s1776, 40
  %p1778 = scmp.le.s32.totalorder %s1777, 36
  // Predicated region
  $region18: #{_lambda_.3} parent=0 // pred_check
    %p1779 = pneg %p1778
  $region19: #{_lambda_.3} parent=0 // pred_check_branch
    %1781 = sbr.rel (%p1779) target = $region21
  $region20: #{_lambda_.3} parent=0 // pred_region
    %v1782 = vld [vmem:[#allocation2] sm:$0xff]
    %v1783 = vld [vmem:[#allocation2 + $0x8] sm:$0xff]
    %v1784 = vld [vmem:[#allocation2 + $0x10] sm:$0xff]
    %v1785 = vld [vmem:[#allocation2 + $0x18] sm:$0xff]
    %v1786 = vld [vmem:[#allocation2 + $0x20] sm:$0xff]
    %v1787 = vadd.f32 %v1782, %v1770
    %v1788 = vadd.f32 %v1783, %v1771
    %v1789 = vadd.f32 %v1784, %v1772
    %v1790 = vadd.f32 %v1785, %v1773
    %v1791 = vadd.f32 %v1786, %v1774
    %1792 = vst [vmem:[#allocation2] sm:$0xff] %v1787
    %1793 = vst [vmem:[#allocation2 + $0x8] sm:$0xff] %v1788
    %1794 = vst [vmem:[#allocation2 + $0x10] sm:$0xff] %v1789
    %1795 = vst [vmem:[#allocation2 + $0x18] sm:$0xff] %v1790
    %1796 = vst [vmem:[#allocation2 + $0x20] sm:$0xff] %v1791
  $region21: #{_lambda_.3} parent=0 // pred_fallthru
    _
  %p1797 = scmp.gt.s32.totalorder %s1777, 36
  // Predicated region
  $region22: #{_lambda_.3} parent=0 // pred_check
    %p1798 = pneg %p1797
  $region23: #{_lambda_.3} parent=0 // pred_check_branch
    %1800 = sbr.rel (%p1798) target = $region25
  $region24: #{_lambda_.3} parent=0 // pred_region
    %v1801 = vlaneseq
    %v1802 = vshrl.u32 %v1801, 7
    %v1803 = vadd.s32 %v1802, 8
    %v1804 = vadd.s32 %v1802, 16
    %v1805 = vadd.s32 %v1802, 24
    %v1806 = vadd.s32 %v1802, 32
    %v1807 = vstv %s1776
    %v1808 = vadd.s32 %v1807, %v1802
    %v1809 = vadd.s32 %v1807, %v1803
    %v1810 = vadd.s32 %v1807, %v1804
    %v1811 = vadd.s32 %v1807, %v1805
    %v1812 = vadd.s32 %v1807, %v1806
    %v1813 = vld [vmem:[#allocation2] sm:$0xff]
    %v1814 = vld [vmem:[#allocation2 + $0x8] sm:$0xff]
    %v1815 = vld [vmem:[#allocation2 + $0x10] sm:$0xff]
    %v1816 = vld [vmem:[#allocation2 + $0x18] sm:$0xff]
    %v1817 = vld [vmem:[#allocation2 + $0x20] sm:$0xff]
    %vm1818 = vcmp.lt.s32.totalorder %v1808, 36
    %vm1819 = vcmp.lt.s32.totalorder %v1809, 36
    %vm1820 = vcmp.lt.s32.totalorder %v1810, 36
    %vm1821 = vcmp.lt.s32.totalorder %v1811, 36
    %vm1822 = vcmp.lt.s32.totalorder %v1812, 36
    %v1823 = vsel %vm1818, %v1770, 0.0
    %v1824 = vsel %vm1819, %v1771, 0.0
    %v1825 = vsel %vm1820, %v1772, 0.0
    %v1826 = vsel %vm1821, %v1773, 0.0
    %v1827 = vsel %vm1822, %v1774, 0.0
    %v1828 = vadd.f32 %v1813, %v1823
    %v1829 = vadd.f32 %v1814, %v1824
    %v1830 = vadd.f32 %v1815, %v1825
    %v1831 = vadd.f32 %v1816, %v1826
    %v1832 = vadd.f32 %v1817, %v1827
    %1833 = vst [vmem:[#allocation2] sm:$0xff] %v1828
    %1834 = vst [vmem:[#allocation2 + $0x8] sm:$0xff] %v1829
    %1835 = vst [vmem:[#allocation2 + $0x10] sm:$0xff] %v1830
    %1836 = vst [vmem:[#allocation2 + $0x18] sm:$0xff] %v1831
    %1837 = vst [vmem:[#allocation2 + $0x20] sm:$0xff] %v1832
  $region25: #{_lambda_.3} parent=0 // pred_fallthru
    _
  // Predicated region
  $region26: #{_lambda_.3} parent=0 // pred_check
    %p1838 = pneg %p64
  $region27: #{_lambda_.3} parent=0 // pred_check_branch
    %1840 = sbr.rel (%p1838) target = $region29
  $region28: #{_lambda_.3} parent=0 // pred_region
    %v1841 = vld [vmem:[#allocation2] sm:$0xff]
    %v1842 = vld [vmem:[#allocation2 + $0x8] sm:$0xff]
    %v1843 = vld [vmem:[#allocation2 + $0x10] sm:$0xff]
    %v1844 = vld [vmem:[#allocation2 + $0x18] sm:$0xff]
    %v1845 = vld [vmem:[#allocation2 + $0x20] sm:$0xff]
    %v1846 = vadd.f32 %v1841, %v1842
    %v1847 = vadd.f32 %v1846, %v1843
    %v1848 = vadd.f32 %v1847, %v1844
    %v1849 = vadd.f32 %v1848, %v1845
    %1850 = vadd.xlane.f32.xlu0 %v1849
    %v1851 = vpop.xlane.xlu0 %1850
    %v1852 = vrot.slane %v1851, 4
    %v1853 = vadd.f32 %v1851, %v1852
    %v1854 = vrot.slane %v1853, 2
    %v1855 = vadd.f32 %v1853, %v1854
    %v1856 = vrot.slane %v1855, 1
    %v1857 = vadd.f32 %v1855, %v1856
    %s1858 = vtos %v1857
    %v1859 = vstv %s1858
    %1860 = vst [vmem:[%s3] sm:$0xff] %v1859
  $region29: #{_lambda_.3} parent=0 // pred_fallthru
    _
  // Predicated region
  $region30: #{_lambda_.3} parent=0 // pred_check
    _
  $region31: #{_lambda_.3} parent=0 // pred_check_branch
    %1862 = sbr.rel (0) target = $region33
  $region32: #{_lambda_.3} parent=0 // pred_region
    _
  $region33: #{_lambda_.3} parent=0 // pred_fallthru
    _
  // Predicated region
  $region34: #{_lambda_.3} parent=0 // pred_check
    _
  $region35: #{_lambda_.3} parent=0 // pred_check_branch
    %1864 = sbr.rel (0) target = $region37
  $region36: #{_lambda_.3} parent=0 // pred_region
    _
  $region37: #{_lambda_.3} parent=0 // pred_fallthru
    _

// kernel: _lambda_.5
$region0: #{_lambda_.5}
  #allocation0 [shape = 'u32[]', space=smem, size = 0x4, offset = 0x4, fixed_abs, tag = 'smem constant byte address 0x4 - core index']
  #allocation1 [shape = 'u32[144,128]{1,0:T(1,128)}', space=vmem, size = 0x12000, scoped, tag = 'internal scratch']
  #allocation2 [shape = 'f32[24,256]{1,0:T(8,128)}', space=vmem, size = 0x6000, scoped, tag = 'scratch operand']
  %s0 = inlined_call_operand.vmem [shape: bf16[24,2048], index: 0, kind: input, shape index: {}]
  %s1 = inlined_call_operand.vmem [shape: bf16[24,2048], index: 1, kind: input, shape index: {}]
  %s2 = inlined_call_operand.vmem [shape: bf16[2048,512], index: 2, kind: input, shape index: {}]
  %s3 = inlined_call_operand.vmem [shape: f32[1,8,128], index: 3, kind: output, shape index: {}]
  %s4 = sld [smem:[#allocation0]]
  $region38: #{_lambda_.5} parent=0
    _
  %s6 = ssub.s32 1, %s4
  %s7 = scalar_select 0, %s6, %s4
  // Predicated region
  $region2: #{_lambda_.5} parent=0 // pred_check
    _
  $region3: #{_lambda_.5} parent=0 // pred_check_branch
    %9 = sbr.rel (0) target = $region5
  $region4: #{_lambda_.5} parent=0 // pred_region
    %s10 = sadd.s32 0, 0
    %s11 = smul.u32 3, %s10
    %p12 = scmp.lt.s32.totalorder %s11, 2
    %s13 = scalar_select %p12, %s11, 2
    %s14 = smul.addr %s13, 16
    %s15 = smul.addr %s14, 4
    %s16 = scalar_lea.vmem %s0, %s15
    %s17 = sadd.s32 0, 0
    %s18 = smul.u32 3, %s17
  $region5: #{_lambda_.5} parent=0 // pred_fallthru
    _
  // Predicated region
  $region6: #{_lambda_.5} parent=0 // pred_check
    _
  $region7: #{_lambda_.5} parent=0 // pred_check_branch
    %20 = sbr.rel (0) target = $region9
  $region8: #{_lambda_.5} parent=0 // pred_region
    %s21 = sadd.s32 0, 0
    %s22 = smul.u32 3, %s21
    %p23 = scmp.lt.s32.totalorder %s22, 2
    %s24 = scalar_select %p23, %s22, 2
    %s25 = smul.addr %s24, 16
    %s26 = smul.addr %s25, 4
    %s27 = scalar_lea.vmem %s1, %s26
    %s28 = sadd.s32 0, 0
    %s29 = smul.u32 3, %s28
  $region9: #{_lambda_.5} parent=0 // pred_fallthru
    _
  // Predicated region
  $region10: #{_lambda_.5} parent=0 // pred_check
    _
  $region11: #{_lambda_.5} parent=0 // pred_check_branch
    %31 = sbr.rel (0) target = $region13
  $region12: #{_lambda_.5} parent=0 // pred_region
    _
  $region13: #{_lambda_.5} parent=0 // pred_fallthru
    _
  %s32 = sadd.s32 0, 0
  %s33 = smul.u32 3, %s32
  %p34 = scmp.lt.s32.totalorder %s33, 2
  %s35 = scalar_select %p34, %s33, 2
  %s36 = smul.addr %s35, 16
  %s37 = smul.addr %s36, 4
  %s38 = scalar_lea.vmem %s0, %s37
  %s39 = sadd.s32 0, 0
  %s40 = smul.u32 3, %s39
  %p41 = scmp.lt.s32.totalorder %s40, 2
  %s42 = scalar_select %p41, %s40, 2
  %s43 = smul.addr %s42, 16
  %s44 = smul.addr %s43, 4
  %s45 = scalar_lea.vmem %s1, %s44
  %s46 = sadd.s32 0, 0
  %s47 = smul.u32 3, %s46
  %p48 = scmp.lt.s32.totalorder %s47, 2
  %s49 = scalar_select %p48, %s47, 2
  %s50 = smul.addr %s49, 16
  %s51 = smul.addr %s50, 4
  %s52 = scalar_lea.vmem %s0, %s51
  %s53 = sadd.s32 0, 0
  %s54 = smul.u32 3, %s53
  %s55 = sadd.s32 0, 0
  %s56 = smul.u32 3, %s55
  %p57 = scmp.lt.s32.totalorder %s56, 2
  %s58 = scalar_select %p57, %s56, 2
  %s59 = smul.addr %s58, 16
  %s60 = smul.addr %s59, 4
  %s61 = scalar_lea.vmem %s1, %s60
  %s62 = sadd.s32 0, 0
  %s63 = smul.u32 3, %s62
  %p64 = scmp.eq.s32.totalorder 0, 0
  // Predicated region
  $region14: #{_lambda_.5} parent=0 // pred_check
    %p65 = pneg %p64
  $region15: #{_lambda_.5} parent=0 // pred_check_branch
    %67 = sbr.rel (%p65) target = $region17
  $region16: #{_lambda_.5} parent=0 // pred_region
    %68 = vst [vmem:[#allocation2] sm:$0xff] 0.0
    %69 = vst [vmem:[#allocation2 + $0x8] sm:$0xff] 0.0
    %70 = vst [vmem:[#allocation2 + $0x10] sm:$0xff] 0.0
    %71 = vst [vmem:[#allocation2 + $0x18] sm:$0xff] 0.0
    %72 = vst [vmem:[#allocation2 + $0x20] sm:$0xff] 0.0
    %73 = vst [vmem:[#allocation2 + $0x28] sm:$0xff] 0.0
  $region17: #{_lambda_.5} parent=0 // pred_fallthru
    _
  %v74 = vld [vmem:[%s2] sm:$0xff]
  %v75 = vld [vmem:[%s2 + $0x8] sm:$0xff]
  %v76 = vld [vmem:[%s2 + $0x10] sm:$0xff]
  %v77 = vld [vmem:[%s2 + $0x18] sm:$0xff]
  %v78 = vld [vmem:[%s2 + $0x20] sm:$0xff]
  %v79 = vld [vmem:[%s2 + $0x28] sm:$0xff]
  %v80 = vld [vmem:[%s2 + $0x30] sm:$0xff]
  %v81 = vld [vmem:[%s2 + $0x38] sm:$0xff]
  %v82 = vld [vmem:[%s2 + $0x40] sm:$0xff]
  %v83 = vld [vmem:[%s2 + $0x48] sm:$0xff]
  %v84 = vld [vmem:[%s2 + $0x50] sm:$0xff]
  %v85 = vld [vmem:[%s2 + $0x58] sm:$0xff]
  %v86 = vld [vmem:[%s2 + $0x60] sm:$0xff]
  %v87 = vld [vmem:[%s2 + $0x68] sm:$0xff]
  %v88 = vld [vmem:[%s2 + $0x70] sm:$0xff]
  %v89 = vld [vmem:[%s2 + $0x78] sm:$0xff]
  %v90 = vld [vmem:[%s2 + $0x80] sm:$0xff]
  %v91 = vld [vmem:[%s2 + $0x88] sm:$0xff]
  %v92 = vld [vmem:[%s2 + $0x90] sm:$0xff]
  %v93 = vld [vmem:[%s2 + $0x98] sm:$0xff]
  %v94 = vld [vmem:[%s2 + $0xa0] sm:$0xff]
  %v95 = vld [vmem:[%s2 + $0xa8] sm:$0xff]
  %v96 = vld [vmem:[%s2 + $0xb0] sm:$0xff]
  %v97 = vld [vmem:[%s2 + $0xb8] sm:$0xff]
  %v98 = vld [vmem:[%s2 + $0xc0] sm:$0xff]
  %v99 = vld [vmem:[%s2 + $0xc8] sm:$0xff]
  %v100 = vld [vmem:[%s2 + $0xd0] sm:$0xff]
  %v101 = vld [vmem:[%s2 + $0xd8] sm:$0xff]
  %v102 = vld [vmem:[%s2 + $0xe0] sm:$0xff]
  %v103 = vld [vmem:[%s2 + $0xe8] sm:$0xff]
  %v104 = vld [vmem:[%s2 + $0xf0] sm:$0xff]
  %v105 = vld [vmem:[%s2 + $0xf8] sm:$0xff]
  %v106 = vld [vmem:[%s2 + $0x100] sm:$0xff]
  %v107 = vld [vmem:[%s2 + $0x108] sm:$0xff]
  %v108 = vld [vmem:[%s2 + $0x110] sm:$0xff]
  %v109 = vld [vmem:[%s2 + $0x118] sm:$0xff]
  %v110 = vld [vmem:[%s2 + $0x120] sm:$0xff]
  %v111 = vld [vmem:[%s2 + $0x128] sm:$0xff]
  %v112 = vld [vmem:[%s2 + $0x130] sm:$0xff]
  %v113 = vld [vmem:[%s2 + $0x138] sm:$0xff]
  %v114 = vld [vmem:[%s2 + $0x140] sm:$0xff]
  %v115 = vld [vmem:[%s2 + $0x148] sm:$0xff]
  %v116 = vld [vmem:[%s2 + $0x150] sm:$0xff]
  %v117 = vld [vmem:[%s2 + $0x158] sm:$0xff]
  %v118 = vld [vmem:[%s2 + $0x160] sm:$0xff]
  %v119 = vld [vmem:[%s2 + $0x168] sm:$0xff]
  %v120 = vld [vmem:[%s2 + $0x170] sm:$0xff]
  %v121 = vld [vmem:[%s2 + $0x178] sm:$0xff]
  %v122 = vld [vmem:[%s2 + $0x180] sm:$0xff]
  %v123 = vld [vmem:[%s2 + $0x188] sm:$0xff]
  %v124 = vld [vmem:[%s2 + $0x190] sm:$0xff]
  %v125 = vld [vmem:[%s2 + $0x198] sm:$0xff]
  %v126 = vld [vmem:[%s2 + $0x1a0] sm:$0xff]
  %v127 = vld [vmem:[%s2 + $0x1a8] sm:$0xff]
  %v128 = vld [vmem:[%s2 + $0x1b0] sm:$0xff]
  %v129 = vld [vmem:[%s2 + $0x1b8] sm:$0xff]
  %v130 = vld [vmem:[%s2 + $0x1c0] sm:$0xff]
  %v131 = vld [vmem:[%s2 + $0x1c8] sm:$0xff]
  %v132 = vld [vmem:[%s2 + $0x1d0] sm:$0xff]
  %v133 = vld [vmem:[%s2 + $0x1d8] sm:$0xff]
  %v134 = vld [vmem:[%s2 + $0x1e0] sm:$0xff]
  %v135 = vld [vmem:[%s2 + $0x1e8] sm:$0xff]
  %v136 = vld [vmem:[%s2 + $0x1f0] sm:$0xff]
  %v137 = vld [vmem:[%s2 + $0x1f8] sm:$0xff]
  %v138 = vld [vmem:[%s2 + $0x200] sm:$0xff]
  %v139 = vld [vmem:[%s2 + $0x208] sm:$0xff]
  %v140 = vld [vmem:[%s2 + $0x210] sm:$0xff]
  %v141 = vld [vmem:[%s2 + $0x218] sm:$0xff]
  %v142 = vld [vmem:[%s2 + $0x220] sm:$0xff]
  %v143 = vld [vmem:[%s2 + $0x228] sm:$0xff]
  %v144 = vld [vmem:[%s2 + $0x230] sm:$0xff]
  %v145 = vld [vmem:[%s2 + $0x238] sm:$0xff]
  %v146 = vld [vmem:[%s2 + $0x240] sm:$0xff]
  %v147 = vld [vmem:[%s2 + $0x248] sm:$0xff]
  %v148 = vld [vmem:[%s2 + $0x250] sm:$0xff]
  %v149 = vld [vmem:[%s2 + $0x258] sm:$0xff]
  %v150 = vld [vmem:[%s2 + $0x260] sm:$0xff]
  %v151 = vld [vmem:[%s2 + $0x268] sm:$0xff]
  %v152 = vld [vmem:[%s2 + $0x270] sm:$0xff]
  %v153 = vld [vmem:[%s2 + $0x278] sm:$0xff]
  %v154 = vld [vmem:[%s2 + $0x280] sm:$0xff]
  %v155 = vld [vmem:[%s2 + $0x288] sm:$0xff]
  %v156 = vld [vmem:[%s2 + $0x290] sm:$0xff]
  %v157 = vld [vmem:[%s2 + $0x298] sm:$0xff]
  %v158 = vld [vmem:[%s2 + $0x2a0] sm:$0xff]
  %v159 = vld [vmem:[%s2 + $0x2a8] sm:$0xff]
  %v160 = vld [vmem:[%s2 + $0x2b0] sm:$0xff]
  %v161 = vld [vmem:[%s2 + $0x2b8] sm:$0xff]
  %v162 = vld [vmem:[%s2 + $0x2c0] sm:$0xff]
  %v163 = vld [vmem:[%s2 + $0x2c8] sm:$0xff]
  %v164 = vld [vmem:[%s2 + $0x2d0] sm:$0xff]
  %v165 = vld [vmem:[%s2 + $0x2d8] sm:$0xff]
  %v166 = vld [vmem:[%s2 + $0x2e0] sm:$0xff]
  %v167 = vld [vmem:[%s2 + $0x2e8] sm:$0xff]
  %v168 = vld [vmem:[%s2 + $0x2f0] sm:$0xff]
  %v169 = vld [vmem:[%s2 + $0x2f8] sm:$0xff]
  %v170 = vld [vmem:[%s2 + $0x300] sm:$0xff]
  %v171 = vld [vmem:[%s2 + $0x308] sm:$0xff]
  %v172 = vld [vmem:[%s2 + $0x310] sm:$0xff]
  %v173 = vld [vmem:[%s2 + $0x318] sm:$0xff]
  %v174 = vld [vmem:[%s2 + $0x320] sm:$0xff]
  %v175 = vld [vmem:[%s2 + $0x328] sm:$0xff]
  %v176 = vld [vmem:[%s2 + $0x330] sm:$0xff]
  %v177 = vld [vmem:[%s2 + $0x338] sm:$0xff]
  %v178 = vld [vmem:[%s2 + $0x340] sm:$0xff]
  %v179 = vld [vmem:[%s2 + $0x348] sm:$0xff]
  %v180 = vld [vmem:[%s2 + $0x350] sm:$0xff]
  %v181 = vld [vmem:[%s2 + $0x358] sm:$0xff]
  %v182 = vld [vmem:[%s2 + $0x360] sm:$0xff]
  %v183 = vld [vmem:[%s2 + $0x368] sm:$0xff]
  %v184 = vld [vmem:[%s2 + $0x370] sm:$0xff]
  %v185 = vld [vmem:[%s2 + $0x378] sm:$0xff]
  %v186 = vld [vmem:[%s2 + $0x380] sm:$0xff]
  %v187 = vld [vmem:[%s2 + $0x388] sm:$0xff]
  %v188 = vld [vmem:[%s2 + $0x390] sm:$0xff]
  %v189 = vld [vmem:[%s2 + $0x398] sm:$0xff]
  %v190 = vld [vmem:[%s2 + $0x3a0] sm:$0xff]
  %v191 = vld [vmem:[%s2 + $0x3a8] sm:$0xff]
  %v192 = vld [vmem:[%s2 + $0x3b0] sm:$0xff]
  %v193 = vld [vmem:[%s2 + $0x3b8] sm:$0xff]
  %v194 = vld [vmem:[%s2 + $0x3c0] sm:$0xff]
  %v195 = vld [vmem:[%s2 + $0x3c8] sm:$0xff]
  %v196 = vld [vmem:[%s2 + $0x3d0] sm:$0xff]
  %v197 = vld [vmem:[%s2 + $0x3d8] sm:$0xff]
  %v198 = vld [vmem:[%s2 + $0x3e0] sm:$0xff]
  %v199 = vld [vmem:[%s2 + $0x3e8] sm:$0xff]
  %v200 = vld [vmem:[%s2 + $0x3f0] sm:$0xff]
  %v201 = vld [vmem:[%s2 + $0x3f8] sm:$0xff]
  %v202 = vld [vmem:[%s2 + $0x400] sm:$0xff]
  %v203 = vld [vmem:[%s2 + $0x408] sm:$0xff]
  %v204 = vld [vmem:[%s2 + $0x410] sm:$0xff]
  %v205 = vld [vmem:[%s2 + $0x418] sm:$0xff]
  %v206 = vld [vmem:[%s2 + $0x420] sm:$0xff]
  %v207 = vld [vmem:[%s2 + $0x428] sm:$0xff]
  %v208 = vld [vmem:[%s2 + $0x430] sm:$0xff]
  %v209 = vld [vmem:[%s2 + $0x438] sm:$0xff]
  %v210 = vld [vmem:[%s2 + $0x440] sm:$0xff]
  %v211 = vld [vmem:[%s2 + $0x448] sm:$0xff]
  %v212 = vld [vmem:[%s2 + $0x450] sm:$0xff]
  %v213 = vld [vmem:[%s2 + $0x458] sm:$0xff]
  %v214 = vld [vmem:[%s2 + $0x460] sm:$0xff]
  %v215 = vld [vmem:[%s2 + $0x468] sm:$0xff]
  %v216 = vld [vmem:[%s2 + $0x470] sm:$0xff]
  %v217 = vld [vmem:[%s2 + $0x478] sm:$0xff]
  %v218 = vld [vmem:[%s2 + $0x480] sm:$0xff]
  %v219 = vld [vmem:[%s2 + $0x488] sm:$0xff]
  %v220 = vld [vmem:[%s2 + $0x490] sm:$0xff]
  %v221 = vld [vmem:[%s2 + $0x498] sm:$0xff]
  %v222 = vld [vmem:[%s2 + $0x4a0] sm:$0xff]
  %v223 = vld [vmem:[%s2 + $0x4a8] sm:$0xff]
  %v224 = vld [vmem:[%s2 + $0x4b0] sm:$0xff]
  %v225 = vld [vmem:[%s2 + $0x4b8] sm:$0xff]
  %v226 = vld [vmem:[%s2 + $0x4c0] sm:$0xff]
  %v227 = vld [vmem:[%s2 + $0x4c8] sm:$0xff]
  %v228 = vld [vmem:[%s2 + $0x4d0] sm:$0xff]
  %v229 = vld [vmem:[%s2 + $0x4d8] sm:$0xff]
  %v230 = vld [vmem:[%s2 + $0x4e0] sm:$0xff]
  %v231 = vld [vmem:[%s2 + $0x4e8] sm:$0xff]
  %v232 = vld [vmem:[%s2 + $0x4f0] sm:$0xff]
  %v233 = vld [vmem:[%s2 + $0x4f8] sm:$0xff]
  %v234 = vld [vmem:[%s2 + $0x500] sm:$0xff]
  %v235 = vld [vmem:[%s2 + $0x508] sm:$0xff]
  %v236 = vld [vmem:[%s2 + $0x510] sm:$0xff]
  %v237 = vld [vmem:[%s2 + $0x518] sm:$0xff]
  %v238 = vld [vmem:[%s2 + $0x520] sm:$0xff]
  %v239 = vld [vmem:[%s2 + $0x528] sm:$0xff]
  %v240 = vld [vmem:[%s2 + $0x530] sm:$0xff]
  %v241 = vld [vmem:[%s2 + $0x538] sm:$0xff]
  %v242 = vld [vmem:[%s2 + $0x540] sm:$0xff]
  %v243 = vld [vmem:[%s2 + $0x548] sm:$0xff]
  %v244 = vld [vmem:[%s2 + $0x550] sm:$0xff]
  %v245 = vld [vmem:[%s2 + $0x558] sm:$0xff]
  %v246 = vld [vmem:[%s2 + $0x560] sm:$0xff]
  %v247 = vld [vmem:[%s2 + $0x568] sm:$0xff]
  %v248 = vld [vmem:[%s2 + $0x570] sm:$0xff]
  %v249 = vld [vmem:[%s2 + $0x578] sm:$0xff]
  %v250 = vld [vmem:[%s2 + $0x580] sm:$0xff]
  %v251 = vld [vmem:[%s2 + $0x588] sm:$0xff]
  %v252 = vld [vmem:[%s2 + $0x590] sm:$0xff]
  %v253 = vld [vmem:[%s2 + $0x598] sm:$0xff]
  %v254 = vld [vmem:[%s2 + $0x5a0] sm:$0xff]
  %v255 = vld [vmem:[%s2 + $0x5a8] sm:$0xff]
  %v256 = vld [vmem:[%s2 + $0x5b0] sm:$0xff]
  %v257 = vld [vmem:[%s2 + $0x5b8] sm:$0xff]
  %v258 = vld [vmem:[%s2 + $0x5c0] sm:$0xff]
  %v259 = vld [vmem:[%s2 + $0x5c8] sm:$0xff]
  %v260 = vld [vmem:[%s2 + $0x5d0] sm:$0xff]
  %v261 = vld [vmem:[%s2 + $0x5d8] sm:$0xff]
  %v262 = vld [vmem:[%s2 + $0x5e0] sm:$0xff]
  %v263 = vld [vmem:[%s2 + $0x5e8] sm:$0xff]
  %v264 = vld [vmem:[%s2 + $0x5f0] sm:$0xff]
  %v265 = vld [vmem:[%s2 + $0x5f8] sm:$0xff]
  %v266 = vld [vmem:[%s2 + $0x600] sm:$0xff]
  %v267 = vld [vmem:[%s2 + $0x608] sm:$0xff]
  %v268 = vld [vmem:[%s2 + $0x610] sm:$0xff]
  %v269 = vld [vmem:[%s2 + $0x618] sm:$0xff]
  %v270 = vld [vmem:[%s2 + $0x620] sm:$0xff]
  %v271 = vld [vmem:[%s2 + $0x628] sm:$0xff]
  %v272 = vld [vmem:[%s2 + $0x630] sm:$0xff]
  %v273 = vld [vmem:[%s2 + $0x638] sm:$0xff]
  %v274 = vld [vmem:[%s2 + $0x640] sm:$0xff]
  %v275 = vld [vmem:[%s2 + $0x648] sm:$0xff]
  %v276 = vld [vmem:[%s2 + $0x650] sm:$0xff]
  %v277 = vld [vmem:[%s2 + $0x658] sm:$0xff]
  %v278 = vld [vmem:[%s2 + $0x660] sm:$0xff]
  %v279 = vld [vmem:[%s2 + $0x668] sm:$0xff]
  %v280 = vld [vmem:[%s2 + $0x670] sm:$0xff]
  %v281 = vld [vmem:[%s2 + $0x678] sm:$0xff]
  %v282 = vld [vmem:[%s2 + $0x680] sm:$0xff]
  %v283 = vld [vmem:[%s2 + $0x688] sm:$0xff]
  %v284 = vld [vmem:[%s2 + $0x690] sm:$0xff]
  %v285 = vld [vmem:[%s2 + $0x698] sm:$0xff]
  %v286 = vld [vmem:[%s2 + $0x6a0] sm:$0xff]
  %v287 = vld [vmem:[%s2 + $0x6a8] sm:$0xff]
  %v288 = vld [vmem:[%s2 + $0x6b0] sm:$0xff]
  %v289 = vld [vmem:[%s2 + $0x6b8] sm:$0xff]
  %v290 = vld [vmem:[%s2 + $0x6c0] sm:$0xff]
  %v291 = vld [vmem:[%s2 + $0x6c8] sm:$0xff]
  %v292 = vld [vmem:[%s2 + $0x6d0] sm:$0xff]
  %v293 = vld [vmem:[%s2 + $0x6d8] sm:$0xff]
  %v294 = vld [vmem:[%s2 + $0x6e0] sm:$0xff]
  %v295 = vld [vmem:[%s2 + $0x6e8] sm:$0xff]
  %v296 = vld [vmem:[%s2 + $0x6f0] sm:$0xff]
  %v297 = vld [vmem:[%s2 + $0x6f8] sm:$0xff]
  %v298 = vld [vmem:[%s2 + $0x700] sm:$0xff]
  %v299 = vld [vmem:[%s2 + $0x708] sm:$0xff]
  %v300 = vld [vmem:[%s2 + $0x710] sm:$0xff]
  %v301 = vld [vmem:[%s2 + $0x718] sm:$0xff]
  %v302 = vld [vmem:[%s2 + $0x720] sm:$0xff]
  %v303 = vld [vmem:[%s2 + $0x728] sm:$0xff]
  %v304 = vld [vmem:[%s2 + $0x730] sm:$0xff]
  %v305 = vld [vmem:[%s2 + $0x738] sm:$0xff]
  %v306 = vld [vmem:[%s2 + $0x740] sm:$0xff]
  %v307 = vld [vmem:[%s2 + $0x748] sm:$0xff]
  %v308 = vld [vmem:[%s2 + $0x750] sm:$0xff]
  %v309 = vld [vmem:[%s2 + $0x758] sm:$0xff]
  %v310 = vld [vmem:[%s2 + $0x760] sm:$0xff]
  %v311 = vld [vmem:[%s2 + $0x768] sm:$0xff]
  %v312 = vld [vmem:[%s2 + $0x770] sm:$0xff]
  %v313 = vld [vmem:[%s2 + $0x778] sm:$0xff]
  %v314 = vld [vmem:[%s2 + $0x780] sm:$0xff]
  %v315 = vld [vmem:[%s2 + $0x788] sm:$0xff]
  %v316 = vld [vmem:[%s2 + $0x790] sm:$0xff]
  %v317 = vld [vmem:[%s2 + $0x798] sm:$0xff]
  %v318 = vld [vmem:[%s2 + $0x7a0] sm:$0xff]
  %v319 = vld [vmem:[%s2 + $0x7a8] sm:$0xff]
  %v320 = vld [vmem:[%s2 + $0x7b0] sm:$0xff]
  %v321 = vld [vmem:[%s2 + $0x7b8] sm:$0xff]
  %v322 = vld [vmem:[%s2 + $0x7c0] sm:$0xff]
  %v323 = vld [vmem:[%s2 + $0x7c8] sm:$0xff]
  %v324 = vld [vmem:[%s2 + $0x7d0] sm:$0xff]
  %v325 = vld [vmem:[%s2 + $0x7d8] sm:$0xff]
  %v326 = vld [vmem:[%s2 + $0x7e0] sm:$0xff]
  %v327 = vld [vmem:[%s2 + $0x7e8] sm:$0xff]
  %v328 = vld [vmem:[%s2 + $0x7f0] sm:$0xff]
  %v329 = vld [vmem:[%s2 + $0x7f8] sm:$0xff]
  %v330 = vld [vmem:[%s2 + $0x800] sm:$0xff]
  %v331 = vld [vmem:[%s2 + $0x808] sm:$0xff]
  %v332 = vld [vmem:[%s2 + $0x810] sm:$0xff]
  %v333 = vld [vmem:[%s2 + $0x818] sm:$0xff]
  %v334 = vld [vmem:[%s2 + $0x820] sm:$0xff]
  %v335 = vld [vmem:[%s2 + $0x828] sm:$0xff]
  %v336 = vld [vmem:[%s2 + $0x830] sm:$0xff]
  %v337 = vld [vmem:[%s2 + $0x838] sm:$0xff]
  %v338 = vld [vmem:[%s2 + $0x840] sm:$0xff]
  %v339 = vld [vmem:[%s2 + $0x848] sm:$0xff]
  %v340 = vld [vmem:[%s2 + $0x850] sm:$0xff]
  %v341 = vld [vmem:[%s2 + $0x858] sm:$0xff]
  %v342 = vld [vmem:[%s2 + $0x860] sm:$0xff]
  %v343 = vld [vmem:[%s2 + $0x868] sm:$0xff]
  %v344 = vld [vmem:[%s2 + $0x870] sm:$0xff]
  %v345 = vld [vmem:[%s2 + $0x878] sm:$0xff]
  %v346 = vld [vmem:[%s2 + $0x880] sm:$0xff]
  %v347 = vld [vmem:[%s2 + $0x888] sm:$0xff]
  %v348 = vld [vmem:[%s2 + $0x890] sm:$0xff]
  %v349 = vld [vmem:[%s2 + $0x898] sm:$0xff]
  %v350 = vld [vmem:[%s2 + $0x8a0] sm:$0xff]
  %v351 = vld [vmem:[%s2 + $0x8a8] sm:$0xff]
  %v352 = vld [vmem:[%s2 + $0x8b0] sm:$0xff]
  %v353 = vld [vmem:[%s2 + $0x8b8] sm:$0xff]
  %v354 = vld [vmem:[%s2 + $0x8c0] sm:$0xff]
  %v355 = vld [vmem:[%s2 + $0x8c8] sm:$0xff]
  %v356 = vld [vmem:[%s2 + $0x8d0] sm:$0xff]
  %v357 = vld [vmem:[%s2 + $0x8d8] sm:$0xff]
  %v358 = vld [vmem:[%s2 + $0x8e0] sm:$0xff]
  %v359 = vld [vmem:[%s2 + $0x8e8] sm:$0xff]
  %v360 = vld [vmem:[%s2 + $0x8f0] sm:$0xff]
  %v361 = vld [vmem:[%s2 + $0x8f8] sm:$0xff]
  %v362 = vld [vmem:[%s2 + $0x900] sm:$0xff]
  %v363 = vld [vmem:[%s2 + $0x908] sm:$0xff]
  %v364 = vld [vmem:[%s2 + $0x910] sm:$0xff]
  %v365 = vld [vmem:[%s2 + $0x918] sm:$0xff]
  %v366 = vld [vmem:[%s2 + $0x920] sm:$0xff]
  %v367 = vld [vmem:[%s2 + $0x928] sm:$0xff]
  %v368 = vld [vmem:[%s2 + $0x930] sm:$0xff]
  %v369 = vld [vmem:[%s2 + $0x938] sm:$0xff]
  %v370 = vld [vmem:[%s2 + $0x940] sm:$0xff]
  %v371 = vld [vmem:[%s2 + $0x948] sm:$0xff]
  %v372 = vld [vmem:[%s2 + $0x950] sm:$0xff]
  %v373 = vld [vmem:[%s2 + $0x958] sm:$0xff]
  %v374 = vld [vmem:[%s2 + $0x960] sm:$0xff]
  %v375 = vld [vmem:[%s2 + $0x968] sm:$0xff]
  %v376 = vld [vmem:[%s2 + $0x970] sm:$0xff]
  %v377 = vld [vmem:[%s2 + $0x978] sm:$0xff]
  %v378 = vld [vmem:[%s2 + $0x980] sm:$0xff]
  %v379 = vld [vmem:[%s2 + $0x988] sm:$0xff]
  %v380 = vld [vmem:[%s2 + $0x990] sm:$0xff]
  %v381 = vld [vmem:[%s2 + $0x998] sm:$0xff]
  %v382 = vld [vmem:[%s2 + $0x9a0] sm:$0xff]
  %v383 = vld [vmem:[%s2 + $0x9a8] sm:$0xff]
  %v384 = vld [vmem:[%s2 + $0x9b0] sm:$0xff]
  %v385 = vld [vmem:[%s2 + $0x9b8] sm:$0xff]
  %v386 = vld [vmem:[%s2 + $0x9c0] sm:$0xff]
  %v387 = vld [vmem:[%s2 + $0x9c8] sm:$0xff]
  %v388 = vld [vmem:[%s2 + $0x9d0] sm:$0xff]
  %v389 = vld [vmem:[%s2 + $0x9d8] sm:$0xff]
  %v390 = vld [vmem:[%s2 + $0x9e0] sm:$0xff]
  %v391 = vld [vmem:[%s2 + $0x9e8] sm:$0xff]
  %v392 = vld [vmem:[%s2 + $0x9f0] sm:$0xff]
  %v393 = vld [vmem:[%s2 + $0x9f8] sm:$0xff]
  %v394 = vld [vmem:[%s2 + $0xa00] sm:$0xff]
  %v395 = vld [vmem:[%s2 + $0xa08] sm:$0xff]
  %v396 = vld [vmem:[%s2 + $0xa10] sm:$0xff]
  %v397 = vld [vmem:[%s2 + $0xa18] sm:$0xff]
  %v398 = vld [vmem:[%s2 + $0xa20] sm:$0xff]
  %v399 = vld [vmem:[%s2 + $0xa28] sm:$0xff]
  %v400 = vld [vmem:[%s2 + $0xa30] sm:$0xff]
  %v401 = vld [vmem:[%s2 + $0xa38] sm:$0xff]
  %v402 = vld [vmem:[%s2 + $0xa40] sm:$0xff]
  %v403 = vld [vmem:[%s2 + $0xa48] sm:$0xff]
  %v404 = vld [vmem:[%s2 + $0xa50] sm:$0xff]
  %v405 = vld [vmem:[%s2 + $0xa58] sm:$0xff]
  %v406 = vld [vmem:[%s2 + $0xa60] sm:$0xff]
  %v407 = vld [vmem:[%s2 + $0xa68] sm:$0xff]
  %v408 = vld [vmem:[%s2 + $0xa70] sm:$0xff]
  %v409 = vld [vmem:[%s2 + $0xa78] sm:$0xff]
  %v410 = vld [vmem:[%s2 + $0xa80] sm:$0xff]
  %v411 = vld [vmem:[%s2 + $0xa88] sm:$0xff]
  %v412 = vld [vmem:[%s2 + $0xa90] sm:$0xff]
  %v413 = vld [vmem:[%s2 + $0xa98] sm:$0xff]
  %v414 = vld [vmem:[%s2 + $0xaa0] sm:$0xff]
  %v415 = vld [vmem:[%s2 + $0xaa8] sm:$0xff]
  %v416 = vld [vmem:[%s2 + $0xab0] sm:$0xff]
  %v417 = vld [vmem:[%s2 + $0xab8] sm:$0xff]
  %v418 = vld [vmem:[%s2 + $0xac0] sm:$0xff]
  %v419 = vld [vmem:[%s2 + $0xac8] sm:$0xff]
  %v420 = vld [vmem:[%s2 + $0xad0] sm:$0xff]
  %v421 = vld [vmem:[%s2 + $0xad8] sm:$0xff]
  %v422 = vld [vmem:[%s2 + $0xae0] sm:$0xff]
  %v423 = vld [vmem:[%s2 + $0xae8] sm:$0xff]
  %v424 = vld [vmem:[%s2 + $0xaf0] sm:$0xff]
  %v425 = vld [vmem:[%s2 + $0xaf8] sm:$0xff]
  %v426 = vld [vmem:[%s2 + $0xb00] sm:$0xff]
  %v427 = vld [vmem:[%s2 + $0xb08] sm:$0xff]
  %v428 = vld [vmem:[%s2 + $0xb10] sm:$0xff]
  %v429 = vld [vmem:[%s2 + $0xb18] sm:$0xff]
  %v430 = vld [vmem:[%s2 + $0xb20] sm:$0xff]
  %v431 = vld [vmem:[%s2 + $0xb28] sm:$0xff]
  %v432 = vld [vmem:[%s2 + $0xb30] sm:$0xff]
  %v433 = vld [vmem:[%s2 + $0xb38] sm:$0xff]
  %v434 = vld [vmem:[%s2 + $0xb40] sm:$0xff]
  %v435 = vld [vmem:[%s2 + $0xb48] sm:$0xff]
  %v436 = vld [vmem:[%s2 + $0xb50] sm:$0xff]
  %v437 = vld [vmem:[%s2 + $0xb58] sm:$0xff]
  %v438 = vld [vmem:[%s2 + $0xb60] sm:$0xff]
  %v439 = vld [vmem:[%s2 + $0xb68] sm:$0xff]
  %v440 = vld [vmem:[%s2 + $0xb70] sm:$0xff]
  %v441 = vld [vmem:[%s2 + $0xb78] sm:$0xff]
  %v442 = vld [vmem:[%s2 + $0xb80] sm:$0xff]
  %v443 = vld [vmem:[%s2 + $0xb88] sm:$0xff]
  %v444 = vld [vmem:[%s2 + $0xb90] sm:$0xff]
  %v445 = vld [vmem:[%s2 + $0xb98] sm:$0xff]
  %v446 = vld [vmem:[%s2 + $0xba0] sm:$0xff]
  %v447 = vld [vmem:[%s2 + $0xba8] sm:$0xff]
  %v448 = vld [vmem:[%s2 + $0xbb0] sm:$0xff]
  %v449 = vld [vmem:[%s2 + $0xbb8] sm:$0xff]
  %v450 = vld [vmem:[%s2 + $0xbc0] sm:$0xff]
  %v451 = vld [vmem:[%s2 + $0xbc8] sm:$0xff]
  %v452 = vld [vmem:[%s2 + $0xbd0] sm:$0xff]
  %v453 = vld [vmem:[%s2 + $0xbd8] sm:$0xff]
  %v454 = vld [vmem:[%s2 + $0xbe0] sm:$0xff]
  %v455 = vld [vmem:[%s2 + $0xbe8] sm:$0xff]
  %v456 = vld [vmem:[%s2 + $0xbf0] sm:$0xff]
  %v457 = vld [vmem:[%s2 + $0xbf8] sm:$0xff]
  %v458 = vld [vmem:[%s2 + $0xc00] sm:$0xff]
  %v459 = vld [vmem:[%s2 + $0xc08] sm:$0xff]
  %v460 = vld [vmem:[%s2 + $0xc10] sm:$0xff]
  %v461 = vld [vmem:[%s2 + $0xc18] sm:$0xff]
  %v462 = vld [vmem:[%s2 + $0xc20] sm:$0xff]
  %v463 = vld [vmem:[%s2 + $0xc28] sm:$0xff]
  %v464 = vld [vmem:[%s2 + $0xc30] sm:$0xff]
  %v465 = vld [vmem:[%s2 + $0xc38] sm:$0xff]
  %v466 = vld [vmem:[%s2 + $0xc40] sm:$0xff]
  %v467 = vld [vmem:[%s2 + $0xc48] sm:$0xff]
  %v468 = vld [vmem:[%s2 + $0xc50] sm:$0xff]
  %v469 = vld [vmem:[%s2 + $0xc58] sm:$0xff]
  %v470 = vld [vmem:[%s2 + $0xc60] sm:$0xff]
  %v471 = vld [vmem:[%s2 + $0xc68] sm:$0xff]
  %v472 = vld [vmem:[%s2 + $0xc70] sm:$0xff]
  %v473 = vld [vmem:[%s2 + $0xc78] sm:$0xff]
  %v474 = vld [vmem:[%s2 + $0xc80] sm:$0xff]
  %v475 = vld [vmem:[%s2 + $0xc88] sm:$0xff]
  %v476 = vld [vmem:[%s2 + $0xc90] sm:$0xff]
  %v477 = vld [vmem:[%s2 + $0xc98] sm:$0xff]
  %v478 = vld [vmem:[%s2 + $0xca0] sm:$0xff]
  %v479 = vld [vmem:[%s2 + $0xca8] sm:$0xff]
  %v480 = vld [vmem:[%s2 + $0xcb0] sm:$0xff]
  %v481 = vld [vmem:[%s2 + $0xcb8] sm:$0xff]
  %v482 = vld [vmem:[%s2 + $0xcc0] sm:$0xff]
  %v483 = vld [vmem:[%s2 + $0xcc8] sm:$0xff]
  %v484 = vld [vmem:[%s2 + $0xcd0] sm:$0xff]
  %v485 = vld [vmem:[%s2 + $0xcd8] sm:$0xff]
  %v486 = vld [vmem:[%s2 + $0xce0] sm:$0xff]
  %v487 = vld [vmem:[%s2 + $0xce8] sm:$0xff]
  %v488 = vld [vmem:[%s2 + $0xcf0] sm:$0xff]
  %v489 = vld [vmem:[%s2 + $0xcf8] sm:$0xff]
  %v490 = vld [vmem:[%s2 + $0xd00] sm:$0xff]
  %v491 = vld [vmem:[%s2 + $0xd08] sm:$0xff]
  %v492 = vld [vmem:[%s2 + $0xd10] sm:$0xff]
  %v493 = vld [vmem:[%s2 + $0xd18] sm:$0xff]
  %v494 = vld [vmem:[%s2 + $0xd20] sm:$0xff]
  %v495 = vld [vmem:[%s2 + $0xd28] sm:$0xff]
  %v496 = vld [vmem:[%s2 + $0xd30] sm:$0xff]
  %v497 = vld [vmem:[%s2 + $0xd38] sm:$0xff]
  %v498 = vld [vmem:[%s2 + $0xd40] sm:$0xff]
  %v499 = vld [vmem:[%s2 + $0xd48] sm:$0xff]
  %v500 = vld [vmem:[%s2 + $0xd50] sm:$0xff]
  %v501 = vld [vmem:[%s2 + $0xd58] sm:$0xff]
  %v502 = vld [vmem:[%s2 + $0xd60] sm:$0xff]
  %v503 = vld [vmem:[%s2 + $0xd68] sm:$0xff]
  %v504 = vld [vmem:[%s2 + $0xd70] sm:$0xff]
  %v505 = vld [vmem:[%s2 + $0xd78] sm:$0xff]
  %v506 = vld [vmem:[%s2 + $0xd80] sm:$0xff]
  %v507 = vld [vmem:[%s2 + $0xd88] sm:$0xff]
  %v508 = vld [vmem:[%s2 + $0xd90] sm:$0xff]
  %v509 = vld [vmem:[%s2 + $0xd98] sm:$0xff]
  %v510 = vld [vmem:[%s2 + $0xda0] sm:$0xff]
  %v511 = vld [vmem:[%s2 + $0xda8] sm:$0xff]
  %v512 = vld [vmem:[%s2 + $0xdb0] sm:$0xff]
  %v513 = vld [vmem:[%s2 + $0xdb8] sm:$0xff]
  %v514 = vld [vmem:[%s2 + $0xdc0] sm:$0xff]
  %v515 = vld [vmem:[%s2 + $0xdc8] sm:$0xff]
  %v516 = vld [vmem:[%s2 + $0xdd0] sm:$0xff]
  %v517 = vld [vmem:[%s2 + $0xdd8] sm:$0xff]
  %v518 = vld [vmem:[%s2 + $0xde0] sm:$0xff]
  %v519 = vld [vmem:[%s2 + $0xde8] sm:$0xff]
  %v520 = vld [vmem:[%s2 + $0xdf0] sm:$0xff]
  %v521 = vld [vmem:[%s2 + $0xdf8] sm:$0xff]
  %v522 = vld [vmem:[%s2 + $0xe00] sm:$0xff]
  %v523 = vld [vmem:[%s2 + $0xe08] sm:$0xff]
  %v524 = vld [vmem:[%s2 + $0xe10] sm:$0xff]
  %v525 = vld [vmem:[%s2 + $0xe18] sm:$0xff]
  %v526 = vld [vmem:[%s2 + $0xe20] sm:$0xff]
  %v527 = vld [vmem:[%s2 + $0xe28] sm:$0xff]
  %v528 = vld [vmem:[%s2 + $0xe30] sm:$0xff]
  %v529 = vld [vmem:[%s2 + $0xe38] sm:$0xff]
  %v530 = vld [vmem:[%s2 + $0xe40] sm:$0xff]
  %v531 = vld [vmem:[%s2 + $0xe48] sm:$0xff]
  %v532 = vld [vmem:[%s2 + $0xe50] sm:$0xff]
  %v533 = vld [vmem:[%s2 + $0xe58] sm:$0xff]
  %v534 = vld [vmem:[%s2 + $0xe60] sm:$0xff]
  %v535 = vld [vmem:[%s2 + $0xe68] sm:$0xff]
  %v536 = vld [vmem:[%s2 + $0xe70] sm:$0xff]
  %v537 = vld [vmem:[%s2 + $0xe78] sm:$0xff]
  %v538 = vld [vmem:[%s2 + $0xe80] sm:$0xff]
  %v539 = vld [vmem:[%s2 + $0xe88] sm:$0xff]
  %v540 = vld [vmem:[%s2 + $0xe90] sm:$0xff]
  %v541 = vld [vmem:[%s2 + $0xe98] sm:$0xff]
  %v542 = vld [vmem:[%s2 + $0xea0] sm:$0xff]
  %v543 = vld [vmem:[%s2 + $0xea8] sm:$0xff]
  %v544 = vld [vmem:[%s2 + $0xeb0] sm:$0xff]
  %v545 = vld [vmem:[%s2 + $0xeb8] sm:$0xff]
  %v546 = vld [vmem:[%s2 + $0xec0] sm:$0xff]
  %v547 = vld [vmem:[%s2 + $0xec8] sm:$0xff]
  %v548 = vld [vmem:[%s2 + $0xed0] sm:$0xff]
  %v549 = vld [vmem:[%s2 + $0xed8] sm:$0xff]
  %v550 = vld [vmem:[%s2 + $0xee0] sm:$0xff]
  %v551 = vld [vmem:[%s2 + $0xee8] sm:$0xff]
  %v552 = vld [vmem:[%s2 + $0xef0] sm:$0xff]
  %v553 = vld [vmem:[%s2 + $0xef8] sm:$0xff]
  %v554 = vld [vmem:[%s2 + $0xf00] sm:$0xff]
  %v555 = vld [vmem:[%s2 + $0xf08] sm:$0xff]
  %v556 = vld [vmem:[%s2 + $0xf10] sm:$0xff]
  %v557 = vld [vmem:[%s2 + $0xf18] sm:$0xff]
  %v558 = vld [vmem:[%s2 + $0xf20] sm:$0xff]
  %v559 = vld [vmem:[%s2 + $0xf28] sm:$0xff]
  %v560 = vld [vmem:[%s2 + $0xf30] sm:$0xff]
  %v561 = vld [vmem:[%s2 + $0xf38] sm:$0xff]
  %v562 = vld [vmem:[%s2 + $0xf40] sm:$0xff]
  %v563 = vld [vmem:[%s2 + $0xf48] sm:$0xff]
  %v564 = vld [vmem:[%s2 + $0xf50] sm:$0xff]
  %v565 = vld [vmem:[%s2 + $0xf58] sm:$0xff]
  %v566 = vld [vmem:[%s2 + $0xf60] sm:$0xff]
  %v567 = vld [vmem:[%s2 + $0xf68] sm:$0xff]
  %v568 = vld [vmem:[%s2 + $0xf70] sm:$0xff]
  %v569 = vld [vmem:[%s2 + $0xf78] sm:$0xff]
  %v570 = vld [vmem:[%s2 + $0xf80] sm:$0xff]
  %v571 = vld [vmem:[%s2 + $0xf88] sm:$0xff]
  %v572 = vld [vmem:[%s2 + $0xf90] sm:$0xff]
  %v573 = vld [vmem:[%s2 + $0xf98] sm:$0xff]
  %v574 = vld [vmem:[%s2 + $0xfa0] sm:$0xff]
  %v575 = vld [vmem:[%s2 + $0xfa8] sm:$0xff]
  %v576 = vld [vmem:[%s2 + $0xfb0] sm:$0xff]
  %v577 = vld [vmem:[%s2 + $0xfb8] sm:$0xff]
  %v578 = vld [vmem:[%s2 + $0xfc0] sm:$0xff]
  %v579 = vld [vmem:[%s2 + $0xfc8] sm:$0xff]
  %v580 = vld [vmem:[%s2 + $0xfd0] sm:$0xff]
  %v581 = vld [vmem:[%s2 + $0xfd8] sm:$0xff]
  %v582 = vld [vmem:[%s2 + $0xfe0] sm:$0xff]
  %v583 = vld [vmem:[%s2 + $0xfe8] sm:$0xff]
  %v584 = vld [vmem:[%s2 + $0xff0] sm:$0xff]
  %v585 = vld [vmem:[%s2 + $0xff8] sm:$0xff]
  %v586 = vld [vmem:[%s52] sm:$0xff]
  %v587 = vld [vmem:[%s52 + $0x8] sm:$0xff]
  %v588 = vld [vmem:[%s52 + $0x10] sm:$0xff]
  %v589 = vld [vmem:[%s52 + $0x18] sm:$0xff]
  %v590 = vld [vmem:[%s52 + $0x20] sm:$0xff]
  %v591 = vld [vmem:[%s52 + $0x28] sm:$0xff]
  %v592 = vld [vmem:[%s52 + $0x30] sm:$0xff]
  %v593 = vld [vmem:[%s52 + $0x38] sm:$0xff]
  %v594 = vld [vmem:[%s52 + $0x40] sm:$0xff]
  %v595 = vld [vmem:[%s52 + $0x48] sm:$0xff]
  %v596 = vld [vmem:[%s52 + $0x50] sm:$0xff]
  %v597 = vld [vmem:[%s52 + $0x58] sm:$0xff]
  %v598 = vld [vmem:[%s52 + $0x60] sm:$0xff]
  %v599 = vld [vmem:[%s52 + $0x68] sm:$0xff]
  %v600 = vld [vmem:[%s52 + $0x70] sm:$0xff]
  %v601 = vld [vmem:[%s52 + $0x78] sm:$0xff]
  %v602 = vld [vmem:[%s52 + $0x80] sm:$0xff]
  %v603 = vld [vmem:[%s52 + $0x88] sm:$0xff]
  %v604 = vld [vmem:[%s52 + $0x90] sm:$0xff]
  %v605 = vld [vmem:[%s52 + $0x98] sm:$0xff]
  %v606 = vld [vmem:[%s52 + $0xa0] sm:$0xff]
  %v607 = vld [vmem:[%s52 + $0xa8] sm:$0xff]
  %v608 = vld [vmem:[%s52 + $0xb0] sm:$0xff]
  %v609 = vld [vmem:[%s52 + $0xb8] sm:$0xff]
  %v634 = vunpack.c.l.b16 %v586
  %v635 = vunpack.c.h.b16 %v586
  %v636 = vunpack.c.l.b16 %v587
  %v637 = vunpack.c.h.b16 %v587
  %v638 = vunpack.c.l.b16 %v588
  %v639 = vunpack.c.h.b16 %v588
  %v640 = vunpack.c.l.b16 %v589
  %v641 = vunpack.c.h.b16 %v589
  %v642 = vunpack.c.l.b16 %v590
  %v643 = vunpack.c.h.b16 %v590
  %v644 = vunpack.c.l.b16 %v591
  %v645 = vunpack.c.h.b16 %v591
  %v646 = vunpack.c.l.b16 %v592
  %v647 = vunpack.c.h.b16 %v592
  %v648 = vunpack.c.l.b16 %v593
  %v649 = vunpack.c.h.b16 %v593
  %v650 = vunpack.c.l.b16 %v594
  %v651 = vunpack.c.h.b16 %v594
  %v652 = vunpack.c.l.b16 %v595
  %v653 = vunpack.c.h.b16 %v595
  %v654 = vunpack.c.l.b16 %v596
  %v655 = vunpack.c.h.b16 %v596
  %v656 = vunpack.c.l.b16 %v597
  %v657 = vunpack.c.h.b16 %v597
  %v658 = vunpack.c.l.b16 %v598
  %v659 = vunpack.c.h.b16 %v598
  %v660 = vunpack.c.l.b16 %v599
  %v661 = vunpack.c.h.b16 %v599
  %v662 = vunpack.c.l.b16 %v600
  %v663 = vunpack.c.h.b16 %v600
  %v664 = vunpack.c.l.b16 %v601
  %v665 = vunpack.c.h.b16 %v601
  %v666 = vunpack.c.l.b16 %v602
  %v667 = vunpack.c.h.b16 %v602
  %v668 = vunpack.c.l.b16 %v603
  %v669 = vunpack.c.h.b16 %v603
  %v670 = vunpack.c.l.b16 %v604
  %v671 = vunpack.c.h.b16 %v604
  %v672 = vunpack.c.l.b16 %v605
  %v673 = vunpack.c.h.b16 %v605
  %v674 = vunpack.c.l.b16 %v606
  %v675 = vunpack.c.h.b16 %v606
  %v676 = vunpack.c.l.b16 %v607
  %v677 = vunpack.c.h.b16 %v607
  %v678 = vunpack.c.l.b16 %v608
  %v679 = vunpack.c.h.b16 %v608
  %v680 = vunpack.c.l.b16 %v609
  %v681 = vunpack.c.h.b16 %v609
  %v682 = vpack.c.b16 %v650, %v634
  %v683 = vpack.c.b16 %v651, %v635
  %v684 = vpack.c.b16 %v652, %v636
  %v685 = vpack.c.b16 %v653, %v637
  %v686 = vpack.c.b16 %v654, %v638
  %v687 = vpack.c.b16 %v655, %v639
  %v688 = vpack.c.b16 %v656, %v640
  %v689 = vpack.c.b16 %v657, %v641
  %v690 = vpack.c.b16 %v658, %v642
  %v691 = vpack.c.b16 %v659, %v643
  %v692 = vpack.c.b16 %v660, %v644
  %v693 = vpack.c.b16 %v661, %v645
  %v694 = vpack.c.b16 %v662, %v646
  %v695 = vpack.c.b16 %v663, %v647
  %v696 = vpack.c.b16 %v664, %v648
  %v697 = vpack.c.b16 %v665, %v649
  %v698 = vpack.c.b16 %v666, %v666
  %v699 = vpack.c.b16 %v667, %v667
  %v700 = vpack.c.b16 %v668, %v668
  %v701 = vpack.c.b16 %v669, %v669
  %v702 = vpack.c.b16 %v670, %v670
  %v703 = vpack.c.b16 %v671, %v671
  %v704 = vpack.c.b16 %v672, %v672
  %v705 = vpack.c.b16 %v673, %v673
  %v706 = vpack.c.b16 %v674, %v674
  %v707 = vpack.c.b16 %v675, %v675
  %v708 = vpack.c.b16 %v676, %v676
  %v709 = vpack.c.b16 %v677, %v677
  %v710 = vpack.c.b16 %v678, %v678
  %v711 = vpack.c.b16 %v679, %v679
  %v712 = vpack.c.b16 %v680, %v680
  %v713 = vpack.c.b16 %v681, %v681
  %v1258 = vunpack.c.l.b16 %v74
  %v1259 = vunpack.c.h.b16 %v74
  %v1260 = vunpack.c.l.b16 %v75
  %v1261 = vunpack.c.h.b16 %v75
  %v1262 = vunpack.c.l.b16 %v76
  %v1263 = vunpack.c.h.b16 %v76
  %v1264 = vunpack.c.l.b16 %v77
  %v1265 = vunpack.c.h.b16 %v77
  %v1266 = vunpack.c.l.b16 %v78
  %v1267 = vunpack.c.h.b16 %v78
  %v1268 = vunpack.c.l.b16 %v79
  %v1269 = vunpack.c.h.b16 %v79
  %v1270 = vunpack.c.l.b16 %v80
  %v1271 = vunpack.c.h.b16 %v80
  %v1272 = vunpack.c.l.b16 %v81
  %v1273 = vunpack.c.h.b16 %v81
  %v1274 = vunpack.c.l.b16 %v82
  %v1275 = vunpack.c.h.b16 %v82
  %v1276 = vunpack.c.l.b16 %v83
  %v1277 = vunpack.c.h.b16 %v83
  %v1278 = vunpack.c.l.b16 %v84
  %v1279 = vunpack.c.h.b16 %v84
  %v1280 = vunpack.c.l.b16 %v85
  %v1281 = vunpack.c.h.b16 %v85
  %v1282 = vunpack.c.l.b16 %v86
  %v1283 = vunpack.c.h.b16 %v86
  %v1284 = vunpack.c.l.b16 %v87
  %v1285 = vunpack.c.h.b16 %v87
  %v1286 = vunpack.c.l.b16 %v88
  %v1287 = vunpack.c.h.b16 %v88
  %v1288 = vunpack.c.l.b16 %v89
  %v1289 = vunpack.c.h.b16 %v89
  %v1290 = vunpack.c.l.b16 %v90
  %v1291 = vunpack.c.h.b16 %v90
  %v1292 = vunpack.c.l.b16 %v91
  %v1293 = vunpack.c.h.b16 %v91
  %v1294 = vunpack.c.l.b16 %v92
  %v1295 = vunpack.c.h.b16 %v92
  %v1296 = vunpack.c.l.b16 %v93
  %v1297 = vunpack.c.h.b16 %v93
  %v1298 = vunpack.c.l.b16 %v94
  %v1299 = vunpack.c.h.b16 %v94
  %v1300 = vunpack.c.l.b16 %v95
  %v1301 = vunpack.c.h.b16 %v95
  %v1302 = vunpack.c.l.b16 %v96
  %v1303 = vunpack.c.h.b16 %v96
  %v1304 = vunpack.c.l.b16 %v97
  %v1305 = vunpack.c.h.b16 %v97
  %v1306 = vunpack.c.l.b16 %v98
  %v1307 = vunpack.c.h.b16 %v98
  %v1308 = vunpack.c.l.b16 %v99
  %v1309 = vunpack.c.h.b16 %v99
  %v1310 = vunpack.c.l.b16 %v100
  %v1311 = vunpack.c.h.b16 %v100
  %v1312 = vunpack.c.l.b16 %v101
  %v1313 = vunpack.c.h.b16 %v101
  %v1314 = vunpack.c.l.b16 %v102
  %v1315 = vunpack.c.h.b16 %v102
  %v1316 = vunpack.c.l.b16 %v103
  %v1317 = vunpack.c.h.b16 %v103
  %v1318 = vunpack.c.l.b16 %v104
  %v1319 = vunpack.c.h.b16 %v104
  %v1320 = vunpack.c.l.b16 %v105
  %v1321 = vunpack.c.h.b16 %v105
  %v1322 = vunpack.c.l.b16 %v106
  %v1323 = vunpack.c.h.b16 %v106
  %v1324 = vunpack.c.l.b16 %v107
  %v1325 = vunpack.c.h.b16 %v107
  %v1326 = vunpack.c.l.b16 %v108
  %v1327 = vunpack.c.h.b16 %v108
  %v1328 = vunpack.c.l.b16 %v109
  %v1329 = vunpack.c.h.b16 %v109
  %v1330 = vunpack.c.l.b16 %v110
  %v1331 = vunpack.c.h.b16 %v110
  %v1332 = vunpack.c.l.b16 %v111
  %v1333 = vunpack.c.h.b16 %v111
  %v1334 = vunpack.c.l.b16 %v112
  %v1335 = vunpack.c.h.b16 %v112
  %v1336 = vunpack.c.l.b16 %v113
  %v1337 = vunpack.c.h.b16 %v113
  %v1338 = vunpack.c.l.b16 %v114
  %v1339 = vunpack.c.h.b16 %v114
  %v1340 = vunpack.c.l.b16 %v115
  %v1341 = vunpack.c.h.b16 %v115
  %v1342 = vunpack.c.l.b16 %v116
  %v1343 = vunpack.c.h.b16 %v116
  %v1344 = vunpack.c.l.b16 %v117
  %v1345 = vunpack.c.h.b16 %v117
  %v1346 = vunpack.c.l.b16 %v118
  %v1347 = vunpack.c.h.b16 %v118
  %v1348 = vunpack.c.l.b16 %v119
  %v1349 = vunpack.c.h.b16 %v119
  %v1350 = vunpack.c.l.b16 %v120
  %v1351 = vunpack.c.h.b16 %v120
  %v1352 = vunpack.c.l.b16 %v121
  %v1353 = vunpack.c.h.b16 %v121
  %v1354 = vunpack.c.l.b16 %v122
  %v1355 = vunpack.c.h.b16 %v122
  %v1356 = vunpack.c.l.b16 %v123
  %v1357 = vunpack.c.h.b16 %v123
  %v1358 = vunpack.c.l.b16 %v124
  %v1359 = vunpack.c.h.b16 %v124
  %v1360 = vunpack.c.l.b16 %v125
  %v1361 = vunpack.c.h.b16 %v125
  %v1362 = vunpack.c.l.b16 %v126
  %v1363 = vunpack.c.h.b16 %v126
  %v1364 = vunpack.c.l.b16 %v127
  %v1365 = vunpack.c.h.b16 %v127
  %v1366 = vunpack.c.l.b16 %v128
  %v1367 = vunpack.c.h.b16 %v128
  %v1368 = vunpack.c.l.b16 %v129
  %v1369 = vunpack.c.h.b16 %v129
  %v1370 = vunpack.c.l.b16 %v130
  %v1371 = vunpack.c.h.b16 %v130
  %v1372 = vunpack.c.l.b16 %v131
  %v1373 = vunpack.c.h.b16 %v131
  %v1374 = vunpack.c.l.b16 %v132
  %v1375 = vunpack.c.h.b16 %v132
  %v1376 = vunpack.c.l.b16 %v133
  %v1377 = vunpack.c.h.b16 %v133
  %v1378 = vunpack.c.l.b16 %v134
  %v1379 = vunpack.c.h.b16 %v134
  %v1380 = vunpack.c.l.b16 %v135
  %v1381 = vunpack.c.h.b16 %v135
  %v1382 = vunpack.c.l.b16 %v136
  %v1383 = vunpack.c.h.b16 %v136
  %v1384 = vunpack.c.l.b16 %v137
  %v1385 = vunpack.c.h.b16 %v137
  %v1386 = vunpack.c.l.b16 %v138
  %v1387 = vunpack.c.h.b16 %v138
  %v1388 = vunpack.c.l.b16 %v139
  %v1389 = vunpack.c.h.b16 %v139
  %v1390 = vunpack.c.l.b16 %v140
  %v1391 = vunpack.c.h.b16 %v140
  %v1392 = vunpack.c.l.b16 %v141
  %v1393 = vunpack.c.h.b16 %v141
  %v1394 = vunpack.c.l.b16 %v142
  %v1395 = vunpack.c.h.b16 %v142
  %v1396 = vunpack.c.l.b16 %v143
  %v1397 = vunpack.c.h.b16 %v143
  %v1398 = vunpack.c.l.b16 %v144
  %v1399 = vunpack.c.h.b16 %v144
  %v1400 = vunpack.c.l.b16 %v145
  %v1401 = vunpack.c.h.b16 %v145
  %v1402 = vunpack.c.l.b16 %v146
  %v1403 = vunpack.c.h.b16 %v146
  %v1404 = vunpack.c.l.b16 %v147
  %v1405 = vunpack.c.h.b16 %v147
  %v1406 = vunpack.c.l.b16 %v148
  %v1407 = vunpack.c.h.b16 %v148
  %v1408 = vunpack.c.l.b16 %v149
  %v1409 = vunpack.c.h.b16 %v149
  %v1410 = vunpack.c.l.b16 %v150
  %v1411 = vunpack.c.h.b16 %v150
  %v1412 = vunpack.c.l.b16 %v151
  %v1413 = vunpack.c.h.b16 %v151
  %v1414 = vunpack.c.l.b16 %v152
  %v1415 = vunpack.c.h.b16 %v152
  %v1416 = vunpack.c.l.b16 %v153
  %v1417 = vunpack.c.h.b16 %v153
  %v1418 = vunpack.c.l.b16 %v154
  %v1419 = vunpack.c.h.b16 %v154
  %v1420 = vunpack.c.l.b16 %v155
  %v1421 = vunpack.c.h.b16 %v155
  %v1422 = vunpack.c.l.b16 %v156
  %v1423 = vunpack.c.h.b16 %v156
  %v1424 = vunpack.c.l.b16 %v157
  %v1425 = vunpack.c.h.b16 %v157
  %v1426 = vunpack.c.l.b16 %v158
  %v1427 = vunpack.c.h.b16 %v158
  %v1428 = vunpack.c.l.b16 %v159
  %v1429 = vunpack.c.h.b16 %v159
  %v1430 = vunpack.c.l.b16 %v160
  %v1431 = vunpack.c.h.b16 %v160
  %v1432 = vunpack.c.l.b16 %v161
  %v1433 = vunpack.c.h.b16 %v161
  %v1434 = vunpack.c.l.b16 %v162
  %v1435 = vunpack.c.h.b16 %v162
  %v1436 = vunpack.c.l.b16 %v163
  %v1437 = vunpack.c.h.b16 %v163
  %v1438 = vunpack.c.l.b16 %v164
  %v1439 = vunpack.c.h.b16 %v164
  %v1440 = vunpack.c.l.b16 %v165
  %v1441 = vunpack.c.h.b16 %v165
  %v1442 = vunpack.c.l.b16 %v166
  %v1443 = vunpack.c.h.b16 %v166
  %v1444 = vunpack.c.l.b16 %v167
  %v1445 = vunpack.c.h.b16 %v167
  %v1446 = vunpack.c.l.b16 %v168
  %v1447 = vunpack.c.h.b16 %v168
  %v1448 = vunpack.c.l.b16 %v169
  %v1449 = vunpack.c.h.b16 %v169
  %v1450 = vunpack.c.l.b16 %v170
  %v1451 = vunpack.c.h.b16 %v170
  %v1452 = vunpack.c.l.b16 %v171
  %v1453 = vunpack.c.h.b16 %v171
  %v1454 = vunpack.c.l.b16 %v172
  %v1455 = vunpack.c.h.b16 %v172
  %v1456 = vunpack.c.l.b16 %v173
  %v1457 = vunpack.c.h.b16 %v173
  %v1458 = vunpack.c.l.b16 %v174
  %v1459 = vunpack.c.h.b16 %v174
  %v1460 = vunpack.c.l.b16 %v175
  %v1461 = vunpack.c.h.b16 %v175
  %v1462 = vunpack.c.l.b16 %v176
  %v1463 = vunpack.c.h.b16 %v176
  %v1464 = vunpack.c.l.b16 %v177
  %v1465 = vunpack.c.h.b16 %v177
  %v1466 = vunpack.c.l.b16 %v178
  %v1467 = vunpack.c.h.b16 %v178
  %v1468 = vunpack.c.l.b16 %v179
  %v1469 = vunpack.c.h.b16 %v179
  %v1470 = vunpack.c.l.b16 %v180
  %v1471 = vunpack.c.h.b16 %v180
  %v1472 = vunpack.c.l.b16 %v181
  %v1473 = vunpack.c.h.b16 %v181
  %v1474 = vunpack.c.l.b16 %v182
  %v1475 = vunpack.c.h.b16 %v182
  %v1476 = vunpack.c.l.b16 %v183
  %v1477 = vunpack.c.h.b16 %v183
  %v1478 = vunpack.c.l.b16 %v184
  %v1479 = vunpack.c.h.b16 %v184
  %v1480 = vunpack.c.l.b16 %v185
  %v1481 = vunpack.c.h.b16 %v185
  %v1482 = vunpack.c.l.b16 %v186
  %v1483 = vunpack.c.h.b16 %v186
  %v1484 = vunpack.c.l.b16 %v187
  %v1485 = vunpack.c.h.b16 %v187
  %v1486 = vunpack.c.l.b16 %v188
  %v1487 = vunpack.c.h.b16 %v188
  %v1488 = vunpack.c.l.b16 %v189
  %v1489 = vunpack.c.h.b16 %v189
  %v1490 = vunpack.c.l.b16 %v190
  %v1491 = vunpack.c.h.b16 %v190
  %v1492 = vunpack.c.l.b16 %v191
  %v1493 = vunpack.c.h.b16 %v191
  %v1494 = vunpack.c.l.b16 %v192
  %v1495 = vunpack.c.h.b16 %v192
  %v1496 = vunpack.c.l.b16 %v193
  %v1497 = vunpack.c.h.b16 %v193
  %v1498 = vunpack.c.l.b16 %v194
  %v1499 = vunpack.c.h.b16 %v194
  %v1500 = vunpack.c.l.b16 %v195
  %v1501 = vunpack.c.h.b16 %v195
  %v1502 = vunpack.c.l.b16 %v196
  %v1503 = vunpack.c.h.b16 %v196
  %v1504 = vunpack.c.l.b16 %v197
  %v1505 = vunpack.c.h.b16 %v197
  %v1506 = vunpack.c.l.b16 %v198
  %v1507 = vunpack.c.h.b16 %v198
  %v1508 = vunpack.c.l.b16 %v199
  %v1509 = vunpack.c.h.b16 %v199
  %v1510 = vunpack.c.l.b16 %v200
  %v1511 = vunpack.c.h.b16 %v200
  %v1512 = vunpack.c.l.b16 %v201
  %v1513 = vunpack.c.h.b16 %v201
  %v1514 = vunpack.c.l.b16 %v202
  %v1515 = vunpack.c.h.b16 %v202
  %v1516 = vunpack.c.l.b16 %v203
  %v1517 = vunpack.c.h.b16 %v203
  %v1518 = vunpack.c.l.b16 %v204
  %v1519 = vunpack.c.h.b16 %v204
  %v1520 = vunpack.c.l.b16 %v205
  %v1521 = vunpack.c.h.b16 %v205
  %v1522 = vunpack.c.l.b16 %v206
  %v1523 = vunpack.c.h.b16 %v206
  %v1524 = vunpack.c.l.b16 %v207
  %v1525 = vunpack.c.h.b16 %v207
  %v1526 = vunpack.c.l.b16 %v208
  %v1527 = vunpack.c.h.b16 %v208
  %v1528 = vunpack.c.l.b16 %v209
  %v1529 = vunpack.c.h.b16 %v209
  %v1530 = vunpack.c.l.b16 %v210
  %v1531 = vunpack.c.h.b16 %v210
  %v1532 = vunpack.c.l.b16 %v211
  %v1533 = vunpack.c.h.b16 %v211
  %v1534 = vunpack.c.l.b16 %v212
  %v1535 = vunpack.c.h.b16 %v212
  %v1536 = vunpack.c.l.b16 %v213
  %v1537 = vunpack.c.h.b16 %v213
  %v1538 = vunpack.c.l.b16 %v214
  %v1539 = vunpack.c.h.b16 %v214
  %v1540 = vunpack.c.l.b16 %v215
  %v1541 = vunpack.c.h.b16 %v215
  %v1542 = vunpack.c.l.b16 %v216
  %v1543 = vunpack.c.h.b16 %v216
  %v1544 = vunpack.c.l.b16 %v217
  %v1545 = vunpack.c.h.b16 %v217
  %v1546 = vunpack.c.l.b16 %v218
  %v1547 = vunpack.c.h.b16 %v218
  %v1548 = vunpack.c.l.b16 %v219
  %v1549 = vunpack.c.h.b16 %v219
  %v1550 = vunpack.c.l.b16 %v220
  %v1551 = vunpack.c.h.b16 %v220
  %v1552 = vunpack.c.l.b16 %v221
  %v1553 = vunpack.c.h.b16 %v221
  %v1554 = vunpack.c.l.b16 %v222
  %v1555 = vunpack.c.h.b16 %v222
  %v1556 = vunpack.c.l.b16 %v223
  %v1557 = vunpack.c.h.b16 %v223
  %v1558 = vunpack.c.l.b16 %v224
  %v1559 = vunpack.c.h.b16 %v224
  %v1560 = vunpack.c.l.b16 %v225
  %v1561 = vunpack.c.h.b16 %v225
  %v1562 = vunpack.c.l.b16 %v226
  %v1563 = vunpack.c.h.b16 %v226
  %v1564 = vunpack.c.l.b16 %v227
  %v1565 = vunpack.c.h.b16 %v227
  %v1566 = vunpack.c.l.b16 %v228
  %v1567 = vunpack.c.h.b16 %v228
  %v1568 = vunpack.c.l.b16 %v229
  %v1569 = vunpack.c.h.b16 %v229
  %v1570 = vunpack.c.l.b16 %v230
  %v1571 = vunpack.c.h.b16 %v230
  %v1572 = vunpack.c.l.b16 %v231
  %v1573 = vunpack.c.h.b16 %v231
  %v1574 = vunpack.c.l.b16 %v232
  %v1575 = vunpack.c.h.b16 %v232
  %v1576 = vunpack.c.l.b16 %v233
  %v1577 = vunpack.c.h.b16 %v233
  %v1578 = vunpack.c.l.b16 %v234
  %v1579 = vunpack.c.h.b16 %v234
  %v1580 = vunpack.c.l.b16 %v235
  %v1581 = vunpack.c.h.b16 %v235
  %v1582 = vunpack.c.l.b16 %v236
  %v1583 = vunpack.c.h.b16 %v236
  %v1584 = vunpack.c.l.b16 %v237
  %v1585 = vunpack.c.h.b16 %v237
  %v1586 = vunpack.c.l.b16 %v238
  %v1587 = vunpack.c.h.b16 %v238
  %v1588 = vunpack.c.l.b16 %v239
  %v1589 = vunpack.c.h.b16 %v239
  %v1590 = vunpack.c.l.b16 %v240
  %v1591 = vunpack.c.h.b16 %v240
  %v1592 = vunpack.c.l.b16 %v241
  %v1593 = vunpack.c.h.b16 %v241
  %v1594 = vunpack.c.l.b16 %v242
  %v1595 = vunpack.c.h.b16 %v242
  %v1596 = vunpack.c.l.b16 %v243
  %v1597 = vunpack.c.h.b16 %v243
  %v1598 = vunpack.c.l.b16 %v244
  %v1599 = vunpack.c.h.b16 %v244
  %v1600 = vunpack.c.l.b16 %v245
  %v1601 = vunpack.c.h.b16 %v245
  %v1602 = vunpack.c.l.b16 %v246
  %v1603 = vunpack.c.h.b16 %v246
  %v1604 = vunpack.c.l.b16 %v247
  %v1605 = vunpack.c.h.b16 %v247
  %v1606 = vunpack.c.l.b16 %v248
  %v1607 = vunpack.c.h.b16 %v248
  %v1608 = vunpack.c.l.b16 %v249
  %v1609 = vunpack.c.h.b16 %v249
  %v1610 = vunpack.c.l.b16 %v250
  %v1611 = vunpack.c.h.b16 %v250
  %v1612 = vunpack.c.l.b16 %v251
  %v1613 = vunpack.c.h.b16 %v251
  %v1614 = vunpack.c.l.b16 %v252
  %v1615 = vunpack.c.h.b16 %v252
  %v1616 = vunpack.c.l.b16 %v253
  %v1617 = vunpack.c.h.b16 %v253
  %v1618 = vunpack.c.l.b16 %v254
  %v1619 = vunpack.c.h.b16 %v254
  %v1620 = vunpack.c.l.b16 %v255
  %v1621 = vunpack.c.h.b16 %v255
  %v1622 = vunpack.c.l.b16 %v256
  %v1623 = vunpack.c.h.b16 %v256
  %v1624 = vunpack.c.l.b16 %v257
  %v1625 = vunpack.c.h.b16 %v257
  %v1626 = vunpack.c.l.b16 %v258
  %v1627 = vunpack.c.h.b16 %v258
  %v1628 = vunpack.c.l.b16 %v259
  %v1629 = vunpack.c.h.b16 %v259
  %v1630 = vunpack.c.l.b16 %v260
  %v1631 = vunpack.c.h.b16 %v260
  %v1632 = vunpack.c.l.b16 %v261
  %v1633 = vunpack.c.h.b16 %v261
  %v1634 = vunpack.c.l.b16 %v262
  %v1635 = vunpack.c.h.b16 %v262
  %v1636 = vunpack.c.l.b16 %v263
  %v1637 = vunpack.c.h.b16 %v263
  %v1638 = vunpack.c.l.b16 %v264
  %v1639 = vunpack.c.h.b16 %v264
  %v1640 = vunpack.c.l.b16 %v265
  %v1641 = vunpack.c.h.b16 %v265
  %v1642 = vunpack.c.l.b16 %v266
  %v1643 = vunpack.c.h.b16 %v266
  %v1644 = vunpack.c.l.b16 %v267
  %v1645 = vunpack.c.h.b16 %v267
  %v1646 = vunpack.c.l.b16 %v268
  %v1647 = vunpack.c.h.b16 %v268
  %v1648 = vunpack.c.l.b16 %v269
  %v1649 = vunpack.c.h.b16 %v269
  %v1650 = vunpack.c.l.b16 %v270
  %v1651 = vunpack.c.h.b16 %v270
  %v1652 = vunpack.c.l.b16 %v271
  %v1653 = vunpack.c.h.b16 %v271
  %v1654 = vunpack.c.l.b16 %v272
  %v1655 = vunpack.c.h.b16 %v272
  %v1656 = vunpack.c.l.b16 %v273
  %v1657 = vunpack.c.h.b16 %v273
  %v1658 = vunpack.c.l.b16 %v274
  %v1659 = vunpack.c.h.b16 %v274
  %v1660 = vunpack.c.l.b16 %v275
  %v1661 = vunpack.c.h.b16 %v275
  %v1662 = vunpack.c.l.b16 %v276
  %v1663 = vunpack.c.h.b16 %v276
  %v1664 = vunpack.c.l.b16 %v277
  %v1665 = vunpack.c.h.b16 %v277
  %v1666 = vunpack.c.l.b16 %v278
  %v1667 = vunpack.c.h.b16 %v278
  %v1668 = vunpack.c.l.b16 %v279
  %v1669 = vunpack.c.h.b16 %v279
  %v1670 = vunpack.c.l.b16 %v280
  %v1671 = vunpack.c.h.b16 %v280
  %v1672 = vunpack.c.l.b16 %v281
  %v1673 = vunpack.c.h.b16 %v281
  %v1674 = vunpack.c.l.b16 %v282
  %v1675 = vunpack.c.h.b16 %v282
  %v1676 = vunpack.c.l.b16 %v283
  %v1677 = vunpack.c.h.b16 %v283
  %v1678 = vunpack.c.l.b16 %v284
  %v1679 = vunpack.c.h.b16 %v284
  %v1680 = vunpack.c.l.b16 %v285
  %v1681 = vunpack.c.h.b16 %v285
  %v1682 = vunpack.c.l.b16 %v286
  %v1683 = vunpack.c.h.b16 %v286
  %v1684 = vunpack.c.l.b16 %v287
  %v1685 = vunpack.c.h.b16 %v287
  %v1686 = vunpack.c.l.b16 %v288
  %v1687 = vunpack.c.h.b16 %v288
  %v1688 = vunpack.c.l.b16 %v289
  %v1689 = vunpack.c.h.b16 %v289
  %v1690 = vunpack.c.l.b16 %v290
  %v1691 = vunpack.c.h.b16 %v290
  %v1692 = vunpack.c.l.b16 %v291
  %v1693 = vunpack.c.h.b16 %v291
  %v1694 = vunpack.c.l.b16 %v292
  %v1695 = vunpack.c.h.b16 %v292
  %v1696 = vunpack.c.l.b16 %v293
  %v1697 = vunpack.c.h.b16 %v293
  %v1698 = vunpack.c.l.b16 %v294
  %v1699 = vunpack.c.h.b16 %v294
  %v1700 = vunpack.c.l.b16 %v295
  %v1701 = vunpack.c.h.b16 %v295
  %v1702 = vunpack.c.l.b16 %v296
  %v1703 = vunpack.c.h.b16 %v296
  %v1704 = vunpack.c.l.b16 %v297
  %v1705 = vunpack.c.h.b16 %v297
  %v1706 = vunpack.c.l.b16 %v298
  %v1707 = vunpack.c.h.b16 %v298
  %v1708 = vunpack.c.l.b16 %v299
  %v1709 = vunpack.c.h.b16 %v299
  %v1710 = vunpack.c.l.b16 %v300
  %v1711 = vunpack.c.h.b16 %v300
  %v1712 = vunpack.c.l.b16 %v301
  %v1713 = vunpack.c.h.b16 %v301
  %v1714 = vunpack.c.l.b16 %v302
  %v1715 = vunpack.c.h.b16 %v302
  %v1716 = vunpack.c.l.b16 %v303
  %v1717 = vunpack.c.h.b16 %v303
  %v1718 = vunpack.c.l.b16 %v304
  %v1719 = vunpack.c.h.b16 %v304
  %v1720 = vunpack.c.l.b16 %v305
  %v1721 = vunpack.c.h.b16 %v305
  %v1722 = vunpack.c.l.b16 %v306
  %v1723 = vunpack.c.h.b16 %v306
  %v1724 = vunpack.c.l.b16 %v307
  %v1725 = vunpack.c.h.b16 %v307
  %v1726 = vunpack.c.l.b16 %v308
  %v1727 = vunpack.c.h.b16 %v308
  %v1728 = vunpack.c.l.b16 %v309
  %v1729 = vunpack.c.h.b16 %v309
  %v1730 = vunpack.c.l.b16 %v310
  %v1731 = vunpack.c.h.b16 %v310
  %v1732 = vunpack.c.l.b16 %v311
  %v1733 = vunpack.c.h.b16 %v311
  %v1734 = vunpack.c.l.b16 %v312
  %v1735 = vunpack.c.h.b16 %v312
  %v1736 = vunpack.c.l.b16 %v313
  %v1737 = vunpack.c.h.b16 %v313
  %v1738 = vunpack.c.l.b16 %v314
  %v1739 = vunpack.c.h.b16 %v314
  %v1740 = vunpack.c.l.b16 %v315
  %v1741 = vunpack.c.h.b16 %v315
  %v1742 = vunpack.c.l.b16 %v316
  %v1743 = vunpack.c.h.b16 %v316
  %v1744 = vunpack.c.l.b16 %v317
  %v1745 = vunpack.c.h.b16 %v317
  %v1746 = vunpack.c.l.b16 %v318
  %v1747 = vunpack.c.h.b16 %v318
  %v1748 = vunpack.c.l.b16 %v319
  %v1749 = vunpack.c.h.b16 %v319
  %v1750 = vunpack.c.l.b16 %v320
  %v1751 = vunpack.c.h.b16 %v320
  %v1752 = vunpack.c.l.b16 %v321
  %v1753 = vunpack.c.h.b16 %v321
  %v1754 = vunpack.c.l.b16 %v322
  %v1755 = vunpack.c.h.b16 %v322
  %v1756 = vunpack.c.l.b16 %v323
  %v1757 = vunpack.c.h.b16 %v323
  %v1758 = vunpack.c.l.b16 %v324
  %v1759 = vunpack.c.h.b16 %v324
  %v1760 = vunpack.c.l.b16 %v325
  %v1761 = vunpack.c.h.b16 %v325
  %v1762 = vunpack.c.l.b16 %v326
  %v1763 = vunpack.c.h.b16 %v326
  %v1764 = vunpack.c.l.b16 %v327
  %v1765 = vunpack.c.h.b16 %v327
  %v1766 = vunpack.c.l.b16 %v328
  %v1767 = vunpack.c.h.b16 %v328
  %v1768 = vunpack.c.l.b16 %v329
  %v1769 = vunpack.c.h.b16 %v329
  %v1770 = vunpack.c.l.b16 %v330
  %v1771 = vunpack.c.h.b16 %v330
  %v1772 = vunpack.c.l.b16 %v331
  %v1773 = vunpack.c.h.b16 %v331
  %v1774 = vunpack.c.l.b16 %v332
  %v1775 = vunpack.c.h.b16 %v332
  %v1776 = vunpack.c.l.b16 %v333
  %v1777 = vunpack.c.h.b16 %v333
  %v1778 = vunpack.c.l.b16 %v334
  %v1779 = vunpack.c.h.b16 %v334
  %v1780 = vunpack.c.l.b16 %v335
  %v1781 = vunpack.c.h.b16 %v335
  %v1782 = vunpack.c.l.b16 %v336
  %v1783 = vunpack.c.h.b16 %v336
  %v1784 = vunpack.c.l.b16 %v337
  %v1785 = vunpack.c.h.b16 %v337
  %v1786 = vunpack.c.l.b16 %v338
  %v1787 = vunpack.c.h.b16 %v338
  %v1788 = vunpack.c.l.b16 %v339
  %v1789 = vunpack.c.h.b16 %v339
  %v1790 = vunpack.c.l.b16 %v340
  %v1791 = vunpack.c.h.b16 %v340
  %v1792 = vunpack.c.l.b16 %v341
  %v1793 = vunpack.c.h.b16 %v341
  %v1794 = vunpack.c.l.b16 %v342
  %v1795 = vunpack.c.h.b16 %v342
  %v1796 = vunpack.c.l.b16 %v343
  %v1797 = vunpack.c.h.b16 %v343
  %v1798 = vunpack.c.l.b16 %v344
  %v1799 = vunpack.c.h.b16 %v344
  %v1800 = vunpack.c.l.b16 %v345
  %v1801 = vunpack.c.h.b16 %v345
  %v1802 = vunpack.c.l.b16 %v346
  %v1803 = vunpack.c.h.b16 %v346
  %v1804 = vunpack.c.l.b16 %v347
  %v1805 = vunpack.c.h.b16 %v347
  %v1806 = vunpack.c.l.b16 %v348
  %v1807 = vunpack.c.h.b16 %v348
  %v1808 = vunpack.c.l.b16 %v349
  %v1809 = vunpack.c.h.b16 %v349
  %v1810 = vunpack.c.l.b16 %v350
  %v1811 = vunpack.c.h.b16 %v350
  %v1812 = vunpack.c.l.b16 %v351
  %v1813 = vunpack.c.h.b16 %v351
  %v1814 = vunpack.c.l.b16 %v352
  %v1815 = vunpack.c.h.b16 %v352
  %v1816 = vunpack.c.l.b16 %v353
  %v1817 = vunpack.c.h.b16 %v353
  %v1818 = vunpack.c.l.b16 %v354
  %v1819 = vunpack.c.h.b16 %v354
  %v1820 = vunpack.c.l.b16 %v355
  %v1821 = vunpack.c.h.b16 %v355
  %v1822 = vunpack.c.l.b16 %v356
  %v1823 = vunpack.c.h.b16 %v356
  %v1824 = vunpack.c.l.b16 %v357
  %v1825 = vunpack.c.h.b16 %v357
  %v1826 = vunpack.c.l.b16 %v358
  %v1827 = vunpack.c.h.b16 %v358
  %v1828 = vunpack.c.l.b16 %v359
  %v1829 = vunpack.c.h.b16 %v359
  %v1830 = vunpack.c.l.b16 %v360
  %v1831 = vunpack.c.h.b16 %v360
  %v1832 = vunpack.c.l.b16 %v361
  %v1833 = vunpack.c.h.b16 %v361
  %v1834 = vunpack.c.l.b16 %v362
  %v1835 = vunpack.c.h.b16 %v362
  %v1836 = vunpack.c.l.b16 %v363
  %v1837 = vunpack.c.h.b16 %v363
  %v1838 = vunpack.c.l.b16 %v364
  %v1839 = vunpack.c.h.b16 %v364
  %v1840 = vunpack.c.l.b16 %v365
  %v1841 = vunpack.c.h.b16 %v365
  %v1842 = vunpack.c.l.b16 %v366
  %v1843 = vunpack.c.h.b16 %v366
  %v1844 = vunpack.c.l.b16 %v367
  %v1845 = vunpack.c.h.b16 %v367
  %v1846 = vunpack.c.l.b16 %v368
  %v1847 = vunpack.c.h.b16 %v368
  %v1848 = vunpack.c.l.b16 %v369
  %v1849 = vunpack.c.h.b16 %v369
  %v1850 = vunpack.c.l.b16 %v370
  %v1851 = vunpack.c.h.b16 %v370
  %v1852 = vunpack.c.l.b16 %v371
  %v1853 = vunpack.c.h.b16 %v371
  %v1854 = vunpack.c.l.b16 %v372
  %v1855 = vunpack.c.h.b16 %v372
  %v1856 = vunpack.c.l.b16 %v373
  %v1857 = vunpack.c.h.b16 %v373
  %v1858 = vunpack.c.l.b16 %v374
  %v1859 = vunpack.c.h.b16 %v374
  %v1860 = vunpack.c.l.b16 %v375
  %v1861 = vunpack.c.h.b16 %v375
  %v1862 = vunpack.c.l.b16 %v376
  %v1863 = vunpack.c.h.b16 %v376
  %v1864 = vunpack.c.l.b16 %v377
  %v1865 = vunpack.c.h.b16 %v377
  %v1866 = vunpack.c.l.b16 %v378
  %v1867 = vunpack.c.h.b16 %v378
  %v1868 = vunpack.c.l.b16 %v379
  %v1869 = vunpack.c.h.b16 %v379
  %v1870 = vunpack.c.l.b16 %v380
  %v1871 = vunpack.c.h.b16 %v380
  %v1872 = vunpack.c.l.b16 %v381
  %v1873 = vunpack.c.h.b16 %v381
  %v1874 = vunpack.c.l.b16 %v382
  %v1875 = vunpack.c.h.b16 %v382
  %v1876 = vunpack.c.l.b16 %v383
  %v1877 = vunpack.c.h.b16 %v383
  %v1878 = vunpack.c.l.b16 %v384
  %v1879 = vunpack.c.h.b16 %v384
  %v1880 = vunpack.c.l.b16 %v385
  %v1881 = vunpack.c.h.b16 %v385
  %v1882 = vunpack.c.l.b16 %v386
  %v1883 = vunpack.c.h.b16 %v386
  %v1884 = vunpack.c.l.b16 %v387
  %v1885 = vunpack.c.h.b16 %v387
  %v1886 = vunpack.c.l.b16 %v388
  %v1887 = vunpack.c.h.b16 %v388
  %v1888 = vunpack.c.l.b16 %v389
  %v1889 = vunpack.c.h.b16 %v389
  %v1890 = vunpack.c.l.b16 %v390
  %v1891 = vunpack.c.h.b16 %v390
  %v1892 = vunpack.c.l.b16 %v391
  %v1893 = vunpack.c.h.b16 %v391
  %v1894 = vunpack.c.l.b16 %v392
  %v1895 = vunpack.c.h.b16 %v392
  %v1896 = vunpack.c.l.b16 %v393
  %v1897 = vunpack.c.h.b16 %v393
  %v1898 = vunpack.c.l.b16 %v394
  %v1899 = vunpack.c.h.b16 %v394
  %v1900 = vunpack.c.l.b16 %v395
  %v1901 = vunpack.c.h.b16 %v395
  %v1902 = vunpack.c.l.b16 %v396
  %v1903 = vunpack.c.h.b16 %v396
  %v1904 = vunpack.c.l.b16 %v397
  %v1905 = vunpack.c.h.b16 %v397
  %v1906 = vunpack.c.l.b16 %v398
  %v1907 = vunpack.c.h.b16 %v398
  %v1908 = vunpack.c.l.b16 %v399
  %v1909 = vunpack.c.h.b16 %v399
  %v1910 = vunpack.c.l.b16 %v400
  %v1911 = vunpack.c.h.b16 %v400
  %v1912 = vunpack.c.l.b16 %v401
  %v1913 = vunpack.c.h.b16 %v401
  %v1914 = vunpack.c.l.b16 %v402
  %v1915 = vunpack.c.h.b16 %v402
  %v1916 = vunpack.c.l.b16 %v403
  %v1917 = vunpack.c.h.b16 %v403
  %v1918 = vunpack.c.l.b16 %v404
  %v1919 = vunpack.c.h.b16 %v404
  %v1920 = vunpack.c.l.b16 %v405
  %v1921 = vunpack.c.h.b16 %v405
  %v1922 = vunpack.c.l.b16 %v406
  %v1923 = vunpack.c.h.b16 %v406
  %v1924 = vunpack.c.l.b16 %v407
  %v1925 = vunpack.c.h.b16 %v407
  %v1926 = vunpack.c.l.b16 %v408
  %v1927 = vunpack.c.h.b16 %v408
  %v1928 = vunpack.c.l.b16 %v409
  %v1929 = vunpack.c.h.b16 %v409
  %v1930 = vunpack.c.l.b16 %v410
  %v1931 = vunpack.c.h.b16 %v410
  %v1932 = vunpack.c.l.b16 %v411
  %v1933 = vunpack.c.h.b16 %v411
  %v1934 = vunpack.c.l.b16 %v412
  %v1935 = vunpack.c.h.b16 %v412
  %v1936 = vunpack.c.l.b16 %v413
  %v1937 = vunpack.c.h.b16 %v413
  %v1938 = vunpack.c.l.b16 %v414
  %v1939 = vunpack.c.h.b16 %v414
  %v1940 = vunpack.c.l.b16 %v415
  %v1941 = vunpack.c.h.b16 %v415
  %v1942 = vunpack.c.l.b16 %v416
  %v1943 = vunpack.c.h.b16 %v416
  %v1944 = vunpack.c.l.b16 %v417
  %v1945 = vunpack.c.h.b16 %v417
  %v1946 = vunpack.c.l.b16 %v418
  %v1947 = vunpack.c.h.b16 %v418
  %v1948 = vunpack.c.l.b16 %v419
  %v1949 = vunpack.c.h.b16 %v419
  %v1950 = vunpack.c.l.b16 %v420
  %v1951 = vunpack.c.h.b16 %v420
  %v1952 = vunpack.c.l.b16 %v421
  %v1953 = vunpack.c.h.b16 %v421
  %v1954 = vunpack.c.l.b16 %v422
  %v1955 = vunpack.c.h.b16 %v422
  %v1956 = vunpack.c.l.b16 %v423
  %v1957 = vunpack.c.h.b16 %v423
  %v1958 = vunpack.c.l.b16 %v424
  %v1959 = vunpack.c.h.b16 %v424
  %v1960 = vunpack.c.l.b16 %v425
  %v1961 = vunpack.c.h.b16 %v425
  %v1962 = vunpack.c.l.b16 %v426
  %v1963 = vunpack.c.h.b16 %v426
  %v1964 = vunpack.c.l.b16 %v427
  %v1965 = vunpack.c.h.b16 %v427
  %v1966 = vunpack.c.l.b16 %v428
  %v1967 = vunpack.c.h.b16 %v428
  %v1968 = vunpack.c.l.b16 %v429
  %v1969 = vunpack.c.h.b16 %v429
  %v1970 = vunpack.c.l.b16 %v430
  %v1971 = vunpack.c.h.b16 %v430
  %v1972 = vunpack.c.l.b16 %v431
  %v1973 = vunpack.c.h.b16 %v431
  %v1974 = vunpack.c.l.b16 %v432
  %v1975 = vunpack.c.h.b16 %v432
  %v1976 = vunpack.c.l.b16 %v433
  %v1977 = vunpack.c.h.b16 %v433
  %v1978 = vunpack.c.l.b16 %v434
  %v1979 = vunpack.c.h.b16 %v434
  %v1980 = vunpack.c.l.b16 %v435
  %v1981 = vunpack.c.h.b16 %v435
  %v1982 = vunpack.c.l.b16 %v436
  %v1983 = vunpack.c.h.b16 %v436
  %v1984 = vunpack.c.l.b16 %v437
  %v1985 = vunpack.c.h.b16 %v437
  %v1986 = vunpack.c.l.b16 %v438
  %v1987 = vunpack.c.h.b16 %v438
  %v1988 = vunpack.c.l.b16 %v439
  %v1989 = vunpack.c.h.b16 %v439
  %v1990 = vunpack.c.l.b16 %v440
  %v1991 = vunpack.c.h.b16 %v440
  %v1992 = vunpack.c.l.b16 %v441
  %v1993 = vunpack.c.h.b16 %v441
  %v1994 = vunpack.c.l.b16 %v442
  %v1995 = vunpack.c.h.b16 %v442
  %v1996 = vunpack.c.l.b16 %v443
  %v1997 = vunpack.c.h.b16 %v443
  %v1998 = vunpack.c.l.b16 %v444
  %v1999 = vunpack.c.h.b16 %v444
  %v2000 = vunpack.c.l.b16 %v445
  %v2001 = vunpack.c.h.b16 %v445
  %v2002 = vunpack.c.l.b16 %v446
  %v2003 = vunpack.c.h.b16 %v446
  %v2004 = vunpack.c.l.b16 %v447
  %v2005 = vunpack.c.h.b16 %v447
  %v2006 = vunpack.c.l.b16 %v448
  %v2007 = vunpack.c.h.b16 %v448
  %v2008 = vunpack.c.l.b16 %v449
  %v2009 = vunpack.c.h.b16 %v449
  %v2010 = vunpack.c.l.b16 %v450
  %v2011 = vunpack.c.h.b16 %v450
  %v2012 = vunpack.c.l.b16 %v451
  %v2013 = vunpack.c.h.b16 %v451
  %v2014 = vunpack.c.l.b16 %v452
  %v2015 = vunpack.c.h.b16 %v452
  %v2016 = vunpack.c.l.b16 %v453
  %v2017 = vunpack.c.h.b16 %v453
  %v2018 = vunpack.c.l.b16 %v454
  %v2019 = vunpack.c.h.b16 %v454
  %v2020 = vunpack.c.l.b16 %v455
  %v2021 = vunpack.c.h.b16 %v455
  %v2022 = vunpack.c.l.b16 %v456
  %v2023 = vunpack.c.h.b16 %v456
  %v2024 = vunpack.c.l.b16 %v457
  %v2025 = vunpack.c.h.b16 %v457
  %v2026 = vunpack.c.l.b16 %v458
  %v2027 = vunpack.c.h.b16 %v458
  %v2028 = vunpack.c.l.b16 %v459
  %v2029 = vunpack.c.h.b16 %v459
  %v2030 = vunpack.c.l.b16 %v460
  %v2031 = vunpack.c.h.b16 %v460
  %v2032 = vunpack.c.l.b16 %v461
  %v2033 = vunpack.c.h.b16 %v461
  %v2034 = vunpack.c.l.b16 %v462
  %v2035 = vunpack.c.h.b16 %v462
  %v2036 = vunpack.c.l.b16 %v463
  %v2037 = vunpack.c.h.b16 %v463
  %v2038 = vunpack.c.l.b16 %v464
  %v2039 = vunpack.c.h.b16 %v464
  %v2040 = vunpack.c.l.b16 %v465
  %v2041 = vunpack.c.h.b16 %v465
  %v2042 = vunpack.c.l.b16 %v466
  %v2043 = vunpack.c.h.b16 %v466
  %v2044 = vunpack.c.l.b16 %v467
  %v2045 = vunpack.c.h.b16 %v467
  %v2046 = vunpack.c.l.b16 %v468
  %v2047 = vunpack.c.h.b16 %v468
  %v2048 = vunpack.c.l.b16 %v469
  %v2049 = vunpack.c.h.b16 %v469
  %v2050 = vunpack.c.l.b16 %v470
  %v2051 = vunpack.c.h.b16 %v470
  %v2052 = vunpack.c.l.b16 %v471
  %v2053 = vunpack.c.h.b16 %v471
  %v2054 = vunpack.c.l.b16 %v472
  %v2055 = vunpack.c.h.b16 %v472
  %v2056 = vunpack.c.l.b16 %v473
  %v2057 = vunpack.c.h.b16 %v473
  %v2058 = vunpack.c.l.b16 %v474
  %v2059 = vunpack.c.h.b16 %v474
  %v2060 = vunpack.c.l.b16 %v475
  %v2061 = vunpack.c.h.b16 %v475
  %v2062 = vunpack.c.l.b16 %v476
  %v2063 = vunpack.c.h.b16 %v476
  %v2064 = vunpack.c.l.b16 %v477
  %v2065 = vunpack.c.h.b16 %v477
  %v2066 = vunpack.c.l.b16 %v478
  %v2067 = vunpack.c.h.b16 %v478
  %v2068 = vunpack.c.l.b16 %v479
  %v2069 = vunpack.c.h.b16 %v479
  %v2070 = vunpack.c.l.b16 %v480
  %v2071 = vunpack.c.h.b16 %v480
  %v2072 = vunpack.c.l.b16 %v481
  %v2073 = vunpack.c.h.b16 %v481
  %v2074 = vunpack.c.l.b16 %v482
  %v2075 = vunpack.c.h.b16 %v482
  %v2076 = vunpack.c.l.b16 %v483
  %v2077 = vunpack.c.h.b16 %v483
  %v2078 = vunpack.c.l.b16 %v484
  %v2079 = vunpack.c.h.b16 %v484
  %v2080 = vunpack.c.l.b16 %v485
  %v2081 = vunpack.c.h.b16 %v485
  %v2082 = vunpack.c.l.b16 %v486
  %v2083 = vunpack.c.h.b16 %v486
  %v2084 = vunpack.c.l.b16 %v487
  %v2085 = vunpack.c.h.b16 %v487
  %v2086 = vunpack.c.l.b16 %v488
  %v2087 = vunpack.c.h.b16 %v488
  %v2088 = vunpack.c.l.b16 %v489
  %v2089 = vunpack.c.h.b16 %v489
  %v2090 = vunpack.c.l.b16 %v490
  %v2091 = vunpack.c.h.b16 %v490
  %v2092 = vunpack.c.l.b16 %v491
  %v2093 = vunpack.c.h.b16 %v491
  %v2094 = vunpack.c.l.b16 %v492
  %v2095 = vunpack.c.h.b16 %v492
  %v2096 = vunpack.c.l.b16 %v493
  %v2097 = vunpack.c.h.b16 %v493
  %v2098 = vunpack.c.l.b16 %v494
  %v2099 = vunpack.c.h.b16 %v494
  %v2100 = vunpack.c.l.b16 %v495
  %v2101 = vunpack.c.h.b16 %v495
  %v2102 = vunpack.c.l.b16 %v496
  %v2103 = vunpack.c.h.b16 %v496
  %v2104 = vunpack.c.l.b16 %v497
  %v2105 = vunpack.c.h.b16 %v497
  %v2106 = vunpack.c.l.b16 %v498
  %v2107 = vunpack.c.h.b16 %v498
  %v2108 = vunpack.c.l.b16 %v499
  %v2109 = vunpack.c.h.b16 %v499
  %v2110 = vunpack.c.l.b16 %v500
  %v2111 = vunpack.c.h.b16 %v500
  %v2112 = vunpack.c.l.b16 %v501
  %v2113 = vunpack.c.h.b16 %v501
  %v2114 = vunpack.c.l.b16 %v502
  %v2115 = vunpack.c.h.b16 %v502
  %v2116 = vunpack.c.l.b16 %v503
  %v2117 = vunpack.c.h.b16 %v503
  %v2118 = vunpack.c.l.b16 %v504
  %v2119 = vunpack.c.h.b16 %v504
  %v2120 = vunpack.c.l.b16 %v505
  %v2121 = vunpack.c.h.b16 %v505
  %v2122 = vunpack.c.l.b16 %v506
  %v2123 = vunpack.c.h.b16 %v506
  %v2124 = vunpack.c.l.b16 %v507
  %v2125 = vunpack.c.h.b16 %v507
  %v2126 = vunpack.c.l.b16 %v508
  %v2127 = vunpack.c.h.b16 %v508
  %v2128 = vunpack.c.l.b16 %v509
  %v2129 = vunpack.c.h.b16 %v509
  %v2130 = vunpack.c.l.b16 %v510
  %v2131 = vunpack.c.h.b16 %v510
  %v2132 = vunpack.c.l.b16 %v511
  %v2133 = vunpack.c.h.b16 %v511
  %v2134 = vunpack.c.l.b16 %v512
  %v2135 = vunpack.c.h.b16 %v512
  %v2136 = vunpack.c.l.b16 %v513
  %v2137 = vunpack.c.h.b16 %v513
  %v2138 = vunpack.c.l.b16 %v514
  %v2139 = vunpack.c.h.b16 %v514
  %v2140 = vunpack.c.l.b16 %v515
  %v2141 = vunpack.c.h.b16 %v515
  %v2142 = vunpack.c.l.b16 %v516
  %v2143 = vunpack.c.h.b16 %v516
  %v2144 = vunpack.c.l.b16 %v517
  %v2145 = vunpack.c.h.b16 %v517
  %v2146 = vunpack.c.l.b16 %v518
  %v2147 = vunpack.c.h.b16 %v518
  %v2148 = vunpack.c.l.b16 %v519
  %v2149 = vunpack.c.h.b16 %v519
  %v2150 = vunpack.c.l.b16 %v520
  %v2151 = vunpack.c.h.b16 %v520
  %v2152 = vunpack.c.l.b16 %v521
  %v2153 = vunpack.c.h.b16 %v521
  %v2154 = vunpack.c.l.b16 %v522
  %v2155 = vunpack.c.h.b16 %v522
  %v2156 = vunpack.c.l.b16 %v523
  %v2157 = vunpack.c.h.b16 %v523
  %v2158 = vunpack.c.l.b16 %v524
  %v2159 = vunpack.c.h.b16 %v524
  %v2160 = vunpack.c.l.b16 %v525
  %v2161 = vunpack.c.h.b16 %v525
  %v2162 = vunpack.c.l.b16 %v526
  %v2163 = vunpack.c.h.b16 %v526
  %v2164 = vunpack.c.l.b16 %v527
  %v2165 = vunpack.c.h.b16 %v527
  %v2166 = vunpack.c.l.b16 %v528
  %v2167 = vunpack.c.h.b16 %v528
  %v2168 = vunpack.c.l.b16 %v529
  %v2169 = vunpack.c.h.b16 %v529
  %v2170 = vunpack.c.l.b16 %v530
  %v2171 = vunpack.c.h.b16 %v530
  %v2172 = vunpack.c.l.b16 %v531
  %v2173 = vunpack.c.h.b16 %v531
  %v2174 = vunpack.c.l.b16 %v532
  %v2175 = vunpack.c.h.b16 %v532
  %v2176 = vunpack.c.l.b16 %v533
  %v2177 = vunpack.c.h.b16 %v533
  %v2178 = vunpack.c.l.b16 %v534
  %v2179 = vunpack.c.h.b16 %v534
  %v2180 = vunpack.c.l.b16 %v535
  %v2181 = vunpack.c.h.b16 %v535
  %v2182 = vunpack.c.l.b16 %v536
  %v2183 = vunpack.c.h.b16 %v536
  %v2184 = vunpack.c.l.b16 %v537
  %v2185 = vunpack.c.h.b16 %v537
  %v2186 = vunpack.c.l.b16 %v538
  %v2187 = vunpack.c.h.b16 %v538
  %v2188 = vunpack.c.l.b16 %v539
  %v2189 = vunpack.c.h.b16 %v539
  %v2190 = vunpack.c.l.b16 %v540
  %v2191 = vunpack.c.h.b16 %v540
  %v2192 = vunpack.c.l.b16 %v541
  %v2193 = vunpack.c.h.b16 %v541
  %v2194 = vunpack.c.l.b16 %v542
  %v2195 = vunpack.c.h.b16 %v542
  %v2196 = vunpack.c.l.b16 %v543
  %v2197 = vunpack.c.h.b16 %v543
  %v2198 = vunpack.c.l.b16 %v544
  %v2199 = vunpack.c.h.b16 %v544
  %v2200 = vunpack.c.l.b16 %v545
  %v2201 = vunpack.c.h.b16 %v545
  %v2202 = vunpack.c.l.b16 %v546
  %v2203 = vunpack.c.h.b16 %v546
  %v2204 = vunpack.c.l.b16 %v547
  %v2205 = vunpack.c.h.b16 %v547
  %v2206 = vunpack.c.l.b16 %v548
  %v2207 = vunpack.c.h.b16 %v548
  %v2208 = vunpack.c.l.b16 %v549
  %v2209 = vunpack.c.h.b16 %v549
  %v2210 = vunpack.c.l.b16 %v550
  %v2211 = vunpack.c.h.b16 %v550
  %v2212 = vunpack.c.l.b16 %v551
  %v2213 = vunpack.c.h.b16 %v551
  %v2214 = vunpack.c.l.b16 %v552
  %v2215 = vunpack.c.h.b16 %v552
  %v2216 = vunpack.c.l.b16 %v553
  %v2217 = vunpack.c.h.b16 %v553
  %v2218 = vunpack.c.l.b16 %v554
  %v2219 = vunpack.c.h.b16 %v554
  %v2220 = vunpack.c.l.b16 %v555
  %v2221 = vunpack.c.h.b16 %v555
  %v2222 = vunpack.c.l.b16 %v556
  %v2223 = vunpack.c.h.b16 %v556
  %v2224 = vunpack.c.l.b16 %v557
  %v2225 = vunpack.c.h.b16 %v557
  %v2226 = vunpack.c.l.b16 %v558
  %v2227 = vunpack.c.h.b16 %v558
  %v2228 = vunpack.c.l.b16 %v559
  %v2229 = vunpack.c.h.b16 %v559
  %v2230 = vunpack.c.l.b16 %v560
  %v2231 = vunpack.c.h.b16 %v560
  %v2232 = vunpack.c.l.b16 %v561
  %v2233 = vunpack.c.h.b16 %v561
  %v2234 = vunpack.c.l.b16 %v562
  %v2235 = vunpack.c.h.b16 %v562
  %v2236 = vunpack.c.l.b16 %v563
  %v2237 = vunpack.c.h.b16 %v563
  %v2238 = vunpack.c.l.b16 %v564
  %v2239 = vunpack.c.h.b16 %v564
  %v2240 = vunpack.c.l.b16 %v565
  %v2241 = vunpack.c.h.b16 %v565
  %v2242 = vunpack.c.l.b16 %v566
  %v2243 = vunpack.c.h.b16 %v566
  %v2244 = vunpack.c.l.b16 %v567
  %v2245 = vunpack.c.h.b16 %v567
  %v2246 = vunpack.c.l.b16 %v568
  %v2247 = vunpack.c.h.b16 %v568
  %v2248 = vunpack.c.l.b16 %v569
  %v2249 = vunpack.c.h.b16 %v569
  %v2250 = vunpack.c.l.b16 %v570
  %v2251 = vunpack.c.h.b16 %v570
  %v2252 = vunpack.c.l.b16 %v571
  %v2253 = vunpack.c.h.b16 %v571
  %v2254 = vunpack.c.l.b16 %v572
  %v2255 = vunpack.c.h.b16 %v572
  %v2256 = vunpack.c.l.b16 %v573
  %v2257 = vunpack.c.h.b16 %v573
  %v2258 = vunpack.c.l.b16 %v574
  %v2259 = vunpack.c.h.b16 %v574
  %v2260 = vunpack.c.l.b16 %v575
  %v2261 = vunpack.c.h.b16 %v575
  %v2262 = vunpack.c.l.b16 %v576
  %v2263 = vunpack.c.h.b16 %v576
  %v2264 = vunpack.c.l.b16 %v577
  %v2265 = vunpack.c.h.b16 %v577
  %v2266 = vunpack.c.l.b16 %v578
  %v2267 = vunpack.c.h.b16 %v578
  %v2268 = vunpack.c.l.b16 %v579
  %v2269 = vunpack.c.h.b16 %v579
  %v2270 = vunpack.c.l.b16 %v580
  %v2271 = vunpack.c.h.b16 %v580
  %v2272 = vunpack.c.l.b16 %v581
  %v2273 = vunpack.c.h.b16 %v581
  %v2274 = vunpack.c.l.b16 %v582
  %v2275 = vunpack.c.h.b16 %v582
  %v2276 = vunpack.c.l.b16 %v583
  %v2277 = vunpack.c.h.b16 %v583
  %v2278 = vunpack.c.l.b16 %v584
  %v2279 = vunpack.c.h.b16 %v584
  %v2280 = vunpack.c.l.b16 %v585
  %v2281 = vunpack.c.h.b16 %v585
  %v2282 = vpack.c.b16 %v1262, %v1258
  %v2283 = vpack.c.b16 %v1263, %v1259
  %v2284 = vpack.c.b16 %v1264, %v1260
  %v2285 = vpack.c.b16 %v1265, %v1261
  %v2286 = vpack.c.b16 %v1270, %v1266
  %v2287 = vpack.c.b16 %v1271, %v1267
  %v2288 = vpack.c.b16 %v1272, %v1268
  %v2289 = vpack.c.b16 %v1273, %v1269
  %v2290 = vpack.c.b16 %v1278, %v1274
  %v2291 = vpack.c.b16 %v1279, %v1275
  %v2292 = vpack.c.b16 %v1280, %v1276
  %v2293 = vpack.c.b16 %v1281, %v1277
  %v2294 = vpack.c.b16 %v1286, %v1282
  %v2295 = vpack.c.b16 %v1287, %v1283
  %v2296 = vpack.c.b16 %v1288, %v1284
  %v2297 = vpack.c.b16 %v1289, %v1285
  %v2298 = vpack.c.b16 %v1294, %v1290
  %v2299 = vpack.c.b16 %v1295, %v1291
  %v2300 = vpack.c.b16 %v1296, %v1292
  %v2301 = vpack.c.b16 %v1297, %v1293
  %v2302 = vpack.c.b16 %v1302, %v1298
  %v2303 = vpack.c.b16 %v1303, %v1299
  %v2304 = vpack.c.b16 %v1304, %v1300
  %v2305 = vpack.c.b16 %v1305, %v1301
  %v2306 = vpack.c.b16 %v1310, %v1306
  %v2307 = vpack.c.b16 %v1311, %v1307
  %v2308 = vpack.c.b16 %v1312, %v1308
  %v2309 = vpack.c.b16 %v1313, %v1309
  %v2310 = vpack.c.b16 %v1318, %v1314
  %v2311 = vpack.c.b16 %v1319, %v1315
  %v2312 = vpack.c.b16 %v1320, %v1316
  %v2313 = vpack.c.b16 %v1321, %v1317
  %v2314 = vpack.c.b16 %v1326, %v1322
  %v2315 = vpack.c.b16 %v1327, %v1323
  %v2316 = vpack.c.b16 %v1328, %v1324
  %v2317 = vpack.c.b16 %v1329, %v1325
  %v2318 = vpack.c.b16 %v1334, %v1330
  %v2319 = vpack.c.b16 %v1335, %v1331
  %v2320 = vpack.c.b16 %v1336, %v1332
  %v2321 = vpack.c.b16 %v1337, %v1333
  %v2322 = vpack.c.b16 %v1342, %v1338
  %v2323 = vpack.c.b16 %v1343, %v1339
  %v2324 = vpack.c.b16 %v1344, %v1340
  %v2325 = vpack.c.b16 %v1345, %v1341
  %v2326 = vpack.c.b16 %v1350, %v1346
  %v2327 = vpack.c.b16 %v1351, %v1347
  %v2328 = vpack.c.b16 %v1352, %v1348
  %v2329 = vpack.c.b16 %v1353, %v1349
  %v2330 = vpack.c.b16 %v1358, %v1354
  %v2331 = vpack.c.b16 %v1359, %v1355
  %v2332 = vpack.c.b16 %v1360, %v1356
  %v2333 = vpack.c.b16 %v1361, %v1357
  %v2334 = vpack.c.b16 %v1366, %v1362
  %v2335 = vpack.c.b16 %v1367, %v1363
  %v2336 = vpack.c.b16 %v1368, %v1364
  %v2337 = vpack.c.b16 %v1369, %v1365
  %v2338 = vpack.c.b16 %v1374, %v1370
  %v2339 = vpack.c.b16 %v1375, %v1371
  %v2340 = vpack.c.b16 %v1376, %v1372
  %v2341 = vpack.c.b16 %v1377, %v1373
  %v2342 = vpack.c.b16 %v1382, %v1378
  %v2343 = vpack.c.b16 %v1383, %v1379
  %v2344 = vpack.c.b16 %v1384, %v1380
  %v2345 = vpack.c.b16 %v1385, %v1381
  %v2346 = vpack.c.b16 %v1390, %v1386
  %v2347 = vpack.c.b16 %v1391, %v1387
  %v2348 = vpack.c.b16 %v1392, %v1388
  %v2349 = vpack.c.b16 %v1393, %v1389
  %v2350 = vpack.c.b16 %v1398, %v1394
  %v2351 = vpack.c.b16 %v1399, %v1395
  %v2352 = vpack.c.b16 %v1400, %v1396
  %v2353 = vpack.c.b16 %v1401, %v1397
  %v2354 = vpack.c.b16 %v1406, %v1402
  %v2355 = vpack.c.b16 %v1407, %v1403
  %v2356 = vpack.c.b16 %v1408, %v1404
  %v2357 = vpack.c.b16 %v1409, %v1405
  %v2358 = vpack.c.b16 %v1414, %v1410
  %v2359 = vpack.c.b16 %v1415, %v1411
  %v2360 = vpack.c.b16 %v1416, %v1412
  %v2361 = vpack.c.b16 %v1417, %v1413
  %v2362 = vpack.c.b16 %v1422, %v1418
  %v2363 = vpack.c.b16 %v1423, %v1419
  %v2364 = vpack.c.b16 %v1424, %v1420
  %v2365 = vpack.c.b16 %v1425, %v1421
  %v2366 = vpack.c.b16 %v1430, %v1426
  %v2367 = vpack.c.b16 %v1431, %v1427
  %v2368 = vpack.c.b16 %v1432, %v1428
  %v2369 = vpack.c.b16 %v1433, %v1429
  %v2370 = vpack.c.b16 %v1438, %v1434
  %v2371 = vpack.c.b16 %v1439, %v1435
  %v2372 = vpack.c.b16 %v1440, %v1436
  %v2373 = vpack.c.b16 %v1441, %v1437
  %v2374 = vpack.c.b16 %v1446, %v1442
  %v2375 = vpack.c.b16 %v1447, %v1443
  %v2376 = vpack.c.b16 %v1448, %v1444
  %v2377 = vpack.c.b16 %v1449, %v1445
  %v2378 = vpack.c.b16 %v1454, %v1450
  %v2379 = vpack.c.b16 %v1455, %v1451
  %v2380 = vpack.c.b16 %v1456, %v1452
  %v2381 = vpack.c.b16 %v1457, %v1453
  %v2382 = vpack.c.b16 %v1462, %v1458
  %v2383 = vpack.c.b16 %v1463, %v1459
  %v2384 = vpack.c.b16 %v1464, %v1460
  %v2385 = vpack.c.b16 %v1465, %v1461
  %v2386 = vpack.c.b16 %v1470, %v1466
  %v2387 = vpack.c.b16 %v1471, %v1467
  %v2388 = vpack.c.b16 %v1472, %v1468
  %v2389 = vpack.c.b16 %v1473, %v1469
  %v2390 = vpack.c.b16 %v1478, %v1474
  %v2391 = vpack.c.b16 %v1479, %v1475
  %v2392 = vpack.c.b16 %v1480, %v1476
  %v2393 = vpack.c.b16 %v1481, %v1477
  %v2394 = vpack.c.b16 %v1486, %v1482
  %v2395 = vpack.c.b16 %v1487, %v1483
  %v2396 = vpack.c.b16 %v1488, %v1484
  %v2397 = vpack.c.b16 %v1489, %v1485
  %v2398 = vpack.c.b16 %v1494, %v1490
  %v2399 = vpack.c.b16 %v1495, %v1491
  %v2400 = vpack.c.b16 %v1496, %v1492
  %v2401 = vpack.c.b16 %v1497, %v1493
  %v2402 = vpack.c.b16 %v1502, %v1498
  %v2403 = vpack.c.b16 %v1503, %v1499
  %v2404 = vpack.c.b16 %v1504, %v1500
  %v2405 = vpack.c.b16 %v1505, %v1501
  %v2406 = vpack.c.b16 %v1510, %v1506
  %v2407 = vpack.c.b16 %v1511, %v1507
  %v2408 = vpack.c.b16 %v1512, %v1508
  %v2409 = vpack.c.b16 %v1513, %v1509
  %v2410 = vpack.c.b16 %v1518, %v1514
  %v2411 = vpack.c.b16 %v1519, %v1515
  %v2412 = vpack.c.b16 %v1520, %v1516
  %v2413 = vpack.c.b16 %v1521, %v1517
  %v2414 = vpack.c.b16 %v1526, %v1522
  %v2415 = vpack.c.b16 %v1527, %v1523
  %v2416 = vpack.c.b16 %v1528, %v1524
  %v2417 = vpack.c.b16 %v1529, %v1525
  %v2418 = vpack.c.b16 %v1534, %v1530
  %v2419 = vpack.c.b16 %v1535, %v1531
  %v2420 = vpack.c.b16 %v1536, %v1532
  %v2421 = vpack.c.b16 %v1537, %v1533
  %v2422 = vpack.c.b16 %v1542, %v1538
  %v2423 = vpack.c.b16 %v1543, %v1539
  %v2424 = vpack.c.b16 %v1544, %v1540
  %v2425 = vpack.c.b16 %v1545, %v1541
  %v2426 = vpack.c.b16 %v1550, %v1546
  %v2427 = vpack.c.b16 %v1551, %v1547
  %v2428 = vpack.c.b16 %v1552, %v1548
  %v2429 = vpack.c.b16 %v1553, %v1549
  %v2430 = vpack.c.b16 %v1558, %v1554
  %v2431 = vpack.c.b16 %v1559, %v1555
  %v2432 = vpack.c.b16 %v1560, %v1556
  %v2433 = vpack.c.b16 %v1561, %v1557
  %v2434 = vpack.c.b16 %v1566, %v1562
  %v2435 = vpack.c.b16 %v1567, %v1563
  %v2436 = vpack.c.b16 %v1568, %v1564
  %v2437 = vpack.c.b16 %v1569, %v1565
  %v2438 = vpack.c.b16 %v1574, %v1570
  %v2439 = vpack.c.b16 %v1575, %v1571
  %v2440 = vpack.c.b16 %v1576, %v1572
  %v2441 = vpack.c.b16 %v1577, %v1573
  %v2442 = vpack.c.b16 %v1582, %v1578
  %v2443 = vpack.c.b16 %v1583, %v1579
  %v2444 = vpack.c.b16 %v1584, %v1580
  %v2445 = vpack.c.b16 %v1585, %v1581
  %v2446 = vpack.c.b16 %v1590, %v1586
  %v2447 = vpack.c.b16 %v1591, %v1587
  %v2448 = vpack.c.b16 %v1592, %v1588
  %v2449 = vpack.c.b16 %v1593, %v1589
  %v2450 = vpack.c.b16 %v1598, %v1594
  %v2451 = vpack.c.b16 %v1599, %v1595
  %v2452 = vpack.c.b16 %v1600, %v1596
  %v2453 = vpack.c.b16 %v1601, %v1597
  %v2454 = vpack.c.b16 %v1606, %v1602
  %v2455 = vpack.c.b16 %v1607, %v1603
  %v2456 = vpack.c.b16 %v1608, %v1604
  %v2457 = vpack.c.b16 %v1609, %v1605
  %v2458 = vpack.c.b16 %v1614, %v1610
  %v2459 = vpack.c.b16 %v1615, %v1611
  %v2460 = vpack.c.b16 %v1616, %v1612
  %v2461 = vpack.c.b16 %v1617, %v1613
  %v2462 = vpack.c.b16 %v1622, %v1618
  %v2463 = vpack.c.b16 %v1623, %v1619
  %v2464 = vpack.c.b16 %v1624, %v1620
  %v2465 = vpack.c.b16 %v1625, %v1621
  %v2466 = vpack.c.b16 %v1630, %v1626
  %v2467 = vpack.c.b16 %v1631, %v1627
  %v2468 = vpack.c.b16 %v1632, %v1628
  %v2469 = vpack.c.b16 %v1633, %v1629
  %v2470 = vpack.c.b16 %v1638, %v1634
  %v2471 = vpack.c.b16 %v1639, %v1635
  %v2472 = vpack.c.b16 %v1640, %v1636
  %v2473 = vpack.c.b16 %v1641, %v1637
  %v2474 = vpack.c.b16 %v1646, %v1642
  %v2475 = vpack.c.b16 %v1647, %v1643
  %v2476 = vpack.c.b16 %v1648, %v1644
  %v2477 = vpack.c.b16 %v1649, %v1645
  %v2478 = vpack.c.b16 %v1654, %v1650
  %v2479 = vpack.c.b16 %v1655, %v1651
  %v2480 = vpack.c.b16 %v1656, %v1652
  %v2481 = vpack.c.b16 %v1657, %v1653
  %v2482 = vpack.c.b16 %v1662, %v1658
  %v2483 = vpack.c.b16 %v1663, %v1659
  %v2484 = vpack.c.b16 %v1664, %v1660
  %v2485 = vpack.c.b16 %v1665, %v1661
  %v2486 = vpack.c.b16 %v1670, %v1666
  %v2487 = vpack.c.b16 %v1671, %v1667
  %v2488 = vpack.c.b16 %v1672, %v1668
  %v2489 = vpack.c.b16 %v1673, %v1669
  %v2490 = vpack.c.b16 %v1678, %v1674
  %v2491 = vpack.c.b16 %v1679, %v1675
  %v2492 = vpack.c.b16 %v1680, %v1676
  %v2493 = vpack.c.b16 %v1681, %v1677
  %v2494 = vpack.c.b16 %v1686, %v1682
  %v2495 = vpack.c.b16 %v1687, %v1683
  %v2496 = vpack.c.b16 %v1688, %v1684
  %v2497 = vpack.c.b16 %v1689, %v1685
  %v2498 = vpack.c.b16 %v1694, %v1690
  %v2499 = vpack.c.b16 %v1695, %v1691
  %v2500 = vpack.c.b16 %v1696, %v1692
  %v2501 = vpack.c.b16 %v1697, %v1693
  %v2502 = vpack.c.b16 %v1702, %v1698
  %v2503 = vpack.c.b16 %v1703, %v1699
  %v2504 = vpack.c.b16 %v1704, %v1700
  %v2505 = vpack.c.b16 %v1705, %v1701
  %v2506 = vpack.c.b16 %v1710, %v1706
  %v2507 = vpack.c.b16 %v1711, %v1707
  %v2508 = vpack.c.b16 %v1712, %v1708
  %v2509 = vpack.c.b16 %v1713, %v1709
  %v2510 = vpack.c.b16 %v1718, %v1714
  %v2511 = vpack.c.b16 %v1719, %v1715
  %v2512 = vpack.c.b16 %v1720, %v1716
  %v2513 = vpack.c.b16 %v1721, %v1717
  %v2514 = vpack.c.b16 %v1726, %v1722
  %v2515 = vpack.c.b16 %v1727, %v1723
  %v2516 = vpack.c.b16 %v1728, %v1724
  %v2517 = vpack.c.b16 %v1729, %v1725
  %v2518 = vpack.c.b16 %v1734, %v1730
  %v2519 = vpack.c.b16 %v1735, %v1731
  %v2520 = vpack.c.b16 %v1736, %v1732
  %v2521 = vpack.c.b16 %v1737, %v1733
  %v2522 = vpack.c.b16 %v1742, %v1738
  %v2523 = vpack.c.b16 %v1743, %v1739
  %v2524 = vpack.c.b16 %v1744, %v1740
  %v2525 = vpack.c.b16 %v1745, %v1741
  %v2526 = vpack.c.b16 %v1750, %v1746
  %v2527 = vpack.c.b16 %v1751, %v1747
  %v2528 = vpack.c.b16 %v1752, %v1748
  %v2529 = vpack.c.b16 %v1753, %v1749
  %v2530 = vpack.c.b16 %v1758, %v1754
  %v2531 = vpack.c.b16 %v1759, %v1755
  %v2532 = vpack.c.b16 %v1760, %v1756
  %v2533 = vpack.c.b16 %v1761, %v1757
  %v2534 = vpack.c.b16 %v1766, %v1762
  %v2535 = vpack.c.b16 %v1767, %v1763
  %v2536 = vpack.c.b16 %v1768, %v1764
  %v2537 = vpack.c.b16 %v1769, %v1765
  %v2538 = vpack.c.b16 %v1774, %v1770
  %v2539 = vpack.c.b16 %v1775, %v1771
  %v2540 = vpack.c.b16 %v1776, %v1772
  %v2541 = vpack.c.b16 %v1777, %v1773
  %v2542 = vpack.c.b16 %v1782, %v1778
  %v2543 = vpack.c.b16 %v1783, %v1779
  %v2544 = vpack.c.b16 %v1784, %v1780
  %v2545 = vpack.c.b16 %v1785, %v1781
  %v2546 = vpack.c.b16 %v1790, %v1786
  %v2547 = vpack.c.b16 %v1791, %v1787
  %v2548 = vpack.c.b16 %v1792, %v1788
  %v2549 = vpack.c.b16 %v1793, %v1789
  %v2550 = vpack.c.b16 %v1798, %v1794
  %v2551 = vpack.c.b16 %v1799, %v1795
  %v2552 = vpack.c.b16 %v1800, %v1796
  %v2553 = vpack.c.b16 %v1801, %v1797
  %v2554 = vpack.c.b16 %v1806, %v1802
  %v2555 = vpack.c.b16 %v1807, %v1803
  %v2556 = vpack.c.b16 %v1808, %v1804
  %v2557 = vpack.c.b16 %v1809, %v1805
  %v2558 = vpack.c.b16 %v1814, %v1810
  %v2559 = vpack.c.b16 %v1815, %v1811
  %v2560 = vpack.c.b16 %v1816, %v1812
  %v2561 = vpack.c.b16 %v1817, %v1813
  %v2562 = vpack.c.b16 %v1822, %v1818
  %v2563 = vpack.c.b16 %v1823, %v1819
  %v2564 = vpack.c.b16 %v1824, %v1820
  %v2565 = vpack.c.b16 %v1825, %v1821
  %v2566 = vpack.c.b16 %v1830, %v1826
  %v2567 = vpack.c.b16 %v1831, %v1827
  %v2568 = vpack.c.b16 %v1832, %v1828
  %v2569 = vpack.c.b16 %v1833, %v1829
  %v2570 = vpack.c.b16 %v1838, %v1834
  %v2571 = vpack.c.b16 %v1839, %v1835
  %v2572 = vpack.c.b16 %v1840, %v1836
  %v2573 = vpack.c.b16 %v1841, %v1837
  %v2574 = vpack.c.b16 %v1846, %v1842
  %v2575 = vpack.c.b16 %v1847, %v1843
  %v2576 = vpack.c.b16 %v1848, %v1844
  %v2577 = vpack.c.b16 %v1849, %v1845
  %v2578 = vpack.c.b16 %v1854, %v1850
  %v2579 = vpack.c.b16 %v1855, %v1851
  %v2580 = vpack.c.b16 %v1856, %v1852
  %v2581 = vpack.c.b16 %v1857, %v1853
  %v2582 = vpack.c.b16 %v1862, %v1858
  %v2583 = vpack.c.b16 %v1863, %v1859
  %v2584 = vpack.c.b16 %v1864, %v1860
  %v2585 = vpack.c.b16 %v1865, %v1861
  %v2586 = vpack.c.b16 %v1870, %v1866
  %v2587 = vpack.c.b16 %v1871, %v1867
  %v2588 = vpack.c.b16 %v1872, %v1868
  %v2589 = vpack.c.b16 %v1873, %v1869
  %v2590 = vpack.c.b16 %v1878, %v1874
  %v2591 = vpack.c.b16 %v1879, %v1875
  %v2592 = vpack.c.b16 %v1880, %v1876
  %v2593 = vpack.c.b16 %v1881, %v1877
  %v2594 = vpack.c.b16 %v1886, %v1882
  %v2595 = vpack.c.b16 %v1887, %v1883
  %v2596 = vpack.c.b16 %v1888, %v1884
  %v2597 = vpack.c.b16 %v1889, %v1885
  %v2598 = vpack.c.b16 %v1894, %v1890
  %v2599 = vpack.c.b16 %v1895, %v1891
  %v2600 = vpack.c.b16 %v1896, %v1892
  %v2601 = vpack.c.b16 %v1897, %v1893
  %v2602 = vpack.c.b16 %v1902, %v1898
  %v2603 = vpack.c.b16 %v1903, %v1899
  %v2604 = vpack.c.b16 %v1904, %v1900
  %v2605 = vpack.c.b16 %v1905, %v1901
  %v2606 = vpack.c.b16 %v1910, %v1906
  %v2607 = vpack.c.b16 %v1911, %v1907
  %v2608 = vpack.c.b16 %v1912, %v1908
  %v2609 = vpack.c.b16 %v1913, %v1909
  %v2610 = vpack.c.b16 %v1918, %v1914
  %v2611 = vpack.c.b16 %v1919, %v1915
  %v2612 = vpack.c.b16 %v1920, %v1916
  %v2613 = vpack.c.b16 %v1921, %v1917
  %v2614 = vpack.c.b16 %v1926, %v1922
  %v2615 = vpack.c.b16 %v1927, %v1923
  %v2616 = vpack.c.b16 %v1928, %v1924
  %v2617 = vpack.c.b16 %v1929, %v1925
  %v2618 = vpack.c.b16 %v1934, %v1930
  %v2619 = vpack.c.b16 %v1935, %v1931
  %v2620 = vpack.c.b16 %v1936, %v1932
  %v2621 = vpack.c.b16 %v1937, %v1933
  %v2622 = vpack.c.b16 %v1942, %v1938
  %v2623 = vpack.c.b16 %v1943, %v1939
  %v2624 = vpack.c.b16 %v1944, %v1940
  %v2625 = vpack.c.b16 %v1945, %v1941
  %v2626 = vpack.c.b16 %v1950, %v1946
  %v2627 = vpack.c.b16 %v1951, %v1947
  %v2628 = vpack.c.b16 %v1952, %v1948
  %v2629 = vpack.c.b16 %v1953, %v1949
  %v2630 = vpack.c.b16 %v1958, %v1954
  %v2631 = vpack.c.b16 %v1959, %v1955
  %v2632 = vpack.c.b16 %v1960, %v1956
  %v2633 = vpack.c.b16 %v1961, %v1957
  %v2634 = vpack.c.b16 %v1966, %v1962
  %v2635 = vpack.c.b16 %v1967, %v1963
  %v2636 = vpack.c.b16 %v1968, %v1964
  %v2637 = vpack.c.b16 %v1969, %v1965
  %v2638 = vpack.c.b16 %v1974, %v1970
  %v2639 = vpack.c.b16 %v1975, %v1971
  %v2640 = vpack.c.b16 %v1976, %v1972
  %v2641 = vpack.c.b16 %v1977, %v1973
  %v2642 = vpack.c.b16 %v1982, %v1978
  %v2643 = vpack.c.b16 %v1983, %v1979
  %v2644 = vpack.c.b16 %v1984, %v1980
  %v2645 = vpack.c.b16 %v1985, %v1981
  %v2646 = vpack.c.b16 %v1990, %v1986
  %v2647 = vpack.c.b16 %v1991, %v1987
  %v2648 = vpack.c.b16 %v1992, %v1988
  %v2649 = vpack.c.b16 %v1993, %v1989
  %v2650 = vpack.c.b16 %v1998, %v1994
  %v2651 = vpack.c.b16 %v1999, %v1995
  %v2652 = vpack.c.b16 %v2000, %v1996
  %v2653 = vpack.c.b16 %v2001, %v1997
  %v2654 = vpack.c.b16 %v2006, %v2002
  %v2655 = vpack.c.b16 %v2007, %v2003
  %v2656 = vpack.c.b16 %v2008, %v2004
  %v2657 = vpack.c.b16 %v2009, %v2005
  %v2658 = vpack.c.b16 %v2014, %v2010
  %v2659 = vpack.c.b16 %v2015, %v2011
  %v2660 = vpack.c.b16 %v2016, %v2012
  %v2661 = vpack.c.b16 %v2017, %v2013
  %v2662 = vpack.c.b16 %v2022, %v2018
  %v2663 = vpack.c.b16 %v2023, %v2019
  %v2664 = vpack.c.b16 %v2024, %v2020
  %v2665 = vpack.c.b16 %v2025, %v2021
  %v2666 = vpack.c.b16 %v2030, %v2026
  %v2667 = vpack.c.b16 %v2031, %v2027
  %v2668 = vpack.c.b16 %v2032, %v2028
  %v2669 = vpack.c.b16 %v2033, %v2029
  %v2670 = vpack.c.b16 %v2038, %v2034
  %v2671 = vpack.c.b16 %v2039, %v2035
  %v2672 = vpack.c.b16 %v2040, %v2036
  %v2673 = vpack.c.b16 %v2041, %v2037
  %v2674 = vpack.c.b16 %v2046, %v2042
  %v2675 = vpack.c.b16 %v2047, %v2043
  %v2676 = vpack.c.b16 %v2048, %v2044
  %v2677 = vpack.c.b16 %v2049, %v2045
  %v2678 = vpack.c.b16 %v2054, %v2050
  %v2679 = vpack.c.b16 %v2055, %v2051
  %v2680 = vpack.c.b16 %v2056, %v2052
  %v2681 = vpack.c.b16 %v2057, %v2053
  %v2682 = vpack.c.b16 %v2062, %v2058
  %v2683 = vpack.c.b16 %v2063, %v2059
  %v2684 = vpack.c.b16 %v2064, %v2060
  %v2685 = vpack.c.b16 %v2065, %v2061
  %v2686 = vpack.c.b16 %v2070, %v2066
  %v2687 = vpack.c.b16 %v2071, %v2067
  %v2688 = vpack.c.b16 %v2072, %v2068
  %v2689 = vpack.c.b16 %v2073, %v2069
  %v2690 = vpack.c.b16 %v2078, %v2074
  %v2691 = vpack.c.b16 %v2079, %v2075
  %v2692 = vpack.c.b16 %v2080, %v2076
  %v2693 = vpack.c.b16 %v2081, %v2077
  %v2694 = vpack.c.b16 %v2086, %v2082
  %v2695 = vpack.c.b16 %v2087, %v2083
  %v2696 = vpack.c.b16 %v2088, %v2084
  %v2697 = vpack.c.b16 %v2089, %v2085
  %v2698 = vpack.c.b16 %v2094, %v2090
  %v2699 = vpack.c.b16 %v2095, %v2091
  %v2700 = vpack.c.b16 %v2096, %v2092
  %v2701 = vpack.c.b16 %v2097, %v2093
  %v2702 = vpack.c.b16 %v2102, %v2098
  %v2703 = vpack.c.b16 %v2103, %v2099
  %v2704 = vpack.c.b16 %v2104, %v2100
  %v2705 = vpack.c.b16 %v2105, %v2101
  %v2706 = vpack.c.b16 %v2110, %v2106
  %v2707 = vpack.c.b16 %v2111, %v2107
  %v2708 = vpack.c.b16 %v2112, %v2108
  %v2709 = vpack.c.b16 %v2113, %v2109
  %v2710 = vpack.c.b16 %v2118, %v2114
  %v2711 = vpack.c.b16 %v2119, %v2115
  %v2712 = vpack.c.b16 %v2120, %v2116
  %v2713 = vpack.c.b16 %v2121, %v2117
  %v2714 = vpack.c.b16 %v2126, %v2122
  %v2715 = vpack.c.b16 %v2127, %v2123
  %v2716 = vpack.c.b16 %v2128, %v2124
  %v2717 = vpack.c.b16 %v2129, %v2125
  %v2718 = vpack.c.b16 %v2134, %v2130
  %v2719 = vpack.c.b16 %v2135, %v2131
  %v2720 = vpack.c.b16 %v2136, %v2132
  %v2721 = vpack.c.b16 %v2137, %v2133
  %v2722 = vpack.c.b16 %v2142, %v2138
  %v2723 = vpack.c.b16 %v2143, %v2139
  %v2724 = vpack.c.b16 %v2144, %v2140
  %v2725 = vpack.c.b16 %v2145, %v2141
  %v2726 = vpack.c.b16 %v2150, %v2146
  %v2727 = vpack.c.b16 %v2151, %v2147
  %v2728 = vpack.c.b16 %v2152, %v2148
  %v2729 = vpack.c.b16 %v2153, %v2149
  %v2730 = vpack.c.b16 %v2158, %v2154
  %v2731 = vpack.c.b16 %v2159, %v2155
  %v2732 = vpack.c.b16 %v2160, %v2156
  %v2733 = vpack.c.b16 %v2161, %v2157
  %v2734 = vpack.c.b16 %v2166, %v2162
  %v2735 = vpack.c.b16 %v2167, %v2163
  %v2736 = vpack.c.b16 %v2168, %v2164
  %v2737 = vpack.c.b16 %v2169, %v2165
  %v2738 = vpack.c.b16 %v2174, %v2170
  %v2739 = vpack.c.b16 %v2175, %v2171
  %v2740 = vpack.c.b16 %v2176, %v2172
  %v2741 = vpack.c.b16 %v2177, %v2173
  %v2742 = vpack.c.b16 %v2182, %v2178
  %v2743 = vpack.c.b16 %v2183, %v2179
  %v2744 = vpack.c.b16 %v2184, %v2180
  %v2745 = vpack.c.b16 %v2185, %v2181
  %v2746 = vpack.c.b16 %v2190, %v2186
  %v2747 = vpack.c.b16 %v2191, %v2187
  %v2748 = vpack.c.b16 %v2192, %v2188
  %v2749 = vpack.c.b16 %v2193, %v2189
  %v2750 = vpack.c.b16 %v2198, %v2194
  %v2751 = vpack.c.b16 %v2199, %v2195
  %v2752 = vpack.c.b16 %v2200, %v2196
  %v2753 = vpack.c.b16 %v2201, %v2197
  %v2754 = vpack.c.b16 %v2206, %v2202
  %v2755 = vpack.c.b16 %v2207, %v2203
  %v2756 = vpack.c.b16 %v2208, %v2204
  %v2757 = vpack.c.b16 %v2209, %v2205
  %v2758 = vpack.c.b16 %v2214, %v2210
  %v2759 = vpack.c.b16 %v2215, %v2211
  %v2760 = vpack.c.b16 %v2216, %v2212
  %v2761 = vpack.c.b16 %v2217, %v2213
  %v2762 = vpack.c.b16 %v2222, %v2218
  %v2763 = vpack.c.b16 %v2223, %v2219
  %v2764 = vpack.c.b16 %v2224, %v2220
  %v2765 = vpack.c.b16 %v2225, %v2221
  %v2766 = vpack.c.b16 %v2230, %v2226
  %v2767 = vpack.c.b16 %v2231, %v2227
  %v2768 = vpack.c.b16 %v2232, %v2228
  %v2769 = vpack.c.b16 %v2233, %v2229
  %v2770 = vpack.c.b16 %v2238, %v2234
  %v2771 = vpack.c.b16 %v2239, %v2235
  %v2772 = vpack.c.b16 %v2240, %v2236
  %v2773 = vpack.c.b16 %v2241, %v2237
  %v2774 = vpack.c.b16 %v2246, %v2242
  %v2775 = vpack.c.b16 %v2247, %v2243
  %v2776 = vpack.c.b16 %v2248, %v2244
  %v2777 = vpack.c.b16 %v2249, %v2245
  %v2778 = vpack.c.b16 %v2254, %v2250
  %v2779 = vpack.c.b16 %v2255, %v2251
  %v2780 = vpack.c.b16 %v2256, %v2252
  %v2781 = vpack.c.b16 %v2257, %v2253
  %v2782 = vpack.c.b16 %v2262, %v2258
  %v2783 = vpack.c.b16 %v2263, %v2259
  %v2784 = vpack.c.b16 %v2264, %v2260
  %v2785 = vpack.c.b16 %v2265, %v2261
  %v2786 = vpack.c.b16 %v2270, %v2266
  %v2787 = vpack.c.b16 %v2271, %v2267
  %v2788 = vpack.c.b16 %v2272, %v2268
  %v2789 = vpack.c.b16 %v2273, %v2269
  %v2790 = vpack.c.b16 %v2278, %v2274
  %v2791 = vpack.c.b16 %v2279, %v2275
  %v2792 = vpack.c.b16 %v2280, %v2276
  %v2793 = vpack.c.b16 %v2281, %v2277
  %3306 = vmatprep.subr.bf16.mxu0 %v2283
  %3307 = vmatpush1.bf16.msra.mxu0 %v2282
  %3308 = vmatprep.subr.bf16.mxu0 %v2287
  %3309 = vmatpush1.bf16.msra.mxu0 %v2286
  %3310 = vmatprep.subr.bf16.mxu0 %v2291
  %3311 = vmatpush1.bf16.msra.mxu0 %v2290
  %3312 = vmatprep.subr.bf16.mxu0 %v2295
  %3313 = vmatpush1.bf16.msra.mxu0 %v2294
  %3314 = vmatprep.subr.bf16.mxu0 %v2299
  %3315 = vmatpush1.bf16.msra.mxu0 %v2298
  %3316 = vmatprep.subr.bf16.mxu0 %v2303
  %3317 = vmatpush1.bf16.msra.mxu0 %v2302
  %3318 = vmatprep.subr.bf16.mxu0 %v2307
  %3319 = vmatpush1.bf16.msra.mxu0 %v2306
  %3320 = vmatprep.subr.bf16.mxu0 %v2311
  %3321 = vmatpush1.bf16.msra.mxu0 %v2310
  %3322 = vmatprep.subr.bf16.mxu0 %v2315
  %3323 = vmatpush1.bf16.msra.mxu0 %v2314
  %3324 = vmatprep.subr.bf16.mxu0 %v2319
  %3325 = vmatpush1.bf16.msra.mxu0 %v2318
  %3326 = vmatprep.subr.bf16.mxu0 %v2323
  %3327 = vmatpush1.bf16.msra.mxu0 %v2322
  %3328 = vmatprep.subr.bf16.mxu0 %v2327
  %3329 = vmatpush1.bf16.msra.mxu0 %v2326
  %3330 = vmatprep.subr.bf16.mxu0 %v2331
  %3331 = vmatpush1.bf16.msra.mxu0 %v2330
  %3332 = vmatprep.subr.bf16.mxu0 %v2335
  %3333 = vmatpush1.bf16.msra.mxu0 %v2334
  %3334 = vmatprep.subr.bf16.mxu0 %v2339
  %3335 = vmatpush1.bf16.msra.mxu0 %v2338
  %3336 = vmatprep.subr.bf16.mxu0 %v2343
  %3337 = vmatpush1.bf16.msra.mxu0 %v2342
  %3338 = vmatprep.mubr.bf16.mxu0 %v683
  %3339 = vmatmul.mubr.bf16.gmra.mrb[0].mxu0 %v682
  %v3340 = vpop.f32.mrb[0].mxu0
  %v3341 = vadd.f32 0.0, %v3340
  %v3342 = vpop.f32.mrb[0].mxu0
  %v3343 = vadd.f32 0.0, %v3342
  %v3344 = vpop.f32.mrb[0].mxu0
  %v3345 = vadd.f32 0.0, %v3344
  %v3346 = vpop.f32.mrb[0].mxu0
  %v3347 = vadd.f32 0.0, %v3346
  %3348 = vmatprep.mubr.bf16.mxu0 %v699
  %3349 = vmatmul.mubr.bf16.gmra.mrb[0].mxu0 %v698
  %v3350 = vpop.f32.mrb[0].mxu0
  %v3351 = vadd.f32 0.0, %v3350
  %v3352 = vpop.f32.mrb[0].mxu0
  %v3353 = vadd.f32 0.0, %v3352
  %v3354 = vpop.f32.mrb[0].mxu0
  %v3355 = vpop.f32.mrb[0].mxu0
  %3356 = vdwg.mxu0
  %3357 = vmatprep.subr.bf16.mxu0 %v2347
  %3358 = vmatpush1.bf16.msra.mxu0 %v2346
  %3359 = vmatprep.subr.bf16.mxu0 %v2351
  %3360 = vmatpush1.bf16.msra.mxu0 %v2350
  %3361 = vmatprep.subr.bf16.mxu0 %v2355
  %3362 = vmatpush1.bf16.msra.mxu0 %v2354
  %3363 = vmatprep.subr.bf16.mxu0 %v2359
  %3364 = vmatpush1.bf16.msra.mxu0 %v2358
  %3365 = vmatprep.subr.bf16.mxu0 %v2363
  %3366 = vmatpush1.bf16.msra.mxu0 %v2362
  %3367 = vmatprep.subr.bf16.mxu0 %v2367
  %3368 = vmatpush1.bf16.msra.mxu0 %v2366
  %3369 = vmatprep.subr.bf16.mxu0 %v2371
  %3370 = vmatpush1.bf16.msra.mxu0 %v2370
  %3371 = vmatprep.subr.bf16.mxu0 %v2375
  %3372 = vmatpush1.bf16.msra.mxu0 %v2374
  %3373 = vmatprep.subr.bf16.mxu0 %v2379
  %3374 = vmatpush1.bf16.msra.mxu0 %v2378
  %3375 = vmatprep.subr.bf16.mxu0 %v2383
  %3376 = vmatpush1.bf16.msra.mxu0 %v2382
  %3377 = vmatprep.subr.bf16.mxu0 %v2387
  %3378 = vmatpush1.bf16.msra.mxu0 %v2386
  %3379 = vmatprep.subr.bf16.mxu0 %v2391
  %3380 = vmatpush1.bf16.msra.mxu0 %v2390
  %3381 = vmatprep.subr.bf16.mxu0 %v2395
  %3382 = vmatpush1.bf16.msra.mxu0 %v2394
  %3383 = vmatprep.subr.bf16.mxu0 %v2399
  %3384 = vmatpush1.bf16.msra.mxu0 %v2398
  %3385 = vmatprep.subr.bf16.mxu0 %v2403
  %3386 = vmatpush1.bf16.msra.mxu0 %v2402
  %3387 = vmatprep.subr.bf16.mxu0 %v2407
  %3388 = vmatpush1.bf16.msra.mxu0 %v2406
  %3389 = vmatprep.mubr.bf16.mxu0 %v685
  %3390 = vmatmul.mubr.bf16.gmra.mrb[0].mxu0 %v684
  %v3391 = vpop.f32.mrb[0].mxu0
  %v3392 = vadd.f32 %v3341, %v3391
  %v3393 = vpop.f32.mrb[0].mxu0
  %v3394 = vadd.f32 %v3343, %v3393
  %v3395 = vpop.f32.mrb[0].mxu0
  %v3396 = vadd.f32 %v3345, %v3395
  %v3397 = vpop.f32.mrb[0].mxu0
  %v3398 = vadd.f32 %v3347, %v3397
  %3399 = vmatprep.mubr.bf16.mxu0 %v701
  %3400 = vmatmul.mubr.bf16.gmra.mrb[0].mxu0 %v700
  %v3401 = vpop.f32.mrb[0].mxu0
  %v3402 = vadd.f32 %v3351, %v3401
  %v3403 = vpop.f32.mrb[0].mxu0
  %v3404 = vadd.f32 %v3353, %v3403
  %v3405 = vpop.f32.mrb[0].mxu0
  %v3406 = vpop.f32.mrb[0].mxu0
  %3407 = vdwg.mxu0
  %3408 = vmatprep.subr.bf16.mxu0 %v2411
  %3409 = vmatpush1.bf16.msra.mxu0 %v2410
  %3410 = vmatprep.subr.bf16.mxu0 %v2415
  %3411 = vmatpush1.bf16.msra.mxu0 %v2414
  %3412 = vmatprep.subr.bf16.mxu0 %v2419
  %3413 = vmatpush1.bf16.msra.mxu0 %v2418
  %3414 = vmatprep.subr.bf16.mxu0 %v2423
  %3415 = vmatpush1.bf16.msra.mxu0 %v2422
  %3416 = vmatprep.subr.bf16.mxu0 %v2427
  %3417 = vmatpush1.bf16.msra.mxu0 %v2426
  %3418 = vmatprep.subr.bf16.mxu0 %v2431
  %3419 = vmatpush1.bf16.msra.mxu0 %v2430
  %3420 = vmatprep.subr.bf16.mxu0 %v2435
  %3421 = vmatpush1.bf16.msra.mxu0 %v2434
  %3422 = vmatprep.subr.bf16.mxu0 %v2439
  %3423 = vmatpush1.bf16.msra.mxu0 %v2438
  %3424 = vmatprep.subr.bf16.mxu0 %v2443
  %3425 = vmatpush1.bf16.msra.mxu0 %v2442
  %3426 = vmatprep.subr.bf16.mxu0 %v2447
  %3427 = vmatpush1.bf16.msra.mxu0 %v2446
  %3428 = vmatprep.subr.bf16.mxu0 %v2451
  %3429 = vmatpush1.bf16.msra.mxu0 %v2450
  %3430 = vmatprep.subr.bf16.mxu0 %v2455
  %3431 = vmatpush1.bf16.msra.mxu0 %v2454
  %3432 = vmatprep.subr.bf16.mxu0 %v2459
  %3433 = vmatpush1.bf16.msra.mxu0 %v2458
  %3434 = vmatprep.subr.bf16.mxu0 %v2463
  %3435 = vmatpush1.bf16.msra.mxu0 %v2462
  %3436 = vmatprep.subr.bf16.mxu0 %v2467
  %3437 = vmatpush1.bf16.msra.mxu0 %v2466
  %3438 = vmatprep.subr.bf16.mxu0 %v2471
  %3439 = vmatpush1.bf16.msra.mxu0 %v2470
  %3440 = vmatprep.mubr.bf16.mxu0 %v687
  %3441 = vmatmul.mubr.bf16.gmra.mrb[0].mxu0 %v686
  %v3442 = vpop.f32.mrb[0].mxu0
  %v3443 = vadd.f32 %v3392, %v3442
  %v3444 = vpop.f32.mrb[0].mxu0
  %v3445 = vadd.f32 %v3394, %v3444
  %v3446 = vpop.f32.mrb[0].mxu0
  %v3447 = vadd.f32 %v3396, %v3446
  %v3448 = vpop.f32.mrb[0].mxu0
  %v3449 = vadd.f32 %v3398, %v3448
  %3450 = vmatprep.mubr.bf16.mxu0 %v703
  %3451 = vmatmul.mubr.bf16.gmra.mrb[0].mxu0 %v702
  %v3452 = vpop.f32.mrb[0].mxu0
  %v3453 = vadd.f32 %v3402, %v3452
  %v3454 = vpop.f32.mrb[0].mxu0
  %v3455 = vadd.f32 %v3404, %v3454
  %v3456 = vpop.f32.mrb[0].mxu0
  %v3457 = vpop.f32.mrb[0].mxu0
  %3458 = vdwg.mxu0
  %3459 = vmatprep.subr.bf16.mxu0 %v2475
  %3460 = vmatpush1.bf16.msra.mxu0 %v2474
  %3461 = vmatprep.subr.bf16.mxu0 %v2479
  %3462 = vmatpush1.bf16.msra.mxu0 %v2478
  %3463 = vmatprep.subr.bf16.mxu0 %v2483
  %3464 = vmatpush1.bf16.msra.mxu0 %v2482
  %3465 = vmatprep.subr.bf16.mxu0 %v2487
  %3466 = vmatpush1.bf16.msra.mxu0 %v2486
  %3467 = vmatprep.subr.bf16.mxu0 %v2491
  %3468 = vmatpush1.bf16.msra.mxu0 %v2490
  %3469 = vmatprep.subr.bf16.mxu0 %v2495
  %3470 = vmatpush1.bf16.msra.mxu0 %v2494
  %3471 = vmatprep.subr.bf16.mxu0 %v2499
  %3472 = vmatpush1.bf16.msra.mxu0 %v2498
  %3473 = vmatprep.subr.bf16.mxu0 %v2503
  %3474 = vmatpush1.bf16.msra.mxu0 %v2502
  %3475 = vmatprep.subr.bf16.mxu0 %v2507
  %3476 = vmatpush1.bf16.msra.mxu0 %v2506
  %3477 = vmatprep.subr.bf16.mxu0 %v2511
  %3478 = vmatpush1.bf16.msra.mxu0 %v2510
  %3479 = vmatprep.subr.bf16.mxu0 %v2515
  %3480 = vmatpush1.bf16.msra.mxu0 %v2514
  %3481 = vmatprep.subr.bf16.mxu0 %v2519
  %3482 = vmatpush1.bf16.msra.mxu0 %v2518
  %3483 = vmatprep.subr.bf16.mxu0 %v2523
  %3484 = vmatpush1.bf16.msra.mxu0 %v2522
  %3485 = vmatprep.subr.bf16.mxu0 %v2527
  %3486 = vmatpush1.bf16.msra.mxu0 %v2526
  %3487 = vmatprep.subr.bf16.mxu0 %v2531
  %3488 = vmatpush1.bf16.msra.mxu0 %v2530
  %3489 = vmatprep.subr.bf16.mxu0 %v2535
  %3490 = vmatpush1.bf16.msra.mxu0 %v2534
  %3491 = vmatprep.mubr.bf16.mxu0 %v689
  %3492 = vmatmul.mubr.bf16.gmra.mrb[0].mxu0 %v688
  %v3493 = vpop.f32.mrb[0].mxu0
  %v3494 = vadd.f32 %v3443, %v3493
  %v3495 = vpop.f32.mrb[0].mxu0
  %v3496 = vadd.f32 %v3445, %v3495
  %v3497 = vpop.f32.mrb[0].mxu0
  %v3498 = vadd.f32 %v3447, %v3497
  %v3499 = vpop.f32.mrb[0].mxu0
  %v3500 = vadd.f32 %v3449, %v3499
  %3501 = vmatprep.mubr.bf16.mxu0 %v705
  %3502 = vmatmul.mubr.bf16.gmra.mrb[0].mxu0 %v704
  %v3503 = vpop.f32.mrb[0].mxu0
  %v3504 = vadd.f32 %v3453, %v3503
  %v3505 = vpop.f32.mrb[0].mxu0
  %v3506 = vadd.f32 %v3455, %v3505
  %v3507 = vpop.f32.mrb[0].mxu0
  %v3508 = vpop.f32.mrb[0].mxu0
  %3509 = vdwg.mxu0
  %3510 = vmatprep.subr.bf16.mxu0 %v2539
  %3511 = vmatpush1.bf16.msra.mxu0 %v2538
  %3512 = vmatprep.subr.bf16.mxu0 %v2543
  %3513 = vmatpush1.bf16.msra.mxu0 %v2542
  %3514 = vmatprep.subr.bf16.mxu0 %v2547
  %3515 = vmatpush1.bf16.msra.mxu0 %v2546
  %3516 = vmatprep.subr.bf16.mxu0 %v2551
  %3517 = vmatpush1.bf16.msra.mxu0 %v2550
  %3518 = vmatprep.subr.bf16.mxu0 %v2555
  %3519 = vmatpush1.bf16.msra.mxu0 %v2554
  %3520 = vmatprep.subr.bf16.mxu0 %v2559
  %3521 = vmatpush1.bf16.msra.mxu0 %v2558
  %3522 = vmatprep.subr.bf16.mxu0 %v2563
  %3523 = vmatpush1.bf16.msra.mxu0 %v2562
  %3524 = vmatprep.subr.bf16.mxu0 %v2567
  %3525 = vmatpush1.bf16.msra.mxu0 %v2566
  %3526 = vmatprep.subr.bf16.mxu0 %v2571
  %3527 = vmatpush1.bf16.msra.mxu0 %v2570
  %3528 = vmatprep.subr.bf16.mxu0 %v2575
  %3529 = vmatpush1.bf16.msra.mxu0 %v2574
  %3530 = vmatprep.subr.bf16.mxu0 %v2579
  %3531 = vmatpush1.bf16.msra.mxu0 %v2578
  %3532 = vmatprep.subr.bf16.mxu0 %v2583
  %3533 = vmatpush1.bf16.msra.mxu0 %v2582
  %3534 = vmatprep.subr.bf16.mxu0 %v2587
  %3535 = vmatpush1.bf16.msra.mxu0 %v2586
  %3536 = vmatprep.subr.bf16.mxu0 %v2591
  %3537 = vmatpush1.bf16.msra.mxu0 %v2590
  %3538 = vmatprep.subr.bf16.mxu0 %v2595
  %3539 = vmatpush1.bf16.msra.mxu0 %v2594
  %3540 = vmatprep.subr.bf16.mxu0 %v2599
  %3541 = vmatpush1.bf16.msra.mxu0 %v2598
  %3542 = vmatprep.mubr.bf16.mxu0 %v691
  %3543 = vmatmul.mubr.bf16.gmra.mrb[0].mxu0 %v690
  %v3544 = vpop.f32.mrb[0].mxu0
  %v3545 = vadd.f32 %v3494, %v3544
  %v3546 = vpop.f32.mrb[0].mxu0
  %v3547 = vadd.f32 %v3496, %v3546
  %v3548 = vpop.f32.mrb[0].mxu0
  %v3549 = vadd.f32 %v3498, %v3548
  %v3550 = vpop.f32.mrb[0].mxu0
  %v3551 = vadd.f32 %v3500, %v3550
  %3552 = vmatprep.mubr.bf16.mxu0 %v707
  %3553 = vmatmul.mubr.bf16.gmra.mrb[0].mxu0 %v706
  %v3554 = vpop.f32.mrb[0].mxu0
  %v3555 = vadd.f32 %v3504, %v3554
  %v3556 = vpop.f32.mrb[0].mxu0
  %v3557 = vadd.f32 %v3506, %v3556
  %v3558 = vpop.f32.mrb[0].mxu0
  %v3559 = vpop.f32.mrb[0].mxu0
  %3560 = vdwg.mxu0
  %3561 = vmatprep.subr.bf16.mxu0 %v2603
  %3562 = vmatpush1.bf16.msra.mxu0 %v2602
  %3563 = vmatprep.subr.bf16.mxu0 %v2607
  %3564 = vmatpush1.bf16.msra.mxu0 %v2606
  %3565 = vmatprep.subr.bf16.mxu0 %v2611
  %3566 = vmatpush1.bf16.msra.mxu0 %v2610
  %3567 = vmatprep.subr.bf16.mxu0 %v2615
  %3568 = vmatpush1.bf16.msra.mxu0 %v2614
  %3569 = vmatprep.subr.bf16.mxu0 %v2619
  %3570 = vmatpush1.bf16.msra.mxu0 %v2618
  %3571 = vmatprep.subr.bf16.mxu0 %v2623
  %3572 = vmatpush1.bf16.msra.mxu0 %v2622
  %3573 = vmatprep.subr.bf16.mxu0 %v2627
  %3574 = vmatpush1.bf16.msra.mxu0 %v2626
  %3575 = vmatprep.subr.bf16.mxu0 %v2631
  %3576 = vmatpush1.bf16.msra.mxu0 %v2630
  %3577 = vmatprep.subr.bf16.mxu0 %v2635
  %3578 = vmatpush1.bf16.msra.mxu0 %v2634
  %3579 = vmatprep.subr.bf16.mxu0 %v2639
  %3580 = vmatpush1.bf16.msra.mxu0 %v2638
  %3581 = vmatprep.subr.bf16.mxu0 %v2643
  %3582 = vmatpush1.bf16.msra.mxu0 %v2642
  %3583 = vmatprep.subr.bf16.mxu0 %v2647
  %3584 = vmatpush1.bf16.msra.mxu0 %v2646
  %3585 = vmatprep.subr.bf16.mxu0 %v2651
  %3586 = vmatpush1.bf16.msra.mxu0 %v2650
  %3587 = vmatprep.subr.bf16.mxu0 %v2655
  %3588 = vmatpush1.bf16.msra.mxu0 %v2654
  %3589 = vmatprep.subr.bf16.mxu0 %v2659
  %3590 = vmatpush1.bf16.msra.mxu0 %v2658
  %3591 = vmatprep.subr.bf16.mxu0 %v2663
  %3592 = vmatpush1.bf16.msra.mxu0 %v2662
  %3593 = vmatprep.mubr.bf16.mxu0 %v693
  %3594 = vmatmul.mubr.bf16.gmra.mrb[0].mxu0 %v692
  %v3595 = vpop.f32.mrb[0].mxu0
  %v3596 = vadd.f32 %v3545, %v3595
  %v3597 = vpop.f32.mrb[0].mxu0
  %v3598 = vadd.f32 %v3547, %v3597
  %v3599 = vpop.f32.mrb[0].mxu0
  %v3600 = vadd.f32 %v3549, %v3599
  %v3601 = vpop.f32.mrb[0].mxu0
  %v3602 = vadd.f32 %v3551, %v3601
  %3603 = vmatprep.mubr.bf16.mxu0 %v709
  %3604 = vmatmul.mubr.bf16.gmra.mrb[0].mxu0 %v708
  %v3605 = vpop.f32.mrb[0].mxu0
  %v3606 = vadd.f32 %v3555, %v3605
  %v3607 = vpop.f32.mrb[0].mxu0
  %v3608 = vadd.f32 %v3557, %v3607
  %v3609 = vpop.f32.mrb[0].mxu0
  %v3610 = vpop.f32.mrb[0].mxu0
  %3611 = vdwg.mxu0
  %3612 = vmatprep.subr.bf16.mxu0 %v2667
  %3613 = vmatpush1.bf16.msra.mxu0 %v2666
  %3614 = vmatprep.subr.bf16.mxu0 %v2671
  %3615 = vmatpush1.bf16.msra.mxu0 %v2670
  %3616 = vmatprep.subr.bf16.mxu0 %v2675
  %3617 = vmatpush1.bf16.msra.mxu0 %v2674
  %3618 = vmatprep.subr.bf16.mxu0 %v2679
  %3619 = vmatpush1.bf16.msra.mxu0 %v2678
  %3620 = vmatprep.subr.bf16.mxu0 %v2683
  %3621 = vmatpush1.bf16.msra.mxu0 %v2682
  %3622 = vmatprep.subr.bf16.mxu0 %v2687
  %3623 = vmatpush1.bf16.msra.mxu0 %v2686
  %3624 = vmatprep.subr.bf16.mxu0 %v2691
  %3625 = vmatpush1.bf16.msra.mxu0 %v2690
  %3626 = vmatprep.subr.bf16.mxu0 %v2695
  %3627 = vmatpush1.bf16.msra.mxu0 %v2694
  %3628 = vmatprep.subr.bf16.mxu0 %v2699
  %3629 = vmatpush1.bf16.msra.mxu0 %v2698
  %3630 = vmatprep.subr.bf16.mxu0 %v2703
  %3631 = vmatpush1.bf16.msra.mxu0 %v2702
  %3632 = vmatprep.subr.bf16.mxu0 %v2707
  %3633 = vmatpush1.bf16.msra.mxu0 %v2706
  %3634 = vmatprep.subr.bf16.mxu0 %v2711
  %3635 = vmatpush1.bf16.msra.mxu0 %v2710
  %3636 = vmatprep.subr.bf16.mxu0 %v2715
  %3637 = vmatpush1.bf16.msra.mxu0 %v2714
  %3638 = vmatprep.subr.bf16.mxu0 %v2719
  %3639 = vmatpush1.bf16.msra.mxu0 %v2718
  %3640 = vmatprep.subr.bf16.mxu0 %v2723
  %3641 = vmatpush1.bf16.msra.mxu0 %v2722
  %3642 = vmatprep.subr.bf16.mxu0 %v2727
  %3643 = vmatpush1.bf16.msra.mxu0 %v2726
  %3644 = vmatprep.mubr.bf16.mxu0 %v695
  %3645 = vmatmul.mubr.bf16.gmra.mrb[0].mxu0 %v694
  %v3646 = vpop.f32.mrb[0].mxu0
  %v3647 = vadd.f32 %v3596, %v3646
  %v3648 = vpop.f32.mrb[0].mxu0
  %v3649 = vadd.f32 %v3598, %v3648
  %v3650 = vpop.f32.mrb[0].mxu0
  %v3651 = vadd.f32 %v3600, %v3650
  %v3652 = vpop.f32.mrb[0].mxu0
  %v3653 = vadd.f32 %v3602, %v3652
  %3654 = vmatprep.mubr.bf16.mxu0 %v711
  %3655 = vmatmul.mubr.bf16.gmra.mrb[0].mxu0 %v710
  %v3656 = vpop.f32.mrb[0].mxu0
  %v3657 = vadd.f32 %v3606, %v3656
  %v3658 = vpop.f32.mrb[0].mxu0
  %v3659 = vadd.f32 %v3608, %v3658
  %v3660 = vpop.f32.mrb[0].mxu0
  %v3661 = vpop.f32.mrb[0].mxu0
  %3662 = vdwg.mxu0
  %3663 = vmatprep.subr.bf16.mxu0 %v2731
  %3664 = vmatpush1.bf16.msra.mxu0 %v2730
  %3665 = vmatprep.subr.bf16.mxu0 %v2735
  %3666 = vmatpush1.bf16.msra.mxu0 %v2734
  %3667 = vmatprep.subr.bf16.mxu0 %v2739
  %3668 = vmatpush1.bf16.msra.mxu0 %v2738
  %3669 = vmatprep.subr.bf16.mxu0 %v2743
  %3670 = vmatpush1.bf16.msra.mxu0 %v2742
  %3671 = vmatprep.subr.bf16.mxu0 %v2747
  %3672 = vmatpush1.bf16.msra.mxu0 %v2746
  %3673 = vmatprep.subr.bf16.mxu0 %v2751
  %3674 = vmatpush1.bf16.msra.mxu0 %v2750
  %3675 = vmatprep.subr.bf16.mxu0 %v2755
  %3676 = vmatpush1.bf16.msra.mxu0 %v2754
  %3677 = vmatprep.subr.bf16.mxu0 %v2759
  %3678 = vmatpush1.bf16.msra.mxu0 %v2758
  %3679 = vmatprep.subr.bf16.mxu0 %v2763
  %3680 = vmatpush1.bf16.msra.mxu0 %v2762
  %3681 = vmatprep.subr.bf16.mxu0 %v2767
  %3682 = vmatpush1.bf16.msra.mxu0 %v2766
  %3683 = vmatprep.subr.bf16.mxu0 %v2771
  %3684 = vmatpush1.bf16.msra.mxu0 %v2770
  %3685 = vmatprep.subr.bf16.mxu0 %v2775
  %3686 = vmatpush1.bf16.msra.mxu0 %v2774
  %3687 = vmatprep.subr.bf16.mxu0 %v2779
  %3688 = vmatpush1.bf16.msra.mxu0 %v2778
  %3689 = vmatprep.subr.bf16.mxu0 %v2783
  %3690 = vmatpush1.bf16.msra.mxu0 %v2782
  %3691 = vmatprep.subr.bf16.mxu0 %v2787
  %3692 = vmatpush1.bf16.msra.mxu0 %v2786
  %3693 = vmatprep.subr.bf16.mxu0 %v2791
  %3694 = vmatpush1.bf16.msra.mxu0 %v2790
  %3695 = vmatprep.mubr.bf16.mxu0 %v697
  %3696 = vmatmul.mubr.bf16.gmra.mrb[0].mxu0 %v696
  %v3697 = vpop.f32.mrb[0].mxu0
  %v3698 = vadd.f32 %v3647, %v3697
  %v3699 = vpop.f32.mrb[0].mxu0
  %v3700 = vadd.f32 %v3649, %v3699
  %v3701 = vpop.f32.mrb[0].mxu0
  %v3702 = vadd.f32 %v3651, %v3701
  %v3703 = vpop.f32.mrb[0].mxu0
  %v3704 = vadd.f32 %v3653, %v3703
  %3705 = vmatprep.mubr.bf16.mxu0 %v713
  %3706 = vmatmul.mubr.bf16.gmra.mrb[0].mxu0 %v712
  %v3707 = vpop.f32.mrb[0].mxu0
  %v3708 = vadd.f32 %v3657, %v3707
  %v3709 = vpop.f32.mrb[0].mxu0
  %v3710 = vadd.f32 %v3659, %v3709
  %v3711 = vpop.f32.mrb[0].mxu0
  %v3712 = vpop.f32.mrb[0].mxu0
  %3713 = vdwg.mxu0
  %3714 = vmatprep.subr.bf16.mxu0 %v2285
  %3715 = vmatpush1.bf16.msra.mxu0 %v2284
  %3716 = vmatprep.subr.bf16.mxu0 %v2289
  %3717 = vmatpush1.bf16.msra.mxu0 %v2288
  %3718 = vmatprep.subr.bf16.mxu0 %v2293
  %3719 = vmatpush1.bf16.msra.mxu0 %v2292
  %3720 = vmatprep.subr.bf16.mxu0 %v2297
  %3721 = vmatpush1.bf16.msra.mxu0 %v2296
  %3722 = vmatprep.subr.bf16.mxu0 %v2301
  %3723 = vmatpush1.bf16.msra.mxu0 %v2300
  %3724 = vmatprep.subr.bf16.mxu0 %v2305
  %3725 = vmatpush1.bf16.msra.mxu0 %v2304
  %3726 = vmatprep.subr.bf16.mxu0 %v2309
  %3727 = vmatpush1.bf16.msra.mxu0 %v2308
  %3728 = vmatprep.subr.bf16.mxu0 %v2313
  %3729 = vmatpush1.bf16.msra.mxu0 %v2312
  %3730 = vmatprep.subr.bf16.mxu0 %v2317
  %3731 = vmatpush1.bf16.msra.mxu0 %v2316
  %3732 = vmatprep.subr.bf16.mxu0 %v2321
  %3733 = vmatpush1.bf16.msra.mxu0 %v2320
  %3734 = vmatprep.subr.bf16.mxu0 %v2325
  %3735 = vmatpush1.bf16.msra.mxu0 %v2324
  %3736 = vmatprep.subr.bf16.mxu0 %v2329
  %3737 = vmatpush1.bf16.msra.mxu0 %v2328
  %3738 = vmatprep.subr.bf16.mxu0 %v2333
  %3739 = vmatpush1.bf16.msra.mxu0 %v2332
  %3740 = vmatprep.subr.bf16.mxu0 %v2337
  %3741 = vmatpush1.bf16.msra.mxu0 %v2336
  %3742 = vmatprep.subr.bf16.mxu0 %v2341
  %3743 = vmatpush1.bf16.msra.mxu0 %v2340
  %3744 = vmatprep.subr.bf16.mxu0 %v2345
  %3745 = vmatpush1.bf16.msra.mxu0 %v2344
  %3746 = vmatprep.mubr.bf16.mxu0 %v683
  %3747 = vmatmul.mubr.bf16.gmra.mrb[0].mxu0 %v682
  %v3748 = vpop.f32.mrb[0].mxu0
  %v3749 = vadd.f32 0.0, %v3748
  %v3750 = vpop.f32.mrb[0].mxu0
  %v3751 = vadd.f32 0.0, %v3750
  %v3752 = vpop.f32.mrb[0].mxu0
  %v3753 = vadd.f32 0.0, %v3752
  %v3754 = vpop.f32.mrb[0].mxu0
  %v3755 = vadd.f32 0.0, %v3754
  %3756 = vmatprep.mubr.bf16.mxu0 %v699
  %3757 = vmatmul.mubr.bf16.gmra.mrb[0].mxu0 %v698
  %v3758 = vpop.f32.mrb[0].mxu0
  %v3759 = vadd.f32 0.0, %v3758
  %v3760 = vpop.f32.mrb[0].mxu0
  %v3761 = vadd.f32 0.0, %v3760
  %v3762 = vpop.f32.mrb[0].mxu0
  %v3763 = vpop.f32.mrb[0].mxu0
  %3764 = vdwg.mxu0
  %3765 = vmatprep.subr.bf16.mxu0 %v2349
  %3766 = vmatpush1.bf16.msra.mxu0 %v2348
  %3767 = vmatprep.subr.bf16.mxu0 %v2353
  %3768 = vmatpush1.bf16.msra.mxu0 %v2352
  %3769 = vmatprep.subr.bf16.mxu0 %v2357
  %3770 = vmatpush1.bf16.msra.mxu0 %v2356
  %3771 = vmatprep.subr.bf16.mxu0 %v2361
  %3772 = vmatpush1.bf16.msra.mxu0 %v2360
  %3773 = vmatprep.subr.bf16.mxu0 %v2365
  %3774 = vmatpush1.bf16.msra.mxu0 %v2364
  %3775 = vmatprep.subr.bf16.mxu0 %v2369
  %3776 = vmatpush1.bf16.msra.mxu0 %v2368
  %3777 = vmatprep.subr.bf16.mxu0 %v2373
  %3778 = vmatpush1.bf16.msra.mxu0 %v2372
  %3779 = vmatprep.subr.bf16.mxu0 %v2377
  %3780 = vmatpush1.bf16.msra.mxu0 %v2376
  %3781 = vmatprep.subr.bf16.mxu0 %v2381
  %3782 = vmatpush1.bf16.msra.mxu0 %v2380
  %3783 = vmatprep.subr.bf16.mxu0 %v2385
  %3784 = vmatpush1.bf16.msra.mxu0 %v2384
  %3785 = vmatprep.subr.bf16.mxu0 %v2389
  %3786 = vmatpush1.bf16.msra.mxu0 %v2388
  %3787 = vmatprep.subr.bf16.mxu0 %v2393
  %3788 = vmatpush1.bf16.msra.mxu0 %v2392
  %3789 = vmatprep.subr.bf16.mxu0 %v2397
  %3790 = vmatpush1.bf16.msra.mxu0 %v2396
  %3791 = vmatprep.subr.bf16.mxu0 %v2401
  %3792 = vmatpush1.bf16.msra.mxu0 %v2400
  %3793 = vmatprep.subr.bf16.mxu0 %v2405
  %3794 = vmatpush1.bf16.msra.mxu0 %v2404
  %3795 = vmatprep.subr.bf16.mxu0 %v2409
  %3796 = vmatpush1.bf16.msra.mxu0 %v2408
  %3797 = vmatprep.mubr.bf16.mxu0 %v685
  %3798 = vmatmul.mubr.bf16.gmra.mrb[0].mxu0 %v684
  %v3799 = vpop.f32.mrb[0].mxu0
  %v3800 = vadd.f32 %v3749, %v3799
  %v3801 = vpop.f32.mrb[0].mxu0
  %v3802 = vadd.f32 %v3751, %v3801
  %v3803 = vpop.f32.mrb[0].mxu0
  %v3804 = vadd.f32 %v3753, %v3803
  %v3805 = vpop.f32.mrb[0].mxu0
  %v3806 = vadd.f32 %v3755, %v3805
  %3807 = vmatprep.mubr.bf16.mxu0 %v701
  %3808 = vmatmul.mubr.bf16.gmra.mrb[0].mxu0 %v700
  %v3809 = vpop.f32.mrb[0].mxu0
  %v3810 = vadd.f32 %v3759, %v3809
  %v3811 = vpop.f32.mrb[0].mxu0
  %v3812 = vadd.f32 %v3761, %v3811
  %v3813 = vpop.f32.mrb[0].mxu0
  %v3814 = vpop.f32.mrb[0].mxu0
  %3815 = vdwg.mxu0
  %3816 = vmatprep.subr.bf16.mxu0 %v2413
  %3817 = vmatpush1.bf16.msra.mxu0 %v2412
  %3818 = vmatprep.subr.bf16.mxu0 %v2417
  %3819 = vmatpush1.bf16.msra.mxu0 %v2416
  %3820 = vmatprep.subr.bf16.mxu0 %v2421
  %3821 = vmatpush1.bf16.msra.mxu0 %v2420
  %3822 = vmatprep.subr.bf16.mxu0 %v2425
  %3823 = vmatpush1.bf16.msra.mxu0 %v2424
  %3824 = vmatprep.subr.bf16.mxu0 %v2429
  %3825 = vmatpush1.bf16.msra.mxu0 %v2428
  %3826 = vmatprep.subr.bf16.mxu0 %v2433
  %3827 = vmatpush1.bf16.msra.mxu0 %v2432
  %3828 = vmatprep.subr.bf16.mxu0 %v2437
  %3829 = vmatpush1.bf16.msra.mxu0 %v2436
  %3830 = vmatprep.subr.bf16.mxu0 %v2441
  %3831 = vmatpush1.bf16.msra.mxu0 %v2440
  %3832 = vmatprep.subr.bf16.mxu0 %v2445
  %3833 = vmatpush1.bf16.msra.mxu0 %v2444
  %3834 = vmatprep.subr.bf16.mxu0 %v2449
  %3835 = vmatpush1.bf16.msra.mxu0 %v2448
  %3836 = vmatprep.subr.bf16.mxu0 %v2453
  %3837 = vmatpush1.bf16.msra.mxu0 %v2452
  %3838 = vmatprep.subr.bf16.mxu0 %v2457
  %3839 = vmatpush1.bf16.msra.mxu0 %v2456
  %3840 = vmatprep.subr.bf16.mxu0 %v2461
  %3841 = vmatpush1.bf16.msra.mxu0 %v2460
  %3842 = vmatprep.subr.bf16.mxu0 %v2465
  %3843 = vmatpush1.bf16.msra.mxu0 %v2464
  %3844 = vmatprep.subr.bf16.mxu0 %v2469
  %3845 = vmatpush1.bf16.msra.mxu0 %v2468
  %3846 = vmatprep.subr.bf16.mxu0 %v2473
  %3847 = vmatpush1.bf16.msra.mxu0 %v2472
  %3848 = vmatprep.mubr.bf16.mxu0 %v687
  %3849 = vmatmul.mubr.bf16.gmra.mrb[0].mxu0 %v686
  %v3850 = vpop.f32.mrb[0].mxu0
  %v3851 = vadd.f32 %v3800, %v3850
  %v3852 = vpop.f32.mrb[0].mxu0
  %v3853 = vadd.f32 %v3802, %v3852
  %v3854 = vpop.f32.mrb[0].mxu0
  %v3855 = vadd.f32 %v3804, %v3854
  %v3856 = vpop.f32.mrb[0].mxu0
  %v3857 = vadd.f32 %v3806, %v3856
  %3858 = vmatprep.mubr.bf16.mxu0 %v703
  %3859 = vmatmul.mubr.bf16.gmra.mrb[0].mxu0 %v702
  %v3860 = vpop.f32.mrb[0].mxu0
  %v3861 = vadd.f32 %v3810, %v3860
  %v3862 = vpop.f32.mrb[0].mxu0
  %v3863 = vadd.f32 %v3812, %v3862
  %v3864 = vpop.f32.mrb[0].mxu0
  %v3865 = vpop.f32.mrb[0].mxu0
  %3866 = vdwg.mxu0
  %3867 = vmatprep.subr.bf16.mxu0 %v2477
  %3868 = vmatpush1.bf16.msra.mxu0 %v2476
  %3869 = vmatprep.subr.bf16.mxu0 %v2481
  %3870 = vmatpush1.bf16.msra.mxu0 %v2480
  %3871 = vmatprep.subr.bf16.mxu0 %v2485
  %3872 = vmatpush1.bf16.msra.mxu0 %v2484
  %3873 = vmatprep.subr.bf16.mxu0 %v2489
  %3874 = vmatpush1.bf16.msra.mxu0 %v2488
  %3875 = vmatprep.subr.bf16.mxu0 %v2493
  %3876 = vmatpush1.bf16.msra.mxu0 %v2492
  %3877 = vmatprep.subr.bf16.mxu0 %v2497
  %3878 = vmatpush1.bf16.msra.mxu0 %v2496
  %3879 = vmatprep.subr.bf16.mxu0 %v2501
  %3880 = vmatpush1.bf16.msra.mxu0 %v2500
  %3881 = vmatprep.subr.bf16.mxu0 %v2505
  %3882 = vmatpush1.bf16.msra.mxu0 %v2504
  %3883 = vmatprep.subr.bf16.mxu0 %v2509
  %3884 = vmatpush1.bf16.msra.mxu0 %v2508
  %3885 = vmatprep.subr.bf16.mxu0 %v2513
  %3886 = vmatpush1.bf16.msra.mxu0 %v2512
  %3887 = vmatprep.subr.bf16.mxu0 %v2517
  %3888 = vmatpush1.bf16.msra.mxu0 %v2516
  %3889 = vmatprep.subr.bf16.mxu0 %v2521
  %3890 = vmatpush1.bf16.msra.mxu0 %v2520
  %3891 = vmatprep.subr.bf16.mxu0 %v2525
  %3892 = vmatpush1.bf16.msra.mxu0 %v2524
  %3893 = vmatprep.subr.bf16.mxu0 %v2529
  %3894 = vmatpush1.bf16.msra.mxu0 %v2528
  %3895 = vmatprep.subr.bf16.mxu0 %v2533
  %3896 = vmatpush1.bf16.msra.mxu0 %v2532
  %3897 = vmatprep.subr.bf16.mxu0 %v2537
  %3898 = vmatpush1.bf16.msra.mxu0 %v2536
  %3899 = vmatprep.mubr.bf16.mxu0 %v689
  %3900 = vmatmul.mubr.bf16.gmra.mrb[0].mxu0 %v688
  %v3901 = vpop.f32.mrb[0].mxu0
  %v3902 = vadd.f32 %v3851, %v3901
  %v3903 = vpop.f32.mrb[0].mxu0
  %v3904 = vadd.f32 %v3853, %v3903
  %v3905 = vpop.f32.mrb[0].mxu0
  %v3906 = vadd.f32 %v3855, %v3905
  %v3907 = vpop.f32.mrb[0].mxu0
  %v3908 = vadd.f32 %v3857, %v3907
  %3909 = vmatprep.mubr.bf16.mxu0 %v705
  %3910 = vmatmul.mubr.bf16.gmra.mrb[0].mxu0 %v704
  %v3911 = vpop.f32.mrb[0].mxu0
  %v3912 = vadd.f32 %v3861, %v3911
  %v3913 = vpop.f32.mrb[0].mxu0
  %v3914 = vadd.f32 %v3863, %v3913
  %v3915 = vpop.f32.mrb[0].mxu0
  %v3916 = vpop.f32.mrb[0].mxu0
  %3917 = vdwg.mxu0
  %3918 = vmatprep.subr.bf16.mxu0 %v2541
  %3919 = vmatpush1.bf16.msra.mxu0 %v2540
  %3920 = vmatprep.subr.bf16.mxu0 %v2545
  %3921 = vmatpush1.bf16.msra.mxu0 %v2544
  %3922 = vmatprep.subr.bf16.mxu0 %v2549
  %3923 = vmatpush1.bf16.msra.mxu0 %v2548
  %3924 = vmatprep.subr.bf16.mxu0 %v2553
  %3925 = vmatpush1.bf16.msra.mxu0 %v2552
  %3926 = vmatprep.subr.bf16.mxu0 %v2557
  %3927 = vmatpush1.bf16.msra.mxu0 %v2556
  %3928 = vmatprep.subr.bf16.mxu0 %v2561
  %3929 = vmatpush1.bf16.msra.mxu0 %v2560
  %3930 = vmatprep.subr.bf16.mxu0 %v2565
  %3931 = vmatpush1.bf16.msra.mxu0 %v2564
  %3932 = vmatprep.subr.bf16.mxu0 %v2569
  %3933 = vmatpush1.bf16.msra.mxu0 %v2568
  %3934 = vmatprep.subr.bf16.mxu0 %v2573
  %3935 = vmatpush1.bf16.msra.mxu0 %v2572
  %3936 = vmatprep.subr.bf16.mxu0 %v2577
  %3937 = vmatpush1.bf16.msra.mxu0 %v2576
  %3938 = vmatprep.subr.bf16.mxu0 %v2581
  %3939 = vmatpush1.bf16.msra.mxu0 %v2580
  %3940 = vmatprep.subr.bf16.mxu0 %v2585
  %3941 = vmatpush1.bf16.msra.mxu0 %v2584
  %3942 = vmatprep.subr.bf16.mxu0 %v2589
  %3943 = vmatpush1.bf16.msra.mxu0 %v2588
  %3944 = vmatprep.subr.bf16.mxu0 %v2593
  %3945 = vmatpush1.bf16.msra.mxu0 %v2592
  %3946 = vmatprep.subr.bf16.mxu0 %v2597
  %3947 = vmatpush1.bf16.msra.mxu0 %v2596
  %3948 = vmatprep.subr.bf16.mxu0 %v2601
  %3949 = vmatpush1.bf16.msra.mxu0 %v2600
  %3950 = vmatprep.mubr.bf16.mxu0 %v691
  %3951 = vmatmul.mubr.bf16.gmra.mrb[0].mxu0 %v690
  %v3952 = vpop.f32.mrb[0].mxu0
  %v3953 = vadd.f32 %v3902, %v3952
  %v3954 = vpop.f32.mrb[0].mxu0
  %v3955 = vadd.f32 %v3904, %v3954
  %v3956 = vpop.f32.mrb[0].mxu0
  %v3957 = vadd.f32 %v3906, %v3956
  %v3958 = vpop.f32.mrb[0].mxu0
  %v3959 = vadd.f32 %v3908, %v3958
  %3960 = vmatprep.mubr.bf16.mxu0 %v707
  %3961 = vmatmul.mubr.bf16.gmra.mrb[0].mxu0 %v706
  %v3962 = vpop.f32.mrb[0].mxu0
  %v3963 = vadd.f32 %v3912, %v3962
  %v3964 = vpop.f32.mrb[0].mxu0
  %v3965 = vadd.f32 %v3914, %v3964
  %v3966 = vpop.f32.mrb[0].mxu0
  %v3967 = vpop.f32.mrb[0].mxu0
  %3968 = vdwg.mxu0
  %3969 = vmatprep.subr.bf16.mxu0 %v2605
  %3970 = vmatpush1.bf16.msra.mxu0 %v2604
  %3971 = vmatprep.subr.bf16.mxu0 %v2609
  %3972 = vmatpush1.bf16.msra.mxu0 %v2608
  %3973 = vmatprep.subr.bf16.mxu0 %v2613
  %3974 = vmatpush1.bf16.msra.mxu0 %v2612
  %3975 = vmatprep.subr.bf16.mxu0 %v2617
  %3976 = vmatpush1.bf16.msra.mxu0 %v2616
  %3977 = vmatprep.subr.bf16.mxu0 %v2621
  %3978 = vmatpush1.bf16.msra.mxu0 %v2620
  %3979 = vmatprep.subr.bf16.mxu0 %v2625
  %3980 = vmatpush1.bf16.msra.mxu0 %v2624
  %3981 = vmatprep.subr.bf16.mxu0 %v2629
  %3982 = vmatpush1.bf16.msra.mxu0 %v2628
  %3983 = vmatprep.subr.bf16.mxu0 %v2633
  %3984 = vmatpush1.bf16.msra.mxu0 %v2632
  %3985 = vmatprep.subr.bf16.mxu0 %v2637
  %3986 = vmatpush1.bf16.msra.mxu0 %v2636
  %3987 = vmatprep.subr.bf16.mxu0 %v2641
  %3988 = vmatpush1.bf16.msra.mxu0 %v2640
  %3989 = vmatprep.subr.bf16.mxu0 %v2645
  %3990 = vmatpush1.bf16.msra.mxu0 %v2644
  %3991 = vmatprep.subr.bf16.mxu0 %v2649
  %3992 = vmatpush1.bf16.msra.mxu0 %v2648
  %3993 = vmatprep.subr.bf16.mxu0 %v2653
  %3994 = vmatpush1.bf16.msra.mxu0 %v2652
  %3995 = vmatprep.subr.bf16.mxu0 %v2657
  %3996 = vmatpush1.bf16.msra.mxu0 %v2656
  %3997 = vmatprep.subr.bf16.mxu0 %v2661
  %3998 = vmatpush1.bf16.msra.mxu0 %v2660
  %3999 = vmatprep.subr.bf16.mxu0 %v2665
  %4000 = vmatpush1.bf16.msra.mxu0 %v2664
  %4001 = vmatprep.mubr.bf16.mxu0 %v693
  %4002 = vmatmul.mubr.bf16.gmra.mrb[0].mxu0 %v692
  %v4003 = vpop.f32.mrb[0].mxu0
  %v4004 = vadd.f32 %v3953, %v4003
  %v4005 = vpop.f32.mrb[0].mxu0
  %v4006 = vadd.f32 %v3955, %v4005
  %v4007 = vpop.f32.mrb[0].mxu0
  %v4008 = vadd.f32 %v3957, %v4007
  %v4009 = vpop.f32.mrb[0].mxu0
  %v4010 = vadd.f32 %v3959, %v4009
  %4011 = vmatprep.mubr.bf16.mxu0 %v709
  %4012 = vmatmul.mubr.bf16.gmra.mrb[0].mxu0 %v708
  %v4013 = vpop.f32.mrb[0].mxu0
  %v4014 = vadd.f32 %v3963, %v4013
  %v4015 = vpop.f32.mrb[0].mxu0
  %v4016 = vadd.f32 %v3965, %v4015
  %v4017 = vpop.f32.mrb[0].mxu0
  %v4018 = vpop.f32.mrb[0].mxu0
  %4019 = vdwg.mxu0
  %4020 = vmatprep.subr.bf16.mxu0 %v2669
  %4021 = vmatpush1.bf16.msra.mxu0 %v2668
  %4022 = vmatprep.subr.bf16.mxu0 %v2673
  %4023 = vmatpush1.bf16.msra.mxu0 %v2672
  %4024 = vmatprep.subr.bf16.mxu0 %v2677
  %4025 = vmatpush1.bf16.msra.mxu0 %v2676
  %4026 = vmatprep.subr.bf16.mxu0 %v2681
  %4027 = vmatpush1.bf16.msra.mxu0 %v2680
  %4028 = vmatprep.subr.bf16.mxu0 %v2685
  %4029 = vmatpush1.bf16.msra.mxu0 %v2684
  %4030 = vmatprep.subr.bf16.mxu0 %v2689
  %4031 = vmatpush1.bf16.msra.mxu0 %v2688
  %4032 = vmatprep.subr.bf16.mxu0 %v2693
  %4033 = vmatpush1.bf16.msra.mxu0 %v2692
  %4034 = vmatprep.subr.bf16.mxu0 %v2697
  %4035 = vmatpush1.bf16.msra.mxu0 %v2696
  %4036 = vmatprep.subr.bf16.mxu0 %v2701
  %4037 = vmatpush1.bf16.msra.mxu0 %v2700
  %4038 = vmatprep.subr.bf16.mxu0 %v2705
  %4039 = vmatpush1.bf16.msra.mxu0 %v2704
  %4040 = vmatprep.subr.bf16.mxu0 %v2709
  %4041 = vmatpush1.bf16.msra.mxu0 %v2708
  %4042 = vmatprep.subr.bf16.mxu0 %v2713
  %4043 = vmatpush1.bf16.msra.mxu0 %v2712
  %4044 = vmatprep.subr.bf16.mxu0 %v2717
  %4045 = vmatpush1.bf16.msra.mxu0 %v2716
  %4046 = vmatprep.subr.bf16.mxu0 %v2721
  %4047 = vmatpush1.bf16.msra.mxu0 %v2720
  %4048 = vmatprep.subr.bf16.mxu0 %v2725
  %4049 = vmatpush1.bf16.msra.mxu0 %v2724
  %4050 = vmatprep.subr.bf16.mxu0 %v2729
  %4051 = vmatpush1.bf16.msra.mxu0 %v2728
  %4052 = vmatprep.mubr.bf16.mxu0 %v695
  %4053 = vmatmul.mubr.bf16.gmra.mrb[0].mxu0 %v694
  %v4054 = vpop.f32.mrb[0].mxu0
  %v4055 = vadd.f32 %v4004, %v4054
  %v4056 = vpop.f32.mrb[0].mxu0
  %v4057 = vadd.f32 %v4006, %v4056
  %v4058 = vpop.f32.mrb[0].mxu0
  %v4059 = vadd.f32 %v4008, %v4058
  %v4060 = vpop.f32.mrb[0].mxu0
  %v4061 = vadd.f32 %v4010, %v4060
  %4062 = vmatprep.mubr.bf16.mxu0 %v711
  %4063 = vmatmul.mubr.bf16.gmra.mrb[0].mxu0 %v710
  %v4064 = vpop.f32.mrb[0].mxu0
  %v4065 = vadd.f32 %v4014, %v4064
  %v4066 = vpop.f32.mrb[0].mxu0
  %v4067 = vadd.f32 %v4016, %v4066
  %v4068 = vpop.f32.mrb[0].mxu0
  %v4069 = vpop.f32.mrb[0].mxu0
  %4070 = vdwg.mxu0
  %4071 = vmatprep.subr.bf16.mxu0 %v2733
  %4072 = vmatpush1.bf16.msra.mxu0 %v2732
  %4073 = vmatprep.subr.bf16.mxu0 %v2737
  %4074 = vmatpush1.bf16.msra.mxu0 %v2736
  %4075 = vmatprep.subr.bf16.mxu0 %v2741
  %4076 = vmatpush1.bf16.msra.mxu0 %v2740
  %4077 = vmatprep.subr.bf16.mxu0 %v2745
  %4078 = vmatpush1.bf16.msra.mxu0 %v2744
  %4079 = vmatprep.subr.bf16.mxu0 %v2749
  %4080 = vmatpush1.bf16.msra.mxu0 %v2748
  %4081 = vmatprep.subr.bf16.mxu0 %v2753
  %4082 = vmatpush1.bf16.msra.mxu0 %v2752
  %4083 = vmatprep.subr.bf16.mxu0 %v2757
  %4084 = vmatpush1.bf16.msra.mxu0 %v2756
  %4085 = vmatprep.subr.bf16.mxu0 %v2761
  %4086 = vmatpush1.bf16.msra.mxu0 %v2760
  %4087 = vmatprep.subr.bf16.mxu0 %v2765
  %4088 = vmatpush1.bf16.msra.mxu0 %v2764
  %4089 = vmatprep.subr.bf16.mxu0 %v2769
  %4090 = vmatpush1.bf16.msra.mxu0 %v2768
  %4091 = vmatprep.subr.bf16.mxu0 %v2773
  %4092 = vmatpush1.bf16.msra.mxu0 %v2772
  %4093 = vmatprep.subr.bf16.mxu0 %v2777
  %4094 = vmatpush1.bf16.msra.mxu0 %v2776
  %4095 = vmatprep.subr.bf16.mxu0 %v2781
  %4096 = vmatpush1.bf16.msra.mxu0 %v2780
  %4097 = vmatprep.subr.bf16.mxu0 %v2785
  %4098 = vmatpush1.bf16.msra.mxu0 %v2784
  %4099 = vmatprep.subr.bf16.mxu0 %v2789
  %4100 = vmatpush1.bf16.msra.mxu0 %v2788
  %4101 = vmatprep.subr.bf16.mxu0 %v2793
  %4102 = vmatpush1.bf16.msra.mxu0 %v2792
  %4103 = vmatprep.mubr.bf16.mxu0 %v697
  %4104 = vmatmul.mubr.bf16.gmra.mrb[0].mxu0 %v696
  %v4105 = vpop.f32.mrb[0].mxu0
  %v4106 = vadd.f32 %v4055, %v4105
  %v4107 = vpop.f32.mrb[0].mxu0
  %v4108 = vadd.f32 %v4057, %v4107
  %v4109 = vpop.f32.mrb[0].mxu0
  %v4110 = vadd.f32 %v4059, %v4109
  %v4111 = vpop.f32.mrb[0].mxu0
  %v4112 = vadd.f32 %v4061, %v4111
  %4113 = vmatprep.mubr.bf16.mxu0 %v713
  %4114 = vmatmul.mubr.bf16.gmra.mrb[0].mxu0 %v712
  %v4115 = vpop.f32.mrb[0].mxu0
  %v4116 = vadd.f32 %v4065, %v4115
  %v4117 = vpop.f32.mrb[0].mxu0
  %v4118 = vadd.f32 %v4067, %v4117
  %v4119 = vpop.f32.mrb[0].mxu0
  %v4120 = vpop.f32.mrb[0].mxu0
  %4121 = vdwg.mxu0
  %v4122 = vld [vmem:[%s61] sm:$0xff]
  %v4123 = vld [vmem:[%s61 + $0x8] sm:$0xff]
  %v4124 = vld [vmem:[%s61 + $0x10] sm:$0xff]
  %v4125 = vld [vmem:[%s61 + $0x18] sm:$0xff]
  %v4126 = vld [vmem:[%s61 + $0x20] sm:$0xff]
  %v4127 = vld [vmem:[%s61 + $0x28] sm:$0xff]
  %v4128 = vld [vmem:[%s61 + $0x30] sm:$0xff]
  %v4129 = vld [vmem:[%s61 + $0x38] sm:$0xff]
  %v4130 = vld [vmem:[%s61 + $0x40] sm:$0xff]
  %v4131 = vld [vmem:[%s61 + $0x48] sm:$0xff]
  %v4132 = vld [vmem:[%s61 + $0x50] sm:$0xff]
  %v4133 = vld [vmem:[%s61 + $0x58] sm:$0xff]
  %v4134 = vld [vmem:[%s61 + $0x60] sm:$0xff]
  %v4135 = vld [vmem:[%s61 + $0x68] sm:$0xff]
  %v4136 = vld [vmem:[%s61 + $0x70] sm:$0xff]
  %v4137 = vld [vmem:[%s61 + $0x78] sm:$0xff]
  %v4138 = vld [vmem:[%s61 + $0x80] sm:$0xff]
  %v4139 = vld [vmem:[%s61 + $0x88] sm:$0xff]
  %v4140 = vld [vmem:[%s61 + $0x90] sm:$0xff]
  %v4141 = vld [vmem:[%s61 + $0x98] sm:$0xff]
  %v4142 = vld [vmem:[%s61 + $0xa0] sm:$0xff]
  %v4143 = vld [vmem:[%s61 + $0xa8] sm:$0xff]
  %v4144 = vld [vmem:[%s61 + $0xb0] sm:$0xff]
  %v4145 = vld [vmem:[%s61 + $0xb8] sm:$0xff]
  %v4170 = vunpack.c.l.b16 %v4122
  %v4171 = vunpack.c.h.b16 %v4122
  %v4172 = vunpack.c.l.b16 %v4123
  %v4173 = vunpack.c.h.b16 %v4123
  %v4174 = vunpack.c.l.b16 %v4124
  %v4175 = vunpack.c.h.b16 %v4124
  %v4176 = vunpack.c.l.b16 %v4125
  %v4177 = vunpack.c.h.b16 %v4125
  %v4178 = vunpack.c.l.b16 %v4126
  %v4179 = vunpack.c.h.b16 %v4126
  %v4180 = vunpack.c.l.b16 %v4127
  %v4181 = vunpack.c.h.b16 %v4127
  %v4182 = vunpack.c.l.b16 %v4128
  %v4183 = vunpack.c.h.b16 %v4128
  %v4184 = vunpack.c.l.b16 %v4129
  %v4185 = vunpack.c.h.b16 %v4129
  %v4186 = vunpack.c.l.b16 %v4130
  %v4187 = vunpack.c.h.b16 %v4130
  %v4188 = vunpack.c.l.b16 %v4131
  %v4189 = vunpack.c.h.b16 %v4131
  %v4190 = vunpack.c.l.b16 %v4132
  %v4191 = vunpack.c.h.b16 %v4132
  %v4192 = vunpack.c.l.b16 %v4133
  %v4193 = vunpack.c.h.b16 %v4133
  %v4194 = vunpack.c.l.b16 %v4134
  %v4195 = vunpack.c.h.b16 %v4134
  %v4196 = vunpack.c.l.b16 %v4135
  %v4197 = vunpack.c.h.b16 %v4135
  %v4198 = vunpack.c.l.b16 %v4136
  %v4199 = vunpack.c.h.b16 %v4136
  %v4200 = vunpack.c.l.b16 %v4137
  %v4201 = vunpack.c.h.b16 %v4137
  %v4202 = vunpack.c.l.b16 %v4138
  %v4203 = vunpack.c.h.b16 %v4138
  %v4204 = vunpack.c.l.b16 %v4139
  %v4205 = vunpack.c.h.b16 %v4139
  %v4206 = vunpack.c.l.b16 %v4140
  %v4207 = vunpack.c.h.b16 %v4140
  %v4208 = vunpack.c.l.b16 %v4141
  %v4209 = vunpack.c.h.b16 %v4141
  %v4210 = vunpack.c.l.b16 %v4142
  %v4211 = vunpack.c.h.b16 %v4142
  %v4212 = vunpack.c.l.b16 %v4143
  %v4213 = vunpack.c.h.b16 %v4143
  %v4214 = vunpack.c.l.b16 %v4144
  %v4215 = vunpack.c.h.b16 %v4144
  %v4216 = vunpack.c.l.b16 %v4145
  %v4217 = vunpack.c.h.b16 %v4145
  %v4218 = vpack.c.b16 %v4186, %v4170
  %v4219 = vpack.c.b16 %v4187, %v4171
  %v4220 = vpack.c.b16 %v4188, %v4172
  %v4221 = vpack.c.b16 %v4189, %v4173
  %v4222 = vpack.c.b16 %v4190, %v4174
  %v4223 = vpack.c.b16 %v4191, %v4175
  %v4224 = vpack.c.b16 %v4192, %v4176
  %v4225 = vpack.c.b16 %v4193, %v4177
  %v4226 = vpack.c.b16 %v4194, %v4178
  %v4227 = vpack.c.b16 %v4195, %v4179
  %v4228 = vpack.c.b16 %v4196, %v4180
  %v4229 = vpack.c.b16 %v4197, %v4181
  %v4230 = vpack.c.b16 %v4198, %v4182
  %v4231 = vpack.c.b16 %v4199, %v4183
  %v4232 = vpack.c.b16 %v4200, %v4184
  %v4233 = vpack.c.b16 %v4201, %v4185
  %v4234 = vpack.c.b16 %v4202, %v4202
  %v4235 = vpack.c.b16 %v4203, %v4203
  %v4236 = vpack.c.b16 %v4204, %v4204
  %v4237 = vpack.c.b16 %v4205, %v4205
  %v4238 = vpack.c.b16 %v4206, %v4206
  %v4239 = vpack.c.b16 %v4207, %v4207
  %v4240 = vpack.c.b16 %v4208, %v4208
  %v4241 = vpack.c.b16 %v4209, %v4209
  %v4242 = vpack.c.b16 %v4210, %v4210
  %v4243 = vpack.c.b16 %v4211, %v4211
  %v4244 = vpack.c.b16 %v4212, %v4212
  %v4245 = vpack.c.b16 %v4213, %v4213
  %v4246 = vpack.c.b16 %v4214, %v4214
  %v4247 = vpack.c.b16 %v4215, %v4215
  %v4248 = vpack.c.b16 %v4216, %v4216
  %v4249 = vpack.c.b16 %v4217, %v4217
  %4282 = vmatprep.subr.bf16.mxu0 %v2283
  %4283 = vmatpush1.bf16.msra.mxu0 %v2282
  %4284 = vmatprep.subr.bf16.mxu0 %v2287
  %4285 = vmatpush1.bf16.msra.mxu0 %v2286
  %4286 = vmatprep.subr.bf16.mxu0 %v2291
  %4287 = vmatpush1.bf16.msra.mxu0 %v2290
  %4288 = vmatprep.subr.bf16.mxu0 %v2295
  %4289 = vmatpush1.bf16.msra.mxu0 %v2294
  %4290 = vmatprep.subr.bf16.mxu0 %v2299
  %4291 = vmatpush1.bf16.msra.mxu0 %v2298
  %4292 = vmatprep.subr.bf16.mxu0 %v2303
  %4293 = vmatpush1.bf16.msra.mxu0 %v2302
  %4294 = vmatprep.subr.bf16.mxu0 %v2307
  %4295 = vmatpush1.bf16.msra.mxu0 %v2306
  %4296 = vmatprep.subr.bf16.mxu0 %v2311
  %4297 = vmatpush1.bf16.msra.mxu0 %v2310
  %4298 = vmatprep.subr.bf16.mxu0 %v2315
  %4299 = vmatpush1.bf16.msra.mxu0 %v2314
  %4300 = vmatprep.subr.bf16.mxu0 %v2319
  %4301 = vmatpush1.bf16.msra.mxu0 %v2318
  %4302 = vmatprep.subr.bf16.mxu0 %v2323
  %4303 = vmatpush1.bf16.msra.mxu0 %v2322
  %4304 = vmatprep.subr.bf16.mxu0 %v2327
  %4305 = vmatpush1.bf16.msra.mxu0 %v2326
  %4306 = vmatprep.subr.bf16.mxu0 %v2331
  %4307 = vmatpush1.bf16.msra.mxu0 %v2330
  %4308 = vmatprep.subr.bf16.mxu0 %v2335
  %4309 = vmatpush1.bf16.msra.mxu0 %v2334
  %4310 = vmatprep.subr.bf16.mxu0 %v2339
  %4311 = vmatpush1.bf16.msra.mxu0 %v2338
  %4312 = vmatprep.subr.bf16.mxu0 %v2343
  %4313 = vmatpush1.bf16.msra.mxu0 %v2342
  %4314 = vmatprep.mubr.bf16.mxu0 %v4219
  %4315 = vmatmul.mubr.bf16.gmra.mrb[0].mxu0 %v4218
  %v4316 = vpop.f32.mrb[0].mxu0
  %v4317 = vadd.f32 0.0, %v4316
  %v4318 = vpop.f32.mrb[0].mxu0
  %v4319 = vadd.f32 0.0, %v4318
  %v4320 = vpop.f32.mrb[0].mxu0
  %v4321 = vadd.f32 0.0, %v4320
  %v4322 = vpop.f32.mrb[0].mxu0
  %v4323 = vadd.f32 0.0, %v4322
  %4324 = vmatprep.mubr.bf16.mxu0 %v4235
  %4325 = vmatmul.mubr.bf16.gmra.mrb[0].mxu0 %v4234
  %v4326 = vpop.f32.mrb[0].mxu0
  %v4327 = vadd.f32 0.0, %v4326
  %v4328 = vpop.f32.mrb[0].mxu0
  %v4329 = vadd.f32 0.0, %v4328
  %v4330 = vpop.f32.mrb[0].mxu0
  %v4331 = vpop.f32.mrb[0].mxu0
  %4332 = vdwg.mxu0
  %4333 = vmatprep.subr.bf16.mxu0 %v2347
  %4334 = vmatpush1.bf16.msra.mxu0 %v2346
  %4335 = vmatprep.subr.bf16.mxu0 %v2351
  %4336 = vmatpush1.bf16.msra.mxu0 %v2350
  %4337 = vmatprep.subr.bf16.mxu0 %v2355
  %4338 = vmatpush1.bf16.msra.mxu0 %v2354
  %4339 = vmatprep.subr.bf16.mxu0 %v2359
  %4340 = vmatpush1.bf16.msra.mxu0 %v2358
  %4341 = vmatprep.subr.bf16.mxu0 %v2363
  %4342 = vmatpush1.bf16.msra.mxu0 %v2362
  %4343 = vmatprep.subr.bf16.mxu0 %v2367
  %4344 = vmatpush1.bf16.msra.mxu0 %v2366
  %4345 = vmatprep.subr.bf16.mxu0 %v2371
  %4346 = vmatpush1.bf16.msra.mxu0 %v2370
  %4347 = vmatprep.subr.bf16.mxu0 %v2375
  %4348 = vmatpush1.bf16.msra.mxu0 %v2374
  %4349 = vmatprep.subr.bf16.mxu0 %v2379
  %4350 = vmatpush1.bf16.msra.mxu0 %v2378
  %4351 = vmatprep.subr.bf16.mxu0 %v2383
  %4352 = vmatpush1.bf16.msra.mxu0 %v2382
  %4353 = vmatprep.subr.bf16.mxu0 %v2387
  %4354 = vmatpush1.bf16.msra.mxu0 %v2386
  %4355 = vmatprep.subr.bf16.mxu0 %v2391
  %4356 = vmatpush1.bf16.msra.mxu0 %v2390
  %4357 = vmatprep.subr.bf16.mxu0 %v2395
  %4358 = vmatpush1.bf16.msra.mxu0 %v2394
  %4359 = vmatprep.subr.bf16.mxu0 %v2399
  %4360 = vmatpush1.bf16.msra.mxu0 %v2398
  %4361 = vmatprep.subr.bf16.mxu0 %v2403
  %4362 = vmatpush1.bf16.msra.mxu0 %v2402
  %4363 = vmatprep.subr.bf16.mxu0 %v2407
  %4364 = vmatpush1.bf16.msra.mxu0 %v2406
  %4365 = vmatprep.mubr.bf16.mxu0 %v4221
  %4366 = vmatmul.mubr.bf16.gmra.mrb[0].mxu0 %v4220
  %v4367 = vpop.f32.mrb[0].mxu0
  %v4368 = vadd.f32 %v4317, %v4367
  %v4369 = vpop.f32.mrb[0].mxu0
  %v4370 = vadd.f32 %v4319, %v4369
  %v4371 = vpop.f32.mrb[0].mxu0
  %v4372 = vadd.f32 %v4321, %v4371
  %v4373 = vpop.f32.mrb[0].mxu0
  %v4374 = vadd.f32 %v4323, %v4373
  %4375 = vmatprep.mubr.bf16.mxu0 %v4237
  %4376 = vmatmul.mubr.bf16.gmra.mrb[0].mxu0 %v4236
  %v4377 = vpop.f32.mrb[0].mxu0
  %v4378 = vadd.f32 %v4327, %v4377
  %v4379 = vpop.f32.mrb[0].mxu0
  %v4380 = vadd.f32 %v4329, %v4379
  %v4381 = vpop.f32.mrb[0].mxu0
  %v4382 = vpop.f32.mrb[0].mxu0
  %4383 = vdwg.mxu0
  %4384 = vmatprep.subr.bf16.mxu0 %v2411
  %4385 = vmatpush1.bf16.msra.mxu0 %v2410
  %4386 = vmatprep.subr.bf16.mxu0 %v2415
  %4387 = vmatpush1.bf16.msra.mxu0 %v2414
  %4388 = vmatprep.subr.bf16.mxu0 %v2419
  %4389 = vmatpush1.bf16.msra.mxu0 %v2418
  %4390 = vmatprep.subr.bf16.mxu0 %v2423
  %4391 = vmatpush1.bf16.msra.mxu0 %v2422
  %4392 = vmatprep.subr.bf16.mxu0 %v2427
  %4393 = vmatpush1.bf16.msra.mxu0 %v2426
  %4394 = vmatprep.subr.bf16.mxu0 %v2431
  %4395 = vmatpush1.bf16.msra.mxu0 %v2430
  %4396 = vmatprep.subr.bf16.mxu0 %v2435
  %4397 = vmatpush1.bf16.msra.mxu0 %v2434
  %4398 = vmatprep.subr.bf16.mxu0 %v2439
  %4399 = vmatpush1.bf16.msra.mxu0 %v2438
  %4400 = vmatprep.subr.bf16.mxu0 %v2443
  %4401 = vmatpush1.bf16.msra.mxu0 %v2442
  %4402 = vmatprep.subr.bf16.mxu0 %v2447
  %4403 = vmatpush1.bf16.msra.mxu0 %v2446
  %4404 = vmatprep.subr.bf16.mxu0 %v2451
  %4405 = vmatpush1.bf16.msra.mxu0 %v2450
  %4406 = vmatprep.subr.bf16.mxu0 %v2455
  %4407 = vmatpush1.bf16.msra.mxu0 %v2454
  %4408 = vmatprep.subr.bf16.mxu0 %v2459
  %4409 = vmatpush1.bf16.msra.mxu0 %v2458
  %4410 = vmatprep.subr.bf16.mxu0 %v2463
  %4411 = vmatpush1.bf16.msra.mxu0 %v2462
  %4412 = vmatprep.subr.bf16.mxu0 %v2467
  %4413 = vmatpush1.bf16.msra.mxu0 %v2466
  %4414 = vmatprep.subr.bf16.mxu0 %v2471
  %4415 = vmatpush1.bf16.msra.mxu0 %v2470
  %4416 = vmatprep.mubr.bf16.mxu0 %v4223
  %4417 = vmatmul.mubr.bf16.gmra.mrb[0].mxu0 %v4222
  %v4418 = vpop.f32.mrb[0].mxu0
  %v4419 = vadd.f32 %v4368, %v4418
  %v4420 = vpop.f32.mrb[0].mxu0
  %v4421 = vadd.f32 %v4370, %v4420
  %v4422 = vpop.f32.mrb[0].mxu0
  %v4423 = vadd.f32 %v4372, %v4422
  %v4424 = vpop.f32.mrb[0].mxu0
  %v4425 = vadd.f32 %v4374, %v4424
  %4426 = vmatprep.mubr.bf16.mxu0 %v4239
  %4427 = vmatmul.mubr.bf16.gmra.mrb[0].mxu0 %v4238
  %v4428 = vpop.f32.mrb[0].mxu0
  %v4429 = vadd.f32 %v4378, %v4428
  %v4430 = vpop.f32.mrb[0].mxu0
  %v4431 = vadd.f32 %v4380, %v4430
  %v4432 = vpop.f32.mrb[0].mxu0
  %v4433 = vpop.f32.mrb[0].mxu0
  %4434 = vdwg.mxu0
  %4435 = vmatprep.subr.bf16.mxu0 %v2475
  %4436 = vmatpush1.bf16.msra.mxu0 %v2474
  %4437 = vmatprep.subr.bf16.mxu0 %v2479
  %4438 = vmatpush1.bf16.msra.mxu0 %v2478
  %4439 = vmatprep.subr.bf16.mxu0 %v2483
  %4440 = vmatpush1.bf16.msra.mxu0 %v2482
  %4441 = vmatprep.subr.bf16.mxu0 %v2487
  %4442 = vmatpush1.bf16.msra.mxu0 %v2486
  %4443 = vmatprep.subr.bf16.mxu0 %v2491
  %4444 = vmatpush1.bf16.msra.mxu0 %v2490
  %4445 = vmatprep.subr.bf16.mxu0 %v2495
  %4446 = vmatpush1.bf16.msra.mxu0 %v2494
  %4447 = vmatprep.subr.bf16.mxu0 %v2499
  %4448 = vmatpush1.bf16.msra.mxu0 %v2498
  %4449 = vmatprep.subr.bf16.mxu0 %v2503
  %4450 = vmatpush1.bf16.msra.mxu0 %v2502
  %4451 = vmatprep.subr.bf16.mxu0 %v2507
  %4452 = vmatpush1.bf16.msra.mxu0 %v2506
  %4453 = vmatprep.subr.bf16.mxu0 %v2511
  %4454 = vmatpush1.bf16.msra.mxu0 %v2510
  %4455 = vmatprep.subr.bf16.mxu0 %v2515
  %4456 = vmatpush1.bf16.msra.mxu0 %v2514
  %4457 = vmatprep.subr.bf16.mxu0 %v2519
  %4458 = vmatpush1.bf16.msra.mxu0 %v2518
  %4459 = vmatprep.subr.bf16.mxu0 %v2523
  %4460 = vmatpush1.bf16.msra.mxu0 %v2522
  %4461 = vmatprep.subr.bf16.mxu0 %v2527
  %4462 = vmatpush1.bf16.msra.mxu0 %v2526
  %4463 = vmatprep.subr.bf16.mxu0 %v2531
  %4464 = vmatpush1.bf16.msra.mxu0 %v2530
  %4465 = vmatprep.subr.bf16.mxu0 %v2535
  %4466 = vmatpush1.bf16.msra.mxu0 %v2534
  %4467 = vmatprep.mubr.bf16.mxu0 %v4225
  %4468 = vmatmul.mubr.bf16.gmra.mrb[0].mxu0 %v4224
  %v4469 = vpop.f32.mrb[0].mxu0
  %v4470 = vadd.f32 %v4419, %v4469
  %v4471 = vpop.f32.mrb[0].mxu0
  %v4472 = vadd.f32 %v4421, %v4471
  %v4473 = vpop.f32.mrb[0].mxu0
  %v4474 = vadd.f32 %v4423, %v4473
  %v4475 = vpop.f32.mrb[0].mxu0
  %v4476 = vadd.f32 %v4425, %v4475
  %4477 = vmatprep.mubr.bf16.mxu0 %v4241
  %4478 = vmatmul.mubr.bf16.gmra.mrb[0].mxu0 %v4240
  %v4479 = vpop.f32.mrb[0].mxu0
  %v4480 = vadd.f32 %v4429, %v4479
  %v4481 = vpop.f32.mrb[0].mxu0
  %v4482 = vadd.f32 %v4431, %v4481
  %v4483 = vpop.f32.mrb[0].mxu0
  %v4484 = vpop.f32.mrb[0].mxu0
  %4485 = vdwg.mxu0
  %4486 = vmatprep.subr.bf16.mxu0 %v2539
  %4487 = vmatpush1.bf16.msra.mxu0 %v2538
  %4488 = vmatprep.subr.bf16.mxu0 %v2543
  %4489 = vmatpush1.bf16.msra.mxu0 %v2542
  %4490 = vmatprep.subr.bf16.mxu0 %v2547
  %4491 = vmatpush1.bf16.msra.mxu0 %v2546
  %4492 = vmatprep.subr.bf16.mxu0 %v2551
  %4493 = vmatpush1.bf16.msra.mxu0 %v2550
  %4494 = vmatprep.subr.bf16.mxu0 %v2555
  %4495 = vmatpush1.bf16.msra.mxu0 %v2554
  %4496 = vmatprep.subr.bf16.mxu0 %v2559
  %4497 = vmatpush1.bf16.msra.mxu0 %v2558
  %4498 = vmatprep.subr.bf16.mxu0 %v2563
  %4499 = vmatpush1.bf16.msra.mxu0 %v2562
  %4500 = vmatprep.subr.bf16.mxu0 %v2567
  %4501 = vmatpush1.bf16.msra.mxu0 %v2566
  %4502 = vmatprep.subr.bf16.mxu0 %v2571
  %4503 = vmatpush1.bf16.msra.mxu0 %v2570
  %4504 = vmatprep.subr.bf16.mxu0 %v2575
  %4505 = vmatpush1.bf16.msra.mxu0 %v2574
  %4506 = vmatprep.subr.bf16.mxu0 %v2579
  %4507 = vmatpush1.bf16.msra.mxu0 %v2578
  %4508 = vmatprep.subr.bf16.mxu0 %v2583
  %4509 = vmatpush1.bf16.msra.mxu0 %v2582
  %4510 = vmatprep.subr.bf16.mxu0 %v2587
  %4511 = vmatpush1.bf16.msra.mxu0 %v2586
  %4512 = vmatprep.subr.bf16.mxu0 %v2591
  %4513 = vmatpush1.bf16.msra.mxu0 %v2590
  %4514 = vmatprep.subr.bf16.mxu0 %v2595
  %4515 = vmatpush1.bf16.msra.mxu0 %v2594
  %4516 = vmatprep.subr.bf16.mxu0 %v2599
  %4517 = vmatpush1.bf16.msra.mxu0 %v2598
  %4518 = vmatprep.mubr.bf16.mxu0 %v4227
  %4519 = vmatmul.mubr.bf16.gmra.mrb[0].mxu0 %v4226
  %v4520 = vpop.f32.mrb[0].mxu0
  %v4521 = vadd.f32 %v4470, %v4520
  %v4522 = vpop.f32.mrb[0].mxu0
  %v4523 = vadd.f32 %v4472, %v4522
  %v4524 = vpop.f32.mrb[0].mxu0
  %v4525 = vadd.f32 %v4474, %v4524
  %v4526 = vpop.f32.mrb[0].mxu0
  %v4527 = vadd.f32 %v4476, %v4526
  %4528 = vmatprep.mubr.bf16.mxu0 %v4243
  %4529 = vmatmul.mubr.bf16.gmra.mrb[0].mxu0 %v4242
  %v4530 = vpop.f32.mrb[0].mxu0
  %v4531 = vadd.f32 %v4480, %v4530
  %v4532 = vpop.f32.mrb[0].mxu0
  %v4533 = vadd.f32 %v4482, %v4532
  %v4534 = vpop.f32.mrb[0].mxu0
  %v4535 = vpop.f32.mrb[0].mxu0
  %4536 = vdwg.mxu0
  %4537 = vmatprep.subr.bf16.mxu0 %v2603
  %4538 = vmatpush1.bf16.msra.mxu0 %v2602
  %4539 = vmatprep.subr.bf16.mxu0 %v2607
  %4540 = vmatpush1.bf16.msra.mxu0 %v2606
  %4541 = vmatprep.subr.bf16.mxu0 %v2611
  %4542 = vmatpush1.bf16.msra.mxu0 %v2610
  %4543 = vmatprep.subr.bf16.mxu0 %v2615
  %4544 = vmatpush1.bf16.msra.mxu0 %v2614
  %4545 = vmatprep.subr.bf16.mxu0 %v2619
  %4546 = vmatpush1.bf16.msra.mxu0 %v2618
  %4547 = vmatprep.subr.bf16.mxu0 %v2623
  %4548 = vmatpush1.bf16.msra.mxu0 %v2622
  %4549 = vmatprep.subr.bf16.mxu0 %v2627
  %4550 = vmatpush1.bf16.msra.mxu0 %v2626
  %4551 = vmatprep.subr.bf16.mxu0 %v2631
  %4552 = vmatpush1.bf16.msra.mxu0 %v2630
  %4553 = vmatprep.subr.bf16.mxu0 %v2635
  %4554 = vmatpush1.bf16.msra.mxu0 %v2634
  %4555 = vmatprep.subr.bf16.mxu0 %v2639
  %4556 = vmatpush1.bf16.msra.mxu0 %v2638
  %4557 = vmatprep.subr.bf16.mxu0 %v2643
  %4558 = vmatpush1.bf16.msra.mxu0 %v2642
  %4559 = vmatprep.subr.bf16.mxu0 %v2647
  %4560 = vmatpush1.bf16.msra.mxu0 %v2646
  %4561 = vmatprep.subr.bf16.mxu0 %v2651
  %4562 = vmatpush1.bf16.msra.mxu0 %v2650
  %4563 = vmatprep.subr.bf16.mxu0 %v2655
  %4564 = vmatpush1.bf16.msra.mxu0 %v2654
  %4565 = vmatprep.subr.bf16.mxu0 %v2659
  %4566 = vmatpush1.bf16.msra.mxu0 %v2658
  %4567 = vmatprep.subr.bf16.mxu0 %v2663
  %4568 = vmatpush1.bf16.msra.mxu0 %v2662
  %4569 = vmatprep.mubr.bf16.mxu0 %v4229
  %4570 = vmatmul.mubr.bf16.gmra.mrb[0].mxu0 %v4228
  %v4571 = vpop.f32.mrb[0].mxu0
  %v4572 = vadd.f32 %v4521, %v4571
  %v4573 = vpop.f32.mrb[0].mxu0
  %v4574 = vadd.f32 %v4523, %v4573
  %v4575 = vpop.f32.mrb[0].mxu0
  %v4576 = vadd.f32 %v4525, %v4575
  %v4577 = vpop.f32.mrb[0].mxu0
  %v4578 = vadd.f32 %v4527, %v4577
  %4579 = vmatprep.mubr.bf16.mxu0 %v4245
  %4580 = vmatmul.mubr.bf16.gmra.mrb[0].mxu0 %v4244
  %v4581 = vpop.f32.mrb[0].mxu0
  %v4582 = vadd.f32 %v4531, %v4581
  %v4583 = vpop.f32.mrb[0].mxu0
  %v4584 = vadd.f32 %v4533, %v4583
  %v4585 = vpop.f32.mrb[0].mxu0
  %v4586 = vpop.f32.mrb[0].mxu0
  %4587 = vdwg.mxu0
  %4588 = vmatprep.subr.bf16.mxu0 %v2667
  %4589 = vmatpush1.bf16.msra.mxu0 %v2666
  %4590 = vmatprep.subr.bf16.mxu0 %v2671
  %4591 = vmatpush1.bf16.msra.mxu0 %v2670
  %4592 = vmatprep.subr.bf16.mxu0 %v2675
  %4593 = vmatpush1.bf16.msra.mxu0 %v2674
  %4594 = vmatprep.subr.bf16.mxu0 %v2679
  %4595 = vmatpush1.bf16.msra.mxu0 %v2678
  %4596 = vmatprep.subr.bf16.mxu0 %v2683
  %4597 = vmatpush1.bf16.msra.mxu0 %v2682
  %4598 = vmatprep.subr.bf16.mxu0 %v2687
  %4599 = vmatpush1.bf16.msra.mxu0 %v2686
  %4600 = vmatprep.subr.bf16.mxu0 %v2691
  %4601 = vmatpush1.bf16.msra.mxu0 %v2690
  %4602 = vmatprep.subr.bf16.mxu0 %v2695
  %4603 = vmatpush1.bf16.msra.mxu0 %v2694
  %4604 = vmatprep.subr.bf16.mxu0 %v2699
  %4605 = vmatpush1.bf16.msra.mxu0 %v2698
  %4606 = vmatprep.subr.bf16.mxu0 %v2703
  %4607 = vmatpush1.bf16.msra.mxu0 %v2702
  %4608 = vmatprep.subr.bf16.mxu0 %v2707
  %4609 = vmatpush1.bf16.msra.mxu0 %v2706
  %4610 = vmatprep.subr.bf16.mxu0 %v2711
  %4611 = vmatpush1.bf16.msra.mxu0 %v2710
  %4612 = vmatprep.subr.bf16.mxu0 %v2715
  %4613 = vmatpush1.bf16.msra.mxu0 %v2714
  %4614 = vmatprep.subr.bf16.mxu0 %v2719
  %4615 = vmatpush1.bf16.msra.mxu0 %v2718
  %4616 = vmatprep.subr.bf16.mxu0 %v2723
  %4617 = vmatpush1.bf16.msra.mxu0 %v2722
  %4618 = vmatprep.subr.bf16.mxu0 %v2727
  %4619 = vmatpush1.bf16.msra.mxu0 %v2726
  %4620 = vmatprep.mubr.bf16.mxu0 %v4231
  %4621 = vmatmul.mubr.bf16.gmra.mrb[0].mxu0 %v4230
  %v4622 = vpop.f32.mrb[0].mxu0
  %v4623 = vadd.f32 %v4572, %v4622
  %v4624 = vpop.f32.mrb[0].mxu0
  %v4625 = vadd.f32 %v4574, %v4624
  %v4626 = vpop.f32.mrb[0].mxu0
  %v4627 = vadd.f32 %v4576, %v4626
  %v4628 = vpop.f32.mrb[0].mxu0
  %v4629 = vadd.f32 %v4578, %v4628
  %4630 = vmatprep.mubr.bf16.mxu0 %v4247
  %4631 = vmatmul.mubr.bf16.gmra.mrb[0].mxu0 %v4246
  %v4632 = vpop.f32.mrb[0].mxu0
  %v4633 = vadd.f32 %v4582, %v4632
  %v4634 = vpop.f32.mrb[0].mxu0
  %v4635 = vadd.f32 %v4584, %v4634
  %v4636 = vpop.f32.mrb[0].mxu0
  %v4637 = vpop.f32.mrb[0].mxu0
  %4638 = vdwg.mxu0
  %4639 = vmatprep.subr.bf16.mxu0 %v2731
  %4640 = vmatpush1.bf16.msra.mxu0 %v2730
  %4641 = vmatprep.subr.bf16.mxu0 %v2735
  %4642 = vmatpush1.bf16.msra.mxu0 %v2734
  %4643 = vmatprep.subr.bf16.mxu0 %v2739
  %4644 = vmatpush1.bf16.msra.mxu0 %v2738
  %4645 = vmatprep.subr.bf16.mxu0 %v2743
  %4646 = vmatpush1.bf16.msra.mxu0 %v2742
  %4647 = vmatprep.subr.bf16.mxu0 %v2747
  %4648 = vmatpush1.bf16.msra.mxu0 %v2746
  %4649 = vmatprep.subr.bf16.mxu0 %v2751
  %4650 = vmatpush1.bf16.msra.mxu0 %v2750
  %4651 = vmatprep.subr.bf16.mxu0 %v2755
  %4652 = vmatpush1.bf16.msra.mxu0 %v2754
  %4653 = vmatprep.subr.bf16.mxu0 %v2759
  %4654 = vmatpush1.bf16.msra.mxu0 %v2758
  %4655 = vmatprep.subr.bf16.mxu0 %v2763
  %4656 = vmatpush1.bf16.msra.mxu0 %v2762
  %4657 = vmatprep.subr.bf16.mxu0 %v2767
  %4658 = vmatpush1.bf16.msra.mxu0 %v2766
  %4659 = vmatprep.subr.bf16.mxu0 %v2771
  %4660 = vmatpush1.bf16.msra.mxu0 %v2770
  %4661 = vmatprep.subr.bf16.mxu0 %v2775
  %4662 = vmatpush1.bf16.msra.mxu0 %v2774
  %4663 = vmatprep.subr.bf16.mxu0 %v2779
  %4664 = vmatpush1.bf16.msra.mxu0 %v2778
  %4665 = vmatprep.subr.bf16.mxu0 %v2783
  %4666 = vmatpush1.bf16.msra.mxu0 %v2782
  %4667 = vmatprep.subr.bf16.mxu0 %v2787
  %4668 = vmatpush1.bf16.msra.mxu0 %v2786
  %4669 = vmatprep.subr.bf16.mxu0 %v2791
  %4670 = vmatpush1.bf16.msra.mxu0 %v2790
  %4671 = vmatprep.mubr.bf16.mxu0 %v4233
  %4672 = vmatmul.mubr.bf16.gmra.mrb[0].mxu0 %v4232
  %v4673 = vpop.f32.mrb[0].mxu0
  %v4674 = vadd.f32 %v4623, %v4673
  %v4675 = vpop.f32.mrb[0].mxu0
  %v4676 = vadd.f32 %v4625, %v4675
  %v4677 = vpop.f32.mrb[0].mxu0
  %v4678 = vadd.f32 %v4627, %v4677
  %v4679 = vpop.f32.mrb[0].mxu0
  %v4680 = vadd.f32 %v4629, %v4679
  %4681 = vmatprep.mubr.bf16.mxu0 %v4249
  %4682 = vmatmul.mubr.bf16.gmra.mrb[0].mxu0 %v4248
  %v4683 = vpop.f32.mrb[0].mxu0
  %v4684 = vadd.f32 %v4633, %v4683
  %v4685 = vpop.f32.mrb[0].mxu0
  %v4686 = vadd.f32 %v4635, %v4685
  %v4687 = vpop.f32.mrb[0].mxu0
  %v4688 = vpop.f32.mrb[0].mxu0
  %4689 = vdwg.mxu0
  %4690 = vmatprep.subr.bf16.mxu0 %v2285
  %4691 = vmatpush1.bf16.msra.mxu0 %v2284
  %4692 = vmatprep.subr.bf16.mxu0 %v2289
  %4693 = vmatpush1.bf16.msra.mxu0 %v2288
  %4694 = vmatprep.subr.bf16.mxu0 %v2293
  %4695 = vmatpush1.bf16.msra.mxu0 %v2292
  %4696 = vmatprep.subr.bf16.mxu0 %v2297
  %4697 = vmatpush1.bf16.msra.mxu0 %v2296
  %4698 = vmatprep.subr.bf16.mxu0 %v2301
  %4699 = vmatpush1.bf16.msra.mxu0 %v2300
  %4700 = vmatprep.subr.bf16.mxu0 %v2305
  %4701 = vmatpush1.bf16.msra.mxu0 %v2304
  %4702 = vmatprep.subr.bf16.mxu0 %v2309
  %4703 = vmatpush1.bf16.msra.mxu0 %v2308
  %4704 = vmatprep.subr.bf16.mxu0 %v2313
  %4705 = vmatpush1.bf16.msra.mxu0 %v2312
  %4706 = vmatprep.subr.bf16.mxu0 %v2317
  %4707 = vmatpush1.bf16.msra.mxu0 %v2316
  %4708 = vmatprep.subr.bf16.mxu0 %v2321
  %4709 = vmatpush1.bf16.msra.mxu0 %v2320
  %4710 = vmatprep.subr.bf16.mxu0 %v2325
  %4711 = vmatpush1.bf16.msra.mxu0 %v2324
  %4712 = vmatprep.subr.bf16.mxu0 %v2329
  %4713 = vmatpush1.bf16.msra.mxu0 %v2328
  %4714 = vmatprep.subr.bf16.mxu0 %v2333
  %4715 = vmatpush1.bf16.msra.mxu0 %v2332
  %4716 = vmatprep.subr.bf16.mxu0 %v2337
  %4717 = vmatpush1.bf16.msra.mxu0 %v2336
  %4718 = vmatprep.subr.bf16.mxu0 %v2341
  %4719 = vmatpush1.bf16.msra.mxu0 %v2340
  %4720 = vmatprep.subr.bf16.mxu0 %v2345
  %4721 = vmatpush1.bf16.msra.mxu0 %v2344
  %4722 = vmatprep.mubr.bf16.mxu0 %v4219
  %4723 = vmatmul.mubr.bf16.gmra.mrb[0].mxu0 %v4218
  %v4724 = vpop.f32.mrb[0].mxu0
  %v4725 = vadd.f32 0.0, %v4724
  %v4726 = vpop.f32.mrb[0].mxu0
  %v4727 = vadd.f32 0.0, %v4726
  %v4728 = vpop.f32.mrb[0].mxu0
  %v4729 = vadd.f32 0.0, %v4728
  %v4730 = vpop.f32.mrb[0].mxu0
  %v4731 = vadd.f32 0.0, %v4730
  %4732 = vmatprep.mubr.bf16.mxu0 %v4235
  %4733 = vmatmul.mubr.bf16.gmra.mrb[0].mxu0 %v4234
  %v4734 = vpop.f32.mrb[0].mxu0
  %v4735 = vadd.f32 0.0, %v4734
  %v4736 = vpop.f32.mrb[0].mxu0
  %v4737 = vadd.f32 0.0, %v4736
  %v4738 = vpop.f32.mrb[0].mxu0
  %v4739 = vpop.f32.mrb[0].mxu0
  %4740 = vdwg.mxu0
  %4741 = vmatprep.subr.bf16.mxu0 %v2349
  %4742 = vmatpush1.bf16.msra.mxu0 %v2348
  %4743 = vmatprep.subr.bf16.mxu0 %v2353
  %4744 = vmatpush1.bf16.msra.mxu0 %v2352
  %4745 = vmatprep.subr.bf16.mxu0 %v2357
  %4746 = vmatpush1.bf16.msra.mxu0 %v2356
  %4747 = vmatprep.subr.bf16.mxu0 %v2361
  %4748 = vmatpush1.bf16.msra.mxu0 %v2360
  %4749 = vmatprep.subr.bf16.mxu0 %v2365
  %4750 = vmatpush1.bf16.msra.mxu0 %v2364
  %4751 = vmatprep.subr.bf16.mxu0 %v2369
  %4752 = vmatpush1.bf16.msra.mxu0 %v2368
  %4753 = vmatprep.subr.bf16.mxu0 %v2373
  %4754 = vmatpush1.bf16.msra.mxu0 %v2372
  %4755 = vmatprep.subr.bf16.mxu0 %v2377
  %4756 = vmatpush1.bf16.msra.mxu0 %v2376
  %4757 = vmatprep.subr.bf16.mxu0 %v2381
  %4758 = vmatpush1.bf16.msra.mxu0 %v2380
  %4759 = vmatprep.subr.bf16.mxu0 %v2385
  %4760 = vmatpush1.bf16.msra.mxu0 %v2384
  %4761 = vmatprep.subr.bf16.mxu0 %v2389
  %4762 = vmatpush1.bf16.msra.mxu0 %v2388
  %4763 = vmatprep.subr.bf16.mxu0 %v2393
  %4764 = vmatpush1.bf16.msra.mxu0 %v2392
  %4765 = vmatprep.subr.bf16.mxu0 %v2397
  %4766 = vmatpush1.bf16.msra.mxu0 %v2396
  %4767 = vmatprep.subr.bf16.mxu0 %v2401
  %4768 = vmatpush1.bf16.msra.mxu0 %v2400
  %4769 = vmatprep.subr.bf16.mxu0 %v2405
  %4770 = vmatpush1.bf16.msra.mxu0 %v2404
  %4771 = vmatprep.subr.bf16.mxu0 %v2409
  %4772 = vmatpush1.bf16.msra.mxu0 %v2408
  %4773 = vmatprep.mubr.bf16.mxu0 %v4221
  %4774 = vmatmul.mubr.bf16.gmra.mrb[0].mxu0 %v4220
  %v4775 = vpop.f32.mrb[0].mxu0
  %v4776 = vadd.f32 %v4725, %v4775
  %v4777 = vpop.f32.mrb[0].mxu0
  %v4778 = vadd.f32 %v4727, %v4777
  %v4779 = vpop.f32.mrb[0].mxu0
  %v4780 = vadd.f32 %v4729, %v4779
  %v4781 = vpop.f32.mrb[0].mxu0
  %v4782 = vadd.f32 %v4731, %v4781
  %4783 = vmatprep.mubr.bf16.mxu0 %v4237
  %4784 = vmatmul.mubr.bf16.gmra.mrb[0].mxu0 %v4236
  %v4785 = vpop.f32.mrb[0].mxu0
  %v4786 = vadd.f32 %v4735, %v4785
  %v4787 = vpop.f32.mrb[0].mxu0
  %v4788 = vadd.f32 %v4737, %v4787
  %v4789 = vpop.f32.mrb[0].mxu0
  %v4790 = vpop.f32.mrb[0].mxu0
  %4791 = vdwg.mxu0
  %4792 = vmatprep.subr.bf16.mxu0 %v2413
  %4793 = vmatpush1.bf16.msra.mxu0 %v2412
  %4794 = vmatprep.subr.bf16.mxu0 %v2417
  %4795 = vmatpush1.bf16.msra.mxu0 %v2416
  %4796 = vmatprep.subr.bf16.mxu0 %v2421
  %4797 = vmatpush1.bf16.msra.mxu0 %v2420
  %4798 = vmatprep.subr.bf16.mxu0 %v2425
  %4799 = vmatpush1.bf16.msra.mxu0 %v2424
  %4800 = vmatprep.subr.bf16.mxu0 %v2429
  %4801 = vmatpush1.bf16.msra.mxu0 %v2428
  %4802 = vmatprep.subr.bf16.mxu0 %v2433
  %4803 = vmatpush1.bf16.msra.mxu0 %v2432
  %4804 = vmatprep.subr.bf16.mxu0 %v2437
  %4805 = vmatpush1.bf16.msra.mxu0 %v2436
  %4806 = vmatprep.subr.bf16.mxu0 %v2441
  %4807 = vmatpush1.bf16.msra.mxu0 %v2440
  %4808 = vmatprep.subr.bf16.mxu0 %v2445
  %4809 = vmatpush1.bf16.msra.mxu0 %v2444
  %4810 = vmatprep.subr.bf16.mxu0 %v2449
  %4811 = vmatpush1.bf16.msra.mxu0 %v2448
  %4812 = vmatprep.subr.bf16.mxu0 %v2453
  %4813 = vmatpush1.bf16.msra.mxu0 %v2452
  %4814 = vmatprep.subr.bf16.mxu0 %v2457
  %4815 = vmatpush1.bf16.msra.mxu0 %v2456
  %4816 = vmatprep.subr.bf16.mxu0 %v2461
  %4817 = vmatpush1.bf16.msra.mxu0 %v2460
  %4818 = vmatprep.subr.bf16.mxu0 %v2465
  %4819 = vmatpush1.bf16.msra.mxu0 %v2464
  %4820 = vmatprep.subr.bf16.mxu0 %v2469
  %4821 = vmatpush1.bf16.msra.mxu0 %v2468
  %4822 = vmatprep.subr.bf16.mxu0 %v2473
  %4823 = vmatpush1.bf16.msra.mxu0 %v2472
  %4824 = vmatprep.mubr.bf16.mxu0 %v4223
  %4825 = vmatmul.mubr.bf16.gmra.mrb[0].mxu0 %v4222
  %v4826 = vpop.f32.mrb[0].mxu0
  %v4827 = vadd.f32 %v4776, %v4826
  %v4828 = vpop.f32.mrb[0].mxu0
  %v4829 = vadd.f32 %v4778, %v4828
  %v4830 = vpop.f32.mrb[0].mxu0
  %v4831 = vadd.f32 %v4780, %v4830
  %v4832 = vpop.f32.mrb[0].mxu0
  %v4833 = vadd.f32 %v4782, %v4832
  %4834 = vmatprep.mubr.bf16.mxu0 %v4239
  %4835 = vmatmul.mubr.bf16.gmra.mrb[0].mxu0 %v4238
  %v4836 = vpop.f32.mrb[0].mxu0
  %v4837 = vadd.f32 %v4786, %v4836
  %v4838 = vpop.f32.mrb[0].mxu0
  %v4839 = vadd.f32 %v4788, %v4838
  %v4840 = vpop.f32.mrb[0].mxu0
  %v4841 = vpop.f32.mrb[0].mxu0
  %4842 = vdwg.mxu0
  %4843 = vmatprep.subr.bf16.mxu0 %v2477
  %4844 = vmatpush1.bf16.msra.mxu0 %v2476
  %4845 = vmatprep.subr.bf16.mxu0 %v2481
  %4846 = vmatpush1.bf16.msra.mxu0 %v2480
  %4847 = vmatprep.subr.bf16.mxu0 %v2485
  %4848 = vmatpush1.bf16.msra.mxu0 %v2484
  %4849 = vmatprep.subr.bf16.mxu0 %v2489
  %4850 = vmatpush1.bf16.msra.mxu0 %v2488
  %4851 = vmatprep.subr.bf16.mxu0 %v2493
  %4852 = vmatpush1.bf16.msra.mxu0 %v2492
  %4853 = vmatprep.subr.bf16.mxu0 %v2497
  %4854 = vmatpush1.bf16.msra.mxu0 %v2496
  %4855 = vmatprep.subr.bf16.mxu0 %v2501
  %4856 = vmatpush1.bf16.msra.mxu0 %v2500
  %4857 = vmatprep.subr.bf16.mxu0 %v2505
  %4858 = vmatpush1.bf16.msra.mxu0 %v2504
  %4859 = vmatprep.subr.bf16.mxu0 %v2509
  %4860 = vmatpush1.bf16.msra.mxu0 %v2508
  %4861 = vmatprep.subr.bf16.mxu0 %v2513
  %4862 = vmatpush1.bf16.msra.mxu0 %v2512
  %4863 = vmatprep.subr.bf16.mxu0 %v2517
  %4864 = vmatpush1.bf16.msra.mxu0 %v2516
  %4865 = vmatprep.subr.bf16.mxu0 %v2521
  %4866 = vmatpush1.bf16.msra.mxu0 %v2520
  %4867 = vmatprep.subr.bf16.mxu0 %v2525
  %4868 = vmatpush1.bf16.msra.mxu0 %v2524
  %4869 = vmatprep.subr.bf16.mxu0 %v2529
  %4870 = vmatpush1.bf16.msra.mxu0 %v2528
  %4871 = vmatprep.subr.bf16.mxu0 %v2533
  %4872 = vmatpush1.bf16.msra.mxu0 %v2532
  %4873 = vmatprep.subr.bf16.mxu0 %v2537
  %4874 = vmatpush1.bf16.msra.mxu0 %v2536
  %4875 = vmatprep.mubr.bf16.mxu0 %v4225
  %4876 = vmatmul.mubr.bf16.gmra.mrb[0].mxu0 %v4224
  %v4877 = vpop.f32.mrb[0].mxu0
  %v4878 = vadd.f32 %v4827, %v4877
  %v4879 = vpop.f32.mrb[0].mxu0
  %v4880 = vadd.f32 %v4829, %v4879
  %v4881 = vpop.f32.mrb[0].mxu0
  %v4882 = vadd.f32 %v4831, %v4881
  %v4883 = vpop.f32.mrb[0].mxu0
  %v4884 = vadd.f32 %v4833, %v4883
  %4885 = vmatprep.mubr.bf16.mxu0 %v4241
  %4886 = vmatmul.mubr.bf16.gmra.mrb[0].mxu0 %v4240
  %v4887 = vpop.f32.mrb[0].mxu0
  %v4888 = vadd.f32 %v4837, %v4887
  %v4889 = vpop.f32.mrb[0].mxu0
  %v4890 = vadd.f32 %v4839, %v4889
  %v4891 = vpop.f32.mrb[0].mxu0
  %v4892 = vpop.f32.mrb[0].mxu0
  %4893 = vdwg.mxu0
  %4894 = vmatprep.subr.bf16.mxu0 %v2541
  %4895 = vmatpush1.bf16.msra.mxu0 %v2540
  %4896 = vmatprep.subr.bf16.mxu0 %v2545
  %4897 = vmatpush1.bf16.msra.mxu0 %v2544
  %4898 = vmatprep.subr.bf16.mxu0 %v2549
  %4899 = vmatpush1.bf16.msra.mxu0 %v2548
  %4900 = vmatprep.subr.bf16.mxu0 %v2553
  %4901 = vmatpush1.bf16.msra.mxu0 %v2552
  %4902 = vmatprep.subr.bf16.mxu0 %v2557
  %4903 = vmatpush1.bf16.msra.mxu0 %v2556
  %4904 = vmatprep.subr.bf16.mxu0 %v2561
  %4905 = vmatpush1.bf16.msra.mxu0 %v2560
  %4906 = vmatprep.subr.bf16.mxu0 %v2565
  %4907 = vmatpush1.bf16.msra.mxu0 %v2564
  %4908 = vmatprep.subr.bf16.mxu0 %v2569
  %4909 = vmatpush1.bf16.msra.mxu0 %v2568
  %4910 = vmatprep.subr.bf16.mxu0 %v2573
  %4911 = vmatpush1.bf16.msra.mxu0 %v2572
  %4912 = vmatprep.subr.bf16.mxu0 %v2577
  %4913 = vmatpush1.bf16.msra.mxu0 %v2576
  %4914 = vmatprep.subr.bf16.mxu0 %v2581
  %4915 = vmatpush1.bf16.msra.mxu0 %v2580
  %4916 = vmatprep.subr.bf16.mxu0 %v2585
  %4917 = vmatpush1.bf16.msra.mxu0 %v2584
  %4918 = vmatprep.subr.bf16.mxu0 %v2589
  %4919 = vmatpush1.bf16.msra.mxu0 %v2588
  %4920 = vmatprep.subr.bf16.mxu0 %v2593
  %4921 = vmatpush1.bf16.msra.mxu0 %v2592
  %4922 = vmatprep.subr.bf16.mxu0 %v2597
  %4923 = vmatpush1.bf16.msra.mxu0 %v2596
  %4924 = vmatprep.subr.bf16.mxu0 %v2601
  %4925 = vmatpush1.bf16.msra.mxu0 %v2600
  %4926 = vmatprep.mubr.bf16.mxu0 %v4227
  %4927 = vmatmul.mubr.bf16.gmra.mrb[0].mxu0 %v4226
  %v4928 = vpop.f32.mrb[0].mxu0
  %v4929 = vadd.f32 %v4878, %v4928
  %v4930 = vpop.f32.mrb[0].mxu0
  %v4931 = vadd.f32 %v4880, %v4930
  %v4932 = vpop.f32.mrb[0].mxu0
  %v4933 = vadd.f32 %v4882, %v4932
  %v4934 = vpop.f32.mrb[0].mxu0
  %v4935 = vadd.f32 %v4884, %v4934
  %4936 = vmatprep.mubr.bf16.mxu0 %v4243
  %4937 = vmatmul.mubr.bf16.gmra.mrb[0].mxu0 %v4242
  %v4938 = vpop.f32.mrb[0].mxu0
  %v4939 = vadd.f32 %v4888, %v4938
  %v4940 = vpop.f32.mrb[0].mxu0
  %v4941 = vadd.f32 %v4890, %v4940
  %v4942 = vpop.f32.mrb[0].mxu0
  %v4943 = vpop.f32.mrb[0].mxu0
  %4944 = vdwg.mxu0
  %4945 = vmatprep.subr.bf16.mxu0 %v2605
  %4946 = vmatpush1.bf16.msra.mxu0 %v2604
  %4947 = vmatprep.subr.bf16.mxu0 %v2609
  %4948 = vmatpush1.bf16.msra.mxu0 %v2608
  %4949 = vmatprep.subr.bf16.mxu0 %v2613
  %4950 = vmatpush1.bf16.msra.mxu0 %v2612
  %4951 = vmatprep.subr.bf16.mxu0 %v2617
  %4952 = vmatpush1.bf16.msra.mxu0 %v2616
  %4953 = vmatprep.subr.bf16.mxu0 %v2621
  %4954 = vmatpush1.bf16.msra.mxu0 %v2620
  %4955 = vmatprep.subr.bf16.mxu0 %v2625
  %4956 = vmatpush1.bf16.msra.mxu0 %v2624
  %4957 = vmatprep.subr.bf16.mxu0 %v2629
  %4958 = vmatpush1.bf16.msra.mxu0 %v2628
  %4959 = vmatprep.subr.bf16.mxu0 %v2633
  %4960 = vmatpush1.bf16.msra.mxu0 %v2632
  %4961 = vmatprep.subr.bf16.mxu0 %v2637
  %4962 = vmatpush1.bf16.msra.mxu0 %v2636
  %4963 = vmatprep.subr.bf16.mxu0 %v2641
  %4964 = vmatpush1.bf16.msra.mxu0 %v2640
  %4965 = vmatprep.subr.bf16.mxu0 %v2645
  %4966 = vmatpush1.bf16.msra.mxu0 %v2644
  %4967 = vmatprep.subr.bf16.mxu0 %v2649
  %4968 = vmatpush1.bf16.msra.mxu0 %v2648
  %4969 = vmatprep.subr.bf16.mxu0 %v2653
  %4970 = vmatpush1.bf16.msra.mxu0 %v2652
  %4971 = vmatprep.subr.bf16.mxu0 %v2657
  %4972 = vmatpush1.bf16.msra.mxu0 %v2656
  %4973 = vmatprep.subr.bf16.mxu0 %v2661
  %4974 = vmatpush1.bf16.msra.mxu0 %v2660
  %4975 = vmatprep.subr.bf16.mxu0 %v2665
  %4976 = vmatpush1.bf16.msra.mxu0 %v2664
  %4977 = vmatprep.mubr.bf16.mxu0 %v4229
  %4978 = vmatmul.mubr.bf16.gmra.mrb[0].mxu0 %v4228
  %v4979 = vpop.f32.mrb[0].mxu0
  %v4980 = vadd.f32 %v4929, %v4979
  %v4981 = vpop.f32.mrb[0].mxu0
  %v4982 = vadd.f32 %v4931, %v4981
  %v4983 = vpop.f32.mrb[0].mxu0
  %v4984 = vadd.f32 %v4933, %v4983
  %v4985 = vpop.f32.mrb[0].mxu0
  %v4986 = vadd.f32 %v4935, %v4985
  %4987 = vmatprep.mubr.bf16.mxu0 %v4245
  %4988 = vmatmul.mubr.bf16.gmra.mrb[0].mxu0 %v4244
  %v4989 = vpop.f32.mrb[0].mxu0
  %v4990 = vadd.f32 %v4939, %v4989
  %v4991 = vpop.f32.mrb[0].mxu0
  %v4992 = vadd.f32 %v4941, %v4991
  %v4993 = vpop.f32.mrb[0].mxu0
  %v4994 = vpop.f32.mrb[0].mxu0
  %4995 = vdwg.mxu0
  %4996 = vmatprep.subr.bf16.mxu0 %v2669
  %4997 = vmatpush1.bf16.msra.mxu0 %v2668
  %4998 = vmatprep.subr.bf16.mxu0 %v2673
  %4999 = vmatpush1.bf16.msra.mxu0 %v2672
  %5000 = vmatprep.subr.bf16.mxu0 %v2677
  %5001 = vmatpush1.bf16.msra.mxu0 %v2676
  %5002 = vmatprep.subr.bf16.mxu0 %v2681
  %5003 = vmatpush1.bf16.msra.mxu0 %v2680
  %5004 = vmatprep.subr.bf16.mxu0 %v2685
  %5005 = vmatpush1.bf16.msra.mxu0 %v2684
  %5006 = vmatprep.subr.bf16.mxu0 %v2689
  %5007 = vmatpush1.bf16.msra.mxu0 %v2688
  %5008 = vmatprep.subr.bf16.mxu0 %v2693
  %5009 = vmatpush1.bf16.msra.mxu0 %v2692
  %5010 = vmatprep.subr.bf16.mxu0 %v2697
  %5011 = vmatpush1.bf16.msra.mxu0 %v2696
  %5012 = vmatprep.subr.bf16.mxu0 %v2701
  %5013 = vmatpush1.bf16.msra.mxu0 %v2700
  %5014 = vmatprep.subr.bf16.mxu0 %v2705
  %5015 = vmatpush1.bf16.msra.mxu0 %v2704
  %5016 = vmatprep.subr.bf16.mxu0 %v2709
  %5017 = vmatpush1.bf16.msra.mxu0 %v2708
  %5018 = vmatprep.subr.bf16.mxu0 %v2713
  %5019 = vmatpush1.bf16.msra.mxu0 %v2712
  %5020 = vmatprep.subr.bf16.mxu0 %v2717
  %5021 = vmatpush1.bf16.msra.mxu0 %v2716
  %5022 = vmatprep.subr.bf16.mxu0 %v2721
  %5023 = vmatpush1.bf16.msra.mxu0 %v2720
  %5024 = vmatprep.subr.bf16.mxu0 %v2725
  %5025 = vmatpush1.bf16.msra.mxu0 %v2724
  %5026 = vmatprep.subr.bf16.mxu0 %v2729
  %5027 = vmatpush1.bf16.msra.mxu0 %v2728
  %5028 = vmatprep.mubr.bf16.mxu0 %v4231
  %5029 = vmatmul.mubr.bf16.gmra.mrb[0].mxu0 %v4230
  %v5030 = vpop.f32.mrb[0].mxu0
  %v5031 = vadd.f32 %v4980, %v5030
  %v5032 = vpop.f32.mrb[0].mxu0
  %v5033 = vadd.f32 %v4982, %v5032
  %v5034 = vpop.f32.mrb[0].mxu0
  %v5035 = vadd.f32 %v4984, %v5034
  %v5036 = vpop.f32.mrb[0].mxu0
  %v5037 = vadd.f32 %v4986, %v5036
  %5038 = vmatprep.mubr.bf16.mxu0 %v4247
  %5039 = vmatmul.mubr.bf16.gmra.mrb[0].mxu0 %v4246
  %v5040 = vpop.f32.mrb[0].mxu0
  %v5041 = vadd.f32 %v4990, %v5040
  %v5042 = vpop.f32.mrb[0].mxu0
  %v5043 = vadd.f32 %v4992, %v5042
  %v5044 = vpop.f32.mrb[0].mxu0
  %v5045 = vpop.f32.mrb[0].mxu0
  %5046 = vdwg.mxu0
  %5047 = vmatprep.subr.bf16.mxu0 %v2733
  %5048 = vmatpush1.bf16.msra.mxu0 %v2732
  %5049 = vmatprep.subr.bf16.mxu0 %v2737
  %5050 = vmatpush1.bf16.msra.mxu0 %v2736
  %5051 = vmatprep.subr.bf16.mxu0 %v2741
  %5052 = vmatpush1.bf16.msra.mxu0 %v2740
  %5053 = vmatprep.subr.bf16.mxu0 %v2745
  %5054 = vmatpush1.bf16.msra.mxu0 %v2744
  %5055 = vmatprep.subr.bf16.mxu0 %v2749
  %5056 = vmatpush1.bf16.msra.mxu0 %v2748
  %5057 = vmatprep.subr.bf16.mxu0 %v2753
  %5058 = vmatpush1.bf16.msra.mxu0 %v2752
  %5059 = vmatprep.subr.bf16.mxu0 %v2757
  %5060 = vmatpush1.bf16.msra.mxu0 %v2756
  %5061 = vmatprep.subr.bf16.mxu0 %v2761
  %5062 = vmatpush1.bf16.msra.mxu0 %v2760
  %5063 = vmatprep.subr.bf16.mxu0 %v2765
  %5064 = vmatpush1.bf16.msra.mxu0 %v2764
  %5065 = vmatprep.subr.bf16.mxu0 %v2769
  %5066 = vmatpush1.bf16.msra.mxu0 %v2768
  %5067 = vmatprep.subr.bf16.mxu0 %v2773
  %5068 = vmatpush1.bf16.msra.mxu0 %v2772
  %5069 = vmatprep.subr.bf16.mxu0 %v2777
  %5070 = vmatpush1.bf16.msra.mxu0 %v2776
  %5071 = vmatprep.subr.bf16.mxu0 %v2781
  %5072 = vmatpush1.bf16.msra.mxu0 %v2780
  %5073 = vmatprep.subr.bf16.mxu0 %v2785
  %5074 = vmatpush1.bf16.msra.mxu0 %v2784
  %5075 = vmatprep.subr.bf16.mxu0 %v2789
  %5076 = vmatpush1.bf16.msra.mxu0 %v2788
  %5077 = vmatprep.subr.bf16.mxu0 %v2793
  %5078 = vmatpush1.bf16.msra.mxu0 %v2792
  %5079 = vmatprep.mubr.bf16.mxu0 %v4233
  %5080 = vmatmul.mubr.bf16.gmra.mrb[0].mxu0 %v4232
  %v5081 = vpop.f32.mrb[0].mxu0
  %v5082 = vadd.f32 %v5031, %v5081
  %v5083 = vpop.f32.mrb[0].mxu0
  %v5084 = vadd.f32 %v5033, %v5083
  %v5085 = vpop.f32.mrb[0].mxu0
  %v5086 = vadd.f32 %v5035, %v5085
  %v5087 = vpop.f32.mrb[0].mxu0
  %v5088 = vadd.f32 %v5037, %v5087
  %5089 = vmatprep.mubr.bf16.mxu0 %v4249
  %5090 = vmatmul.mubr.bf16.gmra.mrb[0].mxu0 %v4248
  %v5091 = vpop.f32.mrb[0].mxu0
  %v5092 = vadd.f32 %v5041, %v5091
  %v5093 = vpop.f32.mrb[0].mxu0
  %v5094 = vadd.f32 %v5043, %v5093
  %v5095 = vpop.f32.mrb[0].mxu0
  %v5096 = vpop.f32.mrb[0].mxu0
  %5097 = vdwg.mxu0
  %v5098 = vadd.f32 %v3698, %v4674
  %v5099 = vadd.f32 %v3700, %v4676
  %v5100 = vadd.f32 %v3702, %v4678
  %v5101 = vadd.f32 %v3704, %v4680
  %v5102 = vadd.f32 %v3708, %v4684
  %v5103 = vadd.f32 %v3710, %v4686
  %v5104 = vadd.f32 %v4106, %v5082
  %v5105 = vadd.f32 %v4108, %v5084
  %v5106 = vadd.f32 %v4110, %v5086
  %v5107 = vadd.f32 %v4112, %v5088
  %v5108 = vadd.f32 %v4116, %v5092
  %v5109 = vadd.f32 %v4118, %v5094
  %v5110 = vmul.f32 %v3698, %v3698
  %v5111 = vmul.f32 %v3700, %v3700
  %v5112 = vmul.f32 %v3702, %v3702
  %v5113 = vmul.f32 %v3704, %v3704
  %v5114 = vmul.f32 %v3708, %v3708
  %v5115 = vmul.f32 %v3710, %v3710
  %v5116 = vmul.f32 %v4106, %v4106
  %v5117 = vmul.f32 %v4108, %v4108
  %v5118 = vmul.f32 %v4110, %v4110
  %v5119 = vmul.f32 %v4112, %v4112
  %v5120 = vmul.f32 %v4116, %v4116
  %v5121 = vmul.f32 %v4118, %v4118
  %v5122 = vadd.f32 %v5110, %v5116
  %v5123 = vadd.f32 %v5111, %v5117
  %v5124 = vadd.f32 %v5112, %v5118
  %v5125 = vadd.f32 %v5113, %v5119
  %v5126 = vadd.f32 %v5114, %v5120
  %v5127 = vadd.f32 %v5115, %v5121
  %v5128 = vmax.f32 %v5122, 1e-08
  %v5129 = vmax.f32 %v5123, 1e-08
  %v5130 = vmax.f32 %v5124, 1e-08
  %v5131 = vmax.f32 %v5125, 1e-08
  %v5132 = vmax.f32 %v5126, 1e-08
  %v5133 = vmax.f32 %v5127, 1e-08
  %v5134 = vrsqrt.pop %v5128
  %v5135 = vmul.f32 %v5128, %v5134
  %vm5136 = vcmp.eq.f32.partialorder %v5128, inf
  %v5137 = vsel %vm5136, %v5128, %v5135
  %vm5138 = vcmp.eq.f32.partialorder %v5128, 0.0
  %v5139 = vand.u32 %v5128, 2147483648
  %v5140 = vsel %vm5138, %v5139, %v5137
  %v5141 = vrsqrt.pop %v5129
  %v5142 = vmul.f32 %v5129, %v5141
  %vm5143 = vcmp.eq.f32.partialorder %v5129, inf
  %v5144 = vsel %vm5143, %v5129, %v5142
  %vm5145 = vcmp.eq.f32.partialorder %v5129, 0.0
  %v5146 = vand.u32 %v5129, 2147483648
  %v5147 = vsel %vm5145, %v5146, %v5144
  %v5148 = vrsqrt.pop %v5130
  %v5149 = vmul.f32 %v5130, %v5148
  %vm5150 = vcmp.eq.f32.partialorder %v5130, inf
  %v5151 = vsel %vm5150, %v5130, %v5149
  %vm5152 = vcmp.eq.f32.partialorder %v5130, 0.0
  %v5153 = vand.u32 %v5130, 2147483648
  %v5154 = vsel %vm5152, %v5153, %v5151
  %v5155 = vrsqrt.pop %v5131
  %v5156 = vmul.f32 %v5131, %v5155
  %vm5157 = vcmp.eq.f32.partialorder %v5131, inf
  %v5158 = vsel %vm5157, %v5131, %v5156
  %vm5159 = vcmp.eq.f32.partialorder %v5131, 0.0
  %v5160 = vand.u32 %v5131, 2147483648
  %v5161 = vsel %vm5159, %v5160, %v5158
  %v5162 = vrsqrt.pop %v5132
  %v5163 = vmul.f32 %v5132, %v5162
  %vm5164 = vcmp.eq.f32.partialorder %v5132, inf
  %v5165 = vsel %vm5164, %v5132, %v5163
  %vm5166 = vcmp.eq.f32.partialorder %v5132, 0.0
  %v5167 = vand.u32 %v5132, 2147483648
  %v5168 = vsel %vm5166, %v5167, %v5165
  %v5169 = vrsqrt.pop %v5133
  %v5170 = vmul.f32 %v5133, %v5169
  %vm5171 = vcmp.eq.f32.partialorder %v5133, inf
  %v5172 = vsel %vm5171, %v5133, %v5170
  %vm5173 = vcmp.eq.f32.partialorder %v5133, 0.0
  %v5174 = vand.u32 %v5133, 2147483648
  %v5175 = vsel %vm5173, %v5174, %v5172
  %v5176 = vmul.f32 %v4674, %v4674
  %v5177 = vmul.f32 %v4676, %v4676
  %v5178 = vmul.f32 %v4678, %v4678
  %v5179 = vmul.f32 %v4680, %v4680
  %v5180 = vmul.f32 %v4684, %v4684
  %v5181 = vmul.f32 %v4686, %v4686
  %v5182 = vmul.f32 %v5082, %v5082
  %v5183 = vmul.f32 %v5084, %v5084
  %v5184 = vmul.f32 %v5086, %v5086
  %v5185 = vmul.f32 %v5088, %v5088
  %v5186 = vmul.f32 %v5092, %v5092
  %v5187 = vmul.f32 %v5094, %v5094
  %v5188 = vadd.f32 %v5176, %v5182
  %v5189 = vadd.f32 %v5177, %v5183
  %v5190 = vadd.f32 %v5178, %v5184
  %v5191 = vadd.f32 %v5179, %v5185
  %v5192 = vadd.f32 %v5180, %v5186
  %v5193 = vadd.f32 %v5181, %v5187
  %v5194 = vmax.f32 %v5188, 1e-08
  %v5195 = vmax.f32 %v5189, 1e-08
  %v5196 = vmax.f32 %v5190, 1e-08
  %v5197 = vmax.f32 %v5191, 1e-08
  %v5198 = vmax.f32 %v5192, 1e-08
  %v5199 = vmax.f32 %v5193, 1e-08
  %v5200 = vrsqrt.pop %v5194
  %v5201 = vmul.f32 %v5194, %v5200
  %vm5202 = vcmp.eq.f32.partialorder %v5194, inf
  %v5203 = vsel %vm5202, %v5194, %v5201
  %vm5204 = vcmp.eq.f32.partialorder %v5194, 0.0
  %v5205 = vand.u32 %v5194, 2147483648
  %v5206 = vsel %vm5204, %v5205, %v5203
  %v5207 = vrsqrt.pop %v5195
  %v5208 = vmul.f32 %v5195, %v5207
  %vm5209 = vcmp.eq.f32.partialorder %v5195, inf
  %v5210 = vsel %vm5209, %v5195, %v5208
  %vm5211 = vcmp.eq.f32.partialorder %v5195, 0.0
  %v5212 = vand.u32 %v5195, 2147483648
  %v5213 = vsel %vm5211, %v5212, %v5210
  %v5214 = vrsqrt.pop %v5196
  %v5215 = vmul.f32 %v5196, %v5214
  %vm5216 = vcmp.eq.f32.partialorder %v5196, inf
  %v5217 = vsel %vm5216, %v5196, %v5215
  %vm5218 = vcmp.eq.f32.partialorder %v5196, 0.0
  %v5219 = vand.u32 %v5196, 2147483648
  %v5220 = vsel %vm5218, %v5219, %v5217
  %v5221 = vrsqrt.pop %v5197
  %v5222 = vmul.f32 %v5197, %v5221
  %vm5223 = vcmp.eq.f32.partialorder %v5197, inf
  %v5224 = vsel %vm5223, %v5197, %v5222
  %vm5225 = vcmp.eq.f32.partialorder %v5197, 0.0
  %v5226 = vand.u32 %v5197, 2147483648
  %v5227 = vsel %vm5225, %v5226, %v5224
  %v5228 = vrsqrt.pop %v5198
  %v5229 = vmul.f32 %v5198, %v5228
  %vm5230 = vcmp.eq.f32.partialorder %v5198, inf
  %v5231 = vsel %vm5230, %v5198, %v5229
  %vm5232 = vcmp.eq.f32.partialorder %v5198, 0.0
  %v5233 = vand.u32 %v5198, 2147483648
  %v5234 = vsel %vm5232, %v5233, %v5231
  %v5235 = vrsqrt.pop %v5199
  %v5236 = vmul.f32 %v5199, %v5235
  %vm5237 = vcmp.eq.f32.partialorder %v5199, inf
  %v5238 = vsel %vm5237, %v5199, %v5236
  %vm5239 = vcmp.eq.f32.partialorder %v5199, 0.0
  %v5240 = vand.u32 %v5199, 2147483648
  %v5241 = vsel %vm5239, %v5240, %v5238
  %v5242 = vmul.f32 %v5098, %v5098
  %v5243 = vmul.f32 %v5099, %v5099
  %v5244 = vmul.f32 %v5100, %v5100
  %v5245 = vmul.f32 %v5101, %v5101
  %v5246 = vmul.f32 %v5102, %v5102
  %v5247 = vmul.f32 %v5103, %v5103
  %v5248 = vmul.f32 %v5104, %v5104
  %v5249 = vmul.f32 %v5105, %v5105
  %v5250 = vmul.f32 %v5106, %v5106
  %v5251 = vmul.f32 %v5107, %v5107
  %v5252 = vmul.f32 %v5108, %v5108
  %v5253 = vmul.f32 %v5109, %v5109
  %v5254 = vadd.f32 %v5242, %v5248
  %v5255 = vadd.f32 %v5243, %v5249
  %v5256 = vadd.f32 %v5244, %v5250
  %v5257 = vadd.f32 %v5245, %v5251
  %v5258 = vadd.f32 %v5246, %v5252
  %v5259 = vadd.f32 %v5247, %v5253
  %v5260 = vmax.f32 %v5254, 1e-08
  %v5261 = vmax.f32 %v5255, 1e-08
  %v5262 = vmax.f32 %v5256, 1e-08
  %v5263 = vmax.f32 %v5257, 1e-08
  %v5264 = vmax.f32 %v5258, 1e-08
  %v5265 = vmax.f32 %v5259, 1e-08
  %v5266 = vrsqrt.pop %v5260
  %v5267 = vmul.f32 %v5260, %v5266
  %vm5268 = vcmp.eq.f32.partialorder %v5260, inf
  %v5269 = vsel %vm5268, %v5260, %v5267
  %vm5270 = vcmp.eq.f32.partialorder %v5260, 0.0
  %v5271 = vand.u32 %v5260, 2147483648
  %v5272 = vsel %vm5270, %v5271, %v5269
  %v5273 = vrsqrt.pop %v5261
  %v5274 = vmul.f32 %v5261, %v5273
  %vm5275 = vcmp.eq.f32.partialorder %v5261, inf
  %v5276 = vsel %vm5275, %v5261, %v5274
  %vm5277 = vcmp.eq.f32.partialorder %v5261, 0.0
  %v5278 = vand.u32 %v5261, 2147483648
  %v5279 = vsel %vm5277, %v5278, %v5276
  %v5280 = vrsqrt.pop %v5262
  %v5281 = vmul.f32 %v5262, %v5280
  %vm5282 = vcmp.eq.f32.partialorder %v5262, inf
  %v5283 = vsel %vm5282, %v5262, %v5281
  %vm5284 = vcmp.eq.f32.partialorder %v5262, 0.0
  %v5285 = vand.u32 %v5262, 2147483648
  %v5286 = vsel %vm5284, %v5285, %v5283
  %v5287 = vrsqrt.pop %v5263
  %v5288 = vmul.f32 %v5263, %v5287
  %vm5289 = vcmp.eq.f32.partialorder %v5263, inf
  %v5290 = vsel %vm5289, %v5263, %v5288
  %vm5291 = vcmp.eq.f32.partialorder %v5263, 0.0
  %v5292 = vand.u32 %v5263, 2147483648
  %v5293 = vsel %vm5291, %v5292, %v5290
  %v5294 = vrsqrt.pop %v5264
  %v5295 = vmul.f32 %v5264, %v5294
  %vm5296 = vcmp.eq.f32.partialorder %v5264, inf
  %v5297 = vsel %vm5296, %v5264, %v5295
  %vm5298 = vcmp.eq.f32.partialorder %v5264, 0.0
  %v5299 = vand.u32 %v5264, 2147483648
  %v5300 = vsel %vm5298, %v5299, %v5297
  %v5301 = vrsqrt.pop %v5265
  %v5302 = vmul.f32 %v5265, %v5301
  %vm5303 = vcmp.eq.f32.partialorder %v5265, inf
  %v5304 = vsel %vm5303, %v5265, %v5302
  %vm5305 = vcmp.eq.f32.partialorder %v5265, 0.0
  %v5306 = vand.u32 %v5265, 2147483648
  %v5307 = vsel %vm5305, %v5306, %v5304
  %v5308 = vadd.f32 %v5140, %v5206
  %v5309 = vadd.f32 %v5147, %v5213
  %v5310 = vadd.f32 %v5154, %v5220
  %v5311 = vadd.f32 %v5161, %v5227
  %v5312 = vadd.f32 %v5168, %v5234
  %v5313 = vadd.f32 %v5175, %v5241
  %v5314 = vsub.f32 %v5308, %v5272
  %v5315 = vsub.f32 %v5309, %v5279
  %v5316 = vsub.f32 %v5310, %v5286
  %v5317 = vsub.f32 %v5311, %v5293
  %v5318 = vsub.f32 %v5312, %v5300
  %v5319 = vsub.f32 %v5313, %v5307
  %v5320 = vmul.f32 %v5314, %v5314
  %v5321 = vmul.f32 %v5315, %v5315
  %v5322 = vmul.f32 %v5316, %v5316
  %v5323 = vmul.f32 %v5317, %v5317
  %v5324 = vmul.f32 %v5318, %v5318
  %v5325 = vmul.f32 %v5319, %v5319
  %s5326 = sadd.s32 0, 0
  %s5327 = smul.u32 %s5326, 24
  %s5328 = sadd.s32 %s5327, 24
  %p5329 = scmp.le.s32.totalorder %s5328, 18
  // Predicated region
  $region18: #{_lambda_.5} parent=0 // pred_check
    %p5330 = pneg %p5329
  $region19: #{_lambda_.5} parent=0 // pred_check_branch
    %5332 = sbr.rel (%p5330) target = $region21
  $region20: #{_lambda_.5} parent=0 // pred_region
    %v5333 = vld [vmem:[#allocation2] sm:$0xff]
    %v5334 = vld [vmem:[#allocation2 + $0x8] sm:$0xff]
    %v5335 = vld [vmem:[#allocation2 + $0x10] sm:$0xff]
    %v5336 = vld [vmem:[#allocation2 + $0x18] sm:$0xff]
    %v5337 = vld [vmem:[#allocation2 + $0x20] sm:$0xff]
    %v5338 = vld [vmem:[#allocation2 + $0x28] sm:$0xff]
    %v5339 = vadd.f32 %v5333, %v5320
    %v5340 = vadd.f32 %v5334, %v5321
    %v5341 = vadd.f32 %v5335, %v5322
    %v5342 = vadd.f32 %v5336, %v5323
    %v5343 = vadd.f32 %v5337, %v5324
    %v5344 = vadd.f32 %v5338, %v5325
    %5345 = vst [vmem:[#allocation2] sm:$0xff] %v5339
    %5346 = vst [vmem:[#allocation2 + $0x8] sm:$0xff] %v5340
    %5347 = vst [vmem:[#allocation2 + $0x10] sm:$0xff] %v5341
    %5348 = vst [vmem:[#allocation2 + $0x18] sm:$0xff] %v5342
    %5349 = vst [vmem:[#allocation2 + $0x20] sm:$0xff] %v5343
    %5350 = vst [vmem:[#allocation2 + $0x28] sm:$0xff] %v5344
  $region21: #{_lambda_.5} parent=0 // pred_fallthru
    _
  %p5351 = scmp.gt.s32.totalorder %s5328, 18
  // Predicated region
  $region22: #{_lambda_.5} parent=0 // pred_check
    %p5352 = pneg %p5351
  $region23: #{_lambda_.5} parent=0 // pred_check_branch
    %5354 = sbr.rel (%p5352) target = $region25
  $region24: #{_lambda_.5} parent=0 // pred_region
    %v5355 = vlaneseq
    %v5356 = vshrl.u32 %v5355, 7
    %v5357 = vadd.s32 %v5356, 8
    %v5358 = vadd.s32 %v5356, 16
    %v5359 = vstv %s5327
    %v5360 = vadd.s32 %v5359, %v5356
    %v5361 = vadd.s32 %v5359, %v5357
    %v5362 = vadd.s32 %v5359, %v5358
    %v5363 = vld [vmem:[#allocation2] sm:$0xff]
    %v5364 = vld [vmem:[#allocation2 + $0x8] sm:$0xff]
    %v5365 = vld [vmem:[#allocation2 + $0x10] sm:$0xff]
    %v5366 = vld [vmem:[#allocation2 + $0x18] sm:$0xff]
    %v5367 = vld [vmem:[#allocation2 + $0x20] sm:$0xff]
    %v5368 = vld [vmem:[#allocation2 + $0x28] sm:$0xff]
    %vm5369 = vcmp.lt.s32.totalorder %v5360, 18
    %vm5370 = vcmp.lt.s32.totalorder %v5361, 18
    %vm5371 = vcmp.lt.s32.totalorder %v5362, 18
    %v5372 = vsel %vm5369, %v5320, 0.0
    %v5373 = vsel %vm5369, %v5321, 0.0
    %v5374 = vsel %vm5370, %v5322, 0.0
    %v5375 = vsel %vm5370, %v5323, 0.0
    %v5376 = vsel %vm5371, %v5324, 0.0
    %v5377 = vsel %vm5371, %v5325, 0.0
    %v5378 = vadd.f32 %v5363, %v5372
    %v5379 = vadd.f32 %v5364, %v5373
    %v5380 = vadd.f32 %v5365, %v5374
    %v5381 = vadd.f32 %v5366, %v5375
    %v5382 = vadd.f32 %v5367, %v5376
    %v5383 = vadd.f32 %v5368, %v5377
    %5384 = vst [vmem:[#allocation2] sm:$0xff] %v5378
    %5385 = vst [vmem:[#allocation2 + $0x8] sm:$0xff] %v5379
    %5386 = vst [vmem:[#allocation2 + $0x10] sm:$0xff] %v5380
    %5387 = vst [vmem:[#allocation2 + $0x18] sm:$0xff] %v5381
    %5388 = vst [vmem:[#allocation2 + $0x20] sm:$0xff] %v5382
    %5389 = vst [vmem:[#allocation2 + $0x28] sm:$0xff] %v5383
  $region25: #{_lambda_.5} parent=0 // pred_fallthru
    _
  // Predicated region
  $region26: #{_lambda_.5} parent=0 // pred_check
    %p5390 = pneg %p64
  $region27: #{_lambda_.5} parent=0 // pred_check_branch
    %5392 = sbr.rel (%p5390) target = $region29
  $region28: #{_lambda_.5} parent=0 // pred_region
    %v5393 = vld [vmem:[#allocation2] sm:$0xff]
    %v5394 = vld [vmem:[#allocation2 + $0x8] sm:$0xff]
    %v5395 = vld [vmem:[#allocation2 + $0x10] sm:$0xff]
    %v5396 = vld [vmem:[#allocation2 + $0x18] sm:$0xff]
    %v5397 = vld [vmem:[#allocation2 + $0x20] sm:$0xff]
    %v5398 = vld [vmem:[#allocation2 + $0x28] sm:$0xff]
    %v5399 = vadd.f32 %v5393, %v5394
    %v5400 = vadd.f32 %v5399, %v5395
    %v5401 = vadd.f32 %v5400, %v5396
    %v5402 = vadd.f32 %v5401, %v5397
    %v5403 = vadd.f32 %v5402, %v5398
    %5404 = vadd.xlane.f32.xlu0 %v5403
    %v5405 = vpop.xlane.xlu0 %5404
    %v5406 = vrot.slane %v5405, 4
    %v5407 = vadd.f32 %v5405, %v5406
    %v5408 = vrot.slane %v5407, 2
    %v5409 = vadd.f32 %v5407, %v5408
    %v5410 = vrot.slane %v5409, 1
    %v5411 = vadd.f32 %v5409, %v5410
    %s5412 = vtos %v5411
    %v5413 = vstv %s5412
    %5414 = vst [vmem:[%s3] sm:$0xff] %v5413
  $region29: #{_lambda_.5} parent=0 // pred_fallthru
    _
  // Predicated region
  $region30: #{_lambda_.5} parent=0 // pred_check
    _
  $region31: #{_lambda_.5} parent=0 // pred_check_branch
    %5416 = sbr.rel (0) target = $region33
  $region32: #{_lambda_.5} parent=0 // pred_region
    _
  $region33: #{_lambda_.5} parent=0 // pred_fallthru
    _
  // Predicated region
  $region34: #{_lambda_.5} parent=0 // pred_check
    _
  $region35: #{_lambda_.5} parent=0 // pred_check_branch
    %5418 = sbr.rel (0) target = $region37
  $region36: #{_lambda_.5} parent=0 // pred_region
    _
  $region37: #{_lambda_.5} parent=0 // pred_fallthru
    _

</llo_original>
